<compile_context>
chip_gen: v7x
topology: tpu7x:2x2x1
jax: 0.10.0
libtpu: 0.0.40
codegen_flags: <defaults>
</compile_context>

<pallas_src>
import jax
import jax.numpy as jnp
from jax.experimental import pallas as pl
from jax.experimental.pallas import tpu as pltpu

# ---- problem config (small, consistent with the module) -------------------
B = 2                    # batch
C = 4                    # n_feats (in_feats == out_feats, required by the skip)
H = W = 16               # spatial
K = 3                    # kernel
PAD = 1                  # dilation=1 -> pad = (3 - 1) // 2 = 1
HP, WP = H + 2 * PAD, W + 2 * PAD
N_UNITS = 2              # number of res_blocks in the ResNet body
N_CONV = 2 * N_UNITS     # two convs per res_block
HW = H * W               # 256
KKC = K * K * C          # 36


def resnet_kernel(x_ref, w_ref, o_ref, pad_ref, patch_ref):
    """Fused ResNet forward for one batch element.

    x_ref     : (1, H, W, C)          NHWC input tile
    w_ref     : (N_CONV, K*K*C, C)    im2col-flattened conv weights
    o_ref     : (1, H*W, C)           flattened output tile
    pad_ref   : (HP, WP, C)  VMEM     zero-padded activation scratch
    patch_ref : (H*W, K*K*C) VMEM     im2col patch scratch
    """
    # Zero the padded scratch once; the interior is fully overwritten by every
    # conv, so the zero border (= the conv padding) stays valid for all layers.
    pad_ref[...] = jnp.zeros_like(pad_ref)

    def conv3x3(h_flat, conv_idx):
        # h_flat: (H*W, C) f32 -> (H*W, C) f32
        pad_ref[PAD:PAD + H, PAD:PAD + W, :] = h_flat.reshape(H, W, C)
        # im2col: gather the 9 shifted windows into one (H*W, K*K*C) patch.
        for kh in range(K):
            for kw in range(K):
                col0 = (kh * K + kw) * C
                patch_ref[:, col0:col0 + C] = (
                    pad_ref[kh:kh + H, kw:kw + W, :].reshape(HW, C))
        # One MXU matmul per conv (contraction dim 36), f32 accumulation.
        return jnp.dot(patch_ref[...], w_ref[conv_idx],
                       preferred_element_type=jnp.float32)

    x0 = x_ref[0].reshape(HW, C).astype(jnp.float32)     # (H*W, C)
    h = x0
    for u in range(N_UNITS):                              # res_blocks
        t = jnp.maximum(conv3x3(h, 2 * u), 0.0)           # conv -> ReLU
        t = conv3x3(t, 2 * u + 1)                         # conv
        h = t + h                                         # res_block skip
    o_ref[0] = (h + x0).astype(o_ref.dtype)               # ResNet global skip


@jax.jit
def resnet_pallas(x_nchw, weights):
    """x_nchw: (B, C, H, W) f32; weights: list of N_CONV OIHW (C, C, K, K) f32."""
    # One NCHW -> NHWC transpose for the entire fused network (8 KB tensor).
    x_nhwc = jnp.transpose(x_nchw, (0, 2, 3, 1))
    # OIHW -> (KH, KW, CIN, COUT) -> flat (K*K*CIN, COUT); stack all convs.
    w2d = jnp.stack(
        [jnp.transpose(w, (2, 3, 1, 0)).reshape(KKC, C) for w in weights])

    out_flat = pl.pallas_call(
        resnet_kernel,
        out_shape=jax.ShapeDtypeStruct((B, HW, C), jnp.float32),
        grid_spec=pltpu.PrefetchScalarGridSpec(
            num_scalar_prefetch=0,
            grid=(B,),
            in_specs=[
                pl.BlockSpec((1, H, W, C), lambda b: (b, 0, 0, 0)),
                pl.BlockSpec((N_CONV, KKC, C), lambda b: (0, 0, 0)),
            ],
            out_specs=pl.BlockSpec((1, HW, C), lambda b: (b, 0, 0)),
            scratch_shapes=[
                pltpu.VMEM((HP, WP, C), jnp.float32),   # padded activation
                pltpu.VMEM((HW, KKC), jnp.float32),     # im2col patch
            ],
        ),
        compiler_params=pltpu.CompilerParams(
            dimension_semantics=("parallel",)),
    )(x_nhwc, w2d)

    # Single tiny transpose back to the module's NCHW convention.
    return jnp.transpose(out_flat.reshape(B, H, W, C), (0, 3, 1, 2))


def resnet_ref(x_nchw, weights):
    """Pure-JAX reference (lax convs + ReLU + skips) for correctness checking."""
    def conv(h, w):
        return jax.lax.conv_general_dilated(
            h, w, window_strides=(1, 1),
            padding=((PAD, PAD), (PAD, PAD)),
            dimension_numbers=("NCHW", "OIHW", "NCHW"))
    h = x_nchw
    for u in range(N_UNITS):
        t = jnp.maximum(conv(h, weights[2 * u]), 0.0)
        t = conv(t, weights[2 * u + 1])
        h = t + h
    return h + x_nchw


if __name__ == "__main__":
    key = jax.random.PRNGKey(0)
    keys = jax.random.split(key, N_CONV + 1)
    x = jax.random.normal(keys[0], (B, C, H, W), dtype=jnp.float32)
    # Deterministic Conv2d weights (out_feats, in_feats, 3, 3), bias=False.
    weights = [
        jax.random.normal(keys[1 + i], (C, C, K, K), dtype=jnp.float32) * 0.1
        for i in range(N_CONV)
    ]

    y = resnet_pallas(x, weights)
    jax.block_until_ready(y)

    y_ref = resnet_ref(x, weights)
    assert y.shape == (B, C, H, W)
    assert jnp.allclose(y, y_ref, atol=1e-3, rtol=1e-3), \
        float(jnp.max(jnp.abs(y - y_ref)))

    print("KERNEL_OK")
</pallas_src>

<mosaic_0001>
module attributes {stable_mosaic.version = 11 : i64} {
  func.func @resnet_kernel(%arg0: i32, %arg1: memref<1x16x16x4xf32, #tpu.memory_space<vmem>>, %arg2: memref<4x36x4xf32, #tpu.memory_space<vmem>>, %arg3: memref<1x256x4xf32, #tpu.memory_space<vmem>>, %arg4: memref<18x18x4xf32, #tpu.memory_space<vmem>>, %arg5: memref<256x36xf32, #tpu.memory_space<vmem>>) attributes {dimension_semantics = [#tpu.dimension_semantics<parallel>], iteration_bounds = array<i64: 2>, scalar_prefetch = 0 : i64, scratch_operands = 2 : i64, tpu.core_type = #tpu.core_type<tc>, window_params = [{transform_indices = @transform_0, window_bounds = array<i64: 1, 16, 16, 4>}, {pipeline_mode = #tpu.pipeline_mode<synchronous>, transform_indices = @transform_1, window_bounds = array<i64: 4, 36, 4>}, {transform_indices = @transform_2, window_bounds = array<i64: 1, 256, 4>}]} {
    %cst = arith.constant 0.000000e+00 : f32
    %0 = vector.broadcast %cst : f32 to vector<18x18x4xf32>
    %c0 = arith.constant 0 : index
    %c0_0 = arith.constant 0 : index
    %c0_1 = arith.constant 0 : index
    %1 = vector.load %arg4[%c0, %c0_0, %c0_1] : memref<18x18x4xf32, #tpu.memory_space<vmem>>, vector<18x18x4xf32>
    tpu.vector_store %arg4[%c0, %c0_0, %c0_1], %0 {strides = array<i32>} : memref<18x18x4xf32, #tpu.memory_space<vmem>>, vector<18x18x4xf32>,
    %c0_2 = arith.constant 0 : index
    %c0_3 = arith.constant 0 : index
    %c0_4 = arith.constant 0 : index
    %c0_5 = arith.constant 0 : index
    %2 = vector.load %arg1[%c0_2, %c0_3, %c0_4, %c0_5] : memref<1x16x16x4xf32, #tpu.memory_space<vmem>>, vector<1x16x16x4xf32>
    %3 = vector.shape_cast %2 : vector<1x16x16x4xf32> to vector<16x16x4xf32>
    %4 = vector.shape_cast %3 : vector<16x16x4xf32> to vector<256x4xf32>
    %5 = vector.shape_cast %4 : vector<256x4xf32> to vector<16x16x4xf32>
    %c1 = arith.constant 1 : index
    %c1_6 = arith.constant 1 : index
    %c0_7 = arith.constant 0 : index
    %6 = vector.load %arg4[%c1, %c1_6, %c0_7] : memref<18x18x4xf32, #tpu.memory_space<vmem>>, vector<16x16x4xf32>
    tpu.vector_store %arg4[%c1, %c1_6, %c0_7], %5 {strides = array<i32>} : memref<18x18x4xf32, #tpu.memory_space<vmem>>, vector<16x16x4xf32>,
    %c0_8 = arith.constant 0 : index
    %c0_9 = arith.constant 0 : index
    %c0_10 = arith.constant 0 : index
    %7 = vector.load %arg4[%c0_8, %c0_9, %c0_10] : memref<18x18x4xf32, #tpu.memory_space<vmem>>, vector<16x16x4xf32>
    %8 = vector.shape_cast %7 : vector<16x16x4xf32> to vector<256x4xf32>
    %c0_11 = arith.constant 0 : index
    %c0_12 = arith.constant 0 : index
    %9 = vector.load %arg5[%c0_11, %c0_12] : memref<256x36xf32, #tpu.memory_space<vmem>>, vector<256x4xf32>
    tpu.vector_store %arg5[%c0_11, %c0_12], %8 {strides = array<i32>} : memref<256x36xf32, #tpu.memory_space<vmem>>, vector<256x4xf32>,
    %c0_13 = arith.constant 0 : index
    %c1_14 = arith.constant 1 : index
    %c0_15 = arith.constant 0 : index
    %10 = vector.load %arg4[%c0_13, %c1_14, %c0_15] : memref<18x18x4xf32, #tpu.memory_space<vmem>>, vector<16x16x4xf32>
    %11 = vector.shape_cast %10 : vector<16x16x4xf32> to vector<256x4xf32>
    %c0_16 = arith.constant 0 : index
    %c4 = arith.constant 4 : index
    %12 = vector.load %arg5[%c0_16, %c4] : memref<256x36xf32, #tpu.memory_space<vmem>>, vector<256x4xf32>
    tpu.vector_store %arg5[%c0_16, %c4], %11 {strides = array<i32>} : memref<256x36xf32, #tpu.memory_space<vmem>>, vector<256x4xf32>,
    %c0_17 = arith.constant 0 : index
    %c2 = arith.constant 2 : index
    %c0_18 = arith.constant 0 : index
    %13 = vector.load %arg4[%c0_17, %c2, %c0_18] : memref<18x18x4xf32, #tpu.memory_space<vmem>>, vector<16x16x4xf32>
    %14 = vector.shape_cast %13 : vector<16x16x4xf32> to vector<256x4xf32>
    %c0_19 = arith.constant 0 : index
    %c8 = arith.constant 8 : index
    %15 = vector.load %arg5[%c0_19, %c8] : memref<256x36xf32, #tpu.memory_space<vmem>>, vector<256x4xf32>
    tpu.vector_store %arg5[%c0_19, %c8], %14 {strides = array<i32>} : memref<256x36xf32, #tpu.memory_space<vmem>>, vector<256x4xf32>,
    %c1_20 = arith.constant 1 : index
    %c0_21 = arith.constant 0 : index
    %c0_22 = arith.constant 0 : index
    %16 = vector.load %arg4[%c1_20, %c0_21, %c0_22] : memref<18x18x4xf32, #tpu.memory_space<vmem>>, vector<16x16x4xf32>
    %17 = vector.shape_cast %16 : vector<16x16x4xf32> to vector<256x4xf32>
    %c0_23 = arith.constant 0 : index
    %c12 = arith.constant 12 : index
    %18 = vector.load %arg5[%c0_23, %c12] : memref<256x36xf32, #tpu.memory_space<vmem>>, vector<256x4xf32>
    tpu.vector_store %arg5[%c0_23, %c12], %17 {strides = array<i32>} : memref<256x36xf32, #tpu.memory_space<vmem>>, vector<256x4xf32>,
    %c1_24 = arith.constant 1 : index
    %c1_25 = arith.constant 1 : index
    %c0_26 = arith.constant 0 : index
    %19 = vector.load %arg4[%c1_24, %c1_25, %c0_26] : memref<18x18x4xf32, #tpu.memory_space<vmem>>, vector<16x16x4xf32>
    %20 = vector.shape_cast %19 : vector<16x16x4xf32> to vector<256x4xf32>
    %c0_27 = arith.constant 0 : index
    %c16 = arith.constant 16 : index
    %21 = vector.load %arg5[%c0_27, %c16] : memref<256x36xf32, #tpu.memory_space<vmem>>, vector<256x4xf32>
    tpu.vector_store %arg5[%c0_27, %c16], %20 {strides = array<i32>} : memref<256x36xf32, #tpu.memory_space<vmem>>, vector<256x4xf32>,
    %c1_28 = arith.constant 1 : index
    %c2_29 = arith.constant 2 : index
    %c0_30 = arith.constant 0 : index
    %22 = vector.load %arg4[%c1_28, %c2_29, %c0_30] : memref<18x18x4xf32, #tpu.memory_space<vmem>>, vector<16x16x4xf32>
    %23 = vector.shape_cast %22 : vector<16x16x4xf32> to vector<256x4xf32>
    %c0_31 = arith.constant 0 : index
    %c20 = arith.constant 20 : index
    %24 = vector.load %arg5[%c0_31, %c20] : memref<256x36xf32, #tpu.memory_space<vmem>>, vector<256x4xf32>
    tpu.vector_store %arg5[%c0_31, %c20], %23 {strides = array<i32>} : memref<256x36xf32, #tpu.memory_space<vmem>>, vector<256x4xf32>,
    %c2_32 = arith.constant 2 : index
    %c0_33 = arith.constant 0 : index
    %c0_34 = arith.constant 0 : index
    %25 = vector.load %arg4[%c2_32, %c0_33, %c0_34] : memref<18x18x4xf32, #tpu.memory_space<vmem>>, vector<16x16x4xf32>
    %26 = vector.shape_cast %25 : vector<16x16x4xf32> to vector<256x4xf32>
    %c0_35 = arith.constant 0 : index
    %c24 = arith.constant 24 : index
    %27 = vector.load %arg5[%c0_35, %c24] : memref<256x36xf32, #tpu.memory_space<vmem>>, vector<256x4xf32>
    tpu.vector_store %arg5[%c0_35, %c24], %26 {strides = array<i32>} : memref<256x36xf32, #tpu.memory_space<vmem>>, vector<256x4xf32>,
    %c2_36 = arith.constant 2 : index
    %c1_37 = arith.constant 1 : index
    %c0_38 = arith.constant 0 : index
    %28 = vector.load %arg4[%c2_36, %c1_37, %c0_38] : memref<18x18x4xf32, #tpu.memory_space<vmem>>, vector<16x16x4xf32>
    %29 = vector.shape_cast %28 : vector<16x16x4xf32> to vector<256x4xf32>
    %c0_39 = arith.constant 0 : index
    %c28 = arith.constant 28 : index
    %30 = vector.load %arg5[%c0_39, %c28] : memref<256x36xf32, #tpu.memory_space<vmem>>, vector<256x4xf32>
    tpu.vector_store %arg5[%c0_39, %c28], %29 {strides = array<i32>} : memref<256x36xf32, #tpu.memory_space<vmem>>, vector<256x4xf32>,
    %c2_40 = arith.constant 2 : index
    %c2_41 = arith.constant 2 : index
    %c0_42 = arith.constant 0 : index
    %31 = vector.load %arg4[%c2_40, %c2_41, %c0_42] : memref<18x18x4xf32, #tpu.memory_space<vmem>>, vector<16x16x4xf32>
    %32 = vector.shape_cast %31 : vector<16x16x4xf32> to vector<256x4xf32>
    %c0_43 = arith.constant 0 : index
    %c32 = arith.constant 32 : index
    %33 = vector.load %arg5[%c0_43, %c32] : memref<256x36xf32, #tpu.memory_space<vmem>>, vector<256x4xf32>
    tpu.vector_store %arg5[%c0_43, %c32], %32 {strides = array<i32>} : memref<256x36xf32, #tpu.memory_space<vmem>>, vector<256x4xf32>,
    %c0_44 = arith.constant 0 : index
    %c0_45 = arith.constant 0 : index
    %34 = vector.load %arg5[%c0_44, %c0_45] : memref<256x36xf32, #tpu.memory_space<vmem>>, vector<256x36xf32>
    %c0_46 = arith.constant 0 : index
    %c0_47 = arith.constant 0 : index
    %c0_48 = arith.constant 0 : index
    %35 = vector.load %arg2[%c0_46, %c0_47, %c0_48] : memref<4x36x4xf32, #tpu.memory_space<vmem>>, vector<1x36x4xf32>
    %36 = vector.shape_cast %35 : vector<1x36x4xf32> to vector<36x4xf32>
    %cst_49 = arith.constant dense<0.000000e+00> : vector<256x4xf32>
    %37 = tpu.matmul %34, %36, %cst_49 {dimension_numbers = #tpu.dot_dimension_numbers<[1], [0], [0], [1], [0, 0, 1, 1], [], []>} : vector<256x36xf32>, vector<36x4xf32>, vector<256x4xf32> -> vector<256x4xf32>
    %cst_50 = arith.constant 0.000000e+00 : f32
    %38 = vector.broadcast %cst_50 : f32 to vector<256x4xf32>
    %39 = arith.maximumf %37, %38 : vector<256x4xf32>
    %40 = vector.shape_cast %39 : vector<256x4xf32> to vector<16x16x4xf32>
    %c1_51 = arith.constant 1 : index
    %c1_52 = arith.constant 1 : index
    %c0_53 = arith.constant 0 : index
    %41 = vector.load %arg4[%c1_51, %c1_52, %c0_53] : memref<18x18x4xf32, #tpu.memory_space<vmem>>, vector<16x16x4xf32>
    tpu.vector_store %arg4[%c1_51, %c1_52, %c0_53], %40 {strides = array<i32>} : memref<18x18x4xf32, #tpu.memory_space<vmem>>, vector<16x16x4xf32>,
    %c0_54 = arith.constant 0 : index
    %c0_55 = arith.constant 0 : index
    %c0_56 = arith.constant 0 : index
    %42 = vector.load %arg4[%c0_54, %c0_55, %c0_56] : memref<18x18x4xf32, #tpu.memory_space<vmem>>, vector<16x16x4xf32>
    %43 = vector.shape_cast %42 : vector<16x16x4xf32> to vector<256x4xf32>
    %c0_57 = arith.constant 0 : index
    %c0_58 = arith.constant 0 : index
    %44 = vector.load %arg5[%c0_57, %c0_58] : memref<256x36xf32, #tpu.memory_space<vmem>>, vector<256x4xf32>
    tpu.vector_store %arg5[%c0_57, %c0_58], %43 {strides = array<i32>} : memref<256x36xf32, #tpu.memory_space<vmem>>, vector<256x4xf32>,
    %c0_59 = arith.constant 0 : index
    %c1_60 = arith.constant 1 : index
    %c0_61 = arith.constant 0 : index
    %45 = vector.load %arg4[%c0_59, %c1_60, %c0_61] : memref<18x18x4xf32, #tpu.memory_space<vmem>>, vector<16x16x4xf32>
    %46 = vector.shape_cast %45 : vector<16x16x4xf32> to vector<256x4xf32>
    %c0_62 = arith.constant 0 : index
    %c4_63 = arith.constant 4 : index
    %47 = vector.load %arg5[%c0_62, %c4_63] : memref<256x36xf32, #tpu.memory_space<vmem>>, vector<256x4xf32>
    tpu.vector_store %arg5[%c0_62, %c4_63], %46 {strides = array<i32>} : memref<256x36xf32, #tpu.memory_space<vmem>>, vector<256x4xf32>,
    %c0_64 = arith.constant 0 : index
    %c2_65 = arith.constant 2 : index
    %c0_66 = arith.constant 0 : index
    %48 = vector.load %arg4[%c0_64, %c2_65, %c0_66] : memref<18x18x4xf32, #tpu.memory_space<vmem>>, vector<16x16x4xf32>
    %49 = vector.shape_cast %48 : vector<16x16x4xf32> to vector<256x4xf32>
    %c0_67 = arith.constant 0 : index
    %c8_68 = arith.constant 8 : index
    %50 = vector.load %arg5[%c0_67, %c8_68] : memref<256x36xf32, #tpu.memory_space<vmem>>, vector<256x4xf32>
    tpu.vector_store %arg5[%c0_67, %c8_68], %49 {strides = array<i32>} : memref<256x36xf32, #tpu.memory_space<vmem>>, vector<256x4xf32>,
    %c1_69 = arith.constant 1 : index
    %c0_70 = arith.constant 0 : index
    %c0_71 = arith.constant 0 : index
    %51 = vector.load %arg4[%c1_69, %c0_70, %c0_71] : memref<18x18x4xf32, #tpu.memory_space<vmem>>, vector<16x16x4xf32>
    %52 = vector.shape_cast %51 : vector<16x16x4xf32> to vector<256x4xf32>
    %c0_72 = arith.constant 0 : index
    %c12_73 = arith.constant 12 : index
    %53 = vector.load %arg5[%c0_72, %c12_73] : memref<256x36xf32, #tpu.memory_space<vmem>>, vector<256x4xf32>
    tpu.vector_store %arg5[%c0_72, %c12_73], %52 {strides = array<i32>} : memref<256x36xf32, #tpu.memory_space<vmem>>, vector<256x4xf32>,
    %c1_74 = arith.constant 1 : index
    %c1_75 = arith.constant 1 : index
    %c0_76 = arith.constant 0 : index
    %54 = vector.load %arg4[%c1_74, %c1_75, %c0_76] : memref<18x18x4xf32, #tpu.memory_space<vmem>>, vector<16x16x4xf32>
    %55 = vector.shape_cast %54 : vector<16x16x4xf32> to vector<256x4xf32>
    %c0_77 = arith.constant 0 : index
    %c16_78 = arith.constant 16 : index
    %56 = vector.load %arg5[%c0_77, %c16_78] : memref<256x36xf32, #tpu.memory_space<vmem>>, vector<256x4xf32>
    tpu.vector_store %arg5[%c0_77, %c16_78], %55 {strides = array<i32>} : memref<256x36xf32, #tpu.memory_space<vmem>>, vector<256x4xf32>,
    %c1_79 = arith.constant 1 : index
    %c2_80 = arith.constant 2 : index
    %c0_81 = arith.constant 0 : index
    %57 = vector.load %arg4[%c1_79, %c2_80, %c0_81] : memref<18x18x4xf32, #tpu.memory_space<vmem>>, vector<16x16x4xf32>
    %58 = vector.shape_cast %57 : vector<16x16x4xf32> to vector<256x4xf32>
    %c0_82 = arith.constant 0 : index
    %c20_83 = arith.constant 20 : index
    %59 = vector.load %arg5[%c0_82, %c20_83] : memref<256x36xf32, #tpu.memory_space<vmem>>, vector<256x4xf32>
    tpu.vector_store %arg5[%c0_82, %c20_83], %58 {strides = array<i32>} : memref<256x36xf32, #tpu.memory_space<vmem>>, vector<256x4xf32>,
    %c2_84 = arith.constant 2 : index
    %c0_85 = arith.constant 0 : index
    %c0_86 = arith.constant 0 : index
    %60 = vector.load %arg4[%c2_84, %c0_85, %c0_86] : memref<18x18x4xf32, #tpu.memory_space<vmem>>, vector<16x16x4xf32>
    %61 = vector.shape_cast %60 : vector<16x16x4xf32> to vector<256x4xf32>
    %c0_87 = arith.constant 0 : index
    %c24_88 = arith.constant 24 : index
    %62 = vector.load %arg5[%c0_87, %c24_88] : memref<256x36xf32, #tpu.memory_space<vmem>>, vector<256x4xf32>
    tpu.vector_store %arg5[%c0_87, %c24_88], %61 {strides = array<i32>} : memref<256x36xf32, #tpu.memory_space<vmem>>, vector<256x4xf32>,
    %c2_89 = arith.constant 2 : index
    %c1_90 = arith.constant 1 : index
    %c0_91 = arith.constant 0 : index
    %63 = vector.load %arg4[%c2_89, %c1_90, %c0_91] : memref<18x18x4xf32, #tpu.memory_space<vmem>>, vector<16x16x4xf32>
    %64 = vector.shape_cast %63 : vector<16x16x4xf32> to vector<256x4xf32>
    %c0_92 = arith.constant 0 : index
    %c28_93 = arith.constant 28 : index
    %65 = vector.load %arg5[%c0_92, %c28_93] : memref<256x36xf32, #tpu.memory_space<vmem>>, vector<256x4xf32>
    tpu.vector_store %arg5[%c0_92, %c28_93], %64 {strides = array<i32>} : memref<256x36xf32, #tpu.memory_space<vmem>>, vector<256x4xf32>,
    %c2_94 = arith.constant 2 : index
    %c2_95 = arith.constant 2 : index
    %c0_96 = arith.constant 0 : index
    %66 = vector.load %arg4[%c2_94, %c2_95, %c0_96] : memref<18x18x4xf32, #tpu.memory_space<vmem>>, vector<16x16x4xf32>
    %67 = vector.shape_cast %66 : vector<16x16x4xf32> to vector<256x4xf32>
    %c0_97 = arith.constant 0 : index
    %c32_98 = arith.constant 32 : index
    %68 = vector.load %arg5[%c0_97, %c32_98] : memref<256x36xf32, #tpu.memory_space<vmem>>, vector<256x4xf32>
    tpu.vector_store %arg5[%c0_97, %c32_98], %67 {strides = array<i32>} : memref<256x36xf32, #tpu.memory_space<vmem>>, vector<256x4xf32>,
    %c0_99 = arith.constant 0 : index
    %c0_100 = arith.constant 0 : index
    %69 = vector.load %arg5[%c0_99, %c0_100] : memref<256x36xf32, #tpu.memory_space<vmem>>, vector<256x36xf32>
    %c1_101 = arith.constant 1 : index
    %c0_102 = arith.constant 0 : index
    %c0_103 = arith.constant 0 : index
    %70 = vector.load %arg2[%c1_101, %c0_102, %c0_103] : memref<4x36x4xf32, #tpu.memory_space<vmem>>, vector<1x36x4xf32>
    %71 = vector.shape_cast %70 : vector<1x36x4xf32> to vector<36x4xf32>
    %cst_104 = arith.constant dense<0.000000e+00> : vector<256x4xf32>
    %72 = tpu.matmul %69, %71, %cst_104 {dimension_numbers = #tpu.dot_dimension_numbers<[1], [0], [0], [1], [0, 0, 1, 1], [], []>} : vector<256x36xf32>, vector<36x4xf32>, vector<256x4xf32> -> vector<256x4xf32>
    %73 = arith.addf %72, %4 : vector<256x4xf32>
    %74 = vector.shape_cast %73 : vector<256x4xf32> to vector<16x16x4xf32>
    %c1_105 = arith.constant 1 : index
    %c1_106 = arith.constant 1 : index
    %c0_107 = arith.constant 0 : index
    %75 = vector.load %arg4[%c1_105, %c1_106, %c0_107] : memref<18x18x4xf32, #tpu.memory_space<vmem>>, vector<16x16x4xf32>
    tpu.vector_store %arg4[%c1_105, %c1_106, %c0_107], %74 {strides = array<i32>} : memref<18x18x4xf32, #tpu.memory_space<vmem>>, vector<16x16x4xf32>,
    %c0_108 = arith.constant 0 : index
    %c0_109 = arith.constant 0 : index
    %c0_110 = arith.constant 0 : index
    %76 = vector.load %arg4[%c0_108, %c0_109, %c0_110] : memref<18x18x4xf32, #tpu.memory_space<vmem>>, vector<16x16x4xf32>
    %77 = vector.shape_cast %76 : vector<16x16x4xf32> to vector<256x4xf32>
    %c0_111 = arith.constant 0 : index
    %c0_112 = arith.constant 0 : index
    %78 = vector.load %arg5[%c0_111, %c0_112] : memref<256x36xf32, #tpu.memory_space<vmem>>, vector<256x4xf32>
    tpu.vector_store %arg5[%c0_111, %c0_112], %77 {strides = array<i32>} : memref<256x36xf32, #tpu.memory_space<vmem>>, vector<256x4xf32>,
    %c0_113 = arith.constant 0 : index
    %c1_114 = arith.constant 1 : index
    %c0_115 = arith.constant 0 : index
    %79 = vector.load %arg4[%c0_113, %c1_114, %c0_115] : memref<18x18x4xf32, #tpu.memory_space<vmem>>, vector<16x16x4xf32>
    %80 = vector.shape_cast %79 : vector<16x16x4xf32> to vector<256x4xf32>
    %c0_116 = arith.constant 0 : index
    %c4_117 = arith.constant 4 : index
    %81 = vector.load %arg5[%c0_116, %c4_117] : memref<256x36xf32, #tpu.memory_space<vmem>>, vector<256x4xf32>
    tpu.vector_store %arg5[%c0_116, %c4_117], %80 {strides = array<i32>} : memref<256x36xf32, #tpu.memory_space<vmem>>, vector<256x4xf32>,
    %c0_118 = arith.constant 0 : index
    %c2_119 = arith.constant 2 : index
    %c0_120 = arith.constant 0 : index
    %82 = vector.load %arg4[%c0_118, %c2_119, %c0_120] : memref<18x18x4xf32, #tpu.memory_space<vmem>>, vector<16x16x4xf32>
    %83 = vector.shape_cast %82 : vector<16x16x4xf32> to vector<256x4xf32>
    %c0_121 = arith.constant 0 : index
    %c8_122 = arith.constant 8 : index
    %84 = vector.load %arg5[%c0_121, %c8_122] : memref<256x36xf32, #tpu.memory_space<vmem>>, vector<256x4xf32>
    tpu.vector_store %arg5[%c0_121, %c8_122], %83 {strides = array<i32>} : memref<256x36xf32, #tpu.memory_space<vmem>>, vector<256x4xf32>,
    %c1_123 = arith.constant 1 : index
    %c0_124 = arith.constant 0 : index
    %c0_125 = arith.constant 0 : index
    %85 = vector.load %arg4[%c1_123, %c0_124, %c0_125] : memref<18x18x4xf32, #tpu.memory_space<vmem>>, vector<16x16x4xf32>
    %86 = vector.shape_cast %85 : vector<16x16x4xf32> to vector<256x4xf32>
    %c0_126 = arith.constant 0 : index
    %c12_127 = arith.constant 12 : index
    %87 = vector.load %arg5[%c0_126, %c12_127] : memref<256x36xf32, #tpu.memory_space<vmem>>, vector<256x4xf32>
    tpu.vector_store %arg5[%c0_126, %c12_127], %86 {strides = array<i32>} : memref<256x36xf32, #tpu.memory_space<vmem>>, vector<256x4xf32>,
    %c1_128 = arith.constant 1 : index
    %c1_129 = arith.constant 1 : index
    %c0_130 = arith.constant 0 : index
    %88 = vector.load %arg4[%c1_128, %c1_129, %c0_130] : memref<18x18x4xf32, #tpu.memory_space<vmem>>, vector<16x16x4xf32>
    %89 = vector.shape_cast %88 : vector<16x16x4xf32> to vector<256x4xf32>
    %c0_131 = arith.constant 0 : index
    %c16_132 = arith.constant 16 : index
    %90 = vector.load %arg5[%c0_131, %c16_132] : memref<256x36xf32, #tpu.memory_space<vmem>>, vector<256x4xf32>
    tpu.vector_store %arg5[%c0_131, %c16_132], %89 {strides = array<i32>} : memref<256x36xf32, #tpu.memory_space<vmem>>, vector<256x4xf32>,
    %c1_133 = arith.constant 1 : index
    %c2_134 = arith.constant 2 : index
    %c0_135 = arith.constant 0 : index
    %91 = vector.load %arg4[%c1_133, %c2_134, %c0_135] : memref<18x18x4xf32, #tpu.memory_space<vmem>>, vector<16x16x4xf32>
    %92 = vector.shape_cast %91 : vector<16x16x4xf32> to vector<256x4xf32>
    %c0_136 = arith.constant 0 : index
    %c20_137 = arith.constant 20 : index
    %93 = vector.load %arg5[%c0_136, %c20_137] : memref<256x36xf32, #tpu.memory_space<vmem>>, vector<256x4xf32>
    tpu.vector_store %arg5[%c0_136, %c20_137], %92 {strides = array<i32>} : memref<256x36xf32, #tpu.memory_space<vmem>>, vector<256x4xf32>,
    %c2_138 = arith.constant 2 : index
    %c0_139 = arith.constant 0 : index
    %c0_140 = arith.constant 0 : index
    %94 = vector.load %arg4[%c2_138, %c0_139, %c0_140] : memref<18x18x4xf32, #tpu.memory_space<vmem>>, vector<16x16x4xf32>
    %95 = vector.shape_cast %94 : vector<16x16x4xf32> to vector<256x4xf32>
    %c0_141 = arith.constant 0 : index
    %c24_142 = arith.constant 24 : index
    %96 = vector.load %arg5[%c0_141, %c24_142] : memref<256x36xf32, #tpu.memory_space<vmem>>, vector<256x4xf32>
    tpu.vector_store %arg5[%c0_141, %c24_142], %95 {strides = array<i32>} : memref<256x36xf32, #tpu.memory_space<vmem>>, vector<256x4xf32>,
    %c2_143 = arith.constant 2 : index
    %c1_144 = arith.constant 1 : index
    %c0_145 = arith.constant 0 : index
    %97 = vector.load %arg4[%c2_143, %c1_144, %c0_145] : memref<18x18x4xf32, #tpu.memory_space<vmem>>, vector<16x16x4xf32>
    %98 = vector.shape_cast %97 : vector<16x16x4xf32> to vector<256x4xf32>
    %c0_146 = arith.constant 0 : index
    %c28_147 = arith.constant 28 : index
    %99 = vector.load %arg5[%c0_146, %c28_147] : memref<256x36xf32, #tpu.memory_space<vmem>>, vector<256x4xf32>
    tpu.vector_store %arg5[%c0_146, %c28_147], %98 {strides = array<i32>} : memref<256x36xf32, #tpu.memory_space<vmem>>, vector<256x4xf32>,
    %c2_148 = arith.constant 2 : index
    %c2_149 = arith.constant 2 : index
    %c0_150 = arith.constant 0 : index
    %100 = vector.load %arg4[%c2_148, %c2_149, %c0_150] : memref<18x18x4xf32, #tpu.memory_space<vmem>>, vector<16x16x4xf32>
    %101 = vector.shape_cast %100 : vector<16x16x4xf32> to vector<256x4xf32>
    %c0_151 = arith.constant 0 : index
    %c32_152 = arith.constant 32 : index
    %102 = vector.load %arg5[%c0_151, %c32_152] : memref<256x36xf32, #tpu.memory_space<vmem>>, vector<256x4xf32>
    tpu.vector_store %arg5[%c0_151, %c32_152], %101 {strides = array<i32>} : memref<256x36xf32, #tpu.memory_space<vmem>>, vector<256x4xf32>,
    %c0_153 = arith.constant 0 : index
    %c0_154 = arith.constant 0 : index
    %103 = vector.load %arg5[%c0_153, %c0_154] : memref<256x36xf32, #tpu.memory_space<vmem>>, vector<256x36xf32>
    %c2_155 = arith.constant 2 : index
    %c0_156 = arith.constant 0 : index
    %c0_157 = arith.constant 0 : index
    %104 = vector.load %arg2[%c2_155, %c0_156, %c0_157] : memref<4x36x4xf32, #tpu.memory_space<vmem>>, vector<1x36x4xf32>
    %105 = vector.shape_cast %104 : vector<1x36x4xf32> to vector<36x4xf32>
    %cst_158 = arith.constant dense<0.000000e+00> : vector<256x4xf32>
    %106 = tpu.matmul %103, %105, %cst_158 {dimension_numbers = #tpu.dot_dimension_numbers<[1], [0], [0], [1], [0, 0, 1, 1], [], []>} : vector<256x36xf32>, vector<36x4xf32>, vector<256x4xf32> -> vector<256x4xf32>
    %cst_159 = arith.constant 0.000000e+00 : f32
    %107 = vector.broadcast %cst_159 : f32 to vector<256x4xf32>
    %108 = arith.maximumf %106, %107 : vector<256x4xf32>
    %109 = vector.shape_cast %108 : vector<256x4xf32> to vector<16x16x4xf32>
    %c1_160 = arith.constant 1 : index
    %c1_161 = arith.constant 1 : index
    %c0_162 = arith.constant 0 : index
    %110 = vector.load %arg4[%c1_160, %c1_161, %c0_162] : memref<18x18x4xf32, #tpu.memory_space<vmem>>, vector<16x16x4xf32>
    tpu.vector_store %arg4[%c1_160, %c1_161, %c0_162], %109 {strides = array<i32>} : memref<18x18x4xf32, #tpu.memory_space<vmem>>, vector<16x16x4xf32>,
    %c0_163 = arith.constant 0 : index
    %c0_164 = arith.constant 0 : index
    %c0_165 = arith.constant 0 : index
    %111 = vector.load %arg4[%c0_163, %c0_164, %c0_165] : memref<18x18x4xf32, #tpu.memory_space<vmem>>, vector<16x16x4xf32>
    %112 = vector.shape_cast %111 : vector<16x16x4xf32> to vector<256x4xf32>
    %c0_166 = arith.constant 0 : index
    %c0_167 = arith.constant 0 : index
    %113 = vector.load %arg5[%c0_166, %c0_167] : memref<256x36xf32, #tpu.memory_space<vmem>>, vector<256x4xf32>
    tpu.vector_store %arg5[%c0_166, %c0_167], %112 {strides = array<i32>} : memref<256x36xf32, #tpu.memory_space<vmem>>, vector<256x4xf32>,
    %c0_168 = arith.constant 0 : index
    %c1_169 = arith.constant 1 : index
    %c0_170 = arith.constant 0 : index
    %114 = vector.load %arg4[%c0_168, %c1_169, %c0_170] : memref<18x18x4xf32, #tpu.memory_space<vmem>>, vector<16x16x4xf32>
    %115 = vector.shape_cast %114 : vector<16x16x4xf32> to vector<256x4xf32>
    %c0_171 = arith.constant 0 : index
    %c4_172 = arith.constant 4 : index
    %116 = vector.load %arg5[%c0_171, %c4_172] : memref<256x36xf32, #tpu.memory_space<vmem>>, vector<256x4xf32>
    tpu.vector_store %arg5[%c0_171, %c4_172], %115 {strides = array<i32>} : memref<256x36xf32, #tpu.memory_space<vmem>>, vector<256x4xf32>,
    %c0_173 = arith.constant 0 : index
    %c2_174 = arith.constant 2 : index
    %c0_175 = arith.constant 0 : index
    %117 = vector.load %arg4[%c0_173, %c2_174, %c0_175] : memref<18x18x4xf32, #tpu.memory_space<vmem>>, vector<16x16x4xf32>
    %118 = vector.shape_cast %117 : vector<16x16x4xf32> to vector<256x4xf32>
    %c0_176 = arith.constant 0 : index
    %c8_177 = arith.constant 8 : index
    %119 = vector.load %arg5[%c0_176, %c8_177] : memref<256x36xf32, #tpu.memory_space<vmem>>, vector<256x4xf32>
    tpu.vector_store %arg5[%c0_176, %c8_177], %118 {strides = array<i32>} : memref<256x36xf32, #tpu.memory_space<vmem>>, vector<256x4xf32>,
    %c1_178 = arith.constant 1 : index
    %c0_179 = arith.constant 0 : index
    %c0_180 = arith.constant 0 : index
    %120 = vector.load %arg4[%c1_178, %c0_179, %c0_180] : memref<18x18x4xf32, #tpu.memory_space<vmem>>, vector<16x16x4xf32>
    %121 = vector.shape_cast %120 : vector<16x16x4xf32> to vector<256x4xf32>
    %c0_181 = arith.constant 0 : index
    %c12_182 = arith.constant 12 : index
    %122 = vector.load %arg5[%c0_181, %c12_182] : memref<256x36xf32, #tpu.memory_space<vmem>>, vector<256x4xf32>
    tpu.vector_store %arg5[%c0_181, %c12_182], %121 {strides = array<i32>} : memref<256x36xf32, #tpu.memory_space<vmem>>, vector<256x4xf32>,
    %c1_183 = arith.constant 1 : index
    %c1_184 = arith.constant 1 : index
    %c0_185 = arith.constant 0 : index
    %123 = vector.load %arg4[%c1_183, %c1_184, %c0_185] : memref<18x18x4xf32, #tpu.memory_space<vmem>>, vector<16x16x4xf32>
    %124 = vector.shape_cast %123 : vector<16x16x4xf32> to vector<256x4xf32>
    %c0_186 = arith.constant 0 : index
    %c16_187 = arith.constant 16 : index
    %125 = vector.load %arg5[%c0_186, %c16_187] : memref<256x36xf32, #tpu.memory_space<vmem>>, vector<256x4xf32>
    tpu.vector_store %arg5[%c0_186, %c16_187], %124 {strides = array<i32>} : memref<256x36xf32, #tpu.memory_space<vmem>>, vector<256x4xf32>,
    %c1_188 = arith.constant 1 : index
    %c2_189 = arith.constant 2 : index
    %c0_190 = arith.constant 0 : index
    %126 = vector.load %arg4[%c1_188, %c2_189, %c0_190] : memref<18x18x4xf32, #tpu.memory_space<vmem>>, vector<16x16x4xf32>
    %127 = vector.shape_cast %126 : vector<16x16x4xf32> to vector<256x4xf32>
    %c0_191 = arith.constant 0 : index
    %c20_192 = arith.constant 20 : index
    %128 = vector.load %arg5[%c0_191, %c20_192] : memref<256x36xf32, #tpu.memory_space<vmem>>, vector<256x4xf32>
    tpu.vector_store %arg5[%c0_191, %c20_192], %127 {strides = array<i32>} : memref<256x36xf32, #tpu.memory_space<vmem>>, vector<256x4xf32>,
    %c2_193 = arith.constant 2 : index
    %c0_194 = arith.constant 0 : index
    %c0_195 = arith.constant 0 : index
    %129 = vector.load %arg4[%c2_193, %c0_194, %c0_195] : memref<18x18x4xf32, #tpu.memory_space<vmem>>, vector<16x16x4xf32>
    %130 = vector.shape_cast %129 : vector<16x16x4xf32> to vector<256x4xf32>
    %c0_196 = arith.constant 0 : index
    %c24_197 = arith.constant 24 : index
    %131 = vector.load %arg5[%c0_196, %c24_197] : memref<256x36xf32, #tpu.memory_space<vmem>>, vector<256x4xf32>
    tpu.vector_store %arg5[%c0_196, %c24_197], %130 {strides = array<i32>} : memref<256x36xf32, #tpu.memory_space<vmem>>, vector<256x4xf32>,
    %c2_198 = arith.constant 2 : index
    %c1_199 = arith.constant 1 : index
    %c0_200 = arith.constant 0 : index
    %132 = vector.load %arg4[%c2_198, %c1_199, %c0_200] : memref<18x18x4xf32, #tpu.memory_space<vmem>>, vector<16x16x4xf32>
    %133 = vector.shape_cast %132 : vector<16x16x4xf32> to vector<256x4xf32>
    %c0_201 = arith.constant 0 : index
    %c28_202 = arith.constant 28 : index
    %134 = vector.load %arg5[%c0_201, %c28_202] : memref<256x36xf32, #tpu.memory_space<vmem>>, vector<256x4xf32>
    tpu.vector_store %arg5[%c0_201, %c28_202], %133 {strides = array<i32>} : memref<256x36xf32, #tpu.memory_space<vmem>>, vector<256x4xf32>,
    %c2_203 = arith.constant 2 : index
    %c2_204 = arith.constant 2 : index
    %c0_205 = arith.constant 0 : index
    %135 = vector.load %arg4[%c2_203, %c2_204, %c0_205] : memref<18x18x4xf32, #tpu.memory_space<vmem>>, vector<16x16x4xf32>
    %136 = vector.shape_cast %135 : vector<16x16x4xf32> to vector<256x4xf32>
    %c0_206 = arith.constant 0 : index
    %c32_207 = arith.constant 32 : index
    %137 = vector.load %arg5[%c0_206, %c32_207] : memref<256x36xf32, #tpu.memory_space<vmem>>, vector<256x4xf32>
    tpu.vector_store %arg5[%c0_206, %c32_207], %136 {strides = array<i32>} : memref<256x36xf32, #tpu.memory_space<vmem>>, vector<256x4xf32>,
    %c0_208 = arith.constant 0 : index
    %c0_209 = arith.constant 0 : index
    %138 = vector.load %arg5[%c0_208, %c0_209] : memref<256x36xf32, #tpu.memory_space<vmem>>, vector<256x36xf32>
    %c3 = arith.constant 3 : index
    %c0_210 = arith.constant 0 : index
    %c0_211 = arith.constant 0 : index
    %139 = vector.load %arg2[%c3, %c0_210, %c0_211] : memref<4x36x4xf32, #tpu.memory_space<vmem>>, vector<1x36x4xf32>
    %140 = vector.shape_cast %139 : vector<1x36x4xf32> to vector<36x4xf32>
    %cst_212 = arith.constant dense<0.000000e+00> : vector<256x4xf32>
    %141 = tpu.matmul %138, %140, %cst_212 {dimension_numbers = #tpu.dot_dimension_numbers<[1], [0], [0], [1], [0, 0, 1, 1], [], []>} : vector<256x36xf32>, vector<36x4xf32>, vector<256x4xf32> -> vector<256x4xf32>
    %142 = arith.addf %141, %73 : vector<256x4xf32>
    %143 = arith.addf %142, %4 : vector<256x4xf32>
    %c0_213 = arith.constant 0 : index
    %c0_214 = arith.constant 0 : index
    %c0_215 = arith.constant 0 : index
    %144 = vector.load %arg3[%c0_213, %c0_214, %c0_215] : memref<1x256x4xf32, #tpu.memory_space<vmem>>, vector<1x256x4xf32>
    %145 = vector.shape_cast %144 : vector<1x256x4xf32> to vector<256x4xf32>
    %146 = vector.shape_cast %143 : vector<256x4xf32> to vector<1x256x4xf32>
    tpu.vector_store %arg3[%c0_213, %c0_214, %c0_215], %146 {strides = array<i32>} : memref<1x256x4xf32, #tpu.memory_space<vmem>>, vector<1x256x4xf32>,
    return
  }
  func.func @transform_0(%arg0: i32) -> (i32, i32, i32, i32) {
    %c0_i32 = arith.constant 0 : i32
    %c0_i32_0 = arith.constant 0 : i32
    %c0_i32_1 = arith.constant 0 : i32
    %c0_i32_2 = arith.constant 0 : i32
    return %arg0, %c0_i32, %c0_i32_0, %c0_i32_1 : i32, i32, i32, i32
  }
  func.func @transform_1(%arg0: i32) -> (i32, i32, i32) {
    %c0_i32 = arith.constant 0 : i32
    %c0_i32_0 = arith.constant 0 : i32
    %c0_i32_1 = arith.constant 0 : i32
    %c0_i32_2 = arith.constant 0 : i32
    return %c0_i32, %c0_i32_0, %c0_i32_1 : i32, i32, i32
  }
  func.func @transform_2(%arg0: i32) -> (i32, i32, i32) {
    %c0_i32 = arith.constant 0 : i32
    %c0_i32_0 = arith.constant 0 : i32
    %c0_i32_1 = arith.constant 0 : i32
    return %arg0, %c0_i32, %c0_i32_0 : i32, i32, i32
  }
}

</mosaic_0001>

<llo_original>
// kernel: resnet_pallas.1
$region0: #{resnet_pallas.1}
  #allocation0 [shape = 'u32[]', space=smem, size = 0x4, offset = 0x4, fixed_abs, tag = 'smem constant byte address 0x4 - core index']
  #allocation1 [shape = 'u32[144,128]{1,0:T(1,128)}', space=vmem, size = 0x12000, scoped, tag = 'internal scratch']
  #allocation2 [shape = 'f32[18,18,4]{2,1,0:T(8,128)}', space=vmem, size = 0x36000, scoped, tag = 'scratch operand']
  #allocation3 [shape = 'f32[256,36]{1,0:T(8,128)}', space=vmem, size = 0x20000, scoped, tag = 'scratch operand']
  %s0 = inlined_call_operand.vmem [shape: f32[2,16,16,4], index: 0, kind: input, shape index: {}]
  %s1 = inlined_call_operand.vmem [shape: f32[4,36,4], index: 1, kind: input, shape index: {}]
  %s2 = inlined_call_operand.vmem [shape: f32[2,256,4], index: 2, kind: output, shape index: {}]
  %s3 = sld [smem:[#allocation0]]
  $region41: #{resnet_pallas.1} parent=0
    _
  %s5 = ssub.s32 1, %s3
  %s6 = scalar_select 0, %s5, %s3
  loop: start=0, step=1, limit=4
  $region2: #{resnet_pallas.1} parent=0 // loop_pre_header
    _
  $region3: #{resnet_pallas.1} parent=0 // loop_header
    %s8 = sphi 0, %s12
    %p9 = scmp.ge.s32.totalorder %s8, 4
    %s18 = sphi 0, %s20
    %s21 = sphi 0, %s18
    %s22 = sphi 0, %s21
    %s38 = sphi 0, %s22
    %s42 = sphi 0, %s42
    %s44 = sphi 0, %s42
    %s45 = sphi 0, %s44
    %s59 = sphi 0, %s45
    %s65 = sphi 0, %s67
    %s68 = sphi 0, %s65
    %s69 = sphi 0, %s68
    %s85 = sphi 0, %s69
  $region4: #{resnet_pallas.1} parent=0 // loop_header_branch
    %11 = sbr.rel (%p9) target = $region8
  $region5: #{resnet_pallas.1} parent=0 // loop_body
    %s13 = ssub.s32 %s8, 1
    %s14 = ssub.s32 %s8, 2
    %s15 = sadd.s32 %s8, 1
    %s16 = ssub.s32 %s8, %s15
    %p17 = scmp.eq.s32.totalorder %s16, 0
    %s19 = sadd.s32 %s18, 1
    %s20 = scalar_select %p17, %s18, %s19
    %p23 = pneg %p17
    %p24 = scmp.eq.s32.totalorder %s8, 1
    %p25 = por %p23, %p24
    %p26 = scmp.ne.s32.totalorder %s18, %s21
    %p27 = scmp.eq.s32.totalorder %s8, 0
    %p28 = por %p26, %p27
    %p29 = scmp.ne.s32.totalorder %s18, %s21
    %p30 = scmp.eq.s32.totalorder %s13, 1
    %p31 = por %p29, %p30
    %p32 = scmp.ne.s32.totalorder %s21, %s22
    %p33 = scmp.eq.s32.totalorder %s13, 0
    %p34 = por %p32, %p33
    %p35 = scmp.ne.s32.totalorder %s21, %s22
    %p36 = scmp.eq.s32.totalorder %s14, 1
    %p37 = por %p35, %p36
    %p39 = scmp.ne.s32.totalorder %s22, %s38
    %p40 = scmp.eq.s32.totalorder %s14, 0
    %p41 = por %p39, %p40
    %s43 = sadd.s32 %s42, 1
    %p46 = scmp.eq.s32.totalorder %s8, 1
    %p47 = scmp.ne.s32.totalorder %s42, %s44
    %p48 = scmp.eq.s32.totalorder %s8, 0
    %p49 = por %p47, %p48
    %p50 = scmp.ne.s32.totalorder %s42, %s44
    %p51 = scmp.eq.s32.totalorder %s13, 1
    %p52 = por %p50, %p51
    %p53 = scmp.ne.s32.totalorder %s44, %s45
    %p54 = scmp.eq.s32.totalorder %s13, 0
    %p55 = por %p53, %p54
    %p56 = scmp.ne.s32.totalorder %s44, %s45
    %p57 = scmp.eq.s32.totalorder %s14, 1
    %p58 = por %p56, %p57
    %p60 = scmp.ne.s32.totalorder %s45, %s59
    %p61 = scmp.eq.s32.totalorder %s14, 0
    %p62 = por %p60, %p61
    %s63 = ssub.s32 %s8, %s15
    %p64 = scmp.eq.s32.totalorder %s63, 0
    %s66 = sadd.s32 %s65, 1
    %s67 = scalar_select %p64, %s65, %s66
    %p70 = pneg %p64
    %p71 = scmp.eq.s32.totalorder %s8, 1
    %p72 = por %p70, %p71
    %p73 = scmp.ne.s32.totalorder %s65, %s68
    %p74 = scmp.eq.s32.totalorder %s8, 0
    %p75 = por %p73, %p74
    %p76 = scmp.ne.s32.totalorder %s65, %s68
    %p77 = scmp.eq.s32.totalorder %s13, 1
    %p78 = por %p76, %p77
    %p79 = scmp.ne.s32.totalorder %s68, %s69
    %p80 = scmp.eq.s32.totalorder %s13, 0
    %p81 = por %p79, %p80
    %p82 = scmp.ne.s32.totalorder %s68, %s69
    %p83 = scmp.eq.s32.totalorder %s14, 1
    %p84 = por %p82, %p83
    %p86 = scmp.ne.s32.totalorder %s69, %s85
    %p87 = scmp.eq.s32.totalorder %s14, 0
    %p88 = por %p86, %p87
    %p89 = scmp.le.s32.totalorder 1, %s8
    %p90 = scmp.lt.s32.totalorder %s8, 3
    %p91 = pnand %p89, %p90
    %p92 = pneg %p91
    // Predicated region
    $region9: #{resnet_pallas.1} parent=5 // pred_check
      _
    $region10: #{resnet_pallas.1} parent=5 // pred_check_branch
      %94 = sbr.rel (%p91) target = $region12
    $region11: #{resnet_pallas.1} parent=5 // pred_region
      %s95 = ssub.s32 %s8, 1
      // Predicated region
      $region13: #{resnet_pallas.1} parent=11 // pred_check
        %p96 = pneg %p55
      $region14: #{resnet_pallas.1} parent=11 // pred_check_branch
        %98 = sbr.rel (%p96) target = $region16
      $region15: #{resnet_pallas.1} parent=11 // pred_region
        _
      $region16: #{resnet_pallas.1} parent=11 // pred_fallthru
        _
    $region12: #{resnet_pallas.1} parent=5 // pred_fallthru
      _
    %p99 = scmp.lt.s32.totalorder %s8, 2
    // Predicated region
    $region17: #{resnet_pallas.1} parent=5 // pred_check
      %p100 = pneg %p99
    $region18: #{resnet_pallas.1} parent=5 // pred_check_branch
      %102 = sbr.rel (%p100) target = $region20
    $region19: #{resnet_pallas.1} parent=5 // pred_region
      // Predicated region
      $region21: #{resnet_pallas.1} parent=19 // pred_check
        %p103 = pneg %p28
      $region22: #{resnet_pallas.1} parent=19 // pred_check_branch
        %105 = sbr.rel (%p103) target = $region24
      $region23: #{resnet_pallas.1} parent=19 // pred_region
        %p106 = scmp.lt.s32.totalorder %s8, 1
        %s107 = scalar_select %p106, %s8, 1
        %s108 = smul.addr %s107, 32
        %s109 = smul.addr %s108, 8
        %s110 = scalar_lea.vmem %s0, %s109
      $region24: #{resnet_pallas.1} parent=19 // pred_fallthru
        _
    $region20: #{resnet_pallas.1} parent=5 // pred_fallthru
      _
    %p111 = scmp.le.s32.totalorder 1, %s8
    %p112 = scmp.lt.s32.totalorder %s8, 3
    %p113 = pnand %p111, %p112
    %p114 = pneg %p113
    // Predicated region
    $region25: #{resnet_pallas.1} parent=5 // pred_check
      _
    $region26: #{resnet_pallas.1} parent=5 // pred_check_branch
      %116 = sbr.rel (%p113) target = $region28
    $region27: #{resnet_pallas.1} parent=5 // pred_region
      %s117 = ssub.s32 %s8, 1
      %p118 = scmp.lt.s32.totalorder %s13, 1
      %s119 = scalar_select %p118, %s13, 1
      %s120 = smul.addr %s119, 32
      %s121 = smul.addr %s120, 8
      %s122 = scalar_lea.vmem %s0, %s121
      %p123 = pneg %p34
      %p124 = pneg %p31
      %p125 = pneg %p55
      %p126 = pneg %p52
      %p127 = pneg %p81
      %p128 = pneg %p78
      %p129 = scmp.lt.s32.totalorder %s13, 1
      %s130 = scalar_select %p129, %s13, 1
      %s131 = smul.addr %s130, 32
      %s132 = smul.addr %s131, 8
      %s133 = scalar_lea.vmem %s2, %s132
      %p134 = scmp.lt.s32.totalorder %s13, 1
      %s135 = scalar_select %p134, %s13, 1
      %s136 = smul.addr %s135, 32
      %s137 = smul.addr %s136, 8
      %s138 = scalar_lea.vmem %s0, %s137
      %p139 = scmp.lt.s32.totalorder %s13, 1
      %s140 = scalar_select %p139, %s13, 1
      %s141 = smul.addr %s140, 32
      %s142 = smul.addr %s141, 8
      %s143 = scalar_lea.vmem %s2, %s142
      %vm144 = vcmask 31744
      %145 = vst.msk [vmem:[#allocation2] sm:$0xff] %vm144, 0.0
      %146 = vst.msk [vmem:[#allocation2 + $0x8] sm:$0xff] %vm144, 0.0
      %vm147 = vcmask 25600
      %148 = vst.msk [vmem:[#allocation2 + $0x10] sm:$0x3] %vm147, 0.0
      %149 = vst.msk [vmem:[#allocation2 + $0x18] sm:$0xff] %vm144, 0.0
      %150 = vst.msk [vmem:[#allocation2 + $0x20] sm:$0xff] %vm144, 0.0
      %151 = vst.msk [vmem:[#allocation2 + $0x28] sm:$0x3] %vm147, 0.0
      %152 = vst.msk [vmem:[#allocation2 + $0x30] sm:$0xff] %vm144, 0.0
      %153 = vst.msk [vmem:[#allocation2 + $0x38] sm:$0xff] %vm144, 0.0
      %154 = vst.msk [vmem:[#allocation2 + $0x40] sm:$0x3] %vm147, 0.0
      %155 = vst.msk [vmem:[#allocation2 + $0x48] sm:$0xff] %vm144, 0.0
      %156 = vst.msk [vmem:[#allocation2 + $0x50] sm:$0xff] %vm144, 0.0
      %157 = vst.msk [vmem:[#allocation2 + $0x58] sm:$0x3] %vm147, 0.0
      %158 = vst.msk [vmem:[#allocation2 + $0x60] sm:$0xff] %vm144, 0.0
      %159 = vst.msk [vmem:[#allocation2 + $0x68] sm:$0xff] %vm144, 0.0
      %160 = vst.msk [vmem:[#allocation2 + $0x70] sm:$0x3] %vm147, 0.0
      %161 = vst.msk [vmem:[#allocation2 + $0x78] sm:$0xff] %vm144, 0.0
      %162 = vst.msk [vmem:[#allocation2 + $0x80] sm:$0xff] %vm144, 0.0
      %163 = vst.msk [vmem:[#allocation2 + $0x88] sm:$0x3] %vm147, 0.0
      %164 = vst.msk [vmem:[#allocation2 + $0x90] sm:$0xff] %vm144, 0.0
      %165 = vst.msk [vmem:[#allocation2 + $0x98] sm:$0xff] %vm144, 0.0
      %166 = vst.msk [vmem:[#allocation2 + $0xa0] sm:$0x3] %vm147, 0.0
      %167 = vst.msk [vmem:[#allocation2 + $0xa8] sm:$0xff] %vm144, 0.0
      %168 = vst.msk [vmem:[#allocation2 + $0xb0] sm:$0xff] %vm144, 0.0
      %169 = vst.msk [vmem:[#allocation2 + $0xb8] sm:$0x3] %vm147, 0.0
      %170 = vst.msk [vmem:[#allocation2 + $0xc0] sm:$0xff] %vm144, 0.0
      %171 = vst.msk [vmem:[#allocation2 + $0xc8] sm:$0xff] %vm144, 0.0
      %172 = vst.msk [vmem:[#allocation2 + $0xd0] sm:$0x3] %vm147, 0.0
      %173 = vst.msk [vmem:[#allocation2 + $0xd8] sm:$0xff] %vm144, 0.0
      %174 = vst.msk [vmem:[#allocation2 + $0xe0] sm:$0xff] %vm144, 0.0
      %175 = vst.msk [vmem:[#allocation2 + $0xe8] sm:$0x3] %vm147, 0.0
      %176 = vst.msk [vmem:[#allocation2 + $0xf0] sm:$0xff] %vm144, 0.0
      %177 = vst.msk [vmem:[#allocation2 + $0xf8] sm:$0xff] %vm144, 0.0
      %178 = vst.msk [vmem:[#allocation2 + $0x100] sm:$0x3] %vm147, 0.0
      %179 = vst.msk [vmem:[#allocation2 + $0x108] sm:$0xff] %vm144, 0.0
      %180 = vst.msk [vmem:[#allocation2 + $0x110] sm:$0xff] %vm144, 0.0
      %181 = vst.msk [vmem:[#allocation2 + $0x118] sm:$0x3] %vm147, 0.0
      %182 = vst.msk [vmem:[#allocation2 + $0x120] sm:$0xff] %vm144, 0.0
      %183 = vst.msk [vmem:[#allocation2 + $0x128] sm:$0xff] %vm144, 0.0
      %184 = vst.msk [vmem:[#allocation2 + $0x130] sm:$0x3] %vm147, 0.0
      %185 = vst.msk [vmem:[#allocation2 + $0x138] sm:$0xff] %vm144, 0.0
      %186 = vst.msk [vmem:[#allocation2 + $0x140] sm:$0xff] %vm144, 0.0
      %187 = vst.msk [vmem:[#allocation2 + $0x148] sm:$0x3] %vm147, 0.0
      %188 = vst.msk [vmem:[#allocation2 + $0x150] sm:$0xff] %vm144, 0.0
      %189 = vst.msk [vmem:[#allocation2 + $0x158] sm:$0xff] %vm144, 0.0
      %190 = vst.msk [vmem:[#allocation2 + $0x160] sm:$0x3] %vm147, 0.0
      %191 = vst.msk [vmem:[#allocation2 + $0x168] sm:$0xff] %vm144, 0.0
      %192 = vst.msk [vmem:[#allocation2 + $0x170] sm:$0xff] %vm144, 0.0
      %193 = vst.msk [vmem:[#allocation2 + $0x178] sm:$0x3] %vm147, 0.0
      %194 = vst.msk [vmem:[#allocation2 + $0x180] sm:$0xff] %vm144, 0.0
      %195 = vst.msk [vmem:[#allocation2 + $0x188] sm:$0xff] %vm144, 0.0
      %196 = vst.msk [vmem:[#allocation2 + $0x190] sm:$0x3] %vm147, 0.0
      %197 = vst.msk [vmem:[#allocation2 + $0x198] sm:$0xff] %vm144, 0.0
      %198 = vst.msk [vmem:[#allocation2 + $0x1a0] sm:$0xff] %vm144, 0.0
      %199 = vst.msk [vmem:[#allocation2 + $0x1a8] sm:$0x3] %vm147, 0.0
      %v200 = vld [vmem:[%s138] sm:$0xff]
      %v201 = vld [vmem:[%s138 + $0x8] sm:$0xff]
      %v202 = vld [vmem:[%s138 + $0x10] sm:$0xff]
      %v203 = vld [vmem:[%s138 + $0x18] sm:$0xff]
      %v204 = vld [vmem:[%s138 + $0x20] sm:$0xff]
      %v205 = vld [vmem:[%s138 + $0x28] sm:$0xff]
      %v206 = vld [vmem:[%s138 + $0x30] sm:$0xff]
      %v207 = vld [vmem:[%s138 + $0x38] sm:$0xff]
      %v208 = vld [vmem:[%s138 + $0x40] sm:$0xff]
      %v209 = vld [vmem:[%s138 + $0x48] sm:$0xff]
      %v210 = vld [vmem:[%s138 + $0x50] sm:$0xff]
      %v211 = vld [vmem:[%s138 + $0x58] sm:$0xff]
      %v212 = vld [vmem:[%s138 + $0x60] sm:$0xff]
      %v213 = vld [vmem:[%s138 + $0x68] sm:$0xff]
      %v214 = vld [vmem:[%s138 + $0x70] sm:$0xff]
      %v215 = vld [vmem:[%s138 + $0x78] sm:$0xff]
      %v216 = vld [vmem:[%s138 + $0x80] sm:$0xff]
      %v217 = vld [vmem:[%s138 + $0x88] sm:$0xff]
      %v218 = vld [vmem:[%s138 + $0x90] sm:$0xff]
      %v219 = vld [vmem:[%s138 + $0x98] sm:$0xff]
      %v220 = vld [vmem:[%s138 + $0xa0] sm:$0xff]
      %v221 = vld [vmem:[%s138 + $0xa8] sm:$0xff]
      %v222 = vld [vmem:[%s138 + $0xb0] sm:$0xff]
      %v223 = vld [vmem:[%s138 + $0xb8] sm:$0xff]
      %v224 = vld [vmem:[%s138 + $0xc0] sm:$0xff]
      %v225 = vld [vmem:[%s138 + $0xc8] sm:$0xff]
      %v226 = vld [vmem:[%s138 + $0xd0] sm:$0xff]
      %v227 = vld [vmem:[%s138 + $0xd8] sm:$0xff]
      %v228 = vld [vmem:[%s138 + $0xe0] sm:$0xff]
      %v229 = vld [vmem:[%s138 + $0xe8] sm:$0xff]
      %v230 = vld [vmem:[%s138 + $0xf0] sm:$0xff]
      %v231 = vld [vmem:[%s138 + $0xf8] sm:$0xff]
      %s232 = scalar_lea.vmem [#allocation2], 24
      %233 = vst.msk [vmem:[%s232 + $0x1] sm:$0xff] %vm144, %v200
      %234 = vst.msk [vmem:[%s232 + $0x9] sm:$0xff] %vm144, %v201
      %235 = vst.msk [vmem:[%s232 + $0x19] sm:$0xff] %vm144, %v202
      %236 = vst.msk [vmem:[%s232 + $0x21] sm:$0xff] %vm144, %v203
      %237 = vst.msk [vmem:[%s232 + $0x31] sm:$0xff] %vm144, %v204
      %238 = vst.msk [vmem:[%s232 + $0x39] sm:$0xff] %vm144, %v205
      %239 = vst.msk [vmem:[%s232 + $0x49] sm:$0xff] %vm144, %v206
      %240 = vst.msk [vmem:[%s232 + $0x51] sm:$0xff] %vm144, %v207
      %241 = vst.msk [vmem:[%s232 + $0x61] sm:$0xff] %vm144, %v208
      %242 = vst.msk [vmem:[%s232 + $0x69] sm:$0xff] %vm144, %v209
      %243 = vst.msk [vmem:[%s232 + $0x79] sm:$0xff] %vm144, %v210
      %244 = vst.msk [vmem:[%s232 + $0x81] sm:$0xff] %vm144, %v211
      %245 = vst.msk [vmem:[%s232 + $0x91] sm:$0xff] %vm144, %v212
      %246 = vst.msk [vmem:[%s232 + $0x99] sm:$0xff] %vm144, %v213
      %247 = vst.msk [vmem:[%s232 + $0xa9] sm:$0xff] %vm144, %v214
      %248 = vst.msk [vmem:[%s232 + $0xb1] sm:$0xff] %vm144, %v215
      %249 = vst.msk [vmem:[%s232 + $0xc1] sm:$0xff] %vm144, %v216
      %250 = vst.msk [vmem:[%s232 + $0xc9] sm:$0xff] %vm144, %v217
      %251 = vst.msk [vmem:[%s232 + $0xd9] sm:$0xff] %vm144, %v218
      %252 = vst.msk [vmem:[%s232 + $0xe1] sm:$0xff] %vm144, %v219
      %253 = vst.msk [vmem:[%s232 + $0xf1] sm:$0xff] %vm144, %v220
      %254 = vst.msk [vmem:[%s232 + $0xf9] sm:$0xff] %vm144, %v221
      %255 = vst.msk [vmem:[%s232 + $0x109] sm:$0xff] %vm144, %v222
      %256 = vst.msk [vmem:[%s232 + $0x111] sm:$0xff] %vm144, %v223
      %257 = vst.msk [vmem:[%s232 + $0x121] sm:$0xff] %vm144, %v224
      %258 = vst.msk [vmem:[%s232 + $0x129] sm:$0xff] %vm144, %v225
      %259 = vst.msk [vmem:[%s232 + $0x139] sm:$0xff] %vm144, %v226
      %260 = vst.msk [vmem:[%s232 + $0x141] sm:$0xff] %vm144, %v227
      %261 = vst.msk [vmem:[%s232 + $0x151] sm:$0xff] %vm144, %v228
      %262 = vst.msk [vmem:[%s232 + $0x159] sm:$0xff] %vm144, %v229
      %263 = vst.msk [vmem:[%s232 + $0x169] sm:$0xff] %vm144, %v230
      %264 = vst.msk [vmem:[%s232 + $0x171] sm:$0xff] %vm144, %v231
      %v265 = vld [vmem:[#allocation2] sm:$0xff]
      %v266 = vld [vmem:[#allocation2 + $0x8] sm:$0xff]
      %v267 = vld [vmem:[#allocation2 + $0x18] sm:$0xff]
      %v268 = vld [vmem:[#allocation2 + $0x20] sm:$0xff]
      %v269 = vld [vmem:[#allocation2 + $0x30] sm:$0xff]
      %v270 = vld [vmem:[#allocation2 + $0x38] sm:$0xff]
      %v271 = vld [vmem:[#allocation2 + $0x48] sm:$0xff]
      %v272 = vld [vmem:[#allocation2 + $0x50] sm:$0xff]
      %v273 = vld [vmem:[#allocation2 + $0x60] sm:$0xff]
      %v274 = vld [vmem:[#allocation2 + $0x68] sm:$0xff]
      %v275 = vld [vmem:[#allocation2 + $0x78] sm:$0xff]
      %v276 = vld [vmem:[#allocation2 + $0x80] sm:$0xff]
      %v277 = vld [vmem:[#allocation2 + $0x90] sm:$0xff]
      %v278 = vld [vmem:[#allocation2 + $0x98] sm:$0xff]
      %v279 = vld [vmem:[#allocation2 + $0xa8] sm:$0xff]
      %v280 = vld [vmem:[#allocation2 + $0xb0] sm:$0xff]
      %v281 = vld [vmem:[#allocation2 + $0xc0] sm:$0xff]
      %v282 = vld [vmem:[#allocation2 + $0xc8] sm:$0xff]
      %v283 = vld [vmem:[#allocation2 + $0xd8] sm:$0xff]
      %v284 = vld [vmem:[#allocation2 + $0xe0] sm:$0xff]
      %v285 = vld [vmem:[#allocation2 + $0xf0] sm:$0xff]
      %v286 = vld [vmem:[#allocation2 + $0xf8] sm:$0xff]
      %v287 = vld [vmem:[#allocation2 + $0x108] sm:$0xff]
      %v288 = vld [vmem:[#allocation2 + $0x110] sm:$0xff]
      %v289 = vld [vmem:[#allocation2 + $0x120] sm:$0xff]
      %v290 = vld [vmem:[#allocation2 + $0x128] sm:$0xff]
      %v291 = vld [vmem:[#allocation2 + $0x138] sm:$0xff]
      %v292 = vld [vmem:[#allocation2 + $0x140] sm:$0xff]
      %v293 = vld [vmem:[#allocation2 + $0x150] sm:$0xff]
      %v294 = vld [vmem:[#allocation2 + $0x158] sm:$0xff]
      %v295 = vld [vmem:[#allocation2 + $0x168] sm:$0xff]
      %v296 = vld [vmem:[#allocation2 + $0x170] sm:$0xff]
      %297 = vst.msk [vmem:[#allocation3] sm:$0xff] %vm144, %v265
      %298 = vst.msk [vmem:[#allocation3 + $0x8] sm:$0xff] %vm144, %v266
      %299 = vst.msk [vmem:[#allocation3 + $0x10] sm:$0xff] %vm144, %v267
      %300 = vst.msk [vmem:[#allocation3 + $0x18] sm:$0xff] %vm144, %v268
      %301 = vst.msk [vmem:[#allocation3 + $0x20] sm:$0xff] %vm144, %v269
      %302 = vst.msk [vmem:[#allocation3 + $0x28] sm:$0xff] %vm144, %v270
      %303 = vst.msk [vmem:[#allocation3 + $0x30] sm:$0xff] %vm144, %v271
      %304 = vst.msk [vmem:[#allocation3 + $0x38] sm:$0xff] %vm144, %v272
      %305 = vst.msk [vmem:[#allocation3 + $0x40] sm:$0xff] %vm144, %v273
      %306 = vst.msk [vmem:[#allocation3 + $0x48] sm:$0xff] %vm144, %v274
      %307 = vst.msk [vmem:[#allocation3 + $0x50] sm:$0xff] %vm144, %v275
      %308 = vst.msk [vmem:[#allocation3 + $0x58] sm:$0xff] %vm144, %v276
      %309 = vst.msk [vmem:[#allocation3 + $0x60] sm:$0xff] %vm144, %v277
      %310 = vst.msk [vmem:[#allocation3 + $0x68] sm:$0xff] %vm144, %v278
      %311 = vst.msk [vmem:[#allocation3 + $0x70] sm:$0xff] %vm144, %v279
      %312 = vst.msk [vmem:[#allocation3 + $0x78] sm:$0xff] %vm144, %v280
      %313 = vst.msk [vmem:[#allocation3 + $0x80] sm:$0xff] %vm144, %v281
      %314 = vst.msk [vmem:[#allocation3 + $0x88] sm:$0xff] %vm144, %v282
      %315 = vst.msk [vmem:[#allocation3 + $0x90] sm:$0xff] %vm144, %v283
      %316 = vst.msk [vmem:[#allocation3 + $0x98] sm:$0xff] %vm144, %v284
      %317 = vst.msk [vmem:[#allocation3 + $0xa0] sm:$0xff] %vm144, %v285
      %318 = vst.msk [vmem:[#allocation3 + $0xa8] sm:$0xff] %vm144, %v286
      %319 = vst.msk [vmem:[#allocation3 + $0xb0] sm:$0xff] %vm144, %v287
      %320 = vst.msk [vmem:[#allocation3 + $0xb8] sm:$0xff] %vm144, %v288
      %321 = vst.msk [vmem:[#allocation3 + $0xc0] sm:$0xff] %vm144, %v289
      %322 = vst.msk [vmem:[#allocation3 + $0xc8] sm:$0xff] %vm144, %v290
      %323 = vst.msk [vmem:[#allocation3 + $0xd0] sm:$0xff] %vm144, %v291
      %324 = vst.msk [vmem:[#allocation3 + $0xd8] sm:$0xff] %vm144, %v292
      %325 = vst.msk [vmem:[#allocation3 + $0xe0] sm:$0xff] %vm144, %v293
      %326 = vst.msk [vmem:[#allocation3 + $0xe8] sm:$0xff] %vm144, %v294
      %327 = vst.msk [vmem:[#allocation3 + $0xf0] sm:$0xff] %vm144, %v295
      %328 = vst.msk [vmem:[#allocation3 + $0xf8] sm:$0xff] %vm144, %v296
      %v329 = vld [vmem:[#allocation2 + $0x1] sm:$0xff]
      %v330 = vld [vmem:[#allocation2 + $0x9] sm:$0xff]
      %v331 = vld [vmem:[#allocation2 + $0x19] sm:$0xff]
      %v332 = vld [vmem:[#allocation2 + $0x21] sm:$0xff]
      %v333 = vld [vmem:[#allocation2 + $0x31] sm:$0xff]
      %v334 = vld [vmem:[#allocation2 + $0x39] sm:$0xff]
      %v335 = vld [vmem:[#allocation2 + $0x49] sm:$0xff]
      %v336 = vld [vmem:[#allocation2 + $0x51] sm:$0xff]
      %v337 = vld [vmem:[#allocation2 + $0x61] sm:$0xff]
      %v338 = vld [vmem:[#allocation2 + $0x69] sm:$0xff]
      %v339 = vld [vmem:[#allocation2 + $0x79] sm:$0xff]
      %v340 = vld [vmem:[#allocation2 + $0x81] sm:$0xff]
      %v341 = vld [vmem:[#allocation2 + $0x91] sm:$0xff]
      %v342 = vld [vmem:[#allocation2 + $0x99] sm:$0xff]
      %v343 = vld [vmem:[#allocation2 + $0xa9] sm:$0xff]
      %v344 = vld [vmem:[#allocation2 + $0xb1] sm:$0xff]
      %v345 = vld [vmem:[#allocation2 + $0xc1] sm:$0xff]
      %v346 = vld [vmem:[#allocation2 + $0xc9] sm:$0xff]
      %v347 = vld [vmem:[#allocation2 + $0xd9] sm:$0xff]
      %v348 = vld [vmem:[#allocation2 + $0xe1] sm:$0xff]
      %v349 = vld [vmem:[#allocation2 + $0xf1] sm:$0xff]
      %v350 = vld [vmem:[#allocation2 + $0xf9] sm:$0xff]
      %v351 = vld [vmem:[#allocation2 + $0x109] sm:$0xff]
      %v352 = vld [vmem:[#allocation2 + $0x111] sm:$0xff]
      %v353 = vld [vmem:[#allocation2 + $0x121] sm:$0xff]
      %v354 = vld [vmem:[#allocation2 + $0x129] sm:$0xff]
      %v355 = vld [vmem:[#allocation2 + $0x139] sm:$0xff]
      %v356 = vld [vmem:[#allocation2 + $0x141] sm:$0xff]
      %v357 = vld [vmem:[#allocation2 + $0x151] sm:$0xff]
      %v358 = vld [vmem:[#allocation2 + $0x159] sm:$0xff]
      %v359 = vld [vmem:[#allocation2 + $0x169] sm:$0xff]
      %v360 = vld [vmem:[#allocation2 + $0x171] sm:$0xff]
      %393 = vrot.lane.b32.xlu0 %v329, 4
      %v394 = vpop.permute.xlu0 %393
      %395 = vrot.lane.b32.xlu0 %v330, 4
      %v396 = vpop.permute.xlu0 %395
      %397 = vrot.lane.b32.xlu0 %v331, 4
      %v398 = vpop.permute.xlu0 %397
      %399 = vrot.lane.b32.xlu0 %v332, 4
      %v400 = vpop.permute.xlu0 %399
      %401 = vrot.lane.b32.xlu0 %v333, 4
      %v402 = vpop.permute.xlu0 %401
      %403 = vrot.lane.b32.xlu0 %v334, 4
      %v404 = vpop.permute.xlu0 %403
      %405 = vrot.lane.b32.xlu0 %v335, 4
      %v406 = vpop.permute.xlu0 %405
      %407 = vrot.lane.b32.xlu0 %v336, 4
      %v408 = vpop.permute.xlu0 %407
      %409 = vrot.lane.b32.xlu0 %v337, 4
      %v410 = vpop.permute.xlu0 %409
      %411 = vrot.lane.b32.xlu0 %v338, 4
      %v412 = vpop.permute.xlu0 %411
      %413 = vrot.lane.b32.xlu0 %v339, 4
      %v414 = vpop.permute.xlu0 %413
      %415 = vrot.lane.b32.xlu0 %v340, 4
      %v416 = vpop.permute.xlu0 %415
      %417 = vrot.lane.b32.xlu0 %v341, 4
      %v418 = vpop.permute.xlu0 %417
      %419 = vrot.lane.b32.xlu0 %v342, 4
      %v420 = vpop.permute.xlu0 %419
      %421 = vrot.lane.b32.xlu0 %v343, 4
      %v422 = vpop.permute.xlu0 %421
      %423 = vrot.lane.b32.xlu0 %v344, 4
      %v424 = vpop.permute.xlu0 %423
      %425 = vrot.lane.b32.xlu0 %v345, 4
      %v426 = vpop.permute.xlu0 %425
      %427 = vrot.lane.b32.xlu0 %v346, 4
      %v428 = vpop.permute.xlu0 %427
      %429 = vrot.lane.b32.xlu0 %v347, 4
      %v430 = vpop.permute.xlu0 %429
      %431 = vrot.lane.b32.xlu0 %v348, 4
      %v432 = vpop.permute.xlu0 %431
      %433 = vrot.lane.b32.xlu0 %v349, 4
      %v434 = vpop.permute.xlu0 %433
      %435 = vrot.lane.b32.xlu0 %v350, 4
      %v436 = vpop.permute.xlu0 %435
      %437 = vrot.lane.b32.xlu0 %v351, 4
      %v438 = vpop.permute.xlu0 %437
      %439 = vrot.lane.b32.xlu0 %v352, 4
      %v440 = vpop.permute.xlu0 %439
      %441 = vrot.lane.b32.xlu0 %v353, 4
      %v442 = vpop.permute.xlu0 %441
      %443 = vrot.lane.b32.xlu0 %v354, 4
      %v444 = vpop.permute.xlu0 %443
      %445 = vrot.lane.b32.xlu0 %v355, 4
      %v446 = vpop.permute.xlu0 %445
      %447 = vrot.lane.b32.xlu0 %v356, 4
      %v448 = vpop.permute.xlu0 %447
      %449 = vrot.lane.b32.xlu0 %v357, 4
      %v450 = vpop.permute.xlu0 %449
      %451 = vrot.lane.b32.xlu0 %v358, 4
      %v452 = vpop.permute.xlu0 %451
      %453 = vrot.lane.b32.xlu0 %v359, 4
      %v454 = vpop.permute.xlu0 %453
      %455 = vrot.lane.b32.xlu0 %v360, 4
      %v456 = vpop.permute.xlu0 %455
      %vm489 = vcmask 64544
      %490 = vst.msk [vmem:[#allocation3] sm:$0xff] %vm489, %v394
      %491 = vst.msk [vmem:[#allocation3 + $0x8] sm:$0xff] %vm489, %v396
      %492 = vst.msk [vmem:[#allocation3 + $0x10] sm:$0xff] %vm489, %v398
      %493 = vst.msk [vmem:[#allocation3 + $0x18] sm:$0xff] %vm489, %v400
      %494 = vst.msk [vmem:[#allocation3 + $0x20] sm:$0xff] %vm489, %v402
      %495 = vst.msk [vmem:[#allocation3 + $0x28] sm:$0xff] %vm489, %v404
      %496 = vst.msk [vmem:[#allocation3 + $0x30] sm:$0xff] %vm489, %v406
      %497 = vst.msk [vmem:[#allocation3 + $0x38] sm:$0xff] %vm489, %v408
      %498 = vst.msk [vmem:[#allocation3 + $0x40] sm:$0xff] %vm489, %v410
      %499 = vst.msk [vmem:[#allocation3 + $0x48] sm:$0xff] %vm489, %v412
      %500 = vst.msk [vmem:[#allocation3 + $0x50] sm:$0xff] %vm489, %v414
      %501 = vst.msk [vmem:[#allocation3 + $0x58] sm:$0xff] %vm489, %v416
      %502 = vst.msk [vmem:[#allocation3 + $0x60] sm:$0xff] %vm489, %v418
      %503 = vst.msk [vmem:[#allocation3 + $0x68] sm:$0xff] %vm489, %v420
      %504 = vst.msk [vmem:[#allocation3 + $0x70] sm:$0xff] %vm489, %v422
      %505 = vst.msk [vmem:[#allocation3 + $0x78] sm:$0xff] %vm489, %v424
      %506 = vst.msk [vmem:[#allocation3 + $0x80] sm:$0xff] %vm489, %v426
      %507 = vst.msk [vmem:[#allocation3 + $0x88] sm:$0xff] %vm489, %v428
      %508 = vst.msk [vmem:[#allocation3 + $0x90] sm:$0xff] %vm489, %v430
      %509 = vst.msk [vmem:[#allocation3 + $0x98] sm:$0xff] %vm489, %v432
      %510 = vst.msk [vmem:[#allocation3 + $0xa0] sm:$0xff] %vm489, %v434
      %511 = vst.msk [vmem:[#allocation3 + $0xa8] sm:$0xff] %vm489, %v436
      %512 = vst.msk [vmem:[#allocation3 + $0xb0] sm:$0xff] %vm489, %v438
      %513 = vst.msk [vmem:[#allocation3 + $0xb8] sm:$0xff] %vm489, %v440
      %514 = vst.msk [vmem:[#allocation3 + $0xc0] sm:$0xff] %vm489, %v442
      %515 = vst.msk [vmem:[#allocation3 + $0xc8] sm:$0xff] %vm489, %v444
      %516 = vst.msk [vmem:[#allocation3 + $0xd0] sm:$0xff] %vm489, %v446
      %517 = vst.msk [vmem:[#allocation3 + $0xd8] sm:$0xff] %vm489, %v448
      %518 = vst.msk [vmem:[#allocation3 + $0xe0] sm:$0xff] %vm489, %v450
      %519 = vst.msk [vmem:[#allocation3 + $0xe8] sm:$0xff] %vm489, %v452
      %520 = vst.msk [vmem:[#allocation3 + $0xf0] sm:$0xff] %vm489, %v454
      %521 = vst.msk [vmem:[#allocation3 + $0xf8] sm:$0xff] %vm489, %v456
      %v522 = vld [vmem:[#allocation2 + $0x2] sm:$0xff]
      %v523 = vld [vmem:[#allocation2 + $0xa] sm:$0xff]
      %v524 = vld [vmem:[#allocation2 + $0x1a] sm:$0xff]
      %v525 = vld [vmem:[#allocation2 + $0x22] sm:$0xff]
      %v526 = vld [vmem:[#allocation2 + $0x32] sm:$0xff]
      %v527 = vld [vmem:[#allocation2 + $0x3a] sm:$0xff]
      %v528 = vld [vmem:[#allocation2 + $0x4a] sm:$0xff]
      %v529 = vld [vmem:[#allocation2 + $0x52] sm:$0xff]
      %v530 = vld [vmem:[#allocation2 + $0x62] sm:$0xff]
      %v531 = vld [vmem:[#allocation2 + $0x6a] sm:$0xff]
      %v532 = vld [vmem:[#allocation2 + $0x7a] sm:$0xff]
      %v533 = vld [vmem:[#allocation2 + $0x82] sm:$0xff]
      %v534 = vld [vmem:[#allocation2 + $0x92] sm:$0xff]
      %v535 = vld [vmem:[#allocation2 + $0x9a] sm:$0xff]
      %v536 = vld [vmem:[#allocation2 + $0xaa] sm:$0xff]
      %v537 = vld [vmem:[#allocation2 + $0xb2] sm:$0xff]
      %v538 = vld [vmem:[#allocation2 + $0xc2] sm:$0xff]
      %v539 = vld [vmem:[#allocation2 + $0xca] sm:$0xff]
      %v540 = vld [vmem:[#allocation2 + $0xda] sm:$0xff]
      %v541 = vld [vmem:[#allocation2 + $0xe2] sm:$0xff]
      %v542 = vld [vmem:[#allocation2 + $0xf2] sm:$0xff]
      %v543 = vld [vmem:[#allocation2 + $0xfa] sm:$0xff]
      %v544 = vld [vmem:[#allocation2 + $0x10a] sm:$0xff]
      %v545 = vld [vmem:[#allocation2 + $0x112] sm:$0xff]
      %v546 = vld [vmem:[#allocation2 + $0x122] sm:$0xff]
      %v547 = vld [vmem:[#allocation2 + $0x12a] sm:$0xff]
      %v548 = vld [vmem:[#allocation2 + $0x13a] sm:$0xff]
      %v549 = vld [vmem:[#allocation2 + $0x142] sm:$0xff]
      %v550 = vld [vmem:[#allocation2 + $0x152] sm:$0xff]
      %v551 = vld [vmem:[#allocation2 + $0x15a] sm:$0xff]
      %v552 = vld [vmem:[#allocation2 + $0x16a] sm:$0xff]
      %v553 = vld [vmem:[#allocation2 + $0x172] sm:$0xff]
      %586 = vrot.lane.b32.xlu0 %v522, 8
      %v587 = vpop.permute.xlu0 %586
      %588 = vrot.lane.b32.xlu0 %v523, 8
      %v589 = vpop.permute.xlu0 %588
      %590 = vrot.lane.b32.xlu0 %v524, 8
      %v591 = vpop.permute.xlu0 %590
      %592 = vrot.lane.b32.xlu0 %v525, 8
      %v593 = vpop.permute.xlu0 %592
      %594 = vrot.lane.b32.xlu0 %v526, 8
      %v595 = vpop.permute.xlu0 %594
      %596 = vrot.lane.b32.xlu0 %v527, 8
      %v597 = vpop.permute.xlu0 %596
      %598 = vrot.lane.b32.xlu0 %v528, 8
      %v599 = vpop.permute.xlu0 %598
      %600 = vrot.lane.b32.xlu0 %v529, 8
      %v601 = vpop.permute.xlu0 %600
      %602 = vrot.lane.b32.xlu0 %v530, 8
      %v603 = vpop.permute.xlu0 %602
      %604 = vrot.lane.b32.xlu0 %v531, 8
      %v605 = vpop.permute.xlu0 %604
      %606 = vrot.lane.b32.xlu0 %v532, 8
      %v607 = vpop.permute.xlu0 %606
      %608 = vrot.lane.b32.xlu0 %v533, 8
      %v609 = vpop.permute.xlu0 %608
      %610 = vrot.lane.b32.xlu0 %v534, 8
      %v611 = vpop.permute.xlu0 %610
      %612 = vrot.lane.b32.xlu0 %v535, 8
      %v613 = vpop.permute.xlu0 %612
      %614 = vrot.lane.b32.xlu0 %v536, 8
      %v615 = vpop.permute.xlu0 %614
      %616 = vrot.lane.b32.xlu0 %v537, 8
      %v617 = vpop.permute.xlu0 %616
      %618 = vrot.lane.b32.xlu0 %v538, 8
      %v619 = vpop.permute.xlu0 %618
      %620 = vrot.lane.b32.xlu0 %v539, 8
      %v621 = vpop.permute.xlu0 %620
      %622 = vrot.lane.b32.xlu0 %v540, 8
      %v623 = vpop.permute.xlu0 %622
      %624 = vrot.lane.b32.xlu0 %v541, 8
      %v625 = vpop.permute.xlu0 %624
      %626 = vrot.lane.b32.xlu0 %v542, 8
      %v627 = vpop.permute.xlu0 %626
      %628 = vrot.lane.b32.xlu0 %v543, 8
      %v629 = vpop.permute.xlu0 %628
      %630 = vrot.lane.b32.xlu0 %v544, 8
      %v631 = vpop.permute.xlu0 %630
      %632 = vrot.lane.b32.xlu0 %v545, 8
      %v633 = vpop.permute.xlu0 %632
      %634 = vrot.lane.b32.xlu0 %v546, 8
      %v635 = vpop.permute.xlu0 %634
      %636 = vrot.lane.b32.xlu0 %v547, 8
      %v637 = vpop.permute.xlu0 %636
      %638 = vrot.lane.b32.xlu0 %v548, 8
      %v639 = vpop.permute.xlu0 %638
      %640 = vrot.lane.b32.xlu0 %v549, 8
      %v641 = vpop.permute.xlu0 %640
      %642 = vrot.lane.b32.xlu0 %v550, 8
      %v643 = vpop.permute.xlu0 %642
      %644 = vrot.lane.b32.xlu0 %v551, 8
      %v645 = vpop.permute.xlu0 %644
      %646 = vrot.lane.b32.xlu0 %v552, 8
      %v647 = vpop.permute.xlu0 %646
      %648 = vrot.lane.b32.xlu0 %v553, 8
      %v649 = vpop.permute.xlu0 %648
      %vm682 = vcmask 97344
      %683 = vst.msk [vmem:[#allocation3] sm:$0xff] %vm682, %v587
      %684 = vst.msk [vmem:[#allocation3 + $0x8] sm:$0xff] %vm682, %v589
      %685 = vst.msk [vmem:[#allocation3 + $0x10] sm:$0xff] %vm682, %v591
      %686 = vst.msk [vmem:[#allocation3 + $0x18] sm:$0xff] %vm682, %v593
      %687 = vst.msk [vmem:[#allocation3 + $0x20] sm:$0xff] %vm682, %v595
      %688 = vst.msk [vmem:[#allocation3 + $0x28] sm:$0xff] %vm682, %v597
      %689 = vst.msk [vmem:[#allocation3 + $0x30] sm:$0xff] %vm682, %v599
      %690 = vst.msk [vmem:[#allocation3 + $0x38] sm:$0xff] %vm682, %v601
      %691 = vst.msk [vmem:[#allocation3 + $0x40] sm:$0xff] %vm682, %v603
      %692 = vst.msk [vmem:[#allocation3 + $0x48] sm:$0xff] %vm682, %v605
      %693 = vst.msk [vmem:[#allocation3 + $0x50] sm:$0xff] %vm682, %v607
      %694 = vst.msk [vmem:[#allocation3 + $0x58] sm:$0xff] %vm682, %v609
      %695 = vst.msk [vmem:[#allocation3 + $0x60] sm:$0xff] %vm682, %v611
      %696 = vst.msk [vmem:[#allocation3 + $0x68] sm:$0xff] %vm682, %v613
      %697 = vst.msk [vmem:[#allocation3 + $0x70] sm:$0xff] %vm682, %v615
      %698 = vst.msk [vmem:[#allocation3 + $0x78] sm:$0xff] %vm682, %v617
      %699 = vst.msk [vmem:[#allocation3 + $0x80] sm:$0xff] %vm682, %v619
      %700 = vst.msk [vmem:[#allocation3 + $0x88] sm:$0xff] %vm682, %v621
      %701 = vst.msk [vmem:[#allocation3 + $0x90] sm:$0xff] %vm682, %v623
      %702 = vst.msk [vmem:[#allocation3 + $0x98] sm:$0xff] %vm682, %v625
      %703 = vst.msk [vmem:[#allocation3 + $0xa0] sm:$0xff] %vm682, %v627
      %704 = vst.msk [vmem:[#allocation3 + $0xa8] sm:$0xff] %vm682, %v629
      %705 = vst.msk [vmem:[#allocation3 + $0xb0] sm:$0xff] %vm682, %v631
      %706 = vst.msk [vmem:[#allocation3 + $0xb8] sm:$0xff] %vm682, %v633
      %707 = vst.msk [vmem:[#allocation3 + $0xc0] sm:$0xff] %vm682, %v635
      %708 = vst.msk [vmem:[#allocation3 + $0xc8] sm:$0xff] %vm682, %v637
      %709 = vst.msk [vmem:[#allocation3 + $0xd0] sm:$0xff] %vm682, %v639
      %710 = vst.msk [vmem:[#allocation3 + $0xd8] sm:$0xff] %vm682, %v641
      %711 = vst.msk [vmem:[#allocation3 + $0xe0] sm:$0xff] %vm682, %v643
      %712 = vst.msk [vmem:[#allocation3 + $0xe8] sm:$0xff] %vm682, %v645
      %713 = vst.msk [vmem:[#allocation3 + $0xf0] sm:$0xff] %vm682, %v647
      %714 = vst.msk [vmem:[#allocation3 + $0xf8] sm:$0xff] %vm682, %v649
      %v715 = vld [vmem:[%s232] sm:$0xff]
      %v716 = vld [vmem:[%s232 + $0x8] sm:$0xff]
      %v717 = vld [vmem:[%s232 + $0x18] sm:$0xff]
      %v718 = vld [vmem:[%s232 + $0x20] sm:$0xff]
      %v719 = vld [vmem:[%s232 + $0x30] sm:$0xff]
      %v720 = vld [vmem:[%s232 + $0x38] sm:$0xff]
      %v721 = vld [vmem:[%s232 + $0x48] sm:$0xff]
      %v722 = vld [vmem:[%s232 + $0x50] sm:$0xff]
      %v723 = vld [vmem:[%s232 + $0x60] sm:$0xff]
      %v724 = vld [vmem:[%s232 + $0x68] sm:$0xff]
      %v725 = vld [vmem:[%s232 + $0x78] sm:$0xff]
      %v726 = vld [vmem:[%s232 + $0x80] sm:$0xff]
      %v727 = vld [vmem:[%s232 + $0x90] sm:$0xff]
      %v728 = vld [vmem:[%s232 + $0x98] sm:$0xff]
      %v729 = vld [vmem:[%s232 + $0xa8] sm:$0xff]
      %v730 = vld [vmem:[%s232 + $0xb0] sm:$0xff]
      %v731 = vld [vmem:[%s232 + $0xc0] sm:$0xff]
      %v732 = vld [vmem:[%s232 + $0xc8] sm:$0xff]
      %v733 = vld [vmem:[%s232 + $0xd8] sm:$0xff]
      %v734 = vld [vmem:[%s232 + $0xe0] sm:$0xff]
      %v735 = vld [vmem:[%s232 + $0xf0] sm:$0xff]
      %v736 = vld [vmem:[%s232 + $0xf8] sm:$0xff]
      %v737 = vld [vmem:[%s232 + $0x108] sm:$0xff]
      %v738 = vld [vmem:[%s232 + $0x110] sm:$0xff]
      %v739 = vld [vmem:[%s232 + $0x120] sm:$0xff]
      %v740 = vld [vmem:[%s232 + $0x128] sm:$0xff]
      %v741 = vld [vmem:[%s232 + $0x138] sm:$0xff]
      %v742 = vld [vmem:[%s232 + $0x140] sm:$0xff]
      %v743 = vld [vmem:[%s232 + $0x150] sm:$0xff]
      %v744 = vld [vmem:[%s232 + $0x158] sm:$0xff]
      %v745 = vld [vmem:[%s232 + $0x168] sm:$0xff]
      %v746 = vld [vmem:[%s232 + $0x170] sm:$0xff]
      %779 = vrot.lane.b32.xlu0 %v715, 12
      %v780 = vpop.permute.xlu0 %779
      %781 = vrot.lane.b32.xlu0 %v716, 12
      %v782 = vpop.permute.xlu0 %781
      %783 = vrot.lane.b32.xlu0 %v717, 12
      %v784 = vpop.permute.xlu0 %783
      %785 = vrot.lane.b32.xlu0 %v718, 12
      %v786 = vpop.permute.xlu0 %785
      %787 = vrot.lane.b32.xlu0 %v719, 12
      %v788 = vpop.permute.xlu0 %787
      %789 = vrot.lane.b32.xlu0 %v720, 12
      %v790 = vpop.permute.xlu0 %789
      %791 = vrot.lane.b32.xlu0 %v721, 12
      %v792 = vpop.permute.xlu0 %791
      %793 = vrot.lane.b32.xlu0 %v722, 12
      %v794 = vpop.permute.xlu0 %793
      %795 = vrot.lane.b32.xlu0 %v723, 12
      %v796 = vpop.permute.xlu0 %795
      %797 = vrot.lane.b32.xlu0 %v724, 12
      %v798 = vpop.permute.xlu0 %797
      %799 = vrot.lane.b32.xlu0 %v725, 12
      %v800 = vpop.permute.xlu0 %799
      %801 = vrot.lane.b32.xlu0 %v726, 12
      %v802 = vpop.permute.xlu0 %801
      %803 = vrot.lane.b32.xlu0 %v727, 12
      %v804 = vpop.permute.xlu0 %803
      %805 = vrot.lane.b32.xlu0 %v728, 12
      %v806 = vpop.permute.xlu0 %805
      %807 = vrot.lane.b32.xlu0 %v729, 12
      %v808 = vpop.permute.xlu0 %807
      %809 = vrot.lane.b32.xlu0 %v730, 12
      %v810 = vpop.permute.xlu0 %809
      %811 = vrot.lane.b32.xlu0 %v731, 12
      %v812 = vpop.permute.xlu0 %811
      %813 = vrot.lane.b32.xlu0 %v732, 12
      %v814 = vpop.permute.xlu0 %813
      %815 = vrot.lane.b32.xlu0 %v733, 12
      %v816 = vpop.permute.xlu0 %815
      %817 = vrot.lane.b32.xlu0 %v734, 12
      %v818 = vpop.permute.xlu0 %817
      %819 = vrot.lane.b32.xlu0 %v735, 12
      %v820 = vpop.permute.xlu0 %819
      %821 = vrot.lane.b32.xlu0 %v736, 12
      %v822 = vpop.permute.xlu0 %821
      %823 = vrot.lane.b32.xlu0 %v737, 12
      %v824 = vpop.permute.xlu0 %823
      %825 = vrot.lane.b32.xlu0 %v738, 12
      %v826 = vpop.permute.xlu0 %825
      %827 = vrot.lane.b32.xlu0 %v739, 12
      %v828 = vpop.permute.xlu0 %827
      %829 = vrot.lane.b32.xlu0 %v740, 12
      %v830 = vpop.permute.xlu0 %829
      %831 = vrot.lane.b32.xlu0 %v741, 12
      %v832 = vpop.permute.xlu0 %831
      %833 = vrot.lane.b32.xlu0 %v742, 12
      %v834 = vpop.permute.xlu0 %833
      %835 = vrot.lane.b32.xlu0 %v743, 12
      %v836 = vpop.permute.xlu0 %835
      %837 = vrot.lane.b32.xlu0 %v744, 12
      %v838 = vpop.permute.xlu0 %837
      %839 = vrot.lane.b32.xlu0 %v745, 12
      %v840 = vpop.permute.xlu0 %839
      %841 = vrot.lane.b32.xlu0 %v746, 12
      %v842 = vpop.permute.xlu0 %841
      %vm875 = vcmask 130144
      %876 = vst.msk [vmem:[#allocation3] sm:$0xff] %vm875, %v780
      %877 = vst.msk [vmem:[#allocation3 + $0x8] sm:$0xff] %vm875, %v782
      %878 = vst.msk [vmem:[#allocation3 + $0x10] sm:$0xff] %vm875, %v784
      %879 = vst.msk [vmem:[#allocation3 + $0x18] sm:$0xff] %vm875, %v786
      %880 = vst.msk [vmem:[#allocation3 + $0x20] sm:$0xff] %vm875, %v788
      %881 = vst.msk [vmem:[#allocation3 + $0x28] sm:$0xff] %vm875, %v790
      %882 = vst.msk [vmem:[#allocation3 + $0x30] sm:$0xff] %vm875, %v792
      %883 = vst.msk [vmem:[#allocation3 + $0x38] sm:$0xff] %vm875, %v794
      %884 = vst.msk [vmem:[#allocation3 + $0x40] sm:$0xff] %vm875, %v796
      %885 = vst.msk [vmem:[#allocation3 + $0x48] sm:$0xff] %vm875, %v798
      %886 = vst.msk [vmem:[#allocation3 + $0x50] sm:$0xff] %vm875, %v800
      %887 = vst.msk [vmem:[#allocation3 + $0x58] sm:$0xff] %vm875, %v802
      %888 = vst.msk [vmem:[#allocation3 + $0x60] sm:$0xff] %vm875, %v804
      %889 = vst.msk [vmem:[#allocation3 + $0x68] sm:$0xff] %vm875, %v806
      %890 = vst.msk [vmem:[#allocation3 + $0x70] sm:$0xff] %vm875, %v808
      %891 = vst.msk [vmem:[#allocation3 + $0x78] sm:$0xff] %vm875, %v810
      %892 = vst.msk [vmem:[#allocation3 + $0x80] sm:$0xff] %vm875, %v812
      %893 = vst.msk [vmem:[#allocation3 + $0x88] sm:$0xff] %vm875, %v814
      %894 = vst.msk [vmem:[#allocation3 + $0x90] sm:$0xff] %vm875, %v816
      %895 = vst.msk [vmem:[#allocation3 + $0x98] sm:$0xff] %vm875, %v818
      %896 = vst.msk [vmem:[#allocation3 + $0xa0] sm:$0xff] %vm875, %v820
      %897 = vst.msk [vmem:[#allocation3 + $0xa8] sm:$0xff] %vm875, %v822
      %898 = vst.msk [vmem:[#allocation3 + $0xb0] sm:$0xff] %vm875, %v824
      %899 = vst.msk [vmem:[#allocation3 + $0xb8] sm:$0xff] %vm875, %v826
      %900 = vst.msk [vmem:[#allocation3 + $0xc0] sm:$0xff] %vm875, %v828
      %901 = vst.msk [vmem:[#allocation3 + $0xc8] sm:$0xff] %vm875, %v830
      %902 = vst.msk [vmem:[#allocation3 + $0xd0] sm:$0xff] %vm875, %v832
      %903 = vst.msk [vmem:[#allocation3 + $0xd8] sm:$0xff] %vm875, %v834
      %904 = vst.msk [vmem:[#allocation3 + $0xe0] sm:$0xff] %vm875, %v836
      %905 = vst.msk [vmem:[#allocation3 + $0xe8] sm:$0xff] %vm875, %v838
      %906 = vst.msk [vmem:[#allocation3 + $0xf0] sm:$0xff] %vm875, %v840
      %907 = vst.msk [vmem:[#allocation3 + $0xf8] sm:$0xff] %vm875, %v842
      %v908 = vld [vmem:[%s232 + $0x1] sm:$0xff]
      %v909 = vld [vmem:[%s232 + $0x9] sm:$0xff]
      %v910 = vld [vmem:[%s232 + $0x19] sm:$0xff]
      %v911 = vld [vmem:[%s232 + $0x21] sm:$0xff]
      %v912 = vld [vmem:[%s232 + $0x31] sm:$0xff]
      %v913 = vld [vmem:[%s232 + $0x39] sm:$0xff]
      %v914 = vld [vmem:[%s232 + $0x49] sm:$0xff]
      %v915 = vld [vmem:[%s232 + $0x51] sm:$0xff]
      %v916 = vld [vmem:[%s232 + $0x61] sm:$0xff]
      %v917 = vld [vmem:[%s232 + $0x69] sm:$0xff]
      %v918 = vld [vmem:[%s232 + $0x79] sm:$0xff]
      %v919 = vld [vmem:[%s232 + $0x81] sm:$0xff]
      %v920 = vld [vmem:[%s232 + $0x91] sm:$0xff]
      %v921 = vld [vmem:[%s232 + $0x99] sm:$0xff]
      %v922 = vld [vmem:[%s232 + $0xa9] sm:$0xff]
      %v923 = vld [vmem:[%s232 + $0xb1] sm:$0xff]
      %v924 = vld [vmem:[%s232 + $0xc1] sm:$0xff]
      %v925 = vld [vmem:[%s232 + $0xc9] sm:$0xff]
      %v926 = vld [vmem:[%s232 + $0xd9] sm:$0xff]
      %v927 = vld [vmem:[%s232 + $0xe1] sm:$0xff]
      %v928 = vld [vmem:[%s232 + $0xf1] sm:$0xff]
      %v929 = vld [vmem:[%s232 + $0xf9] sm:$0xff]
      %v930 = vld [vmem:[%s232 + $0x109] sm:$0xff]
      %v931 = vld [vmem:[%s232 + $0x111] sm:$0xff]
      %v932 = vld [vmem:[%s232 + $0x121] sm:$0xff]
      %v933 = vld [vmem:[%s232 + $0x129] sm:$0xff]
      %v934 = vld [vmem:[%s232 + $0x139] sm:$0xff]
      %v935 = vld [vmem:[%s232 + $0x141] sm:$0xff]
      %v936 = vld [vmem:[%s232 + $0x151] sm:$0xff]
      %v937 = vld [vmem:[%s232 + $0x159] sm:$0xff]
      %v938 = vld [vmem:[%s232 + $0x169] sm:$0xff]
      %v939 = vld [vmem:[%s232 + $0x171] sm:$0xff]
      %972 = vrot.lane.b32.xlu0 %v908, 16
      %v973 = vpop.permute.xlu0 %972
      %974 = vrot.lane.b32.xlu0 %v909, 16
      %v975 = vpop.permute.xlu0 %974
      %976 = vrot.lane.b32.xlu0 %v910, 16
      %v977 = vpop.permute.xlu0 %976
      %978 = vrot.lane.b32.xlu0 %v911, 16
      %v979 = vpop.permute.xlu0 %978
      %980 = vrot.lane.b32.xlu0 %v912, 16
      %v981 = vpop.permute.xlu0 %980
      %982 = vrot.lane.b32.xlu0 %v913, 16
      %v983 = vpop.permute.xlu0 %982
      %984 = vrot.lane.b32.xlu0 %v914, 16
      %v985 = vpop.permute.xlu0 %984
      %986 = vrot.lane.b32.xlu0 %v915, 16
      %v987 = vpop.permute.xlu0 %986
      %988 = vrot.lane.b32.xlu0 %v916, 16
      %v989 = vpop.permute.xlu0 %988
      %990 = vrot.lane.b32.xlu0 %v917, 16
      %v991 = vpop.permute.xlu0 %990
      %992 = vrot.lane.b32.xlu0 %v918, 16
      %v993 = vpop.permute.xlu0 %992
      %994 = vrot.lane.b32.xlu0 %v919, 16
      %v995 = vpop.permute.xlu0 %994
      %996 = vrot.lane.b32.xlu0 %v920, 16
      %v997 = vpop.permute.xlu0 %996
      %998 = vrot.lane.b32.xlu0 %v921, 16
      %v999 = vpop.permute.xlu0 %998
      %1000 = vrot.lane.b32.xlu0 %v922, 16
      %v1001 = vpop.permute.xlu0 %1000
      %1002 = vrot.lane.b32.xlu0 %v923, 16
      %v1003 = vpop.permute.xlu0 %1002
      %1004 = vrot.lane.b32.xlu0 %v924, 16
      %v1005 = vpop.permute.xlu0 %1004
      %1006 = vrot.lane.b32.xlu0 %v925, 16
      %v1007 = vpop.permute.xlu0 %1006
      %1008 = vrot.lane.b32.xlu0 %v926, 16
      %v1009 = vpop.permute.xlu0 %1008
      %1010 = vrot.lane.b32.xlu0 %v927, 16
      %v1011 = vpop.permute.xlu0 %1010
      %1012 = vrot.lane.b32.xlu0 %v928, 16
      %v1013 = vpop.permute.xlu0 %1012
      %1014 = vrot.lane.b32.xlu0 %v929, 16
      %v1015 = vpop.permute.xlu0 %1014
      %1016 = vrot.lane.b32.xlu0 %v930, 16
      %v1017 = vpop.permute.xlu0 %1016
      %1018 = vrot.lane.b32.xlu0 %v931, 16
      %v1019 = vpop.permute.xlu0 %1018
      %1020 = vrot.lane.b32.xlu0 %v932, 16
      %v1021 = vpop.permute.xlu0 %1020
      %1022 = vrot.lane.b32.xlu0 %v933, 16
      %v1023 = vpop.permute.xlu0 %1022
      %1024 = vrot.lane.b32.xlu0 %v934, 16
      %v1025 = vpop.permute.xlu0 %1024
      %1026 = vrot.lane.b32.xlu0 %v935, 16
      %v1027 = vpop.permute.xlu0 %1026
      %1028 = vrot.lane.b32.xlu0 %v936, 16
      %v1029 = vpop.permute.xlu0 %1028
      %1030 = vrot.lane.b32.xlu0 %v937, 16
      %v1031 = vpop.permute.xlu0 %1030
      %1032 = vrot.lane.b32.xlu0 %v938, 16
      %v1033 = vpop.permute.xlu0 %1032
      %1034 = vrot.lane.b32.xlu0 %v939, 16
      %v1035 = vpop.permute.xlu0 %1034
      %vm1068 = vcmask 162944
      %1069 = vst.msk [vmem:[#allocation3] sm:$0xff] %vm1068, %v973
      %1070 = vst.msk [vmem:[#allocation3 + $0x8] sm:$0xff] %vm1068, %v975
      %1071 = vst.msk [vmem:[#allocation3 + $0x10] sm:$0xff] %vm1068, %v977
      %1072 = vst.msk [vmem:[#allocation3 + $0x18] sm:$0xff] %vm1068, %v979
      %1073 = vst.msk [vmem:[#allocation3 + $0x20] sm:$0xff] %vm1068, %v981
      %1074 = vst.msk [vmem:[#allocation3 + $0x28] sm:$0xff] %vm1068, %v983
      %1075 = vst.msk [vmem:[#allocation3 + $0x30] sm:$0xff] %vm1068, %v985
      %1076 = vst.msk [vmem:[#allocation3 + $0x38] sm:$0xff] %vm1068, %v987
      %1077 = vst.msk [vmem:[#allocation3 + $0x40] sm:$0xff] %vm1068, %v989
      %1078 = vst.msk [vmem:[#allocation3 + $0x48] sm:$0xff] %vm1068, %v991
      %1079 = vst.msk [vmem:[#allocation3 + $0x50] sm:$0xff] %vm1068, %v993
      %1080 = vst.msk [vmem:[#allocation3 + $0x58] sm:$0xff] %vm1068, %v995
      %1081 = vst.msk [vmem:[#allocation3 + $0x60] sm:$0xff] %vm1068, %v997
      %1082 = vst.msk [vmem:[#allocation3 + $0x68] sm:$0xff] %vm1068, %v999
      %1083 = vst.msk [vmem:[#allocation3 + $0x70] sm:$0xff] %vm1068, %v1001
      %1084 = vst.msk [vmem:[#allocation3 + $0x78] sm:$0xff] %vm1068, %v1003
      %1085 = vst.msk [vmem:[#allocation3 + $0x80] sm:$0xff] %vm1068, %v1005
      %1086 = vst.msk [vmem:[#allocation3 + $0x88] sm:$0xff] %vm1068, %v1007
      %1087 = vst.msk [vmem:[#allocation3 + $0x90] sm:$0xff] %vm1068, %v1009
      %1088 = vst.msk [vmem:[#allocation3 + $0x98] sm:$0xff] %vm1068, %v1011
      %1089 = vst.msk [vmem:[#allocation3 + $0xa0] sm:$0xff] %vm1068, %v1013
      %1090 = vst.msk [vmem:[#allocation3 + $0xa8] sm:$0xff] %vm1068, %v1015
      %1091 = vst.msk [vmem:[#allocation3 + $0xb0] sm:$0xff] %vm1068, %v1017
      %1092 = vst.msk [vmem:[#allocation3 + $0xb8] sm:$0xff] %vm1068, %v1019
      %1093 = vst.msk [vmem:[#allocation3 + $0xc0] sm:$0xff] %vm1068, %v1021
      %1094 = vst.msk [vmem:[#allocation3 + $0xc8] sm:$0xff] %vm1068, %v1023
      %1095 = vst.msk [vmem:[#allocation3 + $0xd0] sm:$0xff] %vm1068, %v1025
      %1096 = vst.msk [vmem:[#allocation3 + $0xd8] sm:$0xff] %vm1068, %v1027
      %1097 = vst.msk [vmem:[#allocation3 + $0xe0] sm:$0xff] %vm1068, %v1029
      %1098 = vst.msk [vmem:[#allocation3 + $0xe8] sm:$0xff] %vm1068, %v1031
      %1099 = vst.msk [vmem:[#allocation3 + $0xf0] sm:$0xff] %vm1068, %v1033
      %1100 = vst.msk [vmem:[#allocation3 + $0xf8] sm:$0xff] %vm1068, %v1035
      %v1101 = vld [vmem:[%s232 + $0x2] sm:$0xff]
      %v1102 = vld [vmem:[%s232 + $0xa] sm:$0xff]
      %v1103 = vld [vmem:[%s232 + $0x1a] sm:$0xff]
      %v1104 = vld [vmem:[%s232 + $0x22] sm:$0xff]
      %v1105 = vld [vmem:[%s232 + $0x32] sm:$0xff]
      %v1106 = vld [vmem:[%s232 + $0x3a] sm:$0xff]
      %v1107 = vld [vmem:[%s232 + $0x4a] sm:$0xff]
      %v1108 = vld [vmem:[%s232 + $0x52] sm:$0xff]
      %v1109 = vld [vmem:[%s232 + $0x62] sm:$0xff]
      %v1110 = vld [vmem:[%s232 + $0x6a] sm:$0xff]
      %v1111 = vld [vmem:[%s232 + $0x7a] sm:$0xff]
      %v1112 = vld [vmem:[%s232 + $0x82] sm:$0xff]
      %v1113 = vld [vmem:[%s232 + $0x92] sm:$0xff]
      %v1114 = vld [vmem:[%s232 + $0x9a] sm:$0xff]
      %v1115 = vld [vmem:[%s232 + $0xaa] sm:$0xff]
      %v1116 = vld [vmem:[%s232 + $0xb2] sm:$0xff]
      %v1117 = vld [vmem:[%s232 + $0xc2] sm:$0xff]
      %v1118 = vld [vmem:[%s232 + $0xca] sm:$0xff]
      %v1119 = vld [vmem:[%s232 + $0xda] sm:$0xff]
      %v1120 = vld [vmem:[%s232 + $0xe2] sm:$0xff]
      %v1121 = vld [vmem:[%s232 + $0xf2] sm:$0xff]
      %v1122 = vld [vmem:[%s232 + $0xfa] sm:$0xff]
      %v1123 = vld [vmem:[%s232 + $0x10a] sm:$0xff]
      %v1124 = vld [vmem:[%s232 + $0x112] sm:$0xff]
      %v1125 = vld [vmem:[%s232 + $0x122] sm:$0xff]
      %v1126 = vld [vmem:[%s232 + $0x12a] sm:$0xff]
      %v1127 = vld [vmem:[%s232 + $0x13a] sm:$0xff]
      %v1128 = vld [vmem:[%s232 + $0x142] sm:$0xff]
      %v1129 = vld [vmem:[%s232 + $0x152] sm:$0xff]
      %v1130 = vld [vmem:[%s232 + $0x15a] sm:$0xff]
      %v1131 = vld [vmem:[%s232 + $0x16a] sm:$0xff]
      %v1132 = vld [vmem:[%s232 + $0x172] sm:$0xff]
      %1165 = vrot.lane.b32.xlu0 %v1101, 20
      %v1166 = vpop.permute.xlu0 %1165
      %1167 = vrot.lane.b32.xlu0 %v1102, 20
      %v1168 = vpop.permute.xlu0 %1167
      %1169 = vrot.lane.b32.xlu0 %v1103, 20
      %v1170 = vpop.permute.xlu0 %1169
      %1171 = vrot.lane.b32.xlu0 %v1104, 20
      %v1172 = vpop.permute.xlu0 %1171
      %1173 = vrot.lane.b32.xlu0 %v1105, 20
      %v1174 = vpop.permute.xlu0 %1173
      %1175 = vrot.lane.b32.xlu0 %v1106, 20
      %v1176 = vpop.permute.xlu0 %1175
      %1177 = vrot.lane.b32.xlu0 %v1107, 20
      %v1178 = vpop.permute.xlu0 %1177
      %1179 = vrot.lane.b32.xlu0 %v1108, 20
      %v1180 = vpop.permute.xlu0 %1179
      %1181 = vrot.lane.b32.xlu0 %v1109, 20
      %v1182 = vpop.permute.xlu0 %1181
      %1183 = vrot.lane.b32.xlu0 %v1110, 20
      %v1184 = vpop.permute.xlu0 %1183
      %1185 = vrot.lane.b32.xlu0 %v1111, 20
      %v1186 = vpop.permute.xlu0 %1185
      %1187 = vrot.lane.b32.xlu0 %v1112, 20
      %v1188 = vpop.permute.xlu0 %1187
      %1189 = vrot.lane.b32.xlu0 %v1113, 20
      %v1190 = vpop.permute.xlu0 %1189
      %1191 = vrot.lane.b32.xlu0 %v1114, 20
      %v1192 = vpop.permute.xlu0 %1191
      %1193 = vrot.lane.b32.xlu0 %v1115, 20
      %v1194 = vpop.permute.xlu0 %1193
      %1195 = vrot.lane.b32.xlu0 %v1116, 20
      %v1196 = vpop.permute.xlu0 %1195
      %1197 = vrot.lane.b32.xlu0 %v1117, 20
      %v1198 = vpop.permute.xlu0 %1197
      %1199 = vrot.lane.b32.xlu0 %v1118, 20
      %v1200 = vpop.permute.xlu0 %1199
      %1201 = vrot.lane.b32.xlu0 %v1119, 20
      %v1202 = vpop.permute.xlu0 %1201
      %1203 = vrot.lane.b32.xlu0 %v1120, 20
      %v1204 = vpop.permute.xlu0 %1203
      %1205 = vrot.lane.b32.xlu0 %v1121, 20
      %v1206 = vpop.permute.xlu0 %1205
      %1207 = vrot.lane.b32.xlu0 %v1122, 20
      %v1208 = vpop.permute.xlu0 %1207
      %1209 = vrot.lane.b32.xlu0 %v1123, 20
      %v1210 = vpop.permute.xlu0 %1209
      %1211 = vrot.lane.b32.xlu0 %v1124, 20
      %v1212 = vpop.permute.xlu0 %1211
      %1213 = vrot.lane.b32.xlu0 %v1125, 20
      %v1214 = vpop.permute.xlu0 %1213
      %1215 = vrot.lane.b32.xlu0 %v1126, 20
      %v1216 = vpop.permute.xlu0 %1215
      %1217 = vrot.lane.b32.xlu0 %v1127, 20
      %v1218 = vpop.permute.xlu0 %1217
      %1219 = vrot.lane.b32.xlu0 %v1128, 20
      %v1220 = vpop.permute.xlu0 %1219
      %1221 = vrot.lane.b32.xlu0 %v1129, 20
      %v1222 = vpop.permute.xlu0 %1221
      %1223 = vrot.lane.b32.xlu0 %v1130, 20
      %v1224 = vpop.permute.xlu0 %1223
      %1225 = vrot.lane.b32.xlu0 %v1131, 20
      %v1226 = vpop.permute.xlu0 %1225
      %1227 = vrot.lane.b32.xlu0 %v1132, 20
      %v1228 = vpop.permute.xlu0 %1227
      %vm1261 = vcmask 195744
      %1262 = vst.msk [vmem:[#allocation3] sm:$0xff] %vm1261, %v1166
      %1263 = vst.msk [vmem:[#allocation3 + $0x8] sm:$0xff] %vm1261, %v1168
      %1264 = vst.msk [vmem:[#allocation3 + $0x10] sm:$0xff] %vm1261, %v1170
      %1265 = vst.msk [vmem:[#allocation3 + $0x18] sm:$0xff] %vm1261, %v1172
      %1266 = vst.msk [vmem:[#allocation3 + $0x20] sm:$0xff] %vm1261, %v1174
      %1267 = vst.msk [vmem:[#allocation3 + $0x28] sm:$0xff] %vm1261, %v1176
      %1268 = vst.msk [vmem:[#allocation3 + $0x30] sm:$0xff] %vm1261, %v1178
      %1269 = vst.msk [vmem:[#allocation3 + $0x38] sm:$0xff] %vm1261, %v1180
      %1270 = vst.msk [vmem:[#allocation3 + $0x40] sm:$0xff] %vm1261, %v1182
      %1271 = vst.msk [vmem:[#allocation3 + $0x48] sm:$0xff] %vm1261, %v1184
      %1272 = vst.msk [vmem:[#allocation3 + $0x50] sm:$0xff] %vm1261, %v1186
      %1273 = vst.msk [vmem:[#allocation3 + $0x58] sm:$0xff] %vm1261, %v1188
      %1274 = vst.msk [vmem:[#allocation3 + $0x60] sm:$0xff] %vm1261, %v1190
      %1275 = vst.msk [vmem:[#allocation3 + $0x68] sm:$0xff] %vm1261, %v1192
      %1276 = vst.msk [vmem:[#allocation3 + $0x70] sm:$0xff] %vm1261, %v1194
      %1277 = vst.msk [vmem:[#allocation3 + $0x78] sm:$0xff] %vm1261, %v1196
      %1278 = vst.msk [vmem:[#allocation3 + $0x80] sm:$0xff] %vm1261, %v1198
      %1279 = vst.msk [vmem:[#allocation3 + $0x88] sm:$0xff] %vm1261, %v1200
      %1280 = vst.msk [vmem:[#allocation3 + $0x90] sm:$0xff] %vm1261, %v1202
      %1281 = vst.msk [vmem:[#allocation3 + $0x98] sm:$0xff] %vm1261, %v1204
      %1282 = vst.msk [vmem:[#allocation3 + $0xa0] sm:$0xff] %vm1261, %v1206
      %1283 = vst.msk [vmem:[#allocation3 + $0xa8] sm:$0xff] %vm1261, %v1208
      %1284 = vst.msk [vmem:[#allocation3 + $0xb0] sm:$0xff] %vm1261, %v1210
      %1285 = vst.msk [vmem:[#allocation3 + $0xb8] sm:$0xff] %vm1261, %v1212
      %1286 = vst.msk [vmem:[#allocation3 + $0xc0] sm:$0xff] %vm1261, %v1214
      %1287 = vst.msk [vmem:[#allocation3 + $0xc8] sm:$0xff] %vm1261, %v1216
      %1288 = vst.msk [vmem:[#allocation3 + $0xd0] sm:$0xff] %vm1261, %v1218
      %1289 = vst.msk [vmem:[#allocation3 + $0xd8] sm:$0xff] %vm1261, %v1220
      %1290 = vst.msk [vmem:[#allocation3 + $0xe0] sm:$0xff] %vm1261, %v1222
      %1291 = vst.msk [vmem:[#allocation3 + $0xe8] sm:$0xff] %vm1261, %v1224
      %1292 = vst.msk [vmem:[#allocation3 + $0xf0] sm:$0xff] %vm1261, %v1226
      %1293 = vst.msk [vmem:[#allocation3 + $0xf8] sm:$0xff] %vm1261, %v1228
      %s1294 = scalar_lea.vmem [#allocation2], 48
      %v1295 = vld [vmem:[%s1294] sm:$0xff]
      %v1296 = vld [vmem:[%s1294 + $0x8] sm:$0xff]
      %v1297 = vld [vmem:[%s1294 + $0x18] sm:$0xff]
      %v1298 = vld [vmem:[%s1294 + $0x20] sm:$0xff]
      %v1299 = vld [vmem:[%s1294 + $0x30] sm:$0xff]
      %v1300 = vld [vmem:[%s1294 + $0x38] sm:$0xff]
      %v1301 = vld [vmem:[%s1294 + $0x48] sm:$0xff]
      %v1302 = vld [vmem:[%s1294 + $0x50] sm:$0xff]
      %v1303 = vld [vmem:[%s1294 + $0x60] sm:$0xff]
      %v1304 = vld [vmem:[%s1294 + $0x68] sm:$0xff]
      %v1305 = vld [vmem:[%s1294 + $0x78] sm:$0xff]
      %v1306 = vld [vmem:[%s1294 + $0x80] sm:$0xff]
      %v1307 = vld [vmem:[%s1294 + $0x90] sm:$0xff]
      %v1308 = vld [vmem:[%s1294 + $0x98] sm:$0xff]
      %v1309 = vld [vmem:[%s1294 + $0xa8] sm:$0xff]
      %v1310 = vld [vmem:[%s1294 + $0xb0] sm:$0xff]
      %v1311 = vld [vmem:[%s1294 + $0xc0] sm:$0xff]
      %v1312 = vld [vmem:[%s1294 + $0xc8] sm:$0xff]
      %v1313 = vld [vmem:[%s1294 + $0xd8] sm:$0xff]
      %v1314 = vld [vmem:[%s1294 + $0xe0] sm:$0xff]
      %v1315 = vld [vmem:[%s1294 + $0xf0] sm:$0xff]
      %v1316 = vld [vmem:[%s1294 + $0xf8] sm:$0xff]
      %v1317 = vld [vmem:[%s1294 + $0x108] sm:$0xff]
      %v1318 = vld [vmem:[%s1294 + $0x110] sm:$0xff]
      %v1319 = vld [vmem:[%s1294 + $0x120] sm:$0xff]
      %v1320 = vld [vmem:[%s1294 + $0x128] sm:$0xff]
      %v1321 = vld [vmem:[%s1294 + $0x138] sm:$0xff]
      %v1322 = vld [vmem:[%s1294 + $0x140] sm:$0xff]
      %v1323 = vld [vmem:[%s1294 + $0x150] sm:$0xff]
      %v1324 = vld [vmem:[%s1294 + $0x158] sm:$0xff]
      %v1325 = vld [vmem:[%s1294 + $0x168] sm:$0xff]
      %v1326 = vld [vmem:[%s1294 + $0x170] sm:$0xff]
      %1359 = vrot.lane.b32.xlu0 %v1295, 24
      %v1360 = vpop.permute.xlu0 %1359
      %1361 = vrot.lane.b32.xlu0 %v1296, 24
      %v1362 = vpop.permute.xlu0 %1361
      %1363 = vrot.lane.b32.xlu0 %v1297, 24
      %v1364 = vpop.permute.xlu0 %1363
      %1365 = vrot.lane.b32.xlu0 %v1298, 24
      %v1366 = vpop.permute.xlu0 %1365
      %1367 = vrot.lane.b32.xlu0 %v1299, 24
      %v1368 = vpop.permute.xlu0 %1367
      %1369 = vrot.lane.b32.xlu0 %v1300, 24
      %v1370 = vpop.permute.xlu0 %1369
      %1371 = vrot.lane.b32.xlu0 %v1301, 24
      %v1372 = vpop.permute.xlu0 %1371
      %1373 = vrot.lane.b32.xlu0 %v1302, 24
      %v1374 = vpop.permute.xlu0 %1373
      %1375 = vrot.lane.b32.xlu0 %v1303, 24
      %v1376 = vpop.permute.xlu0 %1375
      %1377 = vrot.lane.b32.xlu0 %v1304, 24
      %v1378 = vpop.permute.xlu0 %1377
      %1379 = vrot.lane.b32.xlu0 %v1305, 24
      %v1380 = vpop.permute.xlu0 %1379
      %1381 = vrot.lane.b32.xlu0 %v1306, 24
      %v1382 = vpop.permute.xlu0 %1381
      %1383 = vrot.lane.b32.xlu0 %v1307, 24
      %v1384 = vpop.permute.xlu0 %1383
      %1385 = vrot.lane.b32.xlu0 %v1308, 24
      %v1386 = vpop.permute.xlu0 %1385
      %1387 = vrot.lane.b32.xlu0 %v1309, 24
      %v1388 = vpop.permute.xlu0 %1387
      %1389 = vrot.lane.b32.xlu0 %v1310, 24
      %v1390 = vpop.permute.xlu0 %1389
      %1391 = vrot.lane.b32.xlu0 %v1311, 24
      %v1392 = vpop.permute.xlu0 %1391
      %1393 = vrot.lane.b32.xlu0 %v1312, 24
      %v1394 = vpop.permute.xlu0 %1393
      %1395 = vrot.lane.b32.xlu0 %v1313, 24
      %v1396 = vpop.permute.xlu0 %1395
      %1397 = vrot.lane.b32.xlu0 %v1314, 24
      %v1398 = vpop.permute.xlu0 %1397
      %1399 = vrot.lane.b32.xlu0 %v1315, 24
      %v1400 = vpop.permute.xlu0 %1399
      %1401 = vrot.lane.b32.xlu0 %v1316, 24
      %v1402 = vpop.permute.xlu0 %1401
      %1403 = vrot.lane.b32.xlu0 %v1317, 24
      %v1404 = vpop.permute.xlu0 %1403
      %1405 = vrot.lane.b32.xlu0 %v1318, 24
      %v1406 = vpop.permute.xlu0 %1405
      %1407 = vrot.lane.b32.xlu0 %v1319, 24
      %v1408 = vpop.permute.xlu0 %1407
      %1409 = vrot.lane.b32.xlu0 %v1320, 24
      %v1410 = vpop.permute.xlu0 %1409
      %1411 = vrot.lane.b32.xlu0 %v1321, 24
      %v1412 = vpop.permute.xlu0 %1411
      %1413 = vrot.lane.b32.xlu0 %v1322, 24
      %v1414 = vpop.permute.xlu0 %1413
      %1415 = vrot.lane.b32.xlu0 %v1323, 24
      %v1416 = vpop.permute.xlu0 %1415
      %1417 = vrot.lane.b32.xlu0 %v1324, 24
      %v1418 = vpop.permute.xlu0 %1417
      %1419 = vrot.lane.b32.xlu0 %v1325, 24
      %v1420 = vpop.permute.xlu0 %1419
      %1421 = vrot.lane.b32.xlu0 %v1326, 24
      %v1422 = vpop.permute.xlu0 %1421
      %vm1455 = vcmask 228544
      %1456 = vst.msk [vmem:[#allocation3] sm:$0xff] %vm1455, %v1360
      %1457 = vst.msk [vmem:[#allocation3 + $0x8] sm:$0xff] %vm1455, %v1362
      %1458 = vst.msk [vmem:[#allocation3 + $0x10] sm:$0xff] %vm1455, %v1364
      %1459 = vst.msk [vmem:[#allocation3 + $0x18] sm:$0xff] %vm1455, %v1366
      %1460 = vst.msk [vmem:[#allocation3 + $0x20] sm:$0xff] %vm1455, %v1368
      %1461 = vst.msk [vmem:[#allocation3 + $0x28] sm:$0xff] %vm1455, %v1370
      %1462 = vst.msk [vmem:[#allocation3 + $0x30] sm:$0xff] %vm1455, %v1372
      %1463 = vst.msk [vmem:[#allocation3 + $0x38] sm:$0xff] %vm1455, %v1374
      %1464 = vst.msk [vmem:[#allocation3 + $0x40] sm:$0xff] %vm1455, %v1376
      %1465 = vst.msk [vmem:[#allocation3 + $0x48] sm:$0xff] %vm1455, %v1378
      %1466 = vst.msk [vmem:[#allocation3 + $0x50] sm:$0xff] %vm1455, %v1380
      %1467 = vst.msk [vmem:[#allocation3 + $0x58] sm:$0xff] %vm1455, %v1382
      %1468 = vst.msk [vmem:[#allocation3 + $0x60] sm:$0xff] %vm1455, %v1384
      %1469 = vst.msk [vmem:[#allocation3 + $0x68] sm:$0xff] %vm1455, %v1386
      %1470 = vst.msk [vmem:[#allocation3 + $0x70] sm:$0xff] %vm1455, %v1388
      %1471 = vst.msk [vmem:[#allocation3 + $0x78] sm:$0xff] %vm1455, %v1390
      %1472 = vst.msk [vmem:[#allocation3 + $0x80] sm:$0xff] %vm1455, %v1392
      %1473 = vst.msk [vmem:[#allocation3 + $0x88] sm:$0xff] %vm1455, %v1394
      %1474 = vst.msk [vmem:[#allocation3 + $0x90] sm:$0xff] %vm1455, %v1396
      %1475 = vst.msk [vmem:[#allocation3 + $0x98] sm:$0xff] %vm1455, %v1398
      %1476 = vst.msk [vmem:[#allocation3 + $0xa0] sm:$0xff] %vm1455, %v1400
      %1477 = vst.msk [vmem:[#allocation3 + $0xa8] sm:$0xff] %vm1455, %v1402
      %1478 = vst.msk [vmem:[#allocation3 + $0xb0] sm:$0xff] %vm1455, %v1404
      %1479 = vst.msk [vmem:[#allocation3 + $0xb8] sm:$0xff] %vm1455, %v1406
      %1480 = vst.msk [vmem:[#allocation3 + $0xc0] sm:$0xff] %vm1455, %v1408
      %1481 = vst.msk [vmem:[#allocation3 + $0xc8] sm:$0xff] %vm1455, %v1410
      %1482 = vst.msk [vmem:[#allocation3 + $0xd0] sm:$0xff] %vm1455, %v1412
      %1483 = vst.msk [vmem:[#allocation3 + $0xd8] sm:$0xff] %vm1455, %v1414
      %1484 = vst.msk [vmem:[#allocation3 + $0xe0] sm:$0xff] %vm1455, %v1416
      %1485 = vst.msk [vmem:[#allocation3 + $0xe8] sm:$0xff] %vm1455, %v1418
      %1486 = vst.msk [vmem:[#allocation3 + $0xf0] sm:$0xff] %vm1455, %v1420
      %1487 = vst.msk [vmem:[#allocation3 + $0xf8] sm:$0xff] %vm1455, %v1422
      %v1488 = vld [vmem:[%s1294 + $0x1] sm:$0xff]
      %v1489 = vld [vmem:[%s1294 + $0x9] sm:$0xff]
      %v1490 = vld [vmem:[%s1294 + $0x19] sm:$0xff]
      %v1491 = vld [vmem:[%s1294 + $0x21] sm:$0xff]
      %v1492 = vld [vmem:[%s1294 + $0x31] sm:$0xff]
      %v1493 = vld [vmem:[%s1294 + $0x39] sm:$0xff]
      %v1494 = vld [vmem:[%s1294 + $0x49] sm:$0xff]
      %v1495 = vld [vmem:[%s1294 + $0x51] sm:$0xff]
      %v1496 = vld [vmem:[%s1294 + $0x61] sm:$0xff]
      %v1497 = vld [vmem:[%s1294 + $0x69] sm:$0xff]
      %v1498 = vld [vmem:[%s1294 + $0x79] sm:$0xff]
      %v1499 = vld [vmem:[%s1294 + $0x81] sm:$0xff]
      %v1500 = vld [vmem:[%s1294 + $0x91] sm:$0xff]
      %v1501 = vld [vmem:[%s1294 + $0x99] sm:$0xff]
      %v1502 = vld [vmem:[%s1294 + $0xa9] sm:$0xff]
      %v1503 = vld [vmem:[%s1294 + $0xb1] sm:$0xff]
      %v1504 = vld [vmem:[%s1294 + $0xc1] sm:$0xff]
      %v1505 = vld [vmem:[%s1294 + $0xc9] sm:$0xff]
      %v1506 = vld [vmem:[%s1294 + $0xd9] sm:$0xff]
      %v1507 = vld [vmem:[%s1294 + $0xe1] sm:$0xff]
      %v1508 = vld [vmem:[%s1294 + $0xf1] sm:$0xff]
      %v1509 = vld [vmem:[%s1294 + $0xf9] sm:$0xff]
      %v1510 = vld [vmem:[%s1294 + $0x109] sm:$0xff]
      %v1511 = vld [vmem:[%s1294 + $0x111] sm:$0xff]
      %v1512 = vld [vmem:[%s1294 + $0x121] sm:$0xff]
      %v1513 = vld [vmem:[%s1294 + $0x129] sm:$0xff]
      %v1514 = vld [vmem:[%s1294 + $0x139] sm:$0xff]
      %v1515 = vld [vmem:[%s1294 + $0x141] sm:$0xff]
      %v1516 = vld [vmem:[%s1294 + $0x151] sm:$0xff]
      %v1517 = vld [vmem:[%s1294 + $0x159] sm:$0xff]
      %v1518 = vld [vmem:[%s1294 + $0x169] sm:$0xff]
      %v1519 = vld [vmem:[%s1294 + $0x171] sm:$0xff]
      %1552 = vrot.lane.b32.xlu0 %v1488, 28
      %v1553 = vpop.permute.xlu0 %1552
      %1554 = vrot.lane.b32.xlu0 %v1489, 28
      %v1555 = vpop.permute.xlu0 %1554
      %1556 = vrot.lane.b32.xlu0 %v1490, 28
      %v1557 = vpop.permute.xlu0 %1556
      %1558 = vrot.lane.b32.xlu0 %v1491, 28
      %v1559 = vpop.permute.xlu0 %1558
      %1560 = vrot.lane.b32.xlu0 %v1492, 28
      %v1561 = vpop.permute.xlu0 %1560
      %1562 = vrot.lane.b32.xlu0 %v1493, 28
      %v1563 = vpop.permute.xlu0 %1562
      %1564 = vrot.lane.b32.xlu0 %v1494, 28
      %v1565 = vpop.permute.xlu0 %1564
      %1566 = vrot.lane.b32.xlu0 %v1495, 28
      %v1567 = vpop.permute.xlu0 %1566
      %1568 = vrot.lane.b32.xlu0 %v1496, 28
      %v1569 = vpop.permute.xlu0 %1568
      %1570 = vrot.lane.b32.xlu0 %v1497, 28
      %v1571 = vpop.permute.xlu0 %1570
      %1572 = vrot.lane.b32.xlu0 %v1498, 28
      %v1573 = vpop.permute.xlu0 %1572
      %1574 = vrot.lane.b32.xlu0 %v1499, 28
      %v1575 = vpop.permute.xlu0 %1574
      %1576 = vrot.lane.b32.xlu0 %v1500, 28
      %v1577 = vpop.permute.xlu0 %1576
      %1578 = vrot.lane.b32.xlu0 %v1501, 28
      %v1579 = vpop.permute.xlu0 %1578
      %1580 = vrot.lane.b32.xlu0 %v1502, 28
      %v1581 = vpop.permute.xlu0 %1580
      %1582 = vrot.lane.b32.xlu0 %v1503, 28
      %v1583 = vpop.permute.xlu0 %1582
      %1584 = vrot.lane.b32.xlu0 %v1504, 28
      %v1585 = vpop.permute.xlu0 %1584
      %1586 = vrot.lane.b32.xlu0 %v1505, 28
      %v1587 = vpop.permute.xlu0 %1586
      %1588 = vrot.lane.b32.xlu0 %v1506, 28
      %v1589 = vpop.permute.xlu0 %1588
      %1590 = vrot.lane.b32.xlu0 %v1507, 28
      %v1591 = vpop.permute.xlu0 %1590
      %1592 = vrot.lane.b32.xlu0 %v1508, 28
      %v1593 = vpop.permute.xlu0 %1592
      %1594 = vrot.lane.b32.xlu0 %v1509, 28
      %v1595 = vpop.permute.xlu0 %1594
      %1596 = vrot.lane.b32.xlu0 %v1510, 28
      %v1597 = vpop.permute.xlu0 %1596
      %1598 = vrot.lane.b32.xlu0 %v1511, 28
      %v1599 = vpop.permute.xlu0 %1598
      %1600 = vrot.lane.b32.xlu0 %v1512, 28
      %v1601 = vpop.permute.xlu0 %1600
      %1602 = vrot.lane.b32.xlu0 %v1513, 28
      %v1603 = vpop.permute.xlu0 %1602
      %1604 = vrot.lane.b32.xlu0 %v1514, 28
      %v1605 = vpop.permute.xlu0 %1604
      %1606 = vrot.lane.b32.xlu0 %v1515, 28
      %v1607 = vpop.permute.xlu0 %1606
      %1608 = vrot.lane.b32.xlu0 %v1516, 28
      %v1609 = vpop.permute.xlu0 %1608
      %1610 = vrot.lane.b32.xlu0 %v1517, 28
      %v1611 = vpop.permute.xlu0 %1610
      %1612 = vrot.lane.b32.xlu0 %v1518, 28
      %v1613 = vpop.permute.xlu0 %1612
      %1614 = vrot.lane.b32.xlu0 %v1519, 28
      %v1615 = vpop.permute.xlu0 %1614
      %vm1648 = vcmask 261344
      %1649 = vst.msk [vmem:[#allocation3] sm:$0xff] %vm1648, %v1553
      %1650 = vst.msk [vmem:[#allocation3 + $0x8] sm:$0xff] %vm1648, %v1555
      %1651 = vst.msk [vmem:[#allocation3 + $0x10] sm:$0xff] %vm1648, %v1557
      %1652 = vst.msk [vmem:[#allocation3 + $0x18] sm:$0xff] %vm1648, %v1559
      %1653 = vst.msk [vmem:[#allocation3 + $0x20] sm:$0xff] %vm1648, %v1561
      %1654 = vst.msk [vmem:[#allocation3 + $0x28] sm:$0xff] %vm1648, %v1563
      %1655 = vst.msk [vmem:[#allocation3 + $0x30] sm:$0xff] %vm1648, %v1565
      %1656 = vst.msk [vmem:[#allocation3 + $0x38] sm:$0xff] %vm1648, %v1567
      %1657 = vst.msk [vmem:[#allocation3 + $0x40] sm:$0xff] %vm1648, %v1569
      %1658 = vst.msk [vmem:[#allocation3 + $0x48] sm:$0xff] %vm1648, %v1571
      %1659 = vst.msk [vmem:[#allocation3 + $0x50] sm:$0xff] %vm1648, %v1573
      %1660 = vst.msk [vmem:[#allocation3 + $0x58] sm:$0xff] %vm1648, %v1575
      %1661 = vst.msk [vmem:[#allocation3 + $0x60] sm:$0xff] %vm1648, %v1577
      %1662 = vst.msk [vmem:[#allocation3 + $0x68] sm:$0xff] %vm1648, %v1579
      %1663 = vst.msk [vmem:[#allocation3 + $0x70] sm:$0xff] %vm1648, %v1581
      %1664 = vst.msk [vmem:[#allocation3 + $0x78] sm:$0xff] %vm1648, %v1583
      %1665 = vst.msk [vmem:[#allocation3 + $0x80] sm:$0xff] %vm1648, %v1585
      %1666 = vst.msk [vmem:[#allocation3 + $0x88] sm:$0xff] %vm1648, %v1587
      %1667 = vst.msk [vmem:[#allocation3 + $0x90] sm:$0xff] %vm1648, %v1589
      %1668 = vst.msk [vmem:[#allocation3 + $0x98] sm:$0xff] %vm1648, %v1591
      %1669 = vst.msk [vmem:[#allocation3 + $0xa0] sm:$0xff] %vm1648, %v1593
      %1670 = vst.msk [vmem:[#allocation3 + $0xa8] sm:$0xff] %vm1648, %v1595
      %1671 = vst.msk [vmem:[#allocation3 + $0xb0] sm:$0xff] %vm1648, %v1597
      %1672 = vst.msk [vmem:[#allocation3 + $0xb8] sm:$0xff] %vm1648, %v1599
      %1673 = vst.msk [vmem:[#allocation3 + $0xc0] sm:$0xff] %vm1648, %v1601
      %1674 = vst.msk [vmem:[#allocation3 + $0xc8] sm:$0xff] %vm1648, %v1603
      %1675 = vst.msk [vmem:[#allocation3 + $0xd0] sm:$0xff] %vm1648, %v1605
      %1676 = vst.msk [vmem:[#allocation3 + $0xd8] sm:$0xff] %vm1648, %v1607
      %1677 = vst.msk [vmem:[#allocation3 + $0xe0] sm:$0xff] %vm1648, %v1609
      %1678 = vst.msk [vmem:[#allocation3 + $0xe8] sm:$0xff] %vm1648, %v1611
      %1679 = vst.msk [vmem:[#allocation3 + $0xf0] sm:$0xff] %vm1648, %v1613
      %1680 = vst.msk [vmem:[#allocation3 + $0xf8] sm:$0xff] %vm1648, %v1615
      %v1681 = vld [vmem:[%s1294 + $0x2] sm:$0xff]
      %v1682 = vld [vmem:[%s1294 + $0xa] sm:$0xff]
      %v1683 = vld [vmem:[%s1294 + $0x1a] sm:$0xff]
      %v1684 = vld [vmem:[%s1294 + $0x22] sm:$0xff]
      %v1685 = vld [vmem:[%s1294 + $0x32] sm:$0xff]
      %v1686 = vld [vmem:[%s1294 + $0x3a] sm:$0xff]
      %v1687 = vld [vmem:[%s1294 + $0x4a] sm:$0xff]
      %v1688 = vld [vmem:[%s1294 + $0x52] sm:$0xff]
      %v1689 = vld [vmem:[%s1294 + $0x62] sm:$0xff]
      %v1690 = vld [vmem:[%s1294 + $0x6a] sm:$0xff]
      %v1691 = vld [vmem:[%s1294 + $0x7a] sm:$0xff]
      %v1692 = vld [vmem:[%s1294 + $0x82] sm:$0xff]
      %v1693 = vld [vmem:[%s1294 + $0x92] sm:$0xff]
      %v1694 = vld [vmem:[%s1294 + $0x9a] sm:$0xff]
      %v1695 = vld [vmem:[%s1294 + $0xaa] sm:$0xff]
      %v1696 = vld [vmem:[%s1294 + $0xb2] sm:$0xff]
      %v1697 = vld [vmem:[%s1294 + $0xc2] sm:$0xff]
      %v1698 = vld [vmem:[%s1294 + $0xca] sm:$0xff]
      %v1699 = vld [vmem:[%s1294 + $0xda] sm:$0xff]
      %v1700 = vld [vmem:[%s1294 + $0xe2] sm:$0xff]
      %v1701 = vld [vmem:[%s1294 + $0xf2] sm:$0xff]
      %v1702 = vld [vmem:[%s1294 + $0xfa] sm:$0xff]
      %v1703 = vld [vmem:[%s1294 + $0x10a] sm:$0xff]
      %v1704 = vld [vmem:[%s1294 + $0x112] sm:$0xff]
      %v1705 = vld [vmem:[%s1294 + $0x122] sm:$0xff]
      %v1706 = vld [vmem:[%s1294 + $0x12a] sm:$0xff]
      %v1707 = vld [vmem:[%s1294 + $0x13a] sm:$0xff]
      %v1708 = vld [vmem:[%s1294 + $0x142] sm:$0xff]
      %v1709 = vld [vmem:[%s1294 + $0x152] sm:$0xff]
      %v1710 = vld [vmem:[%s1294 + $0x15a] sm:$0xff]
      %v1711 = vld [vmem:[%s1294 + $0x16a] sm:$0xff]
      %v1712 = vld [vmem:[%s1294 + $0x172] sm:$0xff]
      %1745 = vrot.lane.b32.xlu0 %v1681, 32
      %v1746 = vpop.permute.xlu0 %1745
      %1747 = vrot.lane.b32.xlu0 %v1682, 32
      %v1748 = vpop.permute.xlu0 %1747
      %1749 = vrot.lane.b32.xlu0 %v1683, 32
      %v1750 = vpop.permute.xlu0 %1749
      %1751 = vrot.lane.b32.xlu0 %v1684, 32
      %v1752 = vpop.permute.xlu0 %1751
      %1753 = vrot.lane.b32.xlu0 %v1685, 32
      %v1754 = vpop.permute.xlu0 %1753
      %1755 = vrot.lane.b32.xlu0 %v1686, 32
      %v1756 = vpop.permute.xlu0 %1755
      %1757 = vrot.lane.b32.xlu0 %v1687, 32
      %v1758 = vpop.permute.xlu0 %1757
      %1759 = vrot.lane.b32.xlu0 %v1688, 32
      %v1760 = vpop.permute.xlu0 %1759
      %1761 = vrot.lane.b32.xlu0 %v1689, 32
      %v1762 = vpop.permute.xlu0 %1761
      %1763 = vrot.lane.b32.xlu0 %v1690, 32
      %v1764 = vpop.permute.xlu0 %1763
      %1765 = vrot.lane.b32.xlu0 %v1691, 32
      %v1766 = vpop.permute.xlu0 %1765
      %1767 = vrot.lane.b32.xlu0 %v1692, 32
      %v1768 = vpop.permute.xlu0 %1767
      %1769 = vrot.lane.b32.xlu0 %v1693, 32
      %v1770 = vpop.permute.xlu0 %1769
      %1771 = vrot.lane.b32.xlu0 %v1694, 32
      %v1772 = vpop.permute.xlu0 %1771
      %1773 = vrot.lane.b32.xlu0 %v1695, 32
      %v1774 = vpop.permute.xlu0 %1773
      %1775 = vrot.lane.b32.xlu0 %v1696, 32
      %v1776 = vpop.permute.xlu0 %1775
      %1777 = vrot.lane.b32.xlu0 %v1697, 32
      %v1778 = vpop.permute.xlu0 %1777
      %1779 = vrot.lane.b32.xlu0 %v1698, 32
      %v1780 = vpop.permute.xlu0 %1779
      %1781 = vrot.lane.b32.xlu0 %v1699, 32
      %v1782 = vpop.permute.xlu0 %1781
      %1783 = vrot.lane.b32.xlu0 %v1700, 32
      %v1784 = vpop.permute.xlu0 %1783
      %1785 = vrot.lane.b32.xlu0 %v1701, 32
      %v1786 = vpop.permute.xlu0 %1785
      %1787 = vrot.lane.b32.xlu0 %v1702, 32
      %v1788 = vpop.permute.xlu0 %1787
      %1789 = vrot.lane.b32.xlu0 %v1703, 32
      %v1790 = vpop.permute.xlu0 %1789
      %1791 = vrot.lane.b32.xlu0 %v1704, 32
      %v1792 = vpop.permute.xlu0 %1791
      %1793 = vrot.lane.b32.xlu0 %v1705, 32
      %v1794 = vpop.permute.xlu0 %1793
      %1795 = vrot.lane.b32.xlu0 %v1706, 32
      %v1796 = vpop.permute.xlu0 %1795
      %1797 = vrot.lane.b32.xlu0 %v1707, 32
      %v1798 = vpop.permute.xlu0 %1797
      %1799 = vrot.lane.b32.xlu0 %v1708, 32
      %v1800 = vpop.permute.xlu0 %1799
      %1801 = vrot.lane.b32.xlu0 %v1709, 32
      %v1802 = vpop.permute.xlu0 %1801
      %1803 = vrot.lane.b32.xlu0 %v1710, 32
      %v1804 = vpop.permute.xlu0 %1803
      %1805 = vrot.lane.b32.xlu0 %v1711, 32
      %v1806 = vpop.permute.xlu0 %1805
      %1807 = vrot.lane.b32.xlu0 %v1712, 32
      %v1808 = vpop.permute.xlu0 %1807
      %vm1841 = vcmask 294144
      %1842 = vst.msk [vmem:[#allocation3] sm:$0xff] %vm1841, %v1746
      %1843 = vst.msk [vmem:[#allocation3 + $0x8] sm:$0xff] %vm1841, %v1748
      %1844 = vst.msk [vmem:[#allocation3 + $0x10] sm:$0xff] %vm1841, %v1750
      %1845 = vst.msk [vmem:[#allocation3 + $0x18] sm:$0xff] %vm1841, %v1752
      %1846 = vst.msk [vmem:[#allocation3 + $0x20] sm:$0xff] %vm1841, %v1754
      %1847 = vst.msk [vmem:[#allocation3 + $0x28] sm:$0xff] %vm1841, %v1756
      %1848 = vst.msk [vmem:[#allocation3 + $0x30] sm:$0xff] %vm1841, %v1758
      %1849 = vst.msk [vmem:[#allocation3 + $0x38] sm:$0xff] %vm1841, %v1760
      %1850 = vst.msk [vmem:[#allocation3 + $0x40] sm:$0xff] %vm1841, %v1762
      %1851 = vst.msk [vmem:[#allocation3 + $0x48] sm:$0xff] %vm1841, %v1764
      %1852 = vst.msk [vmem:[#allocation3 + $0x50] sm:$0xff] %vm1841, %v1766
      %1853 = vst.msk [vmem:[#allocation3 + $0x58] sm:$0xff] %vm1841, %v1768
      %1854 = vst.msk [vmem:[#allocation3 + $0x60] sm:$0xff] %vm1841, %v1770
      %1855 = vst.msk [vmem:[#allocation3 + $0x68] sm:$0xff] %vm1841, %v1772
      %1856 = vst.msk [vmem:[#allocation3 + $0x70] sm:$0xff] %vm1841, %v1774
      %1857 = vst.msk [vmem:[#allocation3 + $0x78] sm:$0xff] %vm1841, %v1776
      %1858 = vst.msk [vmem:[#allocation3 + $0x80] sm:$0xff] %vm1841, %v1778
      %1859 = vst.msk [vmem:[#allocation3 + $0x88] sm:$0xff] %vm1841, %v1780
      %1860 = vst.msk [vmem:[#allocation3 + $0x90] sm:$0xff] %vm1841, %v1782
      %1861 = vst.msk [vmem:[#allocation3 + $0x98] sm:$0xff] %vm1841, %v1784
      %1862 = vst.msk [vmem:[#allocation3 + $0xa0] sm:$0xff] %vm1841, %v1786
      %1863 = vst.msk [vmem:[#allocation3 + $0xa8] sm:$0xff] %vm1841, %v1788
      %1864 = vst.msk [vmem:[#allocation3 + $0xb0] sm:$0xff] %vm1841, %v1790
      %1865 = vst.msk [vmem:[#allocation3 + $0xb8] sm:$0xff] %vm1841, %v1792
      %1866 = vst.msk [vmem:[#allocation3 + $0xc0] sm:$0xff] %vm1841, %v1794
      %1867 = vst.msk [vmem:[#allocation3 + $0xc8] sm:$0xff] %vm1841, %v1796
      %1868 = vst.msk [vmem:[#allocation3 + $0xd0] sm:$0xff] %vm1841, %v1798
      %1869 = vst.msk [vmem:[#allocation3 + $0xd8] sm:$0xff] %vm1841, %v1800
      %1870 = vst.msk [vmem:[#allocation3 + $0xe0] sm:$0xff] %vm1841, %v1802
      %1871 = vst.msk [vmem:[#allocation3 + $0xe8] sm:$0xff] %vm1841, %v1804
      %1872 = vst.msk [vmem:[#allocation3 + $0xf0] sm:$0xff] %vm1841, %v1806
      %1873 = vst.msk [vmem:[#allocation3 + $0xf8] sm:$0xff] %vm1841, %v1808
      %v1874 = vld [vmem:[#allocation3] sm:$0xff]
      %v1875 = vld [vmem:[#allocation3 + $0x8] sm:$0xff]
      %v1876 = vld [vmem:[#allocation3 + $0x10] sm:$0xff]
      %v1877 = vld [vmem:[#allocation3 + $0x18] sm:$0xff]
      %v1878 = vld [vmem:[#allocation3 + $0x20] sm:$0xff]
      %v1879 = vld [vmem:[#allocation3 + $0x28] sm:$0xff]
      %v1880 = vld [vmem:[#allocation3 + $0x30] sm:$0xff]
      %v1881 = vld [vmem:[#allocation3 + $0x38] sm:$0xff]
      %v1882 = vld [vmem:[#allocation3 + $0x40] sm:$0xff]
      %v1883 = vld [vmem:[#allocation3 + $0x48] sm:$0xff]
      %v1884 = vld [vmem:[#allocation3 + $0x50] sm:$0xff]
      %v1885 = vld [vmem:[#allocation3 + $0x58] sm:$0xff]
      %v1886 = vld [vmem:[#allocation3 + $0x60] sm:$0xff]
      %v1887 = vld [vmem:[#allocation3 + $0x68] sm:$0xff]
      %v1888 = vld [vmem:[#allocation3 + $0x70] sm:$0xff]
      %v1889 = vld [vmem:[#allocation3 + $0x78] sm:$0xff]
      %v1890 = vld [vmem:[#allocation3 + $0x80] sm:$0xff]
      %v1891 = vld [vmem:[#allocation3 + $0x88] sm:$0xff]
      %v1892 = vld [vmem:[#allocation3 + $0x90] sm:$0xff]
      %v1893 = vld [vmem:[#allocation3 + $0x98] sm:$0xff]
      %v1894 = vld [vmem:[#allocation3 + $0xa0] sm:$0xff]
      %v1895 = vld [vmem:[#allocation3 + $0xa8] sm:$0xff]
      %v1896 = vld [vmem:[#allocation3 + $0xb0] sm:$0xff]
      %v1897 = vld [vmem:[#allocation3 + $0xb8] sm:$0xff]
      %v1898 = vld [vmem:[#allocation3 + $0xc0] sm:$0xff]
      %v1899 = vld [vmem:[#allocation3 + $0xc8] sm:$0xff]
      %v1900 = vld [vmem:[#allocation3 + $0xd0] sm:$0xff]
      %v1901 = vld [vmem:[#allocation3 + $0xd8] sm:$0xff]
      %v1902 = vld [vmem:[#allocation3 + $0xe0] sm:$0xff]
      %v1903 = vld [vmem:[#allocation3 + $0xe8] sm:$0xff]
      %v1904 = vld [vmem:[#allocation3 + $0xf0] sm:$0xff]
      %v1905 = vld [vmem:[#allocation3 + $0xf8] sm:$0xff]
      %v1906 = vld [vmem:[%s1] sm:$0xff]
      %v1907 = vld [vmem:[%s1 + $0x8] sm:$0xff]
      %v1908 = vld [vmem:[%s1 + $0x10] sm:$0xff]
      %v1909 = vld [vmem:[%s1 + $0x18] sm:$0xff]
      %v1910 = vld [vmem:[%s1 + $0x20] sm:$0xf]
      %vm1911 = vcmask 293888
      %v1913 = vsel %vm1911, %v1874, 0
      %v1916 = vsel %vm1911, %v1875, 0
      %v1919 = vsel %vm1911, %v1876, 0
      %v1922 = vsel %vm1911, %v1877, 0
      %v1925 = vsel %vm1911, %v1878, 0
      %v1928 = vsel %vm1911, %v1879, 0
      %v1931 = vsel %vm1911, %v1880, 0
      %v1934 = vsel %vm1911, %v1881, 0
      %v1937 = vsel %vm1911, %v1882, 0
      %v1940 = vsel %vm1911, %v1883, 0
      %v1943 = vsel %vm1911, %v1884, 0
      %v1946 = vsel %vm1911, %v1885, 0
      %v1949 = vsel %vm1911, %v1886, 0
      %v1952 = vsel %vm1911, %v1887, 0
      %v1955 = vsel %vm1911, %v1888, 0
      %v1958 = vsel %vm1911, %v1889, 0
      %v1961 = vsel %vm1911, %v1890, 0
      %v1964 = vsel %vm1911, %v1891, 0
      %v1967 = vsel %vm1911, %v1892, 0
      %v1970 = vsel %vm1911, %v1893, 0
      %v1973 = vsel %vm1911, %v1894, 0
      %v1976 = vsel %vm1911, %v1895, 0
      %v1979 = vsel %vm1911, %v1896, 0
      %v1982 = vsel %vm1911, %v1897, 0
      %v1985 = vsel %vm1911, %v1898, 0
      %v1988 = vsel %vm1911, %v1899, 0
      %v1991 = vsel %vm1911, %v1900, 0
      %v1994 = vsel %vm1911, %v1901, 0
      %v1997 = vsel %vm1911, %v1902, 0
      %v2000 = vsel %vm1911, %v1903, 0
      %v2003 = vsel %vm1911, %v1904, 0
      %v2006 = vsel %vm1911, %v1905, 0
      %vm2008 = vcmask 1043456
      %v2010 = vsel %vm2008, %v1910, 0
      %2012 = vmatprep.subr.mxu0 0.0
      %2013 = vmatpush1.msra.mxu0 %v1906
      %2014 = vmatprep.subr.mxu0 0.0
      %2015 = vmatpush1.msra.mxu0 %v1907
      %2016 = vmatprep.subr.mxu0 0.0
      %2017 = vmatpush1.msra.mxu0 %v1908
      %2018 = vmatprep.subr.mxu0 0.0
      %2019 = vmatpush1.msra.mxu0 %v1909
      %2020 = vmatprep.subr.mxu0 0.0
      %2021 = vmatpush1.msra.mxu0 %v2010
      %2022 = vmatprep.subr.mxu0 0.0
      %2023 = vmatpush1.msra.mxu0 0.0
      %2024 = vmatprep.subr.mxu0 0.0
      %2025 = vmatpush1.msra.mxu0 0.0
      %2026 = vmatprep.subr.mxu0 0.0
      %2027 = vmatpush1.msra.mxu0 0.0
      %2028 = vmatprep.subr.mxu0 0.0
      %2029 = vmatpush1.msra.mxu0 0.0
      %2030 = vmatprep.subr.mxu0 0.0
      %2031 = vmatpush1.msra.mxu0 0.0
      %2032 = vmatprep.subr.mxu0 0.0
      %2033 = vmatpush1.msra.mxu0 0.0
      %2034 = vmatprep.subr.mxu0 0.0
      %2035 = vmatpush1.msra.mxu0 0.0
      %2036 = vmatprep.subr.mxu0 0.0
      %2037 = vmatpush1.msra.mxu0 0.0
      %2038 = vmatprep.subr.mxu0 0.0
      %2039 = vmatpush1.msra.mxu0 0.0
      %2040 = vmatprep.subr.mxu0 0.0
      %2041 = vmatpush1.msra.mxu0 0.0
      %2042 = vmatprep.subr.mxu0 0.0
      %2043 = vmatpush1.msra.mxu0 0.0
      %2044 = vmatprep.subr.mxu0 0.0
      %2045 = vmatpush1.msra.mxu0 0.0
      %2046 = vmatprep.subr.mxu0 0.0
      %2047 = vmatpush1.msra.mxu0 0.0
      %2048 = vmatprep.subr.mxu0 0.0
      %2049 = vmatpush1.msra.mxu0 0.0
      %2050 = vmatprep.subr.mxu0 0.0
      %2051 = vmatpush1.msra.mxu0 0.0
      %2052 = vmatprep.subr.mxu0 0.0
      %2053 = vmatpush1.msra.mxu0 0.0
      %2054 = vmatprep.subr.mxu0 0.0
      %2055 = vmatpush1.msra.mxu0 0.0
      %2056 = vmatprep.subr.mxu0 0.0
      %2057 = vmatpush1.msra.mxu0 0.0
      %2058 = vmatprep.subr.mxu0 0.0
      %2059 = vmatpush1.msra.mxu0 0.0
      %2060 = vmatprep.subr.mxu0 0.0
      %2061 = vmatpush1.msra.mxu0 0.0
      %2062 = vmatprep.subr.mxu0 0.0
      %2063 = vmatpush1.msra.mxu0 0.0
      %2064 = vmatprep.subr.mxu0 0.0
      %2065 = vmatpush1.msra.mxu0 0.0
      %2066 = vmatprep.subr.mxu0 0.0
      %2067 = vmatpush1.msra.mxu0 0.0
      %2068 = vmatprep.subr.mxu0 0.0
      %2069 = vmatpush1.msra.mxu0 0.0
      %2070 = vmatprep.subr.mxu0 0.0
      %2071 = vmatpush1.msra.mxu0 0.0
      %2072 = vmatprep.subr.mxu0 0.0
      %2073 = vmatpush1.msra.mxu0 0.0
      %2074 = vmatprep.subr.mxu0 0.0
      %2075 = vmatpush1.msra.mxu0 0.0
      %2076 = vmatprep.mubr.f32.mxu0 0.0
      %2077 = vmatmul.mubr.f32.gmra.mrb[0].mxu0 %v1913
      %v2078 = vpop.f32.mrb[0].mxu0
      %v2079 = vadd.f32 0.0, %v2078
      %v2080 = vpop.f32.mrb[0].mxu0
      %2081 = vmatprep.mubr.f32.mxu0 0.0
      %2082 = vmatmul.mubr.f32.gmra.mrb[0].mxu0 %v1916
      %v2083 = vpop.f32.mrb[0].mxu0
      %v2084 = vadd.f32 0.0, %v2083
      %v2085 = vpop.f32.mrb[0].mxu0
      %2086 = vmatprep.mubr.f32.mxu0 0.0
      %2087 = vmatmul.mubr.f32.gmra.mrb[0].mxu0 %v1919
      %v2088 = vpop.f32.mrb[0].mxu0
      %v2089 = vadd.f32 0.0, %v2088
      %v2090 = vpop.f32.mrb[0].mxu0
      %2091 = vmatprep.mubr.f32.mxu0 0.0
      %2092 = vmatmul.mubr.f32.gmra.mrb[0].mxu0 %v1922
      %v2093 = vpop.f32.mrb[0].mxu0
      %v2094 = vadd.f32 0.0, %v2093
      %v2095 = vpop.f32.mrb[0].mxu0
      %2096 = vmatprep.mubr.f32.mxu0 0.0
      %2097 = vmatmul.mubr.f32.gmra.mrb[0].mxu0 %v1925
      %v2098 = vpop.f32.mrb[0].mxu0
      %v2099 = vadd.f32 0.0, %v2098
      %v2100 = vpop.f32.mrb[0].mxu0
      %2101 = vmatprep.mubr.f32.mxu0 0.0
      %2102 = vmatmul.mubr.f32.gmra.mrb[0].mxu0 %v1928
      %v2103 = vpop.f32.mrb[0].mxu0
      %v2104 = vadd.f32 0.0, %v2103
      %v2105 = vpop.f32.mrb[0].mxu0
      %2106 = vmatprep.mubr.f32.mxu0 0.0
      %2107 = vmatmul.mubr.f32.gmra.mrb[0].mxu0 %v1931
      %v2108 = vpop.f32.mrb[0].mxu0
      %v2109 = vadd.f32 0.0, %v2108
      %v2110 = vpop.f32.mrb[0].mxu0
      %2111 = vmatprep.mubr.f32.mxu0 0.0
      %2112 = vmatmul.mubr.f32.gmra.mrb[0].mxu0 %v1934
      %v2113 = vpop.f32.mrb[0].mxu0
      %v2114 = vadd.f32 0.0, %v2113
      %v2115 = vpop.f32.mrb[0].mxu0
      %2116 = vmatprep.mubr.f32.mxu0 0.0
      %2117 = vmatmul.mubr.f32.gmra.mrb[0].mxu0 %v1937
      %v2118 = vpop.f32.mrb[0].mxu0
      %v2119 = vadd.f32 0.0, %v2118
      %v2120 = vpop.f32.mrb[0].mxu0
      %2121 = vmatprep.mubr.f32.mxu0 0.0
      %2122 = vmatmul.mubr.f32.gmra.mrb[0].mxu0 %v1940
      %v2123 = vpop.f32.mrb[0].mxu0
      %v2124 = vadd.f32 0.0, %v2123
      %v2125 = vpop.f32.mrb[0].mxu0
      %2126 = vmatprep.mubr.f32.mxu0 0.0
      %2127 = vmatmul.mubr.f32.gmra.mrb[0].mxu0 %v1943
      %v2128 = vpop.f32.mrb[0].mxu0
      %v2129 = vadd.f32 0.0, %v2128
      %v2130 = vpop.f32.mrb[0].mxu0
      %2131 = vmatprep.mubr.f32.mxu0 0.0
      %2132 = vmatmul.mubr.f32.gmra.mrb[0].mxu0 %v1946
      %v2133 = vpop.f32.mrb[0].mxu0
      %v2134 = vadd.f32 0.0, %v2133
      %v2135 = vpop.f32.mrb[0].mxu0
      %2136 = vmatprep.mubr.f32.mxu0 0.0
      %2137 = vmatmul.mubr.f32.gmra.mrb[0].mxu0 %v1949
      %v2138 = vpop.f32.mrb[0].mxu0
      %v2139 = vadd.f32 0.0, %v2138
      %v2140 = vpop.f32.mrb[0].mxu0
      %2141 = vmatprep.mubr.f32.mxu0 0.0
      %2142 = vmatmul.mubr.f32.gmra.mrb[0].mxu0 %v1952
      %v2143 = vpop.f32.mrb[0].mxu0
      %v2144 = vadd.f32 0.0, %v2143
      %v2145 = vpop.f32.mrb[0].mxu0
      %2146 = vmatprep.mubr.f32.mxu0 0.0
      %2147 = vmatmul.mubr.f32.gmra.mrb[0].mxu0 %v1955
      %v2148 = vpop.f32.mrb[0].mxu0
      %v2149 = vadd.f32 0.0, %v2148
      %v2150 = vpop.f32.mrb[0].mxu0
      %2151 = vmatprep.mubr.f32.mxu0 0.0
      %2152 = vmatmul.mubr.f32.gmra.mrb[0].mxu0 %v1958
      %v2153 = vpop.f32.mrb[0].mxu0
      %v2154 = vadd.f32 0.0, %v2153
      %v2155 = vpop.f32.mrb[0].mxu0
      %2156 = vmatprep.mubr.f32.mxu0 0.0
      %2157 = vmatmul.mubr.f32.gmra.mrb[0].mxu0 %v1961
      %v2158 = vpop.f32.mrb[0].mxu0
      %v2159 = vadd.f32 0.0, %v2158
      %v2160 = vpop.f32.mrb[0].mxu0
      %2161 = vmatprep.mubr.f32.mxu0 0.0
      %2162 = vmatmul.mubr.f32.gmra.mrb[0].mxu0 %v1964
      %v2163 = vpop.f32.mrb[0].mxu0
      %v2164 = vadd.f32 0.0, %v2163
      %v2165 = vpop.f32.mrb[0].mxu0
      %2166 = vmatprep.mubr.f32.mxu0 0.0
      %2167 = vmatmul.mubr.f32.gmra.mrb[0].mxu0 %v1967
      %v2168 = vpop.f32.mrb[0].mxu0
      %v2169 = vadd.f32 0.0, %v2168
      %v2170 = vpop.f32.mrb[0].mxu0
      %2171 = vmatprep.mubr.f32.mxu0 0.0
      %2172 = vmatmul.mubr.f32.gmra.mrb[0].mxu0 %v1970
      %v2173 = vpop.f32.mrb[0].mxu0
      %v2174 = vadd.f32 0.0, %v2173
      %v2175 = vpop.f32.mrb[0].mxu0
      %2176 = vmatprep.mubr.f32.mxu0 0.0
      %2177 = vmatmul.mubr.f32.gmra.mrb[0].mxu0 %v1973
      %v2178 = vpop.f32.mrb[0].mxu0
      %v2179 = vadd.f32 0.0, %v2178
      %v2180 = vpop.f32.mrb[0].mxu0
      %2181 = vmatprep.mubr.f32.mxu0 0.0
      %2182 = vmatmul.mubr.f32.gmra.mrb[0].mxu0 %v1976
      %v2183 = vpop.f32.mrb[0].mxu0
      %v2184 = vadd.f32 0.0, %v2183
      %v2185 = vpop.f32.mrb[0].mxu0
      %2186 = vmatprep.mubr.f32.mxu0 0.0
      %2187 = vmatmul.mubr.f32.gmra.mrb[0].mxu0 %v1979
      %v2188 = vpop.f32.mrb[0].mxu0
      %v2189 = vadd.f32 0.0, %v2188
      %v2190 = vpop.f32.mrb[0].mxu0
      %2191 = vmatprep.mubr.f32.mxu0 0.0
      %2192 = vmatmul.mubr.f32.gmra.mrb[0].mxu0 %v1982
      %v2193 = vpop.f32.mrb[0].mxu0
      %v2194 = vadd.f32 0.0, %v2193
      %v2195 = vpop.f32.mrb[0].mxu0
      %2196 = vmatprep.mubr.f32.mxu0 0.0
      %2197 = vmatmul.mubr.f32.gmra.mrb[0].mxu0 %v1985
      %v2198 = vpop.f32.mrb[0].mxu0
      %v2199 = vadd.f32 0.0, %v2198
      %v2200 = vpop.f32.mrb[0].mxu0
      %2201 = vmatprep.mubr.f32.mxu0 0.0
      %2202 = vmatmul.mubr.f32.gmra.mrb[0].mxu0 %v1988
      %v2203 = vpop.f32.mrb[0].mxu0
      %v2204 = vadd.f32 0.0, %v2203
      %v2205 = vpop.f32.mrb[0].mxu0
      %2206 = vmatprep.mubr.f32.mxu0 0.0
      %2207 = vmatmul.mubr.f32.gmra.mrb[0].mxu0 %v1991
      %v2208 = vpop.f32.mrb[0].mxu0
      %v2209 = vadd.f32 0.0, %v2208
      %v2210 = vpop.f32.mrb[0].mxu0
      %2211 = vmatprep.mubr.f32.mxu0 0.0
      %2212 = vmatmul.mubr.f32.gmra.mrb[0].mxu0 %v1994
      %v2213 = vpop.f32.mrb[0].mxu0
      %v2214 = vadd.f32 0.0, %v2213
      %v2215 = vpop.f32.mrb[0].mxu0
      %2216 = vmatprep.mubr.f32.mxu0 0.0
      %2217 = vmatmul.mubr.f32.gmra.mrb[0].mxu0 %v1997
      %v2218 = vpop.f32.mrb[0].mxu0
      %v2219 = vadd.f32 0.0, %v2218
      %v2220 = vpop.f32.mrb[0].mxu0
      %2221 = vmatprep.mubr.f32.mxu0 0.0
      %2222 = vmatmul.mubr.f32.gmra.mrb[0].mxu0 %v2000
      %v2223 = vpop.f32.mrb[0].mxu0
      %v2224 = vadd.f32 0.0, %v2223
      %v2225 = vpop.f32.mrb[0].mxu0
      %2226 = vmatprep.mubr.f32.mxu0 0.0
      %2227 = vmatmul.mubr.f32.gmra.mrb[0].mxu0 %v2003
      %v2228 = vpop.f32.mrb[0].mxu0
      %v2229 = vadd.f32 0.0, %v2228
      %v2230 = vpop.f32.mrb[0].mxu0
      %2231 = vmatprep.mubr.f32.mxu0 0.0
      %2232 = vmatmul.mubr.f32.gmra.mrb[0].mxu0 %v2006
      %v2233 = vpop.f32.mrb[0].mxu0
      %v2234 = vadd.f32 0.0, %v2233
      %v2235 = vpop.f32.mrb[0].mxu0
      %2236 = vdwg.mxu0
      %v2237 = vmax.f32 %v2079, 0.0
      %v2238 = vmax.f32 %v2084, 0.0
      %v2239 = vmax.f32 %v2089, 0.0
      %v2240 = vmax.f32 %v2094, 0.0
      %v2241 = vmax.f32 %v2099, 0.0
      %v2242 = vmax.f32 %v2104, 0.0
      %v2243 = vmax.f32 %v2109, 0.0
      %v2244 = vmax.f32 %v2114, 0.0
      %v2245 = vmax.f32 %v2119, 0.0
      %v2246 = vmax.f32 %v2124, 0.0
      %v2247 = vmax.f32 %v2129, 0.0
      %v2248 = vmax.f32 %v2134, 0.0
      %v2249 = vmax.f32 %v2139, 0.0
      %v2250 = vmax.f32 %v2144, 0.0
      %v2251 = vmax.f32 %v2149, 0.0
      %v2252 = vmax.f32 %v2154, 0.0
      %v2253 = vmax.f32 %v2159, 0.0
      %v2254 = vmax.f32 %v2164, 0.0
      %v2255 = vmax.f32 %v2169, 0.0
      %v2256 = vmax.f32 %v2174, 0.0
      %v2257 = vmax.f32 %v2179, 0.0
      %v2258 = vmax.f32 %v2184, 0.0
      %v2259 = vmax.f32 %v2189, 0.0
      %v2260 = vmax.f32 %v2194, 0.0
      %v2261 = vmax.f32 %v2199, 0.0
      %v2262 = vmax.f32 %v2204, 0.0
      %v2263 = vmax.f32 %v2209, 0.0
      %v2264 = vmax.f32 %v2214, 0.0
      %v2265 = vmax.f32 %v2219, 0.0
      %v2266 = vmax.f32 %v2224, 0.0
      %v2267 = vmax.f32 %v2229, 0.0
      %v2268 = vmax.f32 %v2234, 0.0
      %2269 = vst.msk [vmem:[%s232 + $0x1] sm:$0xff] %vm144, %v2237
      %2270 = vst.msk [vmem:[%s232 + $0x9] sm:$0xff] %vm144, %v2238
      %2271 = vst.msk [vmem:[%s232 + $0x19] sm:$0xff] %vm144, %v2239
      %2272 = vst.msk [vmem:[%s232 + $0x21] sm:$0xff] %vm144, %v2240
      %2273 = vst.msk [vmem:[%s232 + $0x31] sm:$0xff] %vm144, %v2241
      %2274 = vst.msk [vmem:[%s232 + $0x39] sm:$0xff] %vm144, %v2242
      %2275 = vst.msk [vmem:[%s232 + $0x49] sm:$0xff] %vm144, %v2243
      %2276 = vst.msk [vmem:[%s232 + $0x51] sm:$0xff] %vm144, %v2244
      %2277 = vst.msk [vmem:[%s232 + $0x61] sm:$0xff] %vm144, %v2245
      %2278 = vst.msk [vmem:[%s232 + $0x69] sm:$0xff] %vm144, %v2246
      %2279 = vst.msk [vmem:[%s232 + $0x79] sm:$0xff] %vm144, %v2247
      %2280 = vst.msk [vmem:[%s232 + $0x81] sm:$0xff] %vm144, %v2248
      %2281 = vst.msk [vmem:[%s232 + $0x91] sm:$0xff] %vm144, %v2249
      %2282 = vst.msk [vmem:[%s232 + $0x99] sm:$0xff] %vm144, %v2250
      %2283 = vst.msk [vmem:[%s232 + $0xa9] sm:$0xff] %vm144, %v2251
      %2284 = vst.msk [vmem:[%s232 + $0xb1] sm:$0xff] %vm144, %v2252
      %2285 = vst.msk [vmem:[%s232 + $0xc1] sm:$0xff] %vm144, %v2253
      %2286 = vst.msk [vmem:[%s232 + $0xc9] sm:$0xff] %vm144, %v2254
      %2287 = vst.msk [vmem:[%s232 + $0xd9] sm:$0xff] %vm144, %v2255
      %2288 = vst.msk [vmem:[%s232 + $0xe1] sm:$0xff] %vm144, %v2256
      %2289 = vst.msk [vmem:[%s232 + $0xf1] sm:$0xff] %vm144, %v2257
      %2290 = vst.msk [vmem:[%s232 + $0xf9] sm:$0xff] %vm144, %v2258
      %2291 = vst.msk [vmem:[%s232 + $0x109] sm:$0xff] %vm144, %v2259
      %2292 = vst.msk [vmem:[%s232 + $0x111] sm:$0xff] %vm144, %v2260
      %2293 = vst.msk [vmem:[%s232 + $0x121] sm:$0xff] %vm144, %v2261
      %2294 = vst.msk [vmem:[%s232 + $0x129] sm:$0xff] %vm144, %v2262
      %2295 = vst.msk [vmem:[%s232 + $0x139] sm:$0xff] %vm144, %v2263
      %2296 = vst.msk [vmem:[%s232 + $0x141] sm:$0xff] %vm144, %v2264
      %2297 = vst.msk [vmem:[%s232 + $0x151] sm:$0xff] %vm144, %v2265
      %2298 = vst.msk [vmem:[%s232 + $0x159] sm:$0xff] %vm144, %v2266
      %2299 = vst.msk [vmem:[%s232 + $0x169] sm:$0xff] %vm144, %v2267
      %2300 = vst.msk [vmem:[%s232 + $0x171] sm:$0xff] %vm144, %v2268
      %v2301 = vld [vmem:[#allocation2] sm:$0xff]
      %v2302 = vld [vmem:[#allocation2 + $0x8] sm:$0xff]
      %v2303 = vld [vmem:[#allocation2 + $0x18] sm:$0xff]
      %v2304 = vld [vmem:[#allocation2 + $0x20] sm:$0xff]
      %v2305 = vld [vmem:[#allocation2 + $0x30] sm:$0xff]
      %v2306 = vld [vmem:[#allocation2 + $0x38] sm:$0xff]
      %v2307 = vld [vmem:[#allocation2 + $0x48] sm:$0xff]
      %v2308 = vld [vmem:[#allocation2 + $0x50] sm:$0xff]
      %v2309 = vld [vmem:[#allocation2 + $0x60] sm:$0xff]
      %v2310 = vld [vmem:[#allocation2 + $0x68] sm:$0xff]
      %v2311 = vld [vmem:[#allocation2 + $0x78] sm:$0xff]
      %v2312 = vld [vmem:[#allocation2 + $0x80] sm:$0xff]
      %v2313 = vld [vmem:[#allocation2 + $0x90] sm:$0xff]
      %v2314 = vld [vmem:[#allocation2 + $0x98] sm:$0xff]
      %v2315 = vld [vmem:[#allocation2 + $0xa8] sm:$0xff]
      %v2316 = vld [vmem:[#allocation2 + $0xb0] sm:$0xff]
      %v2317 = vld [vmem:[#allocation2 + $0xc0] sm:$0xff]
      %v2318 = vld [vmem:[#allocation2 + $0xc8] sm:$0xff]
      %v2319 = vld [vmem:[#allocation2 + $0xd8] sm:$0xff]
      %v2320 = vld [vmem:[#allocation2 + $0xe0] sm:$0xff]
      %v2321 = vld [vmem:[#allocation2 + $0xf0] sm:$0xff]
      %v2322 = vld [vmem:[#allocation2 + $0xf8] sm:$0xff]
      %v2323 = vld [vmem:[#allocation2 + $0x108] sm:$0xff]
      %v2324 = vld [vmem:[#allocation2 + $0x110] sm:$0xff]
      %v2325 = vld [vmem:[#allocation2 + $0x120] sm:$0xff]
      %v2326 = vld [vmem:[#allocation2 + $0x128] sm:$0xff]
      %v2327 = vld [vmem:[#allocation2 + $0x138] sm:$0xff]
      %v2328 = vld [vmem:[#allocation2 + $0x140] sm:$0xff]
      %v2329 = vld [vmem:[#allocation2 + $0x150] sm:$0xff]
      %v2330 = vld [vmem:[#allocation2 + $0x158] sm:$0xff]
      %v2331 = vld [vmem:[#allocation2 + $0x168] sm:$0xff]
      %v2332 = vld [vmem:[#allocation2 + $0x170] sm:$0xff]
      %2333 = vst.msk [vmem:[#allocation3] sm:$0xff] %vm144, %v2301
      %2334 = vst.msk [vmem:[#allocation3 + $0x8] sm:$0xff] %vm144, %v2302
      %2335 = vst.msk [vmem:[#allocation3 + $0x10] sm:$0xff] %vm144, %v2303
      %2336 = vst.msk [vmem:[#allocation3 + $0x18] sm:$0xff] %vm144, %v2304
      %2337 = vst.msk [vmem:[#allocation3 + $0x20] sm:$0xff] %vm144, %v2305
      %2338 = vst.msk [vmem:[#allocation3 + $0x28] sm:$0xff] %vm144, %v2306
      %2339 = vst.msk [vmem:[#allocation3 + $0x30] sm:$0xff] %vm144, %v2307
      %2340 = vst.msk [vmem:[#allocation3 + $0x38] sm:$0xff] %vm144, %v2308
      %2341 = vst.msk [vmem:[#allocation3 + $0x40] sm:$0xff] %vm144, %v2309
      %2342 = vst.msk [vmem:[#allocation3 + $0x48] sm:$0xff] %vm144, %v2310
      %2343 = vst.msk [vmem:[#allocation3 + $0x50] sm:$0xff] %vm144, %v2311
      %2344 = vst.msk [vmem:[#allocation3 + $0x58] sm:$0xff] %vm144, %v2312
      %2345 = vst.msk [vmem:[#allocation3 + $0x60] sm:$0xff] %vm144, %v2313
      %2346 = vst.msk [vmem:[#allocation3 + $0x68] sm:$0xff] %vm144, %v2314
      %2347 = vst.msk [vmem:[#allocation3 + $0x70] sm:$0xff] %vm144, %v2315
      %2348 = vst.msk [vmem:[#allocation3 + $0x78] sm:$0xff] %vm144, %v2316
      %2349 = vst.msk [vmem:[#allocation3 + $0x80] sm:$0xff] %vm144, %v2317
      %2350 = vst.msk [vmem:[#allocation3 + $0x88] sm:$0xff] %vm144, %v2318
      %2351 = vst.msk [vmem:[#allocation3 + $0x90] sm:$0xff] %vm144, %v2319
      %2352 = vst.msk [vmem:[#allocation3 + $0x98] sm:$0xff] %vm144, %v2320
      %2353 = vst.msk [vmem:[#allocation3 + $0xa0] sm:$0xff] %vm144, %v2321
      %2354 = vst.msk [vmem:[#allocation3 + $0xa8] sm:$0xff] %vm144, %v2322
      %2355 = vst.msk [vmem:[#allocation3 + $0xb0] sm:$0xff] %vm144, %v2323
      %2356 = vst.msk [vmem:[#allocation3 + $0xb8] sm:$0xff] %vm144, %v2324
      %2357 = vst.msk [vmem:[#allocation3 + $0xc0] sm:$0xff] %vm144, %v2325
      %2358 = vst.msk [vmem:[#allocation3 + $0xc8] sm:$0xff] %vm144, %v2326
      %2359 = vst.msk [vmem:[#allocation3 + $0xd0] sm:$0xff] %vm144, %v2327
      %2360 = vst.msk [vmem:[#allocation3 + $0xd8] sm:$0xff] %vm144, %v2328
      %2361 = vst.msk [vmem:[#allocation3 + $0xe0] sm:$0xff] %vm144, %v2329
      %2362 = vst.msk [vmem:[#allocation3 + $0xe8] sm:$0xff] %vm144, %v2330
      %2363 = vst.msk [vmem:[#allocation3 + $0xf0] sm:$0xff] %vm144, %v2331
      %2364 = vst.msk [vmem:[#allocation3 + $0xf8] sm:$0xff] %vm144, %v2332
      %v2365 = vld [vmem:[#allocation2 + $0x1] sm:$0xff]
      %v2366 = vld [vmem:[#allocation2 + $0x9] sm:$0xff]
      %v2367 = vld [vmem:[#allocation2 + $0x19] sm:$0xff]
      %v2368 = vld [vmem:[#allocation2 + $0x21] sm:$0xff]
      %v2369 = vld [vmem:[#allocation2 + $0x31] sm:$0xff]
      %v2370 = vld [vmem:[#allocation2 + $0x39] sm:$0xff]
      %v2371 = vld [vmem:[#allocation2 + $0x49] sm:$0xff]
      %v2372 = vld [vmem:[#allocation2 + $0x51] sm:$0xff]
      %v2373 = vld [vmem:[#allocation2 + $0x61] sm:$0xff]
      %v2374 = vld [vmem:[#allocation2 + $0x69] sm:$0xff]
      %v2375 = vld [vmem:[#allocation2 + $0x79] sm:$0xff]
      %v2376 = vld [vmem:[#allocation2 + $0x81] sm:$0xff]
      %v2377 = vld [vmem:[#allocation2 + $0x91] sm:$0xff]
      %v2378 = vld [vmem:[#allocation2 + $0x99] sm:$0xff]
      %v2379 = vld [vmem:[#allocation2 + $0xa9] sm:$0xff]
      %v2380 = vld [vmem:[#allocation2 + $0xb1] sm:$0xff]
      %v2381 = vld [vmem:[#allocation2 + $0xc1] sm:$0xff]
      %v2382 = vld [vmem:[#allocation2 + $0xc9] sm:$0xff]
      %v2383 = vld [vmem:[#allocation2 + $0xd9] sm:$0xff]
      %v2384 = vld [vmem:[#allocation2 + $0xe1] sm:$0xff]
      %v2385 = vld [vmem:[#allocation2 + $0xf1] sm:$0xff]
      %v2386 = vld [vmem:[#allocation2 + $0xf9] sm:$0xff]
      %v2387 = vld [vmem:[#allocation2 + $0x109] sm:$0xff]
      %v2388 = vld [vmem:[#allocation2 + $0x111] sm:$0xff]
      %v2389 = vld [vmem:[#allocation2 + $0x121] sm:$0xff]
      %v2390 = vld [vmem:[#allocation2 + $0x129] sm:$0xff]
      %v2391 = vld [vmem:[#allocation2 + $0x139] sm:$0xff]
      %v2392 = vld [vmem:[#allocation2 + $0x141] sm:$0xff]
      %v2393 = vld [vmem:[#allocation2 + $0x151] sm:$0xff]
      %v2394 = vld [vmem:[#allocation2 + $0x159] sm:$0xff]
      %v2395 = vld [vmem:[#allocation2 + $0x169] sm:$0xff]
      %v2396 = vld [vmem:[#allocation2 + $0x171] sm:$0xff]
      %2429 = vrot.lane.b32.xlu0 %v2365, 4
      %v2430 = vpop.permute.xlu0 %2429
      %2431 = vrot.lane.b32.xlu0 %v2366, 4
      %v2432 = vpop.permute.xlu0 %2431
      %2433 = vrot.lane.b32.xlu0 %v2367, 4
      %v2434 = vpop.permute.xlu0 %2433
      %2435 = vrot.lane.b32.xlu0 %v2368, 4
      %v2436 = vpop.permute.xlu0 %2435
      %2437 = vrot.lane.b32.xlu0 %v2369, 4
      %v2438 = vpop.permute.xlu0 %2437
      %2439 = vrot.lane.b32.xlu0 %v2370, 4
      %v2440 = vpop.permute.xlu0 %2439
      %2441 = vrot.lane.b32.xlu0 %v2371, 4
      %v2442 = vpop.permute.xlu0 %2441
      %2443 = vrot.lane.b32.xlu0 %v2372, 4
      %v2444 = vpop.permute.xlu0 %2443
      %2445 = vrot.lane.b32.xlu0 %v2373, 4
      %v2446 = vpop.permute.xlu0 %2445
      %2447 = vrot.lane.b32.xlu0 %v2374, 4
      %v2448 = vpop.permute.xlu0 %2447
      %2449 = vrot.lane.b32.xlu0 %v2375, 4
      %v2450 = vpop.permute.xlu0 %2449
      %2451 = vrot.lane.b32.xlu0 %v2376, 4
      %v2452 = vpop.permute.xlu0 %2451
      %2453 = vrot.lane.b32.xlu0 %v2377, 4
      %v2454 = vpop.permute.xlu0 %2453
      %2455 = vrot.lane.b32.xlu0 %v2378, 4
      %v2456 = vpop.permute.xlu0 %2455
      %2457 = vrot.lane.b32.xlu0 %v2379, 4
      %v2458 = vpop.permute.xlu0 %2457
      %2459 = vrot.lane.b32.xlu0 %v2380, 4
      %v2460 = vpop.permute.xlu0 %2459
      %2461 = vrot.lane.b32.xlu0 %v2381, 4
      %v2462 = vpop.permute.xlu0 %2461
      %2463 = vrot.lane.b32.xlu0 %v2382, 4
      %v2464 = vpop.permute.xlu0 %2463
      %2465 = vrot.lane.b32.xlu0 %v2383, 4
      %v2466 = vpop.permute.xlu0 %2465
      %2467 = vrot.lane.b32.xlu0 %v2384, 4
      %v2468 = vpop.permute.xlu0 %2467
      %2469 = vrot.lane.b32.xlu0 %v2385, 4
      %v2470 = vpop.permute.xlu0 %2469
      %2471 = vrot.lane.b32.xlu0 %v2386, 4
      %v2472 = vpop.permute.xlu0 %2471
      %2473 = vrot.lane.b32.xlu0 %v2387, 4
      %v2474 = vpop.permute.xlu0 %2473
      %2475 = vrot.lane.b32.xlu0 %v2388, 4
      %v2476 = vpop.permute.xlu0 %2475
      %2477 = vrot.lane.b32.xlu0 %v2389, 4
      %v2478 = vpop.permute.xlu0 %2477
      %2479 = vrot.lane.b32.xlu0 %v2390, 4
      %v2480 = vpop.permute.xlu0 %2479
      %2481 = vrot.lane.b32.xlu0 %v2391, 4
      %v2482 = vpop.permute.xlu0 %2481
      %2483 = vrot.lane.b32.xlu0 %v2392, 4
      %v2484 = vpop.permute.xlu0 %2483
      %2485 = vrot.lane.b32.xlu0 %v2393, 4
      %v2486 = vpop.permute.xlu0 %2485
      %2487 = vrot.lane.b32.xlu0 %v2394, 4
      %v2488 = vpop.permute.xlu0 %2487
      %2489 = vrot.lane.b32.xlu0 %v2395, 4
      %v2490 = vpop.permute.xlu0 %2489
      %2491 = vrot.lane.b32.xlu0 %v2396, 4
      %v2492 = vpop.permute.xlu0 %2491
      %2525 = vst.msk [vmem:[#allocation3] sm:$0xff] %vm489, %v2430
      %2526 = vst.msk [vmem:[#allocation3 + $0x8] sm:$0xff] %vm489, %v2432
      %2527 = vst.msk [vmem:[#allocation3 + $0x10] sm:$0xff] %vm489, %v2434
      %2528 = vst.msk [vmem:[#allocation3 + $0x18] sm:$0xff] %vm489, %v2436
      %2529 = vst.msk [vmem:[#allocation3 + $0x20] sm:$0xff] %vm489, %v2438
      %2530 = vst.msk [vmem:[#allocation3 + $0x28] sm:$0xff] %vm489, %v2440
      %2531 = vst.msk [vmem:[#allocation3 + $0x30] sm:$0xff] %vm489, %v2442
      %2532 = vst.msk [vmem:[#allocation3 + $0x38] sm:$0xff] %vm489, %v2444
      %2533 = vst.msk [vmem:[#allocation3 + $0x40] sm:$0xff] %vm489, %v2446
      %2534 = vst.msk [vmem:[#allocation3 + $0x48] sm:$0xff] %vm489, %v2448
      %2535 = vst.msk [vmem:[#allocation3 + $0x50] sm:$0xff] %vm489, %v2450
      %2536 = vst.msk [vmem:[#allocation3 + $0x58] sm:$0xff] %vm489, %v2452
      %2537 = vst.msk [vmem:[#allocation3 + $0x60] sm:$0xff] %vm489, %v2454
      %2538 = vst.msk [vmem:[#allocation3 + $0x68] sm:$0xff] %vm489, %v2456
      %2539 = vst.msk [vmem:[#allocation3 + $0x70] sm:$0xff] %vm489, %v2458
      %2540 = vst.msk [vmem:[#allocation3 + $0x78] sm:$0xff] %vm489, %v2460
      %2541 = vst.msk [vmem:[#allocation3 + $0x80] sm:$0xff] %vm489, %v2462
      %2542 = vst.msk [vmem:[#allocation3 + $0x88] sm:$0xff] %vm489, %v2464
      %2543 = vst.msk [vmem:[#allocation3 + $0x90] sm:$0xff] %vm489, %v2466
      %2544 = vst.msk [vmem:[#allocation3 + $0x98] sm:$0xff] %vm489, %v2468
      %2545 = vst.msk [vmem:[#allocation3 + $0xa0] sm:$0xff] %vm489, %v2470
      %2546 = vst.msk [vmem:[#allocation3 + $0xa8] sm:$0xff] %vm489, %v2472
      %2547 = vst.msk [vmem:[#allocation3 + $0xb0] sm:$0xff] %vm489, %v2474
      %2548 = vst.msk [vmem:[#allocation3 + $0xb8] sm:$0xff] %vm489, %v2476
      %2549 = vst.msk [vmem:[#allocation3 + $0xc0] sm:$0xff] %vm489, %v2478
      %2550 = vst.msk [vmem:[#allocation3 + $0xc8] sm:$0xff] %vm489, %v2480
      %2551 = vst.msk [vmem:[#allocation3 + $0xd0] sm:$0xff] %vm489, %v2482
      %2552 = vst.msk [vmem:[#allocation3 + $0xd8] sm:$0xff] %vm489, %v2484
      %2553 = vst.msk [vmem:[#allocation3 + $0xe0] sm:$0xff] %vm489, %v2486
      %2554 = vst.msk [vmem:[#allocation3 + $0xe8] sm:$0xff] %vm489, %v2488
      %2555 = vst.msk [vmem:[#allocation3 + $0xf0] sm:$0xff] %vm489, %v2490
      %2556 = vst.msk [vmem:[#allocation3 + $0xf8] sm:$0xff] %vm489, %v2492
      %v2557 = vld [vmem:[#allocation2 + $0x2] sm:$0xff]
      %v2558 = vld [vmem:[#allocation2 + $0xa] sm:$0xff]
      %v2559 = vld [vmem:[#allocation2 + $0x1a] sm:$0xff]
      %v2560 = vld [vmem:[#allocation2 + $0x22] sm:$0xff]
      %v2561 = vld [vmem:[#allocation2 + $0x32] sm:$0xff]
      %v2562 = vld [vmem:[#allocation2 + $0x3a] sm:$0xff]
      %v2563 = vld [vmem:[#allocation2 + $0x4a] sm:$0xff]
      %v2564 = vld [vmem:[#allocation2 + $0x52] sm:$0xff]
      %v2565 = vld [vmem:[#allocation2 + $0x62] sm:$0xff]
      %v2566 = vld [vmem:[#allocation2 + $0x6a] sm:$0xff]
      %v2567 = vld [vmem:[#allocation2 + $0x7a] sm:$0xff]
      %v2568 = vld [vmem:[#allocation2 + $0x82] sm:$0xff]
      %v2569 = vld [vmem:[#allocation2 + $0x92] sm:$0xff]
      %v2570 = vld [vmem:[#allocation2 + $0x9a] sm:$0xff]
      %v2571 = vld [vmem:[#allocation2 + $0xaa] sm:$0xff]
      %v2572 = vld [vmem:[#allocation2 + $0xb2] sm:$0xff]
      %v2573 = vld [vmem:[#allocation2 + $0xc2] sm:$0xff]
      %v2574 = vld [vmem:[#allocation2 + $0xca] sm:$0xff]
      %v2575 = vld [vmem:[#allocation2 + $0xda] sm:$0xff]
      %v2576 = vld [vmem:[#allocation2 + $0xe2] sm:$0xff]
      %v2577 = vld [vmem:[#allocation2 + $0xf2] sm:$0xff]
      %v2578 = vld [vmem:[#allocation2 + $0xfa] sm:$0xff]
      %v2579 = vld [vmem:[#allocation2 + $0x10a] sm:$0xff]
      %v2580 = vld [vmem:[#allocation2 + $0x112] sm:$0xff]
      %v2581 = vld [vmem:[#allocation2 + $0x122] sm:$0xff]
      %v2582 = vld [vmem:[#allocation2 + $0x12a] sm:$0xff]
      %v2583 = vld [vmem:[#allocation2 + $0x13a] sm:$0xff]
      %v2584 = vld [vmem:[#allocation2 + $0x142] sm:$0xff]
      %v2585 = vld [vmem:[#allocation2 + $0x152] sm:$0xff]
      %v2586 = vld [vmem:[#allocation2 + $0x15a] sm:$0xff]
      %v2587 = vld [vmem:[#allocation2 + $0x16a] sm:$0xff]
      %v2588 = vld [vmem:[#allocation2 + $0x172] sm:$0xff]
      %2621 = vrot.lane.b32.xlu0 %v2557, 8
      %v2622 = vpop.permute.xlu0 %2621
      %2623 = vrot.lane.b32.xlu0 %v2558, 8
      %v2624 = vpop.permute.xlu0 %2623
      %2625 = vrot.lane.b32.xlu0 %v2559, 8
      %v2626 = vpop.permute.xlu0 %2625
      %2627 = vrot.lane.b32.xlu0 %v2560, 8
      %v2628 = vpop.permute.xlu0 %2627
      %2629 = vrot.lane.b32.xlu0 %v2561, 8
      %v2630 = vpop.permute.xlu0 %2629
      %2631 = vrot.lane.b32.xlu0 %v2562, 8
      %v2632 = vpop.permute.xlu0 %2631
      %2633 = vrot.lane.b32.xlu0 %v2563, 8
      %v2634 = vpop.permute.xlu0 %2633
      %2635 = vrot.lane.b32.xlu0 %v2564, 8
      %v2636 = vpop.permute.xlu0 %2635
      %2637 = vrot.lane.b32.xlu0 %v2565, 8
      %v2638 = vpop.permute.xlu0 %2637
      %2639 = vrot.lane.b32.xlu0 %v2566, 8
      %v2640 = vpop.permute.xlu0 %2639
      %2641 = vrot.lane.b32.xlu0 %v2567, 8
      %v2642 = vpop.permute.xlu0 %2641
      %2643 = vrot.lane.b32.xlu0 %v2568, 8
      %v2644 = vpop.permute.xlu0 %2643
      %2645 = vrot.lane.b32.xlu0 %v2569, 8
      %v2646 = vpop.permute.xlu0 %2645
      %2647 = vrot.lane.b32.xlu0 %v2570, 8
      %v2648 = vpop.permute.xlu0 %2647
      %2649 = vrot.lane.b32.xlu0 %v2571, 8
      %v2650 = vpop.permute.xlu0 %2649
      %2651 = vrot.lane.b32.xlu0 %v2572, 8
      %v2652 = vpop.permute.xlu0 %2651
      %2653 = vrot.lane.b32.xlu0 %v2573, 8
      %v2654 = vpop.permute.xlu0 %2653
      %2655 = vrot.lane.b32.xlu0 %v2574, 8
      %v2656 = vpop.permute.xlu0 %2655
      %2657 = vrot.lane.b32.xlu0 %v2575, 8
      %v2658 = vpop.permute.xlu0 %2657
      %2659 = vrot.lane.b32.xlu0 %v2576, 8
      %v2660 = vpop.permute.xlu0 %2659
      %2661 = vrot.lane.b32.xlu0 %v2577, 8
      %v2662 = vpop.permute.xlu0 %2661
      %2663 = vrot.lane.b32.xlu0 %v2578, 8
      %v2664 = vpop.permute.xlu0 %2663
      %2665 = vrot.lane.b32.xlu0 %v2579, 8
      %v2666 = vpop.permute.xlu0 %2665
      %2667 = vrot.lane.b32.xlu0 %v2580, 8
      %v2668 = vpop.permute.xlu0 %2667
      %2669 = vrot.lane.b32.xlu0 %v2581, 8
      %v2670 = vpop.permute.xlu0 %2669
      %2671 = vrot.lane.b32.xlu0 %v2582, 8
      %v2672 = vpop.permute.xlu0 %2671
      %2673 = vrot.lane.b32.xlu0 %v2583, 8
      %v2674 = vpop.permute.xlu0 %2673
      %2675 = vrot.lane.b32.xlu0 %v2584, 8
      %v2676 = vpop.permute.xlu0 %2675
      %2677 = vrot.lane.b32.xlu0 %v2585, 8
      %v2678 = vpop.permute.xlu0 %2677
      %2679 = vrot.lane.b32.xlu0 %v2586, 8
      %v2680 = vpop.permute.xlu0 %2679
      %2681 = vrot.lane.b32.xlu0 %v2587, 8
      %v2682 = vpop.permute.xlu0 %2681
      %2683 = vrot.lane.b32.xlu0 %v2588, 8
      %v2684 = vpop.permute.xlu0 %2683
      %2717 = vst.msk [vmem:[#allocation3] sm:$0xff] %vm682, %v2622
      %2718 = vst.msk [vmem:[#allocation3 + $0x8] sm:$0xff] %vm682, %v2624
      %2719 = vst.msk [vmem:[#allocation3 + $0x10] sm:$0xff] %vm682, %v2626
      %2720 = vst.msk [vmem:[#allocation3 + $0x18] sm:$0xff] %vm682, %v2628
      %2721 = vst.msk [vmem:[#allocation3 + $0x20] sm:$0xff] %vm682, %v2630
      %2722 = vst.msk [vmem:[#allocation3 + $0x28] sm:$0xff] %vm682, %v2632
      %2723 = vst.msk [vmem:[#allocation3 + $0x30] sm:$0xff] %vm682, %v2634
      %2724 = vst.msk [vmem:[#allocation3 + $0x38] sm:$0xff] %vm682, %v2636
      %2725 = vst.msk [vmem:[#allocation3 + $0x40] sm:$0xff] %vm682, %v2638
      %2726 = vst.msk [vmem:[#allocation3 + $0x48] sm:$0xff] %vm682, %v2640
      %2727 = vst.msk [vmem:[#allocation3 + $0x50] sm:$0xff] %vm682, %v2642
      %2728 = vst.msk [vmem:[#allocation3 + $0x58] sm:$0xff] %vm682, %v2644
      %2729 = vst.msk [vmem:[#allocation3 + $0x60] sm:$0xff] %vm682, %v2646
      %2730 = vst.msk [vmem:[#allocation3 + $0x68] sm:$0xff] %vm682, %v2648
      %2731 = vst.msk [vmem:[#allocation3 + $0x70] sm:$0xff] %vm682, %v2650
      %2732 = vst.msk [vmem:[#allocation3 + $0x78] sm:$0xff] %vm682, %v2652
      %2733 = vst.msk [vmem:[#allocation3 + $0x80] sm:$0xff] %vm682, %v2654
      %2734 = vst.msk [vmem:[#allocation3 + $0x88] sm:$0xff] %vm682, %v2656
      %2735 = vst.msk [vmem:[#allocation3 + $0x90] sm:$0xff] %vm682, %v2658
      %2736 = vst.msk [vmem:[#allocation3 + $0x98] sm:$0xff] %vm682, %v2660
      %2737 = vst.msk [vmem:[#allocation3 + $0xa0] sm:$0xff] %vm682, %v2662
      %2738 = vst.msk [vmem:[#allocation3 + $0xa8] sm:$0xff] %vm682, %v2664
      %2739 = vst.msk [vmem:[#allocation3 + $0xb0] sm:$0xff] %vm682, %v2666
      %2740 = vst.msk [vmem:[#allocation3 + $0xb8] sm:$0xff] %vm682, %v2668
      %2741 = vst.msk [vmem:[#allocation3 + $0xc0] sm:$0xff] %vm682, %v2670
      %2742 = vst.msk [vmem:[#allocation3 + $0xc8] sm:$0xff] %vm682, %v2672
      %2743 = vst.msk [vmem:[#allocation3 + $0xd0] sm:$0xff] %vm682, %v2674
      %2744 = vst.msk [vmem:[#allocation3 + $0xd8] sm:$0xff] %vm682, %v2676
      %2745 = vst.msk [vmem:[#allocation3 + $0xe0] sm:$0xff] %vm682, %v2678
      %2746 = vst.msk [vmem:[#allocation3 + $0xe8] sm:$0xff] %vm682, %v2680
      %2747 = vst.msk [vmem:[#allocation3 + $0xf0] sm:$0xff] %vm682, %v2682
      %2748 = vst.msk [vmem:[#allocation3 + $0xf8] sm:$0xff] %vm682, %v2684
      %v2749 = vld [vmem:[%s232] sm:$0xff]
      %v2750 = vld [vmem:[%s232 + $0x8] sm:$0xff]
      %v2751 = vld [vmem:[%s232 + $0x18] sm:$0xff]
      %v2752 = vld [vmem:[%s232 + $0x20] sm:$0xff]
      %v2753 = vld [vmem:[%s232 + $0x30] sm:$0xff]
      %v2754 = vld [vmem:[%s232 + $0x38] sm:$0xff]
      %v2755 = vld [vmem:[%s232 + $0x48] sm:$0xff]
      %v2756 = vld [vmem:[%s232 + $0x50] sm:$0xff]
      %v2757 = vld [vmem:[%s232 + $0x60] sm:$0xff]
      %v2758 = vld [vmem:[%s232 + $0x68] sm:$0xff]
      %v2759 = vld [vmem:[%s232 + $0x78] sm:$0xff]
      %v2760 = vld [vmem:[%s232 + $0x80] sm:$0xff]
      %v2761 = vld [vmem:[%s232 + $0x90] sm:$0xff]
      %v2762 = vld [vmem:[%s232 + $0x98] sm:$0xff]
      %v2763 = vld [vmem:[%s232 + $0xa8] sm:$0xff]
      %v2764 = vld [vmem:[%s232 + $0xb0] sm:$0xff]
      %v2765 = vld [vmem:[%s232 + $0xc0] sm:$0xff]
      %v2766 = vld [vmem:[%s232 + $0xc8] sm:$0xff]
      %v2767 = vld [vmem:[%s232 + $0xd8] sm:$0xff]
      %v2768 = vld [vmem:[%s232 + $0xe0] sm:$0xff]
      %v2769 = vld [vmem:[%s232 + $0xf0] sm:$0xff]
      %v2770 = vld [vmem:[%s232 + $0xf8] sm:$0xff]
      %v2771 = vld [vmem:[%s232 + $0x108] sm:$0xff]
      %v2772 = vld [vmem:[%s232 + $0x110] sm:$0xff]
      %v2773 = vld [vmem:[%s232 + $0x120] sm:$0xff]
      %v2774 = vld [vmem:[%s232 + $0x128] sm:$0xff]
      %v2775 = vld [vmem:[%s232 + $0x138] sm:$0xff]
      %v2776 = vld [vmem:[%s232 + $0x140] sm:$0xff]
      %v2777 = vld [vmem:[%s232 + $0x150] sm:$0xff]
      %v2778 = vld [vmem:[%s232 + $0x158] sm:$0xff]
      %v2779 = vld [vmem:[%s232 + $0x168] sm:$0xff]
      %v2780 = vld [vmem:[%s232 + $0x170] sm:$0xff]
      %2813 = vrot.lane.b32.xlu0 %v2749, 12
      %v2814 = vpop.permute.xlu0 %2813
      %2815 = vrot.lane.b32.xlu0 %v2750, 12
      %v2816 = vpop.permute.xlu0 %2815
      %2817 = vrot.lane.b32.xlu0 %v2751, 12
      %v2818 = vpop.permute.xlu0 %2817
      %2819 = vrot.lane.b32.xlu0 %v2752, 12
      %v2820 = vpop.permute.xlu0 %2819
      %2821 = vrot.lane.b32.xlu0 %v2753, 12
      %v2822 = vpop.permute.xlu0 %2821
      %2823 = vrot.lane.b32.xlu0 %v2754, 12
      %v2824 = vpop.permute.xlu0 %2823
      %2825 = vrot.lane.b32.xlu0 %v2755, 12
      %v2826 = vpop.permute.xlu0 %2825
      %2827 = vrot.lane.b32.xlu0 %v2756, 12
      %v2828 = vpop.permute.xlu0 %2827
      %2829 = vrot.lane.b32.xlu0 %v2757, 12
      %v2830 = vpop.permute.xlu0 %2829
      %2831 = vrot.lane.b32.xlu0 %v2758, 12
      %v2832 = vpop.permute.xlu0 %2831
      %2833 = vrot.lane.b32.xlu0 %v2759, 12
      %v2834 = vpop.permute.xlu0 %2833
      %2835 = vrot.lane.b32.xlu0 %v2760, 12
      %v2836 = vpop.permute.xlu0 %2835
      %2837 = vrot.lane.b32.xlu0 %v2761, 12
      %v2838 = vpop.permute.xlu0 %2837
      %2839 = vrot.lane.b32.xlu0 %v2762, 12
      %v2840 = vpop.permute.xlu0 %2839
      %2841 = vrot.lane.b32.xlu0 %v2763, 12
      %v2842 = vpop.permute.xlu0 %2841
      %2843 = vrot.lane.b32.xlu0 %v2764, 12
      %v2844 = vpop.permute.xlu0 %2843
      %2845 = vrot.lane.b32.xlu0 %v2765, 12
      %v2846 = vpop.permute.xlu0 %2845
      %2847 = vrot.lane.b32.xlu0 %v2766, 12
      %v2848 = vpop.permute.xlu0 %2847
      %2849 = vrot.lane.b32.xlu0 %v2767, 12
      %v2850 = vpop.permute.xlu0 %2849
      %2851 = vrot.lane.b32.xlu0 %v2768, 12
      %v2852 = vpop.permute.xlu0 %2851
      %2853 = vrot.lane.b32.xlu0 %v2769, 12
      %v2854 = vpop.permute.xlu0 %2853
      %2855 = vrot.lane.b32.xlu0 %v2770, 12
      %v2856 = vpop.permute.xlu0 %2855
      %2857 = vrot.lane.b32.xlu0 %v2771, 12
      %v2858 = vpop.permute.xlu0 %2857
      %2859 = vrot.lane.b32.xlu0 %v2772, 12
      %v2860 = vpop.permute.xlu0 %2859
      %2861 = vrot.lane.b32.xlu0 %v2773, 12
      %v2862 = vpop.permute.xlu0 %2861
      %2863 = vrot.lane.b32.xlu0 %v2774, 12
      %v2864 = vpop.permute.xlu0 %2863
      %2865 = vrot.lane.b32.xlu0 %v2775, 12
      %v2866 = vpop.permute.xlu0 %2865
      %2867 = vrot.lane.b32.xlu0 %v2776, 12
      %v2868 = vpop.permute.xlu0 %2867
      %2869 = vrot.lane.b32.xlu0 %v2777, 12
      %v2870 = vpop.permute.xlu0 %2869
      %2871 = vrot.lane.b32.xlu0 %v2778, 12
      %v2872 = vpop.permute.xlu0 %2871
      %2873 = vrot.lane.b32.xlu0 %v2779, 12
      %v2874 = vpop.permute.xlu0 %2873
      %2875 = vrot.lane.b32.xlu0 %v2780, 12
      %v2876 = vpop.permute.xlu0 %2875
      %2909 = vst.msk [vmem:[#allocation3] sm:$0xff] %vm875, %v2814
      %2910 = vst.msk [vmem:[#allocation3 + $0x8] sm:$0xff] %vm875, %v2816
      %2911 = vst.msk [vmem:[#allocation3 + $0x10] sm:$0xff] %vm875, %v2818
      %2912 = vst.msk [vmem:[#allocation3 + $0x18] sm:$0xff] %vm875, %v2820
      %2913 = vst.msk [vmem:[#allocation3 + $0x20] sm:$0xff] %vm875, %v2822
      %2914 = vst.msk [vmem:[#allocation3 + $0x28] sm:$0xff] %vm875, %v2824
      %2915 = vst.msk [vmem:[#allocation3 + $0x30] sm:$0xff] %vm875, %v2826
      %2916 = vst.msk [vmem:[#allocation3 + $0x38] sm:$0xff] %vm875, %v2828
      %2917 = vst.msk [vmem:[#allocation3 + $0x40] sm:$0xff] %vm875, %v2830
      %2918 = vst.msk [vmem:[#allocation3 + $0x48] sm:$0xff] %vm875, %v2832
      %2919 = vst.msk [vmem:[#allocation3 + $0x50] sm:$0xff] %vm875, %v2834
      %2920 = vst.msk [vmem:[#allocation3 + $0x58] sm:$0xff] %vm875, %v2836
      %2921 = vst.msk [vmem:[#allocation3 + $0x60] sm:$0xff] %vm875, %v2838
      %2922 = vst.msk [vmem:[#allocation3 + $0x68] sm:$0xff] %vm875, %v2840
      %2923 = vst.msk [vmem:[#allocation3 + $0x70] sm:$0xff] %vm875, %v2842
      %2924 = vst.msk [vmem:[#allocation3 + $0x78] sm:$0xff] %vm875, %v2844
      %2925 = vst.msk [vmem:[#allocation3 + $0x80] sm:$0xff] %vm875, %v2846
      %2926 = vst.msk [vmem:[#allocation3 + $0x88] sm:$0xff] %vm875, %v2848
      %2927 = vst.msk [vmem:[#allocation3 + $0x90] sm:$0xff] %vm875, %v2850
      %2928 = vst.msk [vmem:[#allocation3 + $0x98] sm:$0xff] %vm875, %v2852
      %2929 = vst.msk [vmem:[#allocation3 + $0xa0] sm:$0xff] %vm875, %v2854
      %2930 = vst.msk [vmem:[#allocation3 + $0xa8] sm:$0xff] %vm875, %v2856
      %2931 = vst.msk [vmem:[#allocation3 + $0xb0] sm:$0xff] %vm875, %v2858
      %2932 = vst.msk [vmem:[#allocation3 + $0xb8] sm:$0xff] %vm875, %v2860
      %2933 = vst.msk [vmem:[#allocation3 + $0xc0] sm:$0xff] %vm875, %v2862
      %2934 = vst.msk [vmem:[#allocation3 + $0xc8] sm:$0xff] %vm875, %v2864
      %2935 = vst.msk [vmem:[#allocation3 + $0xd0] sm:$0xff] %vm875, %v2866
      %2936 = vst.msk [vmem:[#allocation3 + $0xd8] sm:$0xff] %vm875, %v2868
      %2937 = vst.msk [vmem:[#allocation3 + $0xe0] sm:$0xff] %vm875, %v2870
      %2938 = vst.msk [vmem:[#allocation3 + $0xe8] sm:$0xff] %vm875, %v2872
      %2939 = vst.msk [vmem:[#allocation3 + $0xf0] sm:$0xff] %vm875, %v2874
      %2940 = vst.msk [vmem:[#allocation3 + $0xf8] sm:$0xff] %vm875, %v2876
      %v2941 = vld [vmem:[%s232 + $0x1] sm:$0xff]
      %v2942 = vld [vmem:[%s232 + $0x9] sm:$0xff]
      %v2943 = vld [vmem:[%s232 + $0x19] sm:$0xff]
      %v2944 = vld [vmem:[%s232 + $0x21] sm:$0xff]
      %v2945 = vld [vmem:[%s232 + $0x31] sm:$0xff]
      %v2946 = vld [vmem:[%s232 + $0x39] sm:$0xff]
      %v2947 = vld [vmem:[%s232 + $0x49] sm:$0xff]
      %v2948 = vld [vmem:[%s232 + $0x51] sm:$0xff]
      %v2949 = vld [vmem:[%s232 + $0x61] sm:$0xff]
      %v2950 = vld [vmem:[%s232 + $0x69] sm:$0xff]
      %v2951 = vld [vmem:[%s232 + $0x79] sm:$0xff]
      %v2952 = vld [vmem:[%s232 + $0x81] sm:$0xff]
      %v2953 = vld [vmem:[%s232 + $0x91] sm:$0xff]
      %v2954 = vld [vmem:[%s232 + $0x99] sm:$0xff]
      %v2955 = vld [vmem:[%s232 + $0xa9] sm:$0xff]
      %v2956 = vld [vmem:[%s232 + $0xb1] sm:$0xff]
      %v2957 = vld [vmem:[%s232 + $0xc1] sm:$0xff]
      %v2958 = vld [vmem:[%s232 + $0xc9] sm:$0xff]
      %v2959 = vld [vmem:[%s232 + $0xd9] sm:$0xff]
      %v2960 = vld [vmem:[%s232 + $0xe1] sm:$0xff]
      %v2961 = vld [vmem:[%s232 + $0xf1] sm:$0xff]
      %v2962 = vld [vmem:[%s232 + $0xf9] sm:$0xff]
      %v2963 = vld [vmem:[%s232 + $0x109] sm:$0xff]
      %v2964 = vld [vmem:[%s232 + $0x111] sm:$0xff]
      %v2965 = vld [vmem:[%s232 + $0x121] sm:$0xff]
      %v2966 = vld [vmem:[%s232 + $0x129] sm:$0xff]
      %v2967 = vld [vmem:[%s232 + $0x139] sm:$0xff]
      %v2968 = vld [vmem:[%s232 + $0x141] sm:$0xff]
      %v2969 = vld [vmem:[%s232 + $0x151] sm:$0xff]
      %v2970 = vld [vmem:[%s232 + $0x159] sm:$0xff]
      %v2971 = vld [vmem:[%s232 + $0x169] sm:$0xff]
      %v2972 = vld [vmem:[%s232 + $0x171] sm:$0xff]
      %3005 = vrot.lane.b32.xlu0 %v2941, 16
      %v3006 = vpop.permute.xlu0 %3005
      %3007 = vrot.lane.b32.xlu0 %v2942, 16
      %v3008 = vpop.permute.xlu0 %3007
      %3009 = vrot.lane.b32.xlu0 %v2943, 16
      %v3010 = vpop.permute.xlu0 %3009
      %3011 = vrot.lane.b32.xlu0 %v2944, 16
      %v3012 = vpop.permute.xlu0 %3011
      %3013 = vrot.lane.b32.xlu0 %v2945, 16
      %v3014 = vpop.permute.xlu0 %3013
      %3015 = vrot.lane.b32.xlu0 %v2946, 16
      %v3016 = vpop.permute.xlu0 %3015
      %3017 = vrot.lane.b32.xlu0 %v2947, 16
      %v3018 = vpop.permute.xlu0 %3017
      %3019 = vrot.lane.b32.xlu0 %v2948, 16
      %v3020 = vpop.permute.xlu0 %3019
      %3021 = vrot.lane.b32.xlu0 %v2949, 16
      %v3022 = vpop.permute.xlu0 %3021
      %3023 = vrot.lane.b32.xlu0 %v2950, 16
      %v3024 = vpop.permute.xlu0 %3023
      %3025 = vrot.lane.b32.xlu0 %v2951, 16
      %v3026 = vpop.permute.xlu0 %3025
      %3027 = vrot.lane.b32.xlu0 %v2952, 16
      %v3028 = vpop.permute.xlu0 %3027
      %3029 = vrot.lane.b32.xlu0 %v2953, 16
      %v3030 = vpop.permute.xlu0 %3029
      %3031 = vrot.lane.b32.xlu0 %v2954, 16
      %v3032 = vpop.permute.xlu0 %3031
      %3033 = vrot.lane.b32.xlu0 %v2955, 16
      %v3034 = vpop.permute.xlu0 %3033
      %3035 = vrot.lane.b32.xlu0 %v2956, 16
      %v3036 = vpop.permute.xlu0 %3035
      %3037 = vrot.lane.b32.xlu0 %v2957, 16
      %v3038 = vpop.permute.xlu0 %3037
      %3039 = vrot.lane.b32.xlu0 %v2958, 16
      %v3040 = vpop.permute.xlu0 %3039
      %3041 = vrot.lane.b32.xlu0 %v2959, 16
      %v3042 = vpop.permute.xlu0 %3041
      %3043 = vrot.lane.b32.xlu0 %v2960, 16
      %v3044 = vpop.permute.xlu0 %3043
      %3045 = vrot.lane.b32.xlu0 %v2961, 16
      %v3046 = vpop.permute.xlu0 %3045
      %3047 = vrot.lane.b32.xlu0 %v2962, 16
      %v3048 = vpop.permute.xlu0 %3047
      %3049 = vrot.lane.b32.xlu0 %v2963, 16
      %v3050 = vpop.permute.xlu0 %3049
      %3051 = vrot.lane.b32.xlu0 %v2964, 16
      %v3052 = vpop.permute.xlu0 %3051
      %3053 = vrot.lane.b32.xlu0 %v2965, 16
      %v3054 = vpop.permute.xlu0 %3053
      %3055 = vrot.lane.b32.xlu0 %v2966, 16
      %v3056 = vpop.permute.xlu0 %3055
      %3057 = vrot.lane.b32.xlu0 %v2967, 16
      %v3058 = vpop.permute.xlu0 %3057
      %3059 = vrot.lane.b32.xlu0 %v2968, 16
      %v3060 = vpop.permute.xlu0 %3059
      %3061 = vrot.lane.b32.xlu0 %v2969, 16
      %v3062 = vpop.permute.xlu0 %3061
      %3063 = vrot.lane.b32.xlu0 %v2970, 16
      %v3064 = vpop.permute.xlu0 %3063
      %3065 = vrot.lane.b32.xlu0 %v2971, 16
      %v3066 = vpop.permute.xlu0 %3065
      %3067 = vrot.lane.b32.xlu0 %v2972, 16
      %v3068 = vpop.permute.xlu0 %3067
      %3101 = vst.msk [vmem:[#allocation3] sm:$0xff] %vm1068, %v3006
      %3102 = vst.msk [vmem:[#allocation3 + $0x8] sm:$0xff] %vm1068, %v3008
      %3103 = vst.msk [vmem:[#allocation3 + $0x10] sm:$0xff] %vm1068, %v3010
      %3104 = vst.msk [vmem:[#allocation3 + $0x18] sm:$0xff] %vm1068, %v3012
      %3105 = vst.msk [vmem:[#allocation3 + $0x20] sm:$0xff] %vm1068, %v3014
      %3106 = vst.msk [vmem:[#allocation3 + $0x28] sm:$0xff] %vm1068, %v3016
      %3107 = vst.msk [vmem:[#allocation3 + $0x30] sm:$0xff] %vm1068, %v3018
      %3108 = vst.msk [vmem:[#allocation3 + $0x38] sm:$0xff] %vm1068, %v3020
      %3109 = vst.msk [vmem:[#allocation3 + $0x40] sm:$0xff] %vm1068, %v3022
      %3110 = vst.msk [vmem:[#allocation3 + $0x48] sm:$0xff] %vm1068, %v3024
      %3111 = vst.msk [vmem:[#allocation3 + $0x50] sm:$0xff] %vm1068, %v3026
      %3112 = vst.msk [vmem:[#allocation3 + $0x58] sm:$0xff] %vm1068, %v3028
      %3113 = vst.msk [vmem:[#allocation3 + $0x60] sm:$0xff] %vm1068, %v3030
      %3114 = vst.msk [vmem:[#allocation3 + $0x68] sm:$0xff] %vm1068, %v3032
      %3115 = vst.msk [vmem:[#allocation3 + $0x70] sm:$0xff] %vm1068, %v3034
      %3116 = vst.msk [vmem:[#allocation3 + $0x78] sm:$0xff] %vm1068, %v3036
      %3117 = vst.msk [vmem:[#allocation3 + $0x80] sm:$0xff] %vm1068, %v3038
      %3118 = vst.msk [vmem:[#allocation3 + $0x88] sm:$0xff] %vm1068, %v3040
      %3119 = vst.msk [vmem:[#allocation3 + $0x90] sm:$0xff] %vm1068, %v3042
      %3120 = vst.msk [vmem:[#allocation3 + $0x98] sm:$0xff] %vm1068, %v3044
      %3121 = vst.msk [vmem:[#allocation3 + $0xa0] sm:$0xff] %vm1068, %v3046
      %3122 = vst.msk [vmem:[#allocation3 + $0xa8] sm:$0xff] %vm1068, %v3048
      %3123 = vst.msk [vmem:[#allocation3 + $0xb0] sm:$0xff] %vm1068, %v3050
      %3124 = vst.msk [vmem:[#allocation3 + $0xb8] sm:$0xff] %vm1068, %v3052
      %3125 = vst.msk [vmem:[#allocation3 + $0xc0] sm:$0xff] %vm1068, %v3054
      %3126 = vst.msk [vmem:[#allocation3 + $0xc8] sm:$0xff] %vm1068, %v3056
      %3127 = vst.msk [vmem:[#allocation3 + $0xd0] sm:$0xff] %vm1068, %v3058
      %3128 = vst.msk [vmem:[#allocation3 + $0xd8] sm:$0xff] %vm1068, %v3060
      %3129 = vst.msk [vmem:[#allocation3 + $0xe0] sm:$0xff] %vm1068, %v3062
      %3130 = vst.msk [vmem:[#allocation3 + $0xe8] sm:$0xff] %vm1068, %v3064
      %3131 = vst.msk [vmem:[#allocation3 + $0xf0] sm:$0xff] %vm1068, %v3066
      %3132 = vst.msk [vmem:[#allocation3 + $0xf8] sm:$0xff] %vm1068, %v3068
      %v3133 = vld [vmem:[%s232 + $0x2] sm:$0xff]
      %v3134 = vld [vmem:[%s232 + $0xa] sm:$0xff]
      %v3135 = vld [vmem:[%s232 + $0x1a] sm:$0xff]
      %v3136 = vld [vmem:[%s232 + $0x22] sm:$0xff]
      %v3137 = vld [vmem:[%s232 + $0x32] sm:$0xff]
      %v3138 = vld [vmem:[%s232 + $0x3a] sm:$0xff]
      %v3139 = vld [vmem:[%s232 + $0x4a] sm:$0xff]
      %v3140 = vld [vmem:[%s232 + $0x52] sm:$0xff]
      %v3141 = vld [vmem:[%s232 + $0x62] sm:$0xff]
      %v3142 = vld [vmem:[%s232 + $0x6a] sm:$0xff]
      %v3143 = vld [vmem:[%s232 + $0x7a] sm:$0xff]
      %v3144 = vld [vmem:[%s232 + $0x82] sm:$0xff]
      %v3145 = vld [vmem:[%s232 + $0x92] sm:$0xff]
      %v3146 = vld [vmem:[%s232 + $0x9a] sm:$0xff]
      %v3147 = vld [vmem:[%s232 + $0xaa] sm:$0xff]
      %v3148 = vld [vmem:[%s232 + $0xb2] sm:$0xff]
      %v3149 = vld [vmem:[%s232 + $0xc2] sm:$0xff]
      %v3150 = vld [vmem:[%s232 + $0xca] sm:$0xff]
      %v3151 = vld [vmem:[%s232 + $0xda] sm:$0xff]
      %v3152 = vld [vmem:[%s232 + $0xe2] sm:$0xff]
      %v3153 = vld [vmem:[%s232 + $0xf2] sm:$0xff]
      %v3154 = vld [vmem:[%s232 + $0xfa] sm:$0xff]
      %v3155 = vld [vmem:[%s232 + $0x10a] sm:$0xff]
      %v3156 = vld [vmem:[%s232 + $0x112] sm:$0xff]
      %v3157 = vld [vmem:[%s232 + $0x122] sm:$0xff]
      %v3158 = vld [vmem:[%s232 + $0x12a] sm:$0xff]
      %v3159 = vld [vmem:[%s232 + $0x13a] sm:$0xff]
      %v3160 = vld [vmem:[%s232 + $0x142] sm:$0xff]
      %v3161 = vld [vmem:[%s232 + $0x152] sm:$0xff]
      %v3162 = vld [vmem:[%s232 + $0x15a] sm:$0xff]
      %v3163 = vld [vmem:[%s232 + $0x16a] sm:$0xff]
      %v3164 = vld [vmem:[%s232 + $0x172] sm:$0xff]
      %3197 = vrot.lane.b32.xlu0 %v3133, 20
      %v3198 = vpop.permute.xlu0 %3197
      %3199 = vrot.lane.b32.xlu0 %v3134, 20
      %v3200 = vpop.permute.xlu0 %3199
      %3201 = vrot.lane.b32.xlu0 %v3135, 20
      %v3202 = vpop.permute.xlu0 %3201
      %3203 = vrot.lane.b32.xlu0 %v3136, 20
      %v3204 = vpop.permute.xlu0 %3203
      %3205 = vrot.lane.b32.xlu0 %v3137, 20
      %v3206 = vpop.permute.xlu0 %3205
      %3207 = vrot.lane.b32.xlu0 %v3138, 20
      %v3208 = vpop.permute.xlu0 %3207
      %3209 = vrot.lane.b32.xlu0 %v3139, 20
      %v3210 = vpop.permute.xlu0 %3209
      %3211 = vrot.lane.b32.xlu0 %v3140, 20
      %v3212 = vpop.permute.xlu0 %3211
      %3213 = vrot.lane.b32.xlu0 %v3141, 20
      %v3214 = vpop.permute.xlu0 %3213
      %3215 = vrot.lane.b32.xlu0 %v3142, 20
      %v3216 = vpop.permute.xlu0 %3215
      %3217 = vrot.lane.b32.xlu0 %v3143, 20
      %v3218 = vpop.permute.xlu0 %3217
      %3219 = vrot.lane.b32.xlu0 %v3144, 20
      %v3220 = vpop.permute.xlu0 %3219
      %3221 = vrot.lane.b32.xlu0 %v3145, 20
      %v3222 = vpop.permute.xlu0 %3221
      %3223 = vrot.lane.b32.xlu0 %v3146, 20
      %v3224 = vpop.permute.xlu0 %3223
      %3225 = vrot.lane.b32.xlu0 %v3147, 20
      %v3226 = vpop.permute.xlu0 %3225
      %3227 = vrot.lane.b32.xlu0 %v3148, 20
      %v3228 = vpop.permute.xlu0 %3227
      %3229 = vrot.lane.b32.xlu0 %v3149, 20
      %v3230 = vpop.permute.xlu0 %3229
      %3231 = vrot.lane.b32.xlu0 %v3150, 20
      %v3232 = vpop.permute.xlu0 %3231
      %3233 = vrot.lane.b32.xlu0 %v3151, 20
      %v3234 = vpop.permute.xlu0 %3233
      %3235 = vrot.lane.b32.xlu0 %v3152, 20
      %v3236 = vpop.permute.xlu0 %3235
      %3237 = vrot.lane.b32.xlu0 %v3153, 20
      %v3238 = vpop.permute.xlu0 %3237
      %3239 = vrot.lane.b32.xlu0 %v3154, 20
      %v3240 = vpop.permute.xlu0 %3239
      %3241 = vrot.lane.b32.xlu0 %v3155, 20
      %v3242 = vpop.permute.xlu0 %3241
      %3243 = vrot.lane.b32.xlu0 %v3156, 20
      %v3244 = vpop.permute.xlu0 %3243
      %3245 = vrot.lane.b32.xlu0 %v3157, 20
      %v3246 = vpop.permute.xlu0 %3245
      %3247 = vrot.lane.b32.xlu0 %v3158, 20
      %v3248 = vpop.permute.xlu0 %3247
      %3249 = vrot.lane.b32.xlu0 %v3159, 20
      %v3250 = vpop.permute.xlu0 %3249
      %3251 = vrot.lane.b32.xlu0 %v3160, 20
      %v3252 = vpop.permute.xlu0 %3251
      %3253 = vrot.lane.b32.xlu0 %v3161, 20
      %v3254 = vpop.permute.xlu0 %3253
      %3255 = vrot.lane.b32.xlu0 %v3162, 20
      %v3256 = vpop.permute.xlu0 %3255
      %3257 = vrot.lane.b32.xlu0 %v3163, 20
      %v3258 = vpop.permute.xlu0 %3257
      %3259 = vrot.lane.b32.xlu0 %v3164, 20
      %v3260 = vpop.permute.xlu0 %3259
      %3293 = vst.msk [vmem:[#allocation3] sm:$0xff] %vm1261, %v3198
      %3294 = vst.msk [vmem:[#allocation3 + $0x8] sm:$0xff] %vm1261, %v3200
      %3295 = vst.msk [vmem:[#allocation3 + $0x10] sm:$0xff] %vm1261, %v3202
      %3296 = vst.msk [vmem:[#allocation3 + $0x18] sm:$0xff] %vm1261, %v3204
      %3297 = vst.msk [vmem:[#allocation3 + $0x20] sm:$0xff] %vm1261, %v3206
      %3298 = vst.msk [vmem:[#allocation3 + $0x28] sm:$0xff] %vm1261, %v3208
      %3299 = vst.msk [vmem:[#allocation3 + $0x30] sm:$0xff] %vm1261, %v3210
      %3300 = vst.msk [vmem:[#allocation3 + $0x38] sm:$0xff] %vm1261, %v3212
      %3301 = vst.msk [vmem:[#allocation3 + $0x40] sm:$0xff] %vm1261, %v3214
      %3302 = vst.msk [vmem:[#allocation3 + $0x48] sm:$0xff] %vm1261, %v3216
      %3303 = vst.msk [vmem:[#allocation3 + $0x50] sm:$0xff] %vm1261, %v3218
      %3304 = vst.msk [vmem:[#allocation3 + $0x58] sm:$0xff] %vm1261, %v3220
      %3305 = vst.msk [vmem:[#allocation3 + $0x60] sm:$0xff] %vm1261, %v3222
      %3306 = vst.msk [vmem:[#allocation3 + $0x68] sm:$0xff] %vm1261, %v3224
      %3307 = vst.msk [vmem:[#allocation3 + $0x70] sm:$0xff] %vm1261, %v3226
      %3308 = vst.msk [vmem:[#allocation3 + $0x78] sm:$0xff] %vm1261, %v3228
      %3309 = vst.msk [vmem:[#allocation3 + $0x80] sm:$0xff] %vm1261, %v3230
      %3310 = vst.msk [vmem:[#allocation3 + $0x88] sm:$0xff] %vm1261, %v3232
      %3311 = vst.msk [vmem:[#allocation3 + $0x90] sm:$0xff] %vm1261, %v3234
      %3312 = vst.msk [vmem:[#allocation3 + $0x98] sm:$0xff] %vm1261, %v3236
      %3313 = vst.msk [vmem:[#allocation3 + $0xa0] sm:$0xff] %vm1261, %v3238
      %3314 = vst.msk [vmem:[#allocation3 + $0xa8] sm:$0xff] %vm1261, %v3240
      %3315 = vst.msk [vmem:[#allocation3 + $0xb0] sm:$0xff] %vm1261, %v3242
      %3316 = vst.msk [vmem:[#allocation3 + $0xb8] sm:$0xff] %vm1261, %v3244
      %3317 = vst.msk [vmem:[#allocation3 + $0xc0] sm:$0xff] %vm1261, %v3246
      %3318 = vst.msk [vmem:[#allocation3 + $0xc8] sm:$0xff] %vm1261, %v3248
      %3319 = vst.msk [vmem:[#allocation3 + $0xd0] sm:$0xff] %vm1261, %v3250
      %3320 = vst.msk [vmem:[#allocation3 + $0xd8] sm:$0xff] %vm1261, %v3252
      %3321 = vst.msk [vmem:[#allocation3 + $0xe0] sm:$0xff] %vm1261, %v3254
      %3322 = vst.msk [vmem:[#allocation3 + $0xe8] sm:$0xff] %vm1261, %v3256
      %3323 = vst.msk [vmem:[#allocation3 + $0xf0] sm:$0xff] %vm1261, %v3258
      %3324 = vst.msk [vmem:[#allocation3 + $0xf8] sm:$0xff] %vm1261, %v3260
      %v3325 = vld [vmem:[%s1294] sm:$0xff]
      %v3326 = vld [vmem:[%s1294 + $0x8] sm:$0xff]
      %v3327 = vld [vmem:[%s1294 + $0x18] sm:$0xff]
      %v3328 = vld [vmem:[%s1294 + $0x20] sm:$0xff]
      %v3329 = vld [vmem:[%s1294 + $0x30] sm:$0xff]
      %v3330 = vld [vmem:[%s1294 + $0x38] sm:$0xff]
      %v3331 = vld [vmem:[%s1294 + $0x48] sm:$0xff]
      %v3332 = vld [vmem:[%s1294 + $0x50] sm:$0xff]
      %v3333 = vld [vmem:[%s1294 + $0x60] sm:$0xff]
      %v3334 = vld [vmem:[%s1294 + $0x68] sm:$0xff]
      %v3335 = vld [vmem:[%s1294 + $0x78] sm:$0xff]
      %v3336 = vld [vmem:[%s1294 + $0x80] sm:$0xff]
      %v3337 = vld [vmem:[%s1294 + $0x90] sm:$0xff]
      %v3338 = vld [vmem:[%s1294 + $0x98] sm:$0xff]
      %v3339 = vld [vmem:[%s1294 + $0xa8] sm:$0xff]
      %v3340 = vld [vmem:[%s1294 + $0xb0] sm:$0xff]
      %v3341 = vld [vmem:[%s1294 + $0xc0] sm:$0xff]
      %v3342 = vld [vmem:[%s1294 + $0xc8] sm:$0xff]
      %v3343 = vld [vmem:[%s1294 + $0xd8] sm:$0xff]
      %v3344 = vld [vmem:[%s1294 + $0xe0] sm:$0xff]
      %v3345 = vld [vmem:[%s1294 + $0xf0] sm:$0xff]
      %v3346 = vld [vmem:[%s1294 + $0xf8] sm:$0xff]
      %v3347 = vld [vmem:[%s1294 + $0x108] sm:$0xff]
      %v3348 = vld [vmem:[%s1294 + $0x110] sm:$0xff]
      %v3349 = vld [vmem:[%s1294 + $0x120] sm:$0xff]
      %v3350 = vld [vmem:[%s1294 + $0x128] sm:$0xff]
      %v3351 = vld [vmem:[%s1294 + $0x138] sm:$0xff]
      %v3352 = vld [vmem:[%s1294 + $0x140] sm:$0xff]
      %v3353 = vld [vmem:[%s1294 + $0x150] sm:$0xff]
      %v3354 = vld [vmem:[%s1294 + $0x158] sm:$0xff]
      %v3355 = vld [vmem:[%s1294 + $0x168] sm:$0xff]
      %v3356 = vld [vmem:[%s1294 + $0x170] sm:$0xff]
      %3389 = vrot.lane.b32.xlu0 %v3325, 24
      %v3390 = vpop.permute.xlu0 %3389
      %3391 = vrot.lane.b32.xlu0 %v3326, 24
      %v3392 = vpop.permute.xlu0 %3391
      %3393 = vrot.lane.b32.xlu0 %v3327, 24
      %v3394 = vpop.permute.xlu0 %3393
      %3395 = vrot.lane.b32.xlu0 %v3328, 24
      %v3396 = vpop.permute.xlu0 %3395
      %3397 = vrot.lane.b32.xlu0 %v3329, 24
      %v3398 = vpop.permute.xlu0 %3397
      %3399 = vrot.lane.b32.xlu0 %v3330, 24
      %v3400 = vpop.permute.xlu0 %3399
      %3401 = vrot.lane.b32.xlu0 %v3331, 24
      %v3402 = vpop.permute.xlu0 %3401
      %3403 = vrot.lane.b32.xlu0 %v3332, 24
      %v3404 = vpop.permute.xlu0 %3403
      %3405 = vrot.lane.b32.xlu0 %v3333, 24
      %v3406 = vpop.permute.xlu0 %3405
      %3407 = vrot.lane.b32.xlu0 %v3334, 24
      %v3408 = vpop.permute.xlu0 %3407
      %3409 = vrot.lane.b32.xlu0 %v3335, 24
      %v3410 = vpop.permute.xlu0 %3409
      %3411 = vrot.lane.b32.xlu0 %v3336, 24
      %v3412 = vpop.permute.xlu0 %3411
      %3413 = vrot.lane.b32.xlu0 %v3337, 24
      %v3414 = vpop.permute.xlu0 %3413
      %3415 = vrot.lane.b32.xlu0 %v3338, 24
      %v3416 = vpop.permute.xlu0 %3415
      %3417 = vrot.lane.b32.xlu0 %v3339, 24
      %v3418 = vpop.permute.xlu0 %3417
      %3419 = vrot.lane.b32.xlu0 %v3340, 24
      %v3420 = vpop.permute.xlu0 %3419
      %3421 = vrot.lane.b32.xlu0 %v3341, 24
      %v3422 = vpop.permute.xlu0 %3421
      %3423 = vrot.lane.b32.xlu0 %v3342, 24
      %v3424 = vpop.permute.xlu0 %3423
      %3425 = vrot.lane.b32.xlu0 %v3343, 24
      %v3426 = vpop.permute.xlu0 %3425
      %3427 = vrot.lane.b32.xlu0 %v3344, 24
      %v3428 = vpop.permute.xlu0 %3427
      %3429 = vrot.lane.b32.xlu0 %v3345, 24
      %v3430 = vpop.permute.xlu0 %3429
      %3431 = vrot.lane.b32.xlu0 %v3346, 24
      %v3432 = vpop.permute.xlu0 %3431
      %3433 = vrot.lane.b32.xlu0 %v3347, 24
      %v3434 = vpop.permute.xlu0 %3433
      %3435 = vrot.lane.b32.xlu0 %v3348, 24
      %v3436 = vpop.permute.xlu0 %3435
      %3437 = vrot.lane.b32.xlu0 %v3349, 24
      %v3438 = vpop.permute.xlu0 %3437
      %3439 = vrot.lane.b32.xlu0 %v3350, 24
      %v3440 = vpop.permute.xlu0 %3439
      %3441 = vrot.lane.b32.xlu0 %v3351, 24
      %v3442 = vpop.permute.xlu0 %3441
      %3443 = vrot.lane.b32.xlu0 %v3352, 24
      %v3444 = vpop.permute.xlu0 %3443
      %3445 = vrot.lane.b32.xlu0 %v3353, 24
      %v3446 = vpop.permute.xlu0 %3445
      %3447 = vrot.lane.b32.xlu0 %v3354, 24
      %v3448 = vpop.permute.xlu0 %3447
      %3449 = vrot.lane.b32.xlu0 %v3355, 24
      %v3450 = vpop.permute.xlu0 %3449
      %3451 = vrot.lane.b32.xlu0 %v3356, 24
      %v3452 = vpop.permute.xlu0 %3451
      %3485 = vst.msk [vmem:[#allocation3] sm:$0xff] %vm1455, %v3390
      %3486 = vst.msk [vmem:[#allocation3 + $0x8] sm:$0xff] %vm1455, %v3392
      %3487 = vst.msk [vmem:[#allocation3 + $0x10] sm:$0xff] %vm1455, %v3394
      %3488 = vst.msk [vmem:[#allocation3 + $0x18] sm:$0xff] %vm1455, %v3396
      %3489 = vst.msk [vmem:[#allocation3 + $0x20] sm:$0xff] %vm1455, %v3398
      %3490 = vst.msk [vmem:[#allocation3 + $0x28] sm:$0xff] %vm1455, %v3400
      %3491 = vst.msk [vmem:[#allocation3 + $0x30] sm:$0xff] %vm1455, %v3402
      %3492 = vst.msk [vmem:[#allocation3 + $0x38] sm:$0xff] %vm1455, %v3404
      %3493 = vst.msk [vmem:[#allocation3 + $0x40] sm:$0xff] %vm1455, %v3406
      %3494 = vst.msk [vmem:[#allocation3 + $0x48] sm:$0xff] %vm1455, %v3408
      %3495 = vst.msk [vmem:[#allocation3 + $0x50] sm:$0xff] %vm1455, %v3410
      %3496 = vst.msk [vmem:[#allocation3 + $0x58] sm:$0xff] %vm1455, %v3412
      %3497 = vst.msk [vmem:[#allocation3 + $0x60] sm:$0xff] %vm1455, %v3414
      %3498 = vst.msk [vmem:[#allocation3 + $0x68] sm:$0xff] %vm1455, %v3416
      %3499 = vst.msk [vmem:[#allocation3 + $0x70] sm:$0xff] %vm1455, %v3418
      %3500 = vst.msk [vmem:[#allocation3 + $0x78] sm:$0xff] %vm1455, %v3420
      %3501 = vst.msk [vmem:[#allocation3 + $0x80] sm:$0xff] %vm1455, %v3422
      %3502 = vst.msk [vmem:[#allocation3 + $0x88] sm:$0xff] %vm1455, %v3424
      %3503 = vst.msk [vmem:[#allocation3 + $0x90] sm:$0xff] %vm1455, %v3426
      %3504 = vst.msk [vmem:[#allocation3 + $0x98] sm:$0xff] %vm1455, %v3428
      %3505 = vst.msk [vmem:[#allocation3 + $0xa0] sm:$0xff] %vm1455, %v3430
      %3506 = vst.msk [vmem:[#allocation3 + $0xa8] sm:$0xff] %vm1455, %v3432
      %3507 = vst.msk [vmem:[#allocation3 + $0xb0] sm:$0xff] %vm1455, %v3434
      %3508 = vst.msk [vmem:[#allocation3 + $0xb8] sm:$0xff] %vm1455, %v3436
      %3509 = vst.msk [vmem:[#allocation3 + $0xc0] sm:$0xff] %vm1455, %v3438
      %3510 = vst.msk [vmem:[#allocation3 + $0xc8] sm:$0xff] %vm1455, %v3440
      %3511 = vst.msk [vmem:[#allocation3 + $0xd0] sm:$0xff] %vm1455, %v3442
      %3512 = vst.msk [vmem:[#allocation3 + $0xd8] sm:$0xff] %vm1455, %v3444
      %3513 = vst.msk [vmem:[#allocation3 + $0xe0] sm:$0xff] %vm1455, %v3446
      %3514 = vst.msk [vmem:[#allocation3 + $0xe8] sm:$0xff] %vm1455, %v3448
      %3515 = vst.msk [vmem:[#allocation3 + $0xf0] sm:$0xff] %vm1455, %v3450
      %3516 = vst.msk [vmem:[#allocation3 + $0xf8] sm:$0xff] %vm1455, %v3452
      %v3517 = vld [vmem:[%s1294 + $0x1] sm:$0xff]
      %v3518 = vld [vmem:[%s1294 + $0x9] sm:$0xff]
      %v3519 = vld [vmem:[%s1294 + $0x19] sm:$0xff]
      %v3520 = vld [vmem:[%s1294 + $0x21] sm:$0xff]
      %v3521 = vld [vmem:[%s1294 + $0x31] sm:$0xff]
      %v3522 = vld [vmem:[%s1294 + $0x39] sm:$0xff]
      %v3523 = vld [vmem:[%s1294 + $0x49] sm:$0xff]
      %v3524 = vld [vmem:[%s1294 + $0x51] sm:$0xff]
      %v3525 = vld [vmem:[%s1294 + $0x61] sm:$0xff]
      %v3526 = vld [vmem:[%s1294 + $0x69] sm:$0xff]
      %v3527 = vld [vmem:[%s1294 + $0x79] sm:$0xff]
      %v3528 = vld [vmem:[%s1294 + $0x81] sm:$0xff]
      %v3529 = vld [vmem:[%s1294 + $0x91] sm:$0xff]
      %v3530 = vld [vmem:[%s1294 + $0x99] sm:$0xff]
      %v3531 = vld [vmem:[%s1294 + $0xa9] sm:$0xff]
      %v3532 = vld [vmem:[%s1294 + $0xb1] sm:$0xff]
      %v3533 = vld [vmem:[%s1294 + $0xc1] sm:$0xff]
      %v3534 = vld [vmem:[%s1294 + $0xc9] sm:$0xff]
      %v3535 = vld [vmem:[%s1294 + $0xd9] sm:$0xff]
      %v3536 = vld [vmem:[%s1294 + $0xe1] sm:$0xff]
      %v3537 = vld [vmem:[%s1294 + $0xf1] sm:$0xff]
      %v3538 = vld [vmem:[%s1294 + $0xf9] sm:$0xff]
      %v3539 = vld [vmem:[%s1294 + $0x109] sm:$0xff]
      %v3540 = vld [vmem:[%s1294 + $0x111] sm:$0xff]
      %v3541 = vld [vmem:[%s1294 + $0x121] sm:$0xff]
      %v3542 = vld [vmem:[%s1294 + $0x129] sm:$0xff]
      %v3543 = vld [vmem:[%s1294 + $0x139] sm:$0xff]
      %v3544 = vld [vmem:[%s1294 + $0x141] sm:$0xff]
      %v3545 = vld [vmem:[%s1294 + $0x151] sm:$0xff]
      %v3546 = vld [vmem:[%s1294 + $0x159] sm:$0xff]
      %v3547 = vld [vmem:[%s1294 + $0x169] sm:$0xff]
      %v3548 = vld [vmem:[%s1294 + $0x171] sm:$0xff]
      %3581 = vrot.lane.b32.xlu0 %v3517, 28
      %v3582 = vpop.permute.xlu0 %3581
      %3583 = vrot.lane.b32.xlu0 %v3518, 28
      %v3584 = vpop.permute.xlu0 %3583
      %3585 = vrot.lane.b32.xlu0 %v3519, 28
      %v3586 = vpop.permute.xlu0 %3585
      %3587 = vrot.lane.b32.xlu0 %v3520, 28
      %v3588 = vpop.permute.xlu0 %3587
      %3589 = vrot.lane.b32.xlu0 %v3521, 28
      %v3590 = vpop.permute.xlu0 %3589
      %3591 = vrot.lane.b32.xlu0 %v3522, 28
      %v3592 = vpop.permute.xlu0 %3591
      %3593 = vrot.lane.b32.xlu0 %v3523, 28
      %v3594 = vpop.permute.xlu0 %3593
      %3595 = vrot.lane.b32.xlu0 %v3524, 28
      %v3596 = vpop.permute.xlu0 %3595
      %3597 = vrot.lane.b32.xlu0 %v3525, 28
      %v3598 = vpop.permute.xlu0 %3597
      %3599 = vrot.lane.b32.xlu0 %v3526, 28
      %v3600 = vpop.permute.xlu0 %3599
      %3601 = vrot.lane.b32.xlu0 %v3527, 28
      %v3602 = vpop.permute.xlu0 %3601
      %3603 = vrot.lane.b32.xlu0 %v3528, 28
      %v3604 = vpop.permute.xlu0 %3603
      %3605 = vrot.lane.b32.xlu0 %v3529, 28
      %v3606 = vpop.permute.xlu0 %3605
      %3607 = vrot.lane.b32.xlu0 %v3530, 28
      %v3608 = vpop.permute.xlu0 %3607
      %3609 = vrot.lane.b32.xlu0 %v3531, 28
      %v3610 = vpop.permute.xlu0 %3609
      %3611 = vrot.lane.b32.xlu0 %v3532, 28
      %v3612 = vpop.permute.xlu0 %3611
      %3613 = vrot.lane.b32.xlu0 %v3533, 28
      %v3614 = vpop.permute.xlu0 %3613
      %3615 = vrot.lane.b32.xlu0 %v3534, 28
      %v3616 = vpop.permute.xlu0 %3615
      %3617 = vrot.lane.b32.xlu0 %v3535, 28
      %v3618 = vpop.permute.xlu0 %3617
      %3619 = vrot.lane.b32.xlu0 %v3536, 28
      %v3620 = vpop.permute.xlu0 %3619
      %3621 = vrot.lane.b32.xlu0 %v3537, 28
      %v3622 = vpop.permute.xlu0 %3621
      %3623 = vrot.lane.b32.xlu0 %v3538, 28
      %v3624 = vpop.permute.xlu0 %3623
      %3625 = vrot.lane.b32.xlu0 %v3539, 28
      %v3626 = vpop.permute.xlu0 %3625
      %3627 = vrot.lane.b32.xlu0 %v3540, 28
      %v3628 = vpop.permute.xlu0 %3627
      %3629 = vrot.lane.b32.xlu0 %v3541, 28
      %v3630 = vpop.permute.xlu0 %3629
      %3631 = vrot.lane.b32.xlu0 %v3542, 28
      %v3632 = vpop.permute.xlu0 %3631
      %3633 = vrot.lane.b32.xlu0 %v3543, 28
      %v3634 = vpop.permute.xlu0 %3633
      %3635 = vrot.lane.b32.xlu0 %v3544, 28
      %v3636 = vpop.permute.xlu0 %3635
      %3637 = vrot.lane.b32.xlu0 %v3545, 28
      %v3638 = vpop.permute.xlu0 %3637
      %3639 = vrot.lane.b32.xlu0 %v3546, 28
      %v3640 = vpop.permute.xlu0 %3639
      %3641 = vrot.lane.b32.xlu0 %v3547, 28
      %v3642 = vpop.permute.xlu0 %3641
      %3643 = vrot.lane.b32.xlu0 %v3548, 28
      %v3644 = vpop.permute.xlu0 %3643
      %3677 = vst.msk [vmem:[#allocation3] sm:$0xff] %vm1648, %v3582
      %3678 = vst.msk [vmem:[#allocation3 + $0x8] sm:$0xff] %vm1648, %v3584
      %3679 = vst.msk [vmem:[#allocation3 + $0x10] sm:$0xff] %vm1648, %v3586
      %3680 = vst.msk [vmem:[#allocation3 + $0x18] sm:$0xff] %vm1648, %v3588
      %3681 = vst.msk [vmem:[#allocation3 + $0x20] sm:$0xff] %vm1648, %v3590
      %3682 = vst.msk [vmem:[#allocation3 + $0x28] sm:$0xff] %vm1648, %v3592
      %3683 = vst.msk [vmem:[#allocation3 + $0x30] sm:$0xff] %vm1648, %v3594
      %3684 = vst.msk [vmem:[#allocation3 + $0x38] sm:$0xff] %vm1648, %v3596
      %3685 = vst.msk [vmem:[#allocation3 + $0x40] sm:$0xff] %vm1648, %v3598
      %3686 = vst.msk [vmem:[#allocation3 + $0x48] sm:$0xff] %vm1648, %v3600
      %3687 = vst.msk [vmem:[#allocation3 + $0x50] sm:$0xff] %vm1648, %v3602
      %3688 = vst.msk [vmem:[#allocation3 + $0x58] sm:$0xff] %vm1648, %v3604
      %3689 = vst.msk [vmem:[#allocation3 + $0x60] sm:$0xff] %vm1648, %v3606
      %3690 = vst.msk [vmem:[#allocation3 + $0x68] sm:$0xff] %vm1648, %v3608
      %3691 = vst.msk [vmem:[#allocation3 + $0x70] sm:$0xff] %vm1648, %v3610
      %3692 = vst.msk [vmem:[#allocation3 + $0x78] sm:$0xff] %vm1648, %v3612
      %3693 = vst.msk [vmem:[#allocation3 + $0x80] sm:$0xff] %vm1648, %v3614
      %3694 = vst.msk [vmem:[#allocation3 + $0x88] sm:$0xff] %vm1648, %v3616
      %3695 = vst.msk [vmem:[#allocation3 + $0x90] sm:$0xff] %vm1648, %v3618
      %3696 = vst.msk [vmem:[#allocation3 + $0x98] sm:$0xff] %vm1648, %v3620
      %3697 = vst.msk [vmem:[#allocation3 + $0xa0] sm:$0xff] %vm1648, %v3622
      %3698 = vst.msk [vmem:[#allocation3 + $0xa8] sm:$0xff] %vm1648, %v3624
      %3699 = vst.msk [vmem:[#allocation3 + $0xb0] sm:$0xff] %vm1648, %v3626
      %3700 = vst.msk [vmem:[#allocation3 + $0xb8] sm:$0xff] %vm1648, %v3628
      %3701 = vst.msk [vmem:[#allocation3 + $0xc0] sm:$0xff] %vm1648, %v3630
      %3702 = vst.msk [vmem:[#allocation3 + $0xc8] sm:$0xff] %vm1648, %v3632
      %3703 = vst.msk [vmem:[#allocation3 + $0xd0] sm:$0xff] %vm1648, %v3634
      %3704 = vst.msk [vmem:[#allocation3 + $0xd8] sm:$0xff] %vm1648, %v3636
      %3705 = vst.msk [vmem:[#allocation3 + $0xe0] sm:$0xff] %vm1648, %v3638
      %3706 = vst.msk [vmem:[#allocation3 + $0xe8] sm:$0xff] %vm1648, %v3640
      %3707 = vst.msk [vmem:[#allocation3 + $0xf0] sm:$0xff] %vm1648, %v3642
      %3708 = vst.msk [vmem:[#allocation3 + $0xf8] sm:$0xff] %vm1648, %v3644
      %v3709 = vld [vmem:[%s1294 + $0x2] sm:$0xff]
      %v3710 = vld [vmem:[%s1294 + $0xa] sm:$0xff]
      %v3711 = vld [vmem:[%s1294 + $0x1a] sm:$0xff]
      %v3712 = vld [vmem:[%s1294 + $0x22] sm:$0xff]
      %v3713 = vld [vmem:[%s1294 + $0x32] sm:$0xff]
      %v3714 = vld [vmem:[%s1294 + $0x3a] sm:$0xff]
      %v3715 = vld [vmem:[%s1294 + $0x4a] sm:$0xff]
      %v3716 = vld [vmem:[%s1294 + $0x52] sm:$0xff]
      %v3717 = vld [vmem:[%s1294 + $0x62] sm:$0xff]
      %v3718 = vld [vmem:[%s1294 + $0x6a] sm:$0xff]
      %v3719 = vld [vmem:[%s1294 + $0x7a] sm:$0xff]
      %v3720 = vld [vmem:[%s1294 + $0x82] sm:$0xff]
      %v3721 = vld [vmem:[%s1294 + $0x92] sm:$0xff]
      %v3722 = vld [vmem:[%s1294 + $0x9a] sm:$0xff]
      %v3723 = vld [vmem:[%s1294 + $0xaa] sm:$0xff]
      %v3724 = vld [vmem:[%s1294 + $0xb2] sm:$0xff]
      %v3725 = vld [vmem:[%s1294 + $0xc2] sm:$0xff]
      %v3726 = vld [vmem:[%s1294 + $0xca] sm:$0xff]
      %v3727 = vld [vmem:[%s1294 + $0xda] sm:$0xff]
      %v3728 = vld [vmem:[%s1294 + $0xe2] sm:$0xff]
      %v3729 = vld [vmem:[%s1294 + $0xf2] sm:$0xff]
      %v3730 = vld [vmem:[%s1294 + $0xfa] sm:$0xff]
      %v3731 = vld [vmem:[%s1294 + $0x10a] sm:$0xff]
      %v3732 = vld [vmem:[%s1294 + $0x112] sm:$0xff]
      %v3733 = vld [vmem:[%s1294 + $0x122] sm:$0xff]
      %v3734 = vld [vmem:[%s1294 + $0x12a] sm:$0xff]
      %v3735 = vld [vmem:[%s1294 + $0x13a] sm:$0xff]
      %v3736 = vld [vmem:[%s1294 + $0x142] sm:$0xff]
      %v3737 = vld [vmem:[%s1294 + $0x152] sm:$0xff]
      %v3738 = vld [vmem:[%s1294 + $0x15a] sm:$0xff]
      %v3739 = vld [vmem:[%s1294 + $0x16a] sm:$0xff]
      %v3740 = vld [vmem:[%s1294 + $0x172] sm:$0xff]
      %3773 = vrot.lane.b32.xlu0 %v3709, 32
      %v3774 = vpop.permute.xlu0 %3773
      %3775 = vrot.lane.b32.xlu0 %v3710, 32
      %v3776 = vpop.permute.xlu0 %3775
      %3777 = vrot.lane.b32.xlu0 %v3711, 32
      %v3778 = vpop.permute.xlu0 %3777
      %3779 = vrot.lane.b32.xlu0 %v3712, 32
      %v3780 = vpop.permute.xlu0 %3779
      %3781 = vrot.lane.b32.xlu0 %v3713, 32
      %v3782 = vpop.permute.xlu0 %3781
      %3783 = vrot.lane.b32.xlu0 %v3714, 32
      %v3784 = vpop.permute.xlu0 %3783
      %3785 = vrot.lane.b32.xlu0 %v3715, 32
      %v3786 = vpop.permute.xlu0 %3785
      %3787 = vrot.lane.b32.xlu0 %v3716, 32
      %v3788 = vpop.permute.xlu0 %3787
      %3789 = vrot.lane.b32.xlu0 %v3717, 32
      %v3790 = vpop.permute.xlu0 %3789
      %3791 = vrot.lane.b32.xlu0 %v3718, 32
      %v3792 = vpop.permute.xlu0 %3791
      %3793 = vrot.lane.b32.xlu0 %v3719, 32
      %v3794 = vpop.permute.xlu0 %3793
      %3795 = vrot.lane.b32.xlu0 %v3720, 32
      %v3796 = vpop.permute.xlu0 %3795
      %3797 = vrot.lane.b32.xlu0 %v3721, 32
      %v3798 = vpop.permute.xlu0 %3797
      %3799 = vrot.lane.b32.xlu0 %v3722, 32
      %v3800 = vpop.permute.xlu0 %3799
      %3801 = vrot.lane.b32.xlu0 %v3723, 32
      %v3802 = vpop.permute.xlu0 %3801
      %3803 = vrot.lane.b32.xlu0 %v3724, 32
      %v3804 = vpop.permute.xlu0 %3803
      %3805 = vrot.lane.b32.xlu0 %v3725, 32
      %v3806 = vpop.permute.xlu0 %3805
      %3807 = vrot.lane.b32.xlu0 %v3726, 32
      %v3808 = vpop.permute.xlu0 %3807
      %3809 = vrot.lane.b32.xlu0 %v3727, 32
      %v3810 = vpop.permute.xlu0 %3809
      %3811 = vrot.lane.b32.xlu0 %v3728, 32
      %v3812 = vpop.permute.xlu0 %3811
      %3813 = vrot.lane.b32.xlu0 %v3729, 32
      %v3814 = vpop.permute.xlu0 %3813
      %3815 = vrot.lane.b32.xlu0 %v3730, 32
      %v3816 = vpop.permute.xlu0 %3815
      %3817 = vrot.lane.b32.xlu0 %v3731, 32
      %v3818 = vpop.permute.xlu0 %3817
      %3819 = vrot.lane.b32.xlu0 %v3732, 32
      %v3820 = vpop.permute.xlu0 %3819
      %3821 = vrot.lane.b32.xlu0 %v3733, 32
      %v3822 = vpop.permute.xlu0 %3821
      %3823 = vrot.lane.b32.xlu0 %v3734, 32
      %v3824 = vpop.permute.xlu0 %3823
      %3825 = vrot.lane.b32.xlu0 %v3735, 32
      %v3826 = vpop.permute.xlu0 %3825
      %3827 = vrot.lane.b32.xlu0 %v3736, 32
      %v3828 = vpop.permute.xlu0 %3827
      %3829 = vrot.lane.b32.xlu0 %v3737, 32
      %v3830 = vpop.permute.xlu0 %3829
      %3831 = vrot.lane.b32.xlu0 %v3738, 32
      %v3832 = vpop.permute.xlu0 %3831
      %3833 = vrot.lane.b32.xlu0 %v3739, 32
      %v3834 = vpop.permute.xlu0 %3833
      %3835 = vrot.lane.b32.xlu0 %v3740, 32
      %v3836 = vpop.permute.xlu0 %3835
      %3869 = vst.msk [vmem:[#allocation3] sm:$0xff] %vm1841, %v3774
      %3870 = vst.msk [vmem:[#allocation3 + $0x8] sm:$0xff] %vm1841, %v3776
      %3871 = vst.msk [vmem:[#allocation3 + $0x10] sm:$0xff] %vm1841, %v3778
      %3872 = vst.msk [vmem:[#allocation3 + $0x18] sm:$0xff] %vm1841, %v3780
      %3873 = vst.msk [vmem:[#allocation3 + $0x20] sm:$0xff] %vm1841, %v3782
      %3874 = vst.msk [vmem:[#allocation3 + $0x28] sm:$0xff] %vm1841, %v3784
      %3875 = vst.msk [vmem:[#allocation3 + $0x30] sm:$0xff] %vm1841, %v3786
      %3876 = vst.msk [vmem:[#allocation3 + $0x38] sm:$0xff] %vm1841, %v3788
      %3877 = vst.msk [vmem:[#allocation3 + $0x40] sm:$0xff] %vm1841, %v3790
      %3878 = vst.msk [vmem:[#allocation3 + $0x48] sm:$0xff] %vm1841, %v3792
      %3879 = vst.msk [vmem:[#allocation3 + $0x50] sm:$0xff] %vm1841, %v3794
      %3880 = vst.msk [vmem:[#allocation3 + $0x58] sm:$0xff] %vm1841, %v3796
      %3881 = vst.msk [vmem:[#allocation3 + $0x60] sm:$0xff] %vm1841, %v3798
      %3882 = vst.msk [vmem:[#allocation3 + $0x68] sm:$0xff] %vm1841, %v3800
      %3883 = vst.msk [vmem:[#allocation3 + $0x70] sm:$0xff] %vm1841, %v3802
      %3884 = vst.msk [vmem:[#allocation3 + $0x78] sm:$0xff] %vm1841, %v3804
      %3885 = vst.msk [vmem:[#allocation3 + $0x80] sm:$0xff] %vm1841, %v3806
      %3886 = vst.msk [vmem:[#allocation3 + $0x88] sm:$0xff] %vm1841, %v3808
      %3887 = vst.msk [vmem:[#allocation3 + $0x90] sm:$0xff] %vm1841, %v3810
      %3888 = vst.msk [vmem:[#allocation3 + $0x98] sm:$0xff] %vm1841, %v3812
      %3889 = vst.msk [vmem:[#allocation3 + $0xa0] sm:$0xff] %vm1841, %v3814
      %3890 = vst.msk [vmem:[#allocation3 + $0xa8] sm:$0xff] %vm1841, %v3816
      %3891 = vst.msk [vmem:[#allocation3 + $0xb0] sm:$0xff] %vm1841, %v3818
      %3892 = vst.msk [vmem:[#allocation3 + $0xb8] sm:$0xff] %vm1841, %v3820
      %3893 = vst.msk [vmem:[#allocation3 + $0xc0] sm:$0xff] %vm1841, %v3822
      %3894 = vst.msk [vmem:[#allocation3 + $0xc8] sm:$0xff] %vm1841, %v3824
      %3895 = vst.msk [vmem:[#allocation3 + $0xd0] sm:$0xff] %vm1841, %v3826
      %3896 = vst.msk [vmem:[#allocation3 + $0xd8] sm:$0xff] %vm1841, %v3828
      %3897 = vst.msk [vmem:[#allocation3 + $0xe0] sm:$0xff] %vm1841, %v3830
      %3898 = vst.msk [vmem:[#allocation3 + $0xe8] sm:$0xff] %vm1841, %v3832
      %3899 = vst.msk [vmem:[#allocation3 + $0xf0] sm:$0xff] %vm1841, %v3834
      %3900 = vst.msk [vmem:[#allocation3 + $0xf8] sm:$0xff] %vm1841, %v3836
      %v3901 = vld [vmem:[#allocation3] sm:$0xff]
      %v3902 = vld [vmem:[#allocation3 + $0x8] sm:$0xff]
      %v3903 = vld [vmem:[#allocation3 + $0x10] sm:$0xff]
      %v3904 = vld [vmem:[#allocation3 + $0x18] sm:$0xff]
      %v3905 = vld [vmem:[#allocation3 + $0x20] sm:$0xff]
      %v3906 = vld [vmem:[#allocation3 + $0x28] sm:$0xff]
      %v3907 = vld [vmem:[#allocation3 + $0x30] sm:$0xff]
      %v3908 = vld [vmem:[#allocation3 + $0x38] sm:$0xff]
      %v3909 = vld [vmem:[#allocation3 + $0x40] sm:$0xff]
      %v3910 = vld [vmem:[#allocation3 + $0x48] sm:$0xff]
      %v3911 = vld [vmem:[#allocation3 + $0x50] sm:$0xff]
      %v3912 = vld [vmem:[#allocation3 + $0x58] sm:$0xff]
      %v3913 = vld [vmem:[#allocation3 + $0x60] sm:$0xff]
      %v3914 = vld [vmem:[#allocation3 + $0x68] sm:$0xff]
      %v3915 = vld [vmem:[#allocation3 + $0x70] sm:$0xff]
      %v3916 = vld [vmem:[#allocation3 + $0x78] sm:$0xff]
      %v3917 = vld [vmem:[#allocation3 + $0x80] sm:$0xff]
      %v3918 = vld [vmem:[#allocation3 + $0x88] sm:$0xff]
      %v3919 = vld [vmem:[#allocation3 + $0x90] sm:$0xff]
      %v3920 = vld [vmem:[#allocation3 + $0x98] sm:$0xff]
      %v3921 = vld [vmem:[#allocation3 + $0xa0] sm:$0xff]
      %v3922 = vld [vmem:[#allocation3 + $0xa8] sm:$0xff]
      %v3923 = vld [vmem:[#allocation3 + $0xb0] sm:$0xff]
      %v3924 = vld [vmem:[#allocation3 + $0xb8] sm:$0xff]
      %v3925 = vld [vmem:[#allocation3 + $0xc0] sm:$0xff]
      %v3926 = vld [vmem:[#allocation3 + $0xc8] sm:$0xff]
      %v3927 = vld [vmem:[#allocation3 + $0xd0] sm:$0xff]
      %v3928 = vld [vmem:[#allocation3 + $0xd8] sm:$0xff]
      %v3929 = vld [vmem:[#allocation3 + $0xe0] sm:$0xff]
      %v3930 = vld [vmem:[#allocation3 + $0xe8] sm:$0xff]
      %v3931 = vld [vmem:[#allocation3 + $0xf0] sm:$0xff]
      %v3932 = vld [vmem:[#allocation3 + $0xf8] sm:$0xff]
      %s3933 = scalar_lea.vmem %s1, 40
      %v3934 = vld [vmem:[%s3933] sm:$0xff]
      %v3935 = vld [vmem:[%s3933 + $0x8] sm:$0xff]
      %v3936 = vld [vmem:[%s3933 + $0x10] sm:$0xff]
      %v3937 = vld [vmem:[%s3933 + $0x18] sm:$0xff]
      %v3938 = vld [vmem:[%s3933 + $0x20] sm:$0xf]
      %v3940 = vsel %vm1911, %v3901, 0
      %v3943 = vsel %vm1911, %v3902, 0
      %v3946 = vsel %vm1911, %v3903, 0
      %v3949 = vsel %vm1911, %v3904, 0
      %v3952 = vsel %vm1911, %v3905, 0
      %v3955 = vsel %vm1911, %v3906, 0
      %v3958 = vsel %vm1911, %v3907, 0
      %v3961 = vsel %vm1911, %v3908, 0
      %v3964 = vsel %vm1911, %v3909, 0
      %v3967 = vsel %vm1911, %v3910, 0
      %v3970 = vsel %vm1911, %v3911, 0
      %v3973 = vsel %vm1911, %v3912, 0
      %v3976 = vsel %vm1911, %v3913, 0
      %v3979 = vsel %vm1911, %v3914, 0
      %v3982 = vsel %vm1911, %v3915, 0
      %v3985 = vsel %vm1911, %v3916, 0
      %v3988 = vsel %vm1911, %v3917, 0
      %v3991 = vsel %vm1911, %v3918, 0
      %v3994 = vsel %vm1911, %v3919, 0
      %v3997 = vsel %vm1911, %v3920, 0
      %v4000 = vsel %vm1911, %v3921, 0
      %v4003 = vsel %vm1911, %v3922, 0
      %v4006 = vsel %vm1911, %v3923, 0
      %v4009 = vsel %vm1911, %v3924, 0
      %v4012 = vsel %vm1911, %v3925, 0
      %v4015 = vsel %vm1911, %v3926, 0
      %v4018 = vsel %vm1911, %v3927, 0
      %v4021 = vsel %vm1911, %v3928, 0
      %v4024 = vsel %vm1911, %v3929, 0
      %v4027 = vsel %vm1911, %v3930, 0
      %v4030 = vsel %vm1911, %v3931, 0
      %v4033 = vsel %vm1911, %v3932, 0
      %v4036 = vsel %vm2008, %v3938, 0
      %4038 = vmatprep.subr.mxu0 0.0
      %4039 = vmatpush1.msra.mxu0 %v3934
      %4040 = vmatprep.subr.mxu0 0.0
      %4041 = vmatpush1.msra.mxu0 %v3935
      %4042 = vmatprep.subr.mxu0 0.0
      %4043 = vmatpush1.msra.mxu0 %v3936
      %4044 = vmatprep.subr.mxu0 0.0
      %4045 = vmatpush1.msra.mxu0 %v3937
      %4046 = vmatprep.subr.mxu0 0.0
      %4047 = vmatpush1.msra.mxu0 %v4036
      %4048 = vmatprep.subr.mxu0 0.0
      %4049 = vmatpush1.msra.mxu0 0.0
      %4050 = vmatprep.subr.mxu0 0.0
      %4051 = vmatpush1.msra.mxu0 0.0
      %4052 = vmatprep.subr.mxu0 0.0
      %4053 = vmatpush1.msra.mxu0 0.0
      %4054 = vmatprep.subr.mxu0 0.0
      %4055 = vmatpush1.msra.mxu0 0.0
      %4056 = vmatprep.subr.mxu0 0.0
      %4057 = vmatpush1.msra.mxu0 0.0
      %4058 = vmatprep.subr.mxu0 0.0
      %4059 = vmatpush1.msra.mxu0 0.0
      %4060 = vmatprep.subr.mxu0 0.0
      %4061 = vmatpush1.msra.mxu0 0.0
      %4062 = vmatprep.subr.mxu0 0.0
      %4063 = vmatpush1.msra.mxu0 0.0
      %4064 = vmatprep.subr.mxu0 0.0
      %4065 = vmatpush1.msra.mxu0 0.0
      %4066 = vmatprep.subr.mxu0 0.0
      %4067 = vmatpush1.msra.mxu0 0.0
      %4068 = vmatprep.subr.mxu0 0.0
      %4069 = vmatpush1.msra.mxu0 0.0
      %4070 = vmatprep.subr.mxu0 0.0
      %4071 = vmatpush1.msra.mxu0 0.0
      %4072 = vmatprep.subr.mxu0 0.0
      %4073 = vmatpush1.msra.mxu0 0.0
      %4074 = vmatprep.subr.mxu0 0.0
      %4075 = vmatpush1.msra.mxu0 0.0
      %4076 = vmatprep.subr.mxu0 0.0
      %4077 = vmatpush1.msra.mxu0 0.0
      %4078 = vmatprep.subr.mxu0 0.0
      %4079 = vmatpush1.msra.mxu0 0.0
      %4080 = vmatprep.subr.mxu0 0.0
      %4081 = vmatpush1.msra.mxu0 0.0
      %4082 = vmatprep.subr.mxu0 0.0
      %4083 = vmatpush1.msra.mxu0 0.0
      %4084 = vmatprep.subr.mxu0 0.0
      %4085 = vmatpush1.msra.mxu0 0.0
      %4086 = vmatprep.subr.mxu0 0.0
      %4087 = vmatpush1.msra.mxu0 0.0
      %4088 = vmatprep.subr.mxu0 0.0
      %4089 = vmatpush1.msra.mxu0 0.0
      %4090 = vmatprep.subr.mxu0 0.0
      %4091 = vmatpush1.msra.mxu0 0.0
      %4092 = vmatprep.subr.mxu0 0.0
      %4093 = vmatpush1.msra.mxu0 0.0
      %4094 = vmatprep.subr.mxu0 0.0
      %4095 = vmatpush1.msra.mxu0 0.0
      %4096 = vmatprep.subr.mxu0 0.0
      %4097 = vmatpush1.msra.mxu0 0.0
      %4098 = vmatprep.subr.mxu0 0.0
      %4099 = vmatpush1.msra.mxu0 0.0
      %4100 = vmatprep.subr.mxu0 0.0
      %4101 = vmatpush1.msra.mxu0 0.0
      %4102 = vmatprep.mubr.f32.mxu0 0.0
      %4103 = vmatmul.mubr.f32.gmra.mrb[0].mxu0 %v3940
      %v4104 = vpop.f32.mrb[0].mxu0
      %v4105 = vadd.f32 %v200, %v4104
      %v4106 = vpop.f32.mrb[0].mxu0
      %4107 = vmatprep.mubr.f32.mxu0 0.0
      %4108 = vmatmul.mubr.f32.gmra.mrb[0].mxu0 %v3943
      %v4109 = vpop.f32.mrb[0].mxu0
      %v4110 = vadd.f32 %v201, %v4109
      %v4111 = vpop.f32.mrb[0].mxu0
      %4112 = vmatprep.mubr.f32.mxu0 0.0
      %4113 = vmatmul.mubr.f32.gmra.mrb[0].mxu0 %v3946
      %v4114 = vpop.f32.mrb[0].mxu0
      %v4115 = vadd.f32 %v202, %v4114
      %v4116 = vpop.f32.mrb[0].mxu0
      %4117 = vmatprep.mubr.f32.mxu0 0.0
      %4118 = vmatmul.mubr.f32.gmra.mrb[0].mxu0 %v3949
      %v4119 = vpop.f32.mrb[0].mxu0
      %v4120 = vadd.f32 %v203, %v4119
      %v4121 = vpop.f32.mrb[0].mxu0
      %4122 = vmatprep.mubr.f32.mxu0 0.0
      %4123 = vmatmul.mubr.f32.gmra.mrb[0].mxu0 %v3952
      %v4124 = vpop.f32.mrb[0].mxu0
      %v4125 = vadd.f32 %v204, %v4124
      %v4126 = vpop.f32.mrb[0].mxu0
      %4127 = vmatprep.mubr.f32.mxu0 0.0
      %4128 = vmatmul.mubr.f32.gmra.mrb[0].mxu0 %v3955
      %v4129 = vpop.f32.mrb[0].mxu0
      %v4130 = vadd.f32 %v205, %v4129
      %v4131 = vpop.f32.mrb[0].mxu0
      %4132 = vmatprep.mubr.f32.mxu0 0.0
      %4133 = vmatmul.mubr.f32.gmra.mrb[0].mxu0 %v3958
      %v4134 = vpop.f32.mrb[0].mxu0
      %v4135 = vadd.f32 %v206, %v4134
      %v4136 = vpop.f32.mrb[0].mxu0
      %4137 = vmatprep.mubr.f32.mxu0 0.0
      %4138 = vmatmul.mubr.f32.gmra.mrb[0].mxu0 %v3961
      %v4139 = vpop.f32.mrb[0].mxu0
      %v4140 = vadd.f32 %v207, %v4139
      %v4141 = vpop.f32.mrb[0].mxu0
      %4142 = vmatprep.mubr.f32.mxu0 0.0
      %4143 = vmatmul.mubr.f32.gmra.mrb[0].mxu0 %v3964
      %v4144 = vpop.f32.mrb[0].mxu0
      %v4145 = vadd.f32 %v208, %v4144
      %v4146 = vpop.f32.mrb[0].mxu0
      %4147 = vmatprep.mubr.f32.mxu0 0.0
      %4148 = vmatmul.mubr.f32.gmra.mrb[0].mxu0 %v3967
      %v4149 = vpop.f32.mrb[0].mxu0
      %v4150 = vadd.f32 %v209, %v4149
      %v4151 = vpop.f32.mrb[0].mxu0
      %4152 = vmatprep.mubr.f32.mxu0 0.0
      %4153 = vmatmul.mubr.f32.gmra.mrb[0].mxu0 %v3970
      %v4154 = vpop.f32.mrb[0].mxu0
      %v4155 = vadd.f32 %v210, %v4154
      %v4156 = vpop.f32.mrb[0].mxu0
      %4157 = vmatprep.mubr.f32.mxu0 0.0
      %4158 = vmatmul.mubr.f32.gmra.mrb[0].mxu0 %v3973
      %v4159 = vpop.f32.mrb[0].mxu0
      %v4160 = vadd.f32 %v211, %v4159
      %v4161 = vpop.f32.mrb[0].mxu0
      %4162 = vmatprep.mubr.f32.mxu0 0.0
      %4163 = vmatmul.mubr.f32.gmra.mrb[0].mxu0 %v3976
      %v4164 = vpop.f32.mrb[0].mxu0
      %v4165 = vadd.f32 %v212, %v4164
      %v4166 = vpop.f32.mrb[0].mxu0
      %4167 = vmatprep.mubr.f32.mxu0 0.0
      %4168 = vmatmul.mubr.f32.gmra.mrb[0].mxu0 %v3979
      %v4169 = vpop.f32.mrb[0].mxu0
      %v4170 = vadd.f32 %v213, %v4169
      %v4171 = vpop.f32.mrb[0].mxu0
      %4172 = vmatprep.mubr.f32.mxu0 0.0
      %4173 = vmatmul.mubr.f32.gmra.mrb[0].mxu0 %v3982
      %v4174 = vpop.f32.mrb[0].mxu0
      %v4175 = vadd.f32 %v214, %v4174
      %v4176 = vpop.f32.mrb[0].mxu0
      %4177 = vmatprep.mubr.f32.mxu0 0.0
      %4178 = vmatmul.mubr.f32.gmra.mrb[0].mxu0 %v3985
      %v4179 = vpop.f32.mrb[0].mxu0
      %v4180 = vadd.f32 %v215, %v4179
      %v4181 = vpop.f32.mrb[0].mxu0
      %4182 = vmatprep.mubr.f32.mxu0 0.0
      %4183 = vmatmul.mubr.f32.gmra.mrb[0].mxu0 %v3988
      %v4184 = vpop.f32.mrb[0].mxu0
      %v4185 = vadd.f32 %v216, %v4184
      %v4186 = vpop.f32.mrb[0].mxu0
      %4187 = vmatprep.mubr.f32.mxu0 0.0
      %4188 = vmatmul.mubr.f32.gmra.mrb[0].mxu0 %v3991
      %v4189 = vpop.f32.mrb[0].mxu0
      %v4190 = vadd.f32 %v217, %v4189
      %v4191 = vpop.f32.mrb[0].mxu0
      %4192 = vmatprep.mubr.f32.mxu0 0.0
      %4193 = vmatmul.mubr.f32.gmra.mrb[0].mxu0 %v3994
      %v4194 = vpop.f32.mrb[0].mxu0
      %v4195 = vadd.f32 %v218, %v4194
      %v4196 = vpop.f32.mrb[0].mxu0
      %4197 = vmatprep.mubr.f32.mxu0 0.0
      %4198 = vmatmul.mubr.f32.gmra.mrb[0].mxu0 %v3997
      %v4199 = vpop.f32.mrb[0].mxu0
      %v4200 = vadd.f32 %v219, %v4199
      %v4201 = vpop.f32.mrb[0].mxu0
      %4202 = vmatprep.mubr.f32.mxu0 0.0
      %4203 = vmatmul.mubr.f32.gmra.mrb[0].mxu0 %v4000
      %v4204 = vpop.f32.mrb[0].mxu0
      %v4205 = vadd.f32 %v220, %v4204
      %v4206 = vpop.f32.mrb[0].mxu0
      %4207 = vmatprep.mubr.f32.mxu0 0.0
      %4208 = vmatmul.mubr.f32.gmra.mrb[0].mxu0 %v4003
      %v4209 = vpop.f32.mrb[0].mxu0
      %v4210 = vadd.f32 %v221, %v4209
      %v4211 = vpop.f32.mrb[0].mxu0
      %4212 = vmatprep.mubr.f32.mxu0 0.0
      %4213 = vmatmul.mubr.f32.gmra.mrb[0].mxu0 %v4006
      %v4214 = vpop.f32.mrb[0].mxu0
      %v4215 = vadd.f32 %v222, %v4214
      %v4216 = vpop.f32.mrb[0].mxu0
      %4217 = vmatprep.mubr.f32.mxu0 0.0
      %4218 = vmatmul.mubr.f32.gmra.mrb[0].mxu0 %v4009
      %v4219 = vpop.f32.mrb[0].mxu0
      %v4220 = vadd.f32 %v223, %v4219
      %v4221 = vpop.f32.mrb[0].mxu0
      %4222 = vmatprep.mubr.f32.mxu0 0.0
      %4223 = vmatmul.mubr.f32.gmra.mrb[0].mxu0 %v4012
      %v4224 = vpop.f32.mrb[0].mxu0
      %v4225 = vadd.f32 %v224, %v4224
      %v4226 = vpop.f32.mrb[0].mxu0
      %4227 = vmatprep.mubr.f32.mxu0 0.0
      %4228 = vmatmul.mubr.f32.gmra.mrb[0].mxu0 %v4015
      %v4229 = vpop.f32.mrb[0].mxu0
      %v4230 = vadd.f32 %v225, %v4229
      %v4231 = vpop.f32.mrb[0].mxu0
      %4232 = vmatprep.mubr.f32.mxu0 0.0
      %4233 = vmatmul.mubr.f32.gmra.mrb[0].mxu0 %v4018
      %v4234 = vpop.f32.mrb[0].mxu0
      %v4235 = vadd.f32 %v226, %v4234
      %v4236 = vpop.f32.mrb[0].mxu0
      %4237 = vmatprep.mubr.f32.mxu0 0.0
      %4238 = vmatmul.mubr.f32.gmra.mrb[0].mxu0 %v4021
      %v4239 = vpop.f32.mrb[0].mxu0
      %v4240 = vadd.f32 %v227, %v4239
      %v4241 = vpop.f32.mrb[0].mxu0
      %4242 = vmatprep.mubr.f32.mxu0 0.0
      %4243 = vmatmul.mubr.f32.gmra.mrb[0].mxu0 %v4024
      %v4244 = vpop.f32.mrb[0].mxu0
      %v4245 = vadd.f32 %v228, %v4244
      %v4246 = vpop.f32.mrb[0].mxu0
      %4247 = vmatprep.mubr.f32.mxu0 0.0
      %4248 = vmatmul.mubr.f32.gmra.mrb[0].mxu0 %v4027
      %v4249 = vpop.f32.mrb[0].mxu0
      %v4250 = vadd.f32 %v229, %v4249
      %v4251 = vpop.f32.mrb[0].mxu0
      %4252 = vmatprep.mubr.f32.mxu0 0.0
      %4253 = vmatmul.mubr.f32.gmra.mrb[0].mxu0 %v4030
      %v4254 = vpop.f32.mrb[0].mxu0
      %v4255 = vadd.f32 %v230, %v4254
      %v4256 = vpop.f32.mrb[0].mxu0
      %4257 = vmatprep.mubr.f32.mxu0 0.0
      %4258 = vmatmul.mubr.f32.gmra.mrb[0].mxu0 %v4033
      %v4259 = vpop.f32.mrb[0].mxu0
      %v4260 = vadd.f32 %v231, %v4259
      %v4261 = vpop.f32.mrb[0].mxu0
      %4262 = vdwg.mxu0
      %4263 = vst.msk [vmem:[%s232 + $0x1] sm:$0xff] %vm144, %v4105
      %4264 = vst.msk [vmem:[%s232 + $0x9] sm:$0xff] %vm144, %v4110
      %4265 = vst.msk [vmem:[%s232 + $0x19] sm:$0xff] %vm144, %v4115
      %4266 = vst.msk [vmem:[%s232 + $0x21] sm:$0xff] %vm144, %v4120
      %4267 = vst.msk [vmem:[%s232 + $0x31] sm:$0xff] %vm144, %v4125
      %4268 = vst.msk [vmem:[%s232 + $0x39] sm:$0xff] %vm144, %v4130
      %4269 = vst.msk [vmem:[%s232 + $0x49] sm:$0xff] %vm144, %v4135
      %4270 = vst.msk [vmem:[%s232 + $0x51] sm:$0xff] %vm144, %v4140
      %4271 = vst.msk [vmem:[%s232 + $0x61] sm:$0xff] %vm144, %v4145
      %4272 = vst.msk [vmem:[%s232 + $0x69] sm:$0xff] %vm144, %v4150
      %4273 = vst.msk [vmem:[%s232 + $0x79] sm:$0xff] %vm144, %v4155
      %4274 = vst.msk [vmem:[%s232 + $0x81] sm:$0xff] %vm144, %v4160
      %4275 = vst.msk [vmem:[%s232 + $0x91] sm:$0xff] %vm144, %v4165
      %4276 = vst.msk [vmem:[%s232 + $0x99] sm:$0xff] %vm144, %v4170
      %4277 = vst.msk [vmem:[%s232 + $0xa9] sm:$0xff] %vm144, %v4175
      %4278 = vst.msk [vmem:[%s232 + $0xb1] sm:$0xff] %vm144, %v4180
      %4279 = vst.msk [vmem:[%s232 + $0xc1] sm:$0xff] %vm144, %v4185
      %4280 = vst.msk [vmem:[%s232 + $0xc9] sm:$0xff] %vm144, %v4190
      %4281 = vst.msk [vmem:[%s232 + $0xd9] sm:$0xff] %vm144, %v4195
      %4282 = vst.msk [vmem:[%s232 + $0xe1] sm:$0xff] %vm144, %v4200
      %4283 = vst.msk [vmem:[%s232 + $0xf1] sm:$0xff] %vm144, %v4205
      %4284 = vst.msk [vmem:[%s232 + $0xf9] sm:$0xff] %vm144, %v4210
      %4285 = vst.msk [vmem:[%s232 + $0x109] sm:$0xff] %vm144, %v4215
      %4286 = vst.msk [vmem:[%s232 + $0x111] sm:$0xff] %vm144, %v4220
      %4287 = vst.msk [vmem:[%s232 + $0x121] sm:$0xff] %vm144, %v4225
      %4288 = vst.msk [vmem:[%s232 + $0x129] sm:$0xff] %vm144, %v4230
      %4289 = vst.msk [vmem:[%s232 + $0x139] sm:$0xff] %vm144, %v4235
      %4290 = vst.msk [vmem:[%s232 + $0x141] sm:$0xff] %vm144, %v4240
      %4291 = vst.msk [vmem:[%s232 + $0x151] sm:$0xff] %vm144, %v4245
      %4292 = vst.msk [vmem:[%s232 + $0x159] sm:$0xff] %vm144, %v4250
      %4293 = vst.msk [vmem:[%s232 + $0x169] sm:$0xff] %vm144, %v4255
      %4294 = vst.msk [vmem:[%s232 + $0x171] sm:$0xff] %vm144, %v4260
      %v4295 = vld [vmem:[#allocation2] sm:$0xff]
      %v4296 = vld [vmem:[#allocation2 + $0x8] sm:$0xff]
      %v4297 = vld [vmem:[#allocation2 + $0x18] sm:$0xff]
      %v4298 = vld [vmem:[#allocation2 + $0x20] sm:$0xff]
      %v4299 = vld [vmem:[#allocation2 + $0x30] sm:$0xff]
      %v4300 = vld [vmem:[#allocation2 + $0x38] sm:$0xff]
      %v4301 = vld [vmem:[#allocation2 + $0x48] sm:$0xff]
      %v4302 = vld [vmem:[#allocation2 + $0x50] sm:$0xff]
      %v4303 = vld [vmem:[#allocation2 + $0x60] sm:$0xff]
      %v4304 = vld [vmem:[#allocation2 + $0x68] sm:$0xff]
      %v4305 = vld [vmem:[#allocation2 + $0x78] sm:$0xff]
      %v4306 = vld [vmem:[#allocation2 + $0x80] sm:$0xff]
      %v4307 = vld [vmem:[#allocation2 + $0x90] sm:$0xff]
      %v4308 = vld [vmem:[#allocation2 + $0x98] sm:$0xff]
      %v4309 = vld [vmem:[#allocation2 + $0xa8] sm:$0xff]
      %v4310 = vld [vmem:[#allocation2 + $0xb0] sm:$0xff]
      %v4311 = vld [vmem:[#allocation2 + $0xc0] sm:$0xff]
      %v4312 = vld [vmem:[#allocation2 + $0xc8] sm:$0xff]
      %v4313 = vld [vmem:[#allocation2 + $0xd8] sm:$0xff]
      %v4314 = vld [vmem:[#allocation2 + $0xe0] sm:$0xff]
      %v4315 = vld [vmem:[#allocation2 + $0xf0] sm:$0xff]
      %v4316 = vld [vmem:[#allocation2 + $0xf8] sm:$0xff]
      %v4317 = vld [vmem:[#allocation2 + $0x108] sm:$0xff]
      %v4318 = vld [vmem:[#allocation2 + $0x110] sm:$0xff]
      %v4319 = vld [vmem:[#allocation2 + $0x120] sm:$0xff]
      %v4320 = vld [vmem:[#allocation2 + $0x128] sm:$0xff]
      %v4321 = vld [vmem:[#allocation2 + $0x138] sm:$0xff]
      %v4322 = vld [vmem:[#allocation2 + $0x140] sm:$0xff]
      %v4323 = vld [vmem:[#allocation2 + $0x150] sm:$0xff]
      %v4324 = vld [vmem:[#allocation2 + $0x158] sm:$0xff]
      %v4325 = vld [vmem:[#allocation2 + $0x168] sm:$0xff]
      %v4326 = vld [vmem:[#allocation2 + $0x170] sm:$0xff]
      %4327 = vst.msk [vmem:[#allocation3] sm:$0xff] %vm144, %v4295
      %4328 = vst.msk [vmem:[#allocation3 + $0x8] sm:$0xff] %vm144, %v4296
      %4329 = vst.msk [vmem:[#allocation3 + $0x10] sm:$0xff] %vm144, %v4297
      %4330 = vst.msk [vmem:[#allocation3 + $0x18] sm:$0xff] %vm144, %v4298
      %4331 = vst.msk [vmem:[#allocation3 + $0x20] sm:$0xff] %vm144, %v4299
      %4332 = vst.msk [vmem:[#allocation3 + $0x28] sm:$0xff] %vm144, %v4300
      %4333 = vst.msk [vmem:[#allocation3 + $0x30] sm:$0xff] %vm144, %v4301
      %4334 = vst.msk [vmem:[#allocation3 + $0x38] sm:$0xff] %vm144, %v4302
      %4335 = vst.msk [vmem:[#allocation3 + $0x40] sm:$0xff] %vm144, %v4303
      %4336 = vst.msk [vmem:[#allocation3 + $0x48] sm:$0xff] %vm144, %v4304
      %4337 = vst.msk [vmem:[#allocation3 + $0x50] sm:$0xff] %vm144, %v4305
      %4338 = vst.msk [vmem:[#allocation3 + $0x58] sm:$0xff] %vm144, %v4306
      %4339 = vst.msk [vmem:[#allocation3 + $0x60] sm:$0xff] %vm144, %v4307
      %4340 = vst.msk [vmem:[#allocation3 + $0x68] sm:$0xff] %vm144, %v4308
      %4341 = vst.msk [vmem:[#allocation3 + $0x70] sm:$0xff] %vm144, %v4309
      %4342 = vst.msk [vmem:[#allocation3 + $0x78] sm:$0xff] %vm144, %v4310
      %4343 = vst.msk [vmem:[#allocation3 + $0x80] sm:$0xff] %vm144, %v4311
      %4344 = vst.msk [vmem:[#allocation3 + $0x88] sm:$0xff] %vm144, %v4312
      %4345 = vst.msk [vmem:[#allocation3 + $0x90] sm:$0xff] %vm144, %v4313
      %4346 = vst.msk [vmem:[#allocation3 + $0x98] sm:$0xff] %vm144, %v4314
      %4347 = vst.msk [vmem:[#allocation3 + $0xa0] sm:$0xff] %vm144, %v4315
      %4348 = vst.msk [vmem:[#allocation3 + $0xa8] sm:$0xff] %vm144, %v4316
      %4349 = vst.msk [vmem:[#allocation3 + $0xb0] sm:$0xff] %vm144, %v4317
      %4350 = vst.msk [vmem:[#allocation3 + $0xb8] sm:$0xff] %vm144, %v4318
      %4351 = vst.msk [vmem:[#allocation3 + $0xc0] sm:$0xff] %vm144, %v4319
      %4352 = vst.msk [vmem:[#allocation3 + $0xc8] sm:$0xff] %vm144, %v4320
      %4353 = vst.msk [vmem:[#allocation3 + $0xd0] sm:$0xff] %vm144, %v4321
      %4354 = vst.msk [vmem:[#allocation3 + $0xd8] sm:$0xff] %vm144, %v4322
      %4355 = vst.msk [vmem:[#allocation3 + $0xe0] sm:$0xff] %vm144, %v4323
      %4356 = vst.msk [vmem:[#allocation3 + $0xe8] sm:$0xff] %vm144, %v4324
      %4357 = vst.msk [vmem:[#allocation3 + $0xf0] sm:$0xff] %vm144, %v4325
      %4358 = vst.msk [vmem:[#allocation3 + $0xf8] sm:$0xff] %vm144, %v4326
      %v4359 = vld [vmem:[#allocation2 + $0x1] sm:$0xff]
      %v4360 = vld [vmem:[#allocation2 + $0x9] sm:$0xff]
      %v4361 = vld [vmem:[#allocation2 + $0x19] sm:$0xff]
      %v4362 = vld [vmem:[#allocation2 + $0x21] sm:$0xff]
      %v4363 = vld [vmem:[#allocation2 + $0x31] sm:$0xff]
      %v4364 = vld [vmem:[#allocation2 + $0x39] sm:$0xff]
      %v4365 = vld [vmem:[#allocation2 + $0x49] sm:$0xff]
      %v4366 = vld [vmem:[#allocation2 + $0x51] sm:$0xff]
      %v4367 = vld [vmem:[#allocation2 + $0x61] sm:$0xff]
      %v4368 = vld [vmem:[#allocation2 + $0x69] sm:$0xff]
      %v4369 = vld [vmem:[#allocation2 + $0x79] sm:$0xff]
      %v4370 = vld [vmem:[#allocation2 + $0x81] sm:$0xff]
      %v4371 = vld [vmem:[#allocation2 + $0x91] sm:$0xff]
      %v4372 = vld [vmem:[#allocation2 + $0x99] sm:$0xff]
      %v4373 = vld [vmem:[#allocation2 + $0xa9] sm:$0xff]
      %v4374 = vld [vmem:[#allocation2 + $0xb1] sm:$0xff]
      %v4375 = vld [vmem:[#allocation2 + $0xc1] sm:$0xff]
      %v4376 = vld [vmem:[#allocation2 + $0xc9] sm:$0xff]
      %v4377 = vld [vmem:[#allocation2 + $0xd9] sm:$0xff]
      %v4378 = vld [vmem:[#allocation2 + $0xe1] sm:$0xff]
      %v4379 = vld [vmem:[#allocation2 + $0xf1] sm:$0xff]
      %v4380 = vld [vmem:[#allocation2 + $0xf9] sm:$0xff]
      %v4381 = vld [vmem:[#allocation2 + $0x109] sm:$0xff]
      %v4382 = vld [vmem:[#allocation2 + $0x111] sm:$0xff]
      %v4383 = vld [vmem:[#allocation2 + $0x121] sm:$0xff]
      %v4384 = vld [vmem:[#allocation2 + $0x129] sm:$0xff]
      %v4385 = vld [vmem:[#allocation2 + $0x139] sm:$0xff]
      %v4386 = vld [vmem:[#allocation2 + $0x141] sm:$0xff]
      %v4387 = vld [vmem:[#allocation2 + $0x151] sm:$0xff]
      %v4388 = vld [vmem:[#allocation2 + $0x159] sm:$0xff]
      %v4389 = vld [vmem:[#allocation2 + $0x169] sm:$0xff]
      %v4390 = vld [vmem:[#allocation2 + $0x171] sm:$0xff]
      %4423 = vrot.lane.b32.xlu0 %v4359, 4
      %v4424 = vpop.permute.xlu0 %4423
      %4425 = vrot.lane.b32.xlu0 %v4360, 4
      %v4426 = vpop.permute.xlu0 %4425
      %4427 = vrot.lane.b32.xlu0 %v4361, 4
      %v4428 = vpop.permute.xlu0 %4427
      %4429 = vrot.lane.b32.xlu0 %v4362, 4
      %v4430 = vpop.permute.xlu0 %4429
      %4431 = vrot.lane.b32.xlu0 %v4363, 4
      %v4432 = vpop.permute.xlu0 %4431
      %4433 = vrot.lane.b32.xlu0 %v4364, 4
      %v4434 = vpop.permute.xlu0 %4433
      %4435 = vrot.lane.b32.xlu0 %v4365, 4
      %v4436 = vpop.permute.xlu0 %4435
      %4437 = vrot.lane.b32.xlu0 %v4366, 4
      %v4438 = vpop.permute.xlu0 %4437
      %4439 = vrot.lane.b32.xlu0 %v4367, 4
      %v4440 = vpop.permute.xlu0 %4439
      %4441 = vrot.lane.b32.xlu0 %v4368, 4
      %v4442 = vpop.permute.xlu0 %4441
      %4443 = vrot.lane.b32.xlu0 %v4369, 4
      %v4444 = vpop.permute.xlu0 %4443
      %4445 = vrot.lane.b32.xlu0 %v4370, 4
      %v4446 = vpop.permute.xlu0 %4445
      %4447 = vrot.lane.b32.xlu0 %v4371, 4
      %v4448 = vpop.permute.xlu0 %4447
      %4449 = vrot.lane.b32.xlu0 %v4372, 4
      %v4450 = vpop.permute.xlu0 %4449
      %4451 = vrot.lane.b32.xlu0 %v4373, 4
      %v4452 = vpop.permute.xlu0 %4451
      %4453 = vrot.lane.b32.xlu0 %v4374, 4
      %v4454 = vpop.permute.xlu0 %4453
      %4455 = vrot.lane.b32.xlu0 %v4375, 4
      %v4456 = vpop.permute.xlu0 %4455
      %4457 = vrot.lane.b32.xlu0 %v4376, 4
      %v4458 = vpop.permute.xlu0 %4457
      %4459 = vrot.lane.b32.xlu0 %v4377, 4
      %v4460 = vpop.permute.xlu0 %4459
      %4461 = vrot.lane.b32.xlu0 %v4378, 4
      %v4462 = vpop.permute.xlu0 %4461
      %4463 = vrot.lane.b32.xlu0 %v4379, 4
      %v4464 = vpop.permute.xlu0 %4463
      %4465 = vrot.lane.b32.xlu0 %v4380, 4
      %v4466 = vpop.permute.xlu0 %4465
      %4467 = vrot.lane.b32.xlu0 %v4381, 4
      %v4468 = vpop.permute.xlu0 %4467
      %4469 = vrot.lane.b32.xlu0 %v4382, 4
      %v4470 = vpop.permute.xlu0 %4469
      %4471 = vrot.lane.b32.xlu0 %v4383, 4
      %v4472 = vpop.permute.xlu0 %4471
      %4473 = vrot.lane.b32.xlu0 %v4384, 4
      %v4474 = vpop.permute.xlu0 %4473
      %4475 = vrot.lane.b32.xlu0 %v4385, 4
      %v4476 = vpop.permute.xlu0 %4475
      %4477 = vrot.lane.b32.xlu0 %v4386, 4
      %v4478 = vpop.permute.xlu0 %4477
      %4479 = vrot.lane.b32.xlu0 %v4387, 4
      %v4480 = vpop.permute.xlu0 %4479
      %4481 = vrot.lane.b32.xlu0 %v4388, 4
      %v4482 = vpop.permute.xlu0 %4481
      %4483 = vrot.lane.b32.xlu0 %v4389, 4
      %v4484 = vpop.permute.xlu0 %4483
      %4485 = vrot.lane.b32.xlu0 %v4390, 4
      %v4486 = vpop.permute.xlu0 %4485
      %4519 = vst.msk [vmem:[#allocation3] sm:$0xff] %vm489, %v4424
      %4520 = vst.msk [vmem:[#allocation3 + $0x8] sm:$0xff] %vm489, %v4426
      %4521 = vst.msk [vmem:[#allocation3 + $0x10] sm:$0xff] %vm489, %v4428
      %4522 = vst.msk [vmem:[#allocation3 + $0x18] sm:$0xff] %vm489, %v4430
      %4523 = vst.msk [vmem:[#allocation3 + $0x20] sm:$0xff] %vm489, %v4432
      %4524 = vst.msk [vmem:[#allocation3 + $0x28] sm:$0xff] %vm489, %v4434
      %4525 = vst.msk [vmem:[#allocation3 + $0x30] sm:$0xff] %vm489, %v4436
      %4526 = vst.msk [vmem:[#allocation3 + $0x38] sm:$0xff] %vm489, %v4438
      %4527 = vst.msk [vmem:[#allocation3 + $0x40] sm:$0xff] %vm489, %v4440
      %4528 = vst.msk [vmem:[#allocation3 + $0x48] sm:$0xff] %vm489, %v4442
      %4529 = vst.msk [vmem:[#allocation3 + $0x50] sm:$0xff] %vm489, %v4444
      %4530 = vst.msk [vmem:[#allocation3 + $0x58] sm:$0xff] %vm489, %v4446
      %4531 = vst.msk [vmem:[#allocation3 + $0x60] sm:$0xff] %vm489, %v4448
      %4532 = vst.msk [vmem:[#allocation3 + $0x68] sm:$0xff] %vm489, %v4450
      %4533 = vst.msk [vmem:[#allocation3 + $0x70] sm:$0xff] %vm489, %v4452
      %4534 = vst.msk [vmem:[#allocation3 + $0x78] sm:$0xff] %vm489, %v4454
      %4535 = vst.msk [vmem:[#allocation3 + $0x80] sm:$0xff] %vm489, %v4456
      %4536 = vst.msk [vmem:[#allocation3 + $0x88] sm:$0xff] %vm489, %v4458
      %4537 = vst.msk [vmem:[#allocation3 + $0x90] sm:$0xff] %vm489, %v4460
      %4538 = vst.msk [vmem:[#allocation3 + $0x98] sm:$0xff] %vm489, %v4462
      %4539 = vst.msk [vmem:[#allocation3 + $0xa0] sm:$0xff] %vm489, %v4464
      %4540 = vst.msk [vmem:[#allocation3 + $0xa8] sm:$0xff] %vm489, %v4466
      %4541 = vst.msk [vmem:[#allocation3 + $0xb0] sm:$0xff] %vm489, %v4468
      %4542 = vst.msk [vmem:[#allocation3 + $0xb8] sm:$0xff] %vm489, %v4470
      %4543 = vst.msk [vmem:[#allocation3 + $0xc0] sm:$0xff] %vm489, %v4472
      %4544 = vst.msk [vmem:[#allocation3 + $0xc8] sm:$0xff] %vm489, %v4474
      %4545 = vst.msk [vmem:[#allocation3 + $0xd0] sm:$0xff] %vm489, %v4476
      %4546 = vst.msk [vmem:[#allocation3 + $0xd8] sm:$0xff] %vm489, %v4478
      %4547 = vst.msk [vmem:[#allocation3 + $0xe0] sm:$0xff] %vm489, %v4480
      %4548 = vst.msk [vmem:[#allocation3 + $0xe8] sm:$0xff] %vm489, %v4482
      %4549 = vst.msk [vmem:[#allocation3 + $0xf0] sm:$0xff] %vm489, %v4484
      %4550 = vst.msk [vmem:[#allocation3 + $0xf8] sm:$0xff] %vm489, %v4486
      %v4551 = vld [vmem:[#allocation2 + $0x2] sm:$0xff]
      %v4552 = vld [vmem:[#allocation2 + $0xa] sm:$0xff]
      %v4553 = vld [vmem:[#allocation2 + $0x1a] sm:$0xff]
      %v4554 = vld [vmem:[#allocation2 + $0x22] sm:$0xff]
      %v4555 = vld [vmem:[#allocation2 + $0x32] sm:$0xff]
      %v4556 = vld [vmem:[#allocation2 + $0x3a] sm:$0xff]
      %v4557 = vld [vmem:[#allocation2 + $0x4a] sm:$0xff]
      %v4558 = vld [vmem:[#allocation2 + $0x52] sm:$0xff]
      %v4559 = vld [vmem:[#allocation2 + $0x62] sm:$0xff]
      %v4560 = vld [vmem:[#allocation2 + $0x6a] sm:$0xff]
      %v4561 = vld [vmem:[#allocation2 + $0x7a] sm:$0xff]
      %v4562 = vld [vmem:[#allocation2 + $0x82] sm:$0xff]
      %v4563 = vld [vmem:[#allocation2 + $0x92] sm:$0xff]
      %v4564 = vld [vmem:[#allocation2 + $0x9a] sm:$0xff]
      %v4565 = vld [vmem:[#allocation2 + $0xaa] sm:$0xff]
      %v4566 = vld [vmem:[#allocation2 + $0xb2] sm:$0xff]
      %v4567 = vld [vmem:[#allocation2 + $0xc2] sm:$0xff]
      %v4568 = vld [vmem:[#allocation2 + $0xca] sm:$0xff]
      %v4569 = vld [vmem:[#allocation2 + $0xda] sm:$0xff]
      %v4570 = vld [vmem:[#allocation2 + $0xe2] sm:$0xff]
      %v4571 = vld [vmem:[#allocation2 + $0xf2] sm:$0xff]
      %v4572 = vld [vmem:[#allocation2 + $0xfa] sm:$0xff]
      %v4573 = vld [vmem:[#allocation2 + $0x10a] sm:$0xff]
      %v4574 = vld [vmem:[#allocation2 + $0x112] sm:$0xff]
      %v4575 = vld [vmem:[#allocation2 + $0x122] sm:$0xff]
      %v4576 = vld [vmem:[#allocation2 + $0x12a] sm:$0xff]
      %v4577 = vld [vmem:[#allocation2 + $0x13a] sm:$0xff]
      %v4578 = vld [vmem:[#allocation2 + $0x142] sm:$0xff]
      %v4579 = vld [vmem:[#allocation2 + $0x152] sm:$0xff]
      %v4580 = vld [vmem:[#allocation2 + $0x15a] sm:$0xff]
      %v4581 = vld [vmem:[#allocation2 + $0x16a] sm:$0xff]
      %v4582 = vld [vmem:[#allocation2 + $0x172] sm:$0xff]
      %4615 = vrot.lane.b32.xlu0 %v4551, 8
      %v4616 = vpop.permute.xlu0 %4615
      %4617 = vrot.lane.b32.xlu0 %v4552, 8
      %v4618 = vpop.permute.xlu0 %4617
      %4619 = vrot.lane.b32.xlu0 %v4553, 8
      %v4620 = vpop.permute.xlu0 %4619
      %4621 = vrot.lane.b32.xlu0 %v4554, 8
      %v4622 = vpop.permute.xlu0 %4621
      %4623 = vrot.lane.b32.xlu0 %v4555, 8
      %v4624 = vpop.permute.xlu0 %4623
      %4625 = vrot.lane.b32.xlu0 %v4556, 8
      %v4626 = vpop.permute.xlu0 %4625
      %4627 = vrot.lane.b32.xlu0 %v4557, 8
      %v4628 = vpop.permute.xlu0 %4627
      %4629 = vrot.lane.b32.xlu0 %v4558, 8
      %v4630 = vpop.permute.xlu0 %4629
      %4631 = vrot.lane.b32.xlu0 %v4559, 8
      %v4632 = vpop.permute.xlu0 %4631
      %4633 = vrot.lane.b32.xlu0 %v4560, 8
      %v4634 = vpop.permute.xlu0 %4633
      %4635 = vrot.lane.b32.xlu0 %v4561, 8
      %v4636 = vpop.permute.xlu0 %4635
      %4637 = vrot.lane.b32.xlu0 %v4562, 8
      %v4638 = vpop.permute.xlu0 %4637
      %4639 = vrot.lane.b32.xlu0 %v4563, 8
      %v4640 = vpop.permute.xlu0 %4639
      %4641 = vrot.lane.b32.xlu0 %v4564, 8
      %v4642 = vpop.permute.xlu0 %4641
      %4643 = vrot.lane.b32.xlu0 %v4565, 8
      %v4644 = vpop.permute.xlu0 %4643
      %4645 = vrot.lane.b32.xlu0 %v4566, 8
      %v4646 = vpop.permute.xlu0 %4645
      %4647 = vrot.lane.b32.xlu0 %v4567, 8
      %v4648 = vpop.permute.xlu0 %4647
      %4649 = vrot.lane.b32.xlu0 %v4568, 8
      %v4650 = vpop.permute.xlu0 %4649
      %4651 = vrot.lane.b32.xlu0 %v4569, 8
      %v4652 = vpop.permute.xlu0 %4651
      %4653 = vrot.lane.b32.xlu0 %v4570, 8
      %v4654 = vpop.permute.xlu0 %4653
      %4655 = vrot.lane.b32.xlu0 %v4571, 8
      %v4656 = vpop.permute.xlu0 %4655
      %4657 = vrot.lane.b32.xlu0 %v4572, 8
      %v4658 = vpop.permute.xlu0 %4657
      %4659 = vrot.lane.b32.xlu0 %v4573, 8
      %v4660 = vpop.permute.xlu0 %4659
      %4661 = vrot.lane.b32.xlu0 %v4574, 8
      %v4662 = vpop.permute.xlu0 %4661
      %4663 = vrot.lane.b32.xlu0 %v4575, 8
      %v4664 = vpop.permute.xlu0 %4663
      %4665 = vrot.lane.b32.xlu0 %v4576, 8
      %v4666 = vpop.permute.xlu0 %4665
      %4667 = vrot.lane.b32.xlu0 %v4577, 8
      %v4668 = vpop.permute.xlu0 %4667
      %4669 = vrot.lane.b32.xlu0 %v4578, 8
      %v4670 = vpop.permute.xlu0 %4669
      %4671 = vrot.lane.b32.xlu0 %v4579, 8
      %v4672 = vpop.permute.xlu0 %4671
      %4673 = vrot.lane.b32.xlu0 %v4580, 8
      %v4674 = vpop.permute.xlu0 %4673
      %4675 = vrot.lane.b32.xlu0 %v4581, 8
      %v4676 = vpop.permute.xlu0 %4675
      %4677 = vrot.lane.b32.xlu0 %v4582, 8
      %v4678 = vpop.permute.xlu0 %4677
      %4711 = vst.msk [vmem:[#allocation3] sm:$0xff] %vm682, %v4616
      %4712 = vst.msk [vmem:[#allocation3 + $0x8] sm:$0xff] %vm682, %v4618
      %4713 = vst.msk [vmem:[#allocation3 + $0x10] sm:$0xff] %vm682, %v4620
      %4714 = vst.msk [vmem:[#allocation3 + $0x18] sm:$0xff] %vm682, %v4622
      %4715 = vst.msk [vmem:[#allocation3 + $0x20] sm:$0xff] %vm682, %v4624
      %4716 = vst.msk [vmem:[#allocation3 + $0x28] sm:$0xff] %vm682, %v4626
      %4717 = vst.msk [vmem:[#allocation3 + $0x30] sm:$0xff] %vm682, %v4628
      %4718 = vst.msk [vmem:[#allocation3 + $0x38] sm:$0xff] %vm682, %v4630
      %4719 = vst.msk [vmem:[#allocation3 + $0x40] sm:$0xff] %vm682, %v4632
      %4720 = vst.msk [vmem:[#allocation3 + $0x48] sm:$0xff] %vm682, %v4634
      %4721 = vst.msk [vmem:[#allocation3 + $0x50] sm:$0xff] %vm682, %v4636
      %4722 = vst.msk [vmem:[#allocation3 + $0x58] sm:$0xff] %vm682, %v4638
      %4723 = vst.msk [vmem:[#allocation3 + $0x60] sm:$0xff] %vm682, %v4640
      %4724 = vst.msk [vmem:[#allocation3 + $0x68] sm:$0xff] %vm682, %v4642
      %4725 = vst.msk [vmem:[#allocation3 + $0x70] sm:$0xff] %vm682, %v4644
      %4726 = vst.msk [vmem:[#allocation3 + $0x78] sm:$0xff] %vm682, %v4646
      %4727 = vst.msk [vmem:[#allocation3 + $0x80] sm:$0xff] %vm682, %v4648
      %4728 = vst.msk [vmem:[#allocation3 + $0x88] sm:$0xff] %vm682, %v4650
      %4729 = vst.msk [vmem:[#allocation3 + $0x90] sm:$0xff] %vm682, %v4652
      %4730 = vst.msk [vmem:[#allocation3 + $0x98] sm:$0xff] %vm682, %v4654
      %4731 = vst.msk [vmem:[#allocation3 + $0xa0] sm:$0xff] %vm682, %v4656
      %4732 = vst.msk [vmem:[#allocation3 + $0xa8] sm:$0xff] %vm682, %v4658
      %4733 = vst.msk [vmem:[#allocation3 + $0xb0] sm:$0xff] %vm682, %v4660
      %4734 = vst.msk [vmem:[#allocation3 + $0xb8] sm:$0xff] %vm682, %v4662
      %4735 = vst.msk [vmem:[#allocation3 + $0xc0] sm:$0xff] %vm682, %v4664
      %4736 = vst.msk [vmem:[#allocation3 + $0xc8] sm:$0xff] %vm682, %v4666
      %4737 = vst.msk [vmem:[#allocation3 + $0xd0] sm:$0xff] %vm682, %v4668
      %4738 = vst.msk [vmem:[#allocation3 + $0xd8] sm:$0xff] %vm682, %v4670
      %4739 = vst.msk [vmem:[#allocation3 + $0xe0] sm:$0xff] %vm682, %v4672
      %4740 = vst.msk [vmem:[#allocation3 + $0xe8] sm:$0xff] %vm682, %v4674
      %4741 = vst.msk [vmem:[#allocation3 + $0xf0] sm:$0xff] %vm682, %v4676
      %4742 = vst.msk [vmem:[#allocation3 + $0xf8] sm:$0xff] %vm682, %v4678
      %v4743 = vld [vmem:[%s232] sm:$0xff]
      %v4744 = vld [vmem:[%s232 + $0x8] sm:$0xff]
      %v4745 = vld [vmem:[%s232 + $0x18] sm:$0xff]
      %v4746 = vld [vmem:[%s232 + $0x20] sm:$0xff]
      %v4747 = vld [vmem:[%s232 + $0x30] sm:$0xff]
      %v4748 = vld [vmem:[%s232 + $0x38] sm:$0xff]
      %v4749 = vld [vmem:[%s232 + $0x48] sm:$0xff]
      %v4750 = vld [vmem:[%s232 + $0x50] sm:$0xff]
      %v4751 = vld [vmem:[%s232 + $0x60] sm:$0xff]
      %v4752 = vld [vmem:[%s232 + $0x68] sm:$0xff]
      %v4753 = vld [vmem:[%s232 + $0x78] sm:$0xff]
      %v4754 = vld [vmem:[%s232 + $0x80] sm:$0xff]
      %v4755 = vld [vmem:[%s232 + $0x90] sm:$0xff]
      %v4756 = vld [vmem:[%s232 + $0x98] sm:$0xff]
      %v4757 = vld [vmem:[%s232 + $0xa8] sm:$0xff]
      %v4758 = vld [vmem:[%s232 + $0xb0] sm:$0xff]
      %v4759 = vld [vmem:[%s232 + $0xc0] sm:$0xff]
      %v4760 = vld [vmem:[%s232 + $0xc8] sm:$0xff]
      %v4761 = vld [vmem:[%s232 + $0xd8] sm:$0xff]
      %v4762 = vld [vmem:[%s232 + $0xe0] sm:$0xff]
      %v4763 = vld [vmem:[%s232 + $0xf0] sm:$0xff]
      %v4764 = vld [vmem:[%s232 + $0xf8] sm:$0xff]
      %v4765 = vld [vmem:[%s232 + $0x108] sm:$0xff]
      %v4766 = vld [vmem:[%s232 + $0x110] sm:$0xff]
      %v4767 = vld [vmem:[%s232 + $0x120] sm:$0xff]
      %v4768 = vld [vmem:[%s232 + $0x128] sm:$0xff]
      %v4769 = vld [vmem:[%s232 + $0x138] sm:$0xff]
      %v4770 = vld [vmem:[%s232 + $0x140] sm:$0xff]
      %v4771 = vld [vmem:[%s232 + $0x150] sm:$0xff]
      %v4772 = vld [vmem:[%s232 + $0x158] sm:$0xff]
      %v4773 = vld [vmem:[%s232 + $0x168] sm:$0xff]
      %v4774 = vld [vmem:[%s232 + $0x170] sm:$0xff]
      %4807 = vrot.lane.b32.xlu0 %v4743, 12
      %v4808 = vpop.permute.xlu0 %4807
      %4809 = vrot.lane.b32.xlu0 %v4744, 12
      %v4810 = vpop.permute.xlu0 %4809
      %4811 = vrot.lane.b32.xlu0 %v4745, 12
      %v4812 = vpop.permute.xlu0 %4811
      %4813 = vrot.lane.b32.xlu0 %v4746, 12
      %v4814 = vpop.permute.xlu0 %4813
      %4815 = vrot.lane.b32.xlu0 %v4747, 12
      %v4816 = vpop.permute.xlu0 %4815
      %4817 = vrot.lane.b32.xlu0 %v4748, 12
      %v4818 = vpop.permute.xlu0 %4817
      %4819 = vrot.lane.b32.xlu0 %v4749, 12
      %v4820 = vpop.permute.xlu0 %4819
      %4821 = vrot.lane.b32.xlu0 %v4750, 12
      %v4822 = vpop.permute.xlu0 %4821
      %4823 = vrot.lane.b32.xlu0 %v4751, 12
      %v4824 = vpop.permute.xlu0 %4823
      %4825 = vrot.lane.b32.xlu0 %v4752, 12
      %v4826 = vpop.permute.xlu0 %4825
      %4827 = vrot.lane.b32.xlu0 %v4753, 12
      %v4828 = vpop.permute.xlu0 %4827
      %4829 = vrot.lane.b32.xlu0 %v4754, 12
      %v4830 = vpop.permute.xlu0 %4829
      %4831 = vrot.lane.b32.xlu0 %v4755, 12
      %v4832 = vpop.permute.xlu0 %4831
      %4833 = vrot.lane.b32.xlu0 %v4756, 12
      %v4834 = vpop.permute.xlu0 %4833
      %4835 = vrot.lane.b32.xlu0 %v4757, 12
      %v4836 = vpop.permute.xlu0 %4835
      %4837 = vrot.lane.b32.xlu0 %v4758, 12
      %v4838 = vpop.permute.xlu0 %4837
      %4839 = vrot.lane.b32.xlu0 %v4759, 12
      %v4840 = vpop.permute.xlu0 %4839
      %4841 = vrot.lane.b32.xlu0 %v4760, 12
      %v4842 = vpop.permute.xlu0 %4841
      %4843 = vrot.lane.b32.xlu0 %v4761, 12
      %v4844 = vpop.permute.xlu0 %4843
      %4845 = vrot.lane.b32.xlu0 %v4762, 12
      %v4846 = vpop.permute.xlu0 %4845
      %4847 = vrot.lane.b32.xlu0 %v4763, 12
      %v4848 = vpop.permute.xlu0 %4847
      %4849 = vrot.lane.b32.xlu0 %v4764, 12
      %v4850 = vpop.permute.xlu0 %4849
      %4851 = vrot.lane.b32.xlu0 %v4765, 12
      %v4852 = vpop.permute.xlu0 %4851
      %4853 = vrot.lane.b32.xlu0 %v4766, 12
      %v4854 = vpop.permute.xlu0 %4853
      %4855 = vrot.lane.b32.xlu0 %v4767, 12
      %v4856 = vpop.permute.xlu0 %4855
      %4857 = vrot.lane.b32.xlu0 %v4768, 12
      %v4858 = vpop.permute.xlu0 %4857
      %4859 = vrot.lane.b32.xlu0 %v4769, 12
      %v4860 = vpop.permute.xlu0 %4859
      %4861 = vrot.lane.b32.xlu0 %v4770, 12
      %v4862 = vpop.permute.xlu0 %4861
      %4863 = vrot.lane.b32.xlu0 %v4771, 12
      %v4864 = vpop.permute.xlu0 %4863
      %4865 = vrot.lane.b32.xlu0 %v4772, 12
      %v4866 = vpop.permute.xlu0 %4865
      %4867 = vrot.lane.b32.xlu0 %v4773, 12
      %v4868 = vpop.permute.xlu0 %4867
      %4869 = vrot.lane.b32.xlu0 %v4774, 12
      %v4870 = vpop.permute.xlu0 %4869
      %4903 = vst.msk [vmem:[#allocation3] sm:$0xff] %vm875, %v4808
      %4904 = vst.msk [vmem:[#allocation3 + $0x8] sm:$0xff] %vm875, %v4810
      %4905 = vst.msk [vmem:[#allocation3 + $0x10] sm:$0xff] %vm875, %v4812
      %4906 = vst.msk [vmem:[#allocation3 + $0x18] sm:$0xff] %vm875, %v4814
      %4907 = vst.msk [vmem:[#allocation3 + $0x20] sm:$0xff] %vm875, %v4816
      %4908 = vst.msk [vmem:[#allocation3 + $0x28] sm:$0xff] %vm875, %v4818
      %4909 = vst.msk [vmem:[#allocation3 + $0x30] sm:$0xff] %vm875, %v4820
      %4910 = vst.msk [vmem:[#allocation3 + $0x38] sm:$0xff] %vm875, %v4822
      %4911 = vst.msk [vmem:[#allocation3 + $0x40] sm:$0xff] %vm875, %v4824
      %4912 = vst.msk [vmem:[#allocation3 + $0x48] sm:$0xff] %vm875, %v4826
      %4913 = vst.msk [vmem:[#allocation3 + $0x50] sm:$0xff] %vm875, %v4828
      %4914 = vst.msk [vmem:[#allocation3 + $0x58] sm:$0xff] %vm875, %v4830
      %4915 = vst.msk [vmem:[#allocation3 + $0x60] sm:$0xff] %vm875, %v4832
      %4916 = vst.msk [vmem:[#allocation3 + $0x68] sm:$0xff] %vm875, %v4834
      %4917 = vst.msk [vmem:[#allocation3 + $0x70] sm:$0xff] %vm875, %v4836
      %4918 = vst.msk [vmem:[#allocation3 + $0x78] sm:$0xff] %vm875, %v4838
      %4919 = vst.msk [vmem:[#allocation3 + $0x80] sm:$0xff] %vm875, %v4840
      %4920 = vst.msk [vmem:[#allocation3 + $0x88] sm:$0xff] %vm875, %v4842
      %4921 = vst.msk [vmem:[#allocation3 + $0x90] sm:$0xff] %vm875, %v4844
      %4922 = vst.msk [vmem:[#allocation3 + $0x98] sm:$0xff] %vm875, %v4846
      %4923 = vst.msk [vmem:[#allocation3 + $0xa0] sm:$0xff] %vm875, %v4848
      %4924 = vst.msk [vmem:[#allocation3 + $0xa8] sm:$0xff] %vm875, %v4850
      %4925 = vst.msk [vmem:[#allocation3 + $0xb0] sm:$0xff] %vm875, %v4852
      %4926 = vst.msk [vmem:[#allocation3 + $0xb8] sm:$0xff] %vm875, %v4854
      %4927 = vst.msk [vmem:[#allocation3 + $0xc0] sm:$0xff] %vm875, %v4856
      %4928 = vst.msk [vmem:[#allocation3 + $0xc8] sm:$0xff] %vm875, %v4858
      %4929 = vst.msk [vmem:[#allocation3 + $0xd0] sm:$0xff] %vm875, %v4860
      %4930 = vst.msk [vmem:[#allocation3 + $0xd8] sm:$0xff] %vm875, %v4862
      %4931 = vst.msk [vmem:[#allocation3 + $0xe0] sm:$0xff] %vm875, %v4864
      %4932 = vst.msk [vmem:[#allocation3 + $0xe8] sm:$0xff] %vm875, %v4866
      %4933 = vst.msk [vmem:[#allocation3 + $0xf0] sm:$0xff] %vm875, %v4868
      %4934 = vst.msk [vmem:[#allocation3 + $0xf8] sm:$0xff] %vm875, %v4870
      %v4935 = vld [vmem:[%s232 + $0x1] sm:$0xff]
      %v4936 = vld [vmem:[%s232 + $0x9] sm:$0xff]
      %v4937 = vld [vmem:[%s232 + $0x19] sm:$0xff]
      %v4938 = vld [vmem:[%s232 + $0x21] sm:$0xff]
      %v4939 = vld [vmem:[%s232 + $0x31] sm:$0xff]
      %v4940 = vld [vmem:[%s232 + $0x39] sm:$0xff]
      %v4941 = vld [vmem:[%s232 + $0x49] sm:$0xff]
      %v4942 = vld [vmem:[%s232 + $0x51] sm:$0xff]
      %v4943 = vld [vmem:[%s232 + $0x61] sm:$0xff]
      %v4944 = vld [vmem:[%s232 + $0x69] sm:$0xff]
      %v4945 = vld [vmem:[%s232 + $0x79] sm:$0xff]
      %v4946 = vld [vmem:[%s232 + $0x81] sm:$0xff]
      %v4947 = vld [vmem:[%s232 + $0x91] sm:$0xff]
      %v4948 = vld [vmem:[%s232 + $0x99] sm:$0xff]
      %v4949 = vld [vmem:[%s232 + $0xa9] sm:$0xff]
      %v4950 = vld [vmem:[%s232 + $0xb1] sm:$0xff]
      %v4951 = vld [vmem:[%s232 + $0xc1] sm:$0xff]
      %v4952 = vld [vmem:[%s232 + $0xc9] sm:$0xff]
      %v4953 = vld [vmem:[%s232 + $0xd9] sm:$0xff]
      %v4954 = vld [vmem:[%s232 + $0xe1] sm:$0xff]
      %v4955 = vld [vmem:[%s232 + $0xf1] sm:$0xff]
      %v4956 = vld [vmem:[%s232 + $0xf9] sm:$0xff]
      %v4957 = vld [vmem:[%s232 + $0x109] sm:$0xff]
      %v4958 = vld [vmem:[%s232 + $0x111] sm:$0xff]
      %v4959 = vld [vmem:[%s232 + $0x121] sm:$0xff]
      %v4960 = vld [vmem:[%s232 + $0x129] sm:$0xff]
      %v4961 = vld [vmem:[%s232 + $0x139] sm:$0xff]
      %v4962 = vld [vmem:[%s232 + $0x141] sm:$0xff]
      %v4963 = vld [vmem:[%s232 + $0x151] sm:$0xff]
      %v4964 = vld [vmem:[%s232 + $0x159] sm:$0xff]
      %v4965 = vld [vmem:[%s232 + $0x169] sm:$0xff]
      %v4966 = vld [vmem:[%s232 + $0x171] sm:$0xff]
      %4999 = vrot.lane.b32.xlu0 %v4935, 16
      %v5000 = vpop.permute.xlu0 %4999
      %5001 = vrot.lane.b32.xlu0 %v4936, 16
      %v5002 = vpop.permute.xlu0 %5001
      %5003 = vrot.lane.b32.xlu0 %v4937, 16
      %v5004 = vpop.permute.xlu0 %5003
      %5005 = vrot.lane.b32.xlu0 %v4938, 16
      %v5006 = vpop.permute.xlu0 %5005
      %5007 = vrot.lane.b32.xlu0 %v4939, 16
      %v5008 = vpop.permute.xlu0 %5007
      %5009 = vrot.lane.b32.xlu0 %v4940, 16
      %v5010 = vpop.permute.xlu0 %5009
      %5011 = vrot.lane.b32.xlu0 %v4941, 16
      %v5012 = vpop.permute.xlu0 %5011
      %5013 = vrot.lane.b32.xlu0 %v4942, 16
      %v5014 = vpop.permute.xlu0 %5013
      %5015 = vrot.lane.b32.xlu0 %v4943, 16
      %v5016 = vpop.permute.xlu0 %5015
      %5017 = vrot.lane.b32.xlu0 %v4944, 16
      %v5018 = vpop.permute.xlu0 %5017
      %5019 = vrot.lane.b32.xlu0 %v4945, 16
      %v5020 = vpop.permute.xlu0 %5019
      %5021 = vrot.lane.b32.xlu0 %v4946, 16
      %v5022 = vpop.permute.xlu0 %5021
      %5023 = vrot.lane.b32.xlu0 %v4947, 16
      %v5024 = vpop.permute.xlu0 %5023
      %5025 = vrot.lane.b32.xlu0 %v4948, 16
      %v5026 = vpop.permute.xlu0 %5025
      %5027 = vrot.lane.b32.xlu0 %v4949, 16
      %v5028 = vpop.permute.xlu0 %5027
      %5029 = vrot.lane.b32.xlu0 %v4950, 16
      %v5030 = vpop.permute.xlu0 %5029
      %5031 = vrot.lane.b32.xlu0 %v4951, 16
      %v5032 = vpop.permute.xlu0 %5031
      %5033 = vrot.lane.b32.xlu0 %v4952, 16
      %v5034 = vpop.permute.xlu0 %5033
      %5035 = vrot.lane.b32.xlu0 %v4953, 16
      %v5036 = vpop.permute.xlu0 %5035
      %5037 = vrot.lane.b32.xlu0 %v4954, 16
      %v5038 = vpop.permute.xlu0 %5037
      %5039 = vrot.lane.b32.xlu0 %v4955, 16
      %v5040 = vpop.permute.xlu0 %5039
      %5041 = vrot.lane.b32.xlu0 %v4956, 16
      %v5042 = vpop.permute.xlu0 %5041
      %5043 = vrot.lane.b32.xlu0 %v4957, 16
      %v5044 = vpop.permute.xlu0 %5043
      %5045 = vrot.lane.b32.xlu0 %v4958, 16
      %v5046 = vpop.permute.xlu0 %5045
      %5047 = vrot.lane.b32.xlu0 %v4959, 16
      %v5048 = vpop.permute.xlu0 %5047
      %5049 = vrot.lane.b32.xlu0 %v4960, 16
      %v5050 = vpop.permute.xlu0 %5049
      %5051 = vrot.lane.b32.xlu0 %v4961, 16
      %v5052 = vpop.permute.xlu0 %5051
      %5053 = vrot.lane.b32.xlu0 %v4962, 16
      %v5054 = vpop.permute.xlu0 %5053
      %5055 = vrot.lane.b32.xlu0 %v4963, 16
      %v5056 = vpop.permute.xlu0 %5055
      %5057 = vrot.lane.b32.xlu0 %v4964, 16
      %v5058 = vpop.permute.xlu0 %5057
      %5059 = vrot.lane.b32.xlu0 %v4965, 16
      %v5060 = vpop.permute.xlu0 %5059
      %5061 = vrot.lane.b32.xlu0 %v4966, 16
      %v5062 = vpop.permute.xlu0 %5061
      %5095 = vst.msk [vmem:[#allocation3] sm:$0xff] %vm1068, %v5000
      %5096 = vst.msk [vmem:[#allocation3 + $0x8] sm:$0xff] %vm1068, %v5002
      %5097 = vst.msk [vmem:[#allocation3 + $0x10] sm:$0xff] %vm1068, %v5004
      %5098 = vst.msk [vmem:[#allocation3 + $0x18] sm:$0xff] %vm1068, %v5006
      %5099 = vst.msk [vmem:[#allocation3 + $0x20] sm:$0xff] %vm1068, %v5008
      %5100 = vst.msk [vmem:[#allocation3 + $0x28] sm:$0xff] %vm1068, %v5010
      %5101 = vst.msk [vmem:[#allocation3 + $0x30] sm:$0xff] %vm1068, %v5012
      %5102 = vst.msk [vmem:[#allocation3 + $0x38] sm:$0xff] %vm1068, %v5014
      %5103 = vst.msk [vmem:[#allocation3 + $0x40] sm:$0xff] %vm1068, %v5016
      %5104 = vst.msk [vmem:[#allocation3 + $0x48] sm:$0xff] %vm1068, %v5018
      %5105 = vst.msk [vmem:[#allocation3 + $0x50] sm:$0xff] %vm1068, %v5020
      %5106 = vst.msk [vmem:[#allocation3 + $0x58] sm:$0xff] %vm1068, %v5022
      %5107 = vst.msk [vmem:[#allocation3 + $0x60] sm:$0xff] %vm1068, %v5024
      %5108 = vst.msk [vmem:[#allocation3 + $0x68] sm:$0xff] %vm1068, %v5026
      %5109 = vst.msk [vmem:[#allocation3 + $0x70] sm:$0xff] %vm1068, %v5028
      %5110 = vst.msk [vmem:[#allocation3 + $0x78] sm:$0xff] %vm1068, %v5030
      %5111 = vst.msk [vmem:[#allocation3 + $0x80] sm:$0xff] %vm1068, %v5032
      %5112 = vst.msk [vmem:[#allocation3 + $0x88] sm:$0xff] %vm1068, %v5034
      %5113 = vst.msk [vmem:[#allocation3 + $0x90] sm:$0xff] %vm1068, %v5036
      %5114 = vst.msk [vmem:[#allocation3 + $0x98] sm:$0xff] %vm1068, %v5038
      %5115 = vst.msk [vmem:[#allocation3 + $0xa0] sm:$0xff] %vm1068, %v5040
      %5116 = vst.msk [vmem:[#allocation3 + $0xa8] sm:$0xff] %vm1068, %v5042
      %5117 = vst.msk [vmem:[#allocation3 + $0xb0] sm:$0xff] %vm1068, %v5044
      %5118 = vst.msk [vmem:[#allocation3 + $0xb8] sm:$0xff] %vm1068, %v5046
      %5119 = vst.msk [vmem:[#allocation3 + $0xc0] sm:$0xff] %vm1068, %v5048
      %5120 = vst.msk [vmem:[#allocation3 + $0xc8] sm:$0xff] %vm1068, %v5050
      %5121 = vst.msk [vmem:[#allocation3 + $0xd0] sm:$0xff] %vm1068, %v5052
      %5122 = vst.msk [vmem:[#allocation3 + $0xd8] sm:$0xff] %vm1068, %v5054
      %5123 = vst.msk [vmem:[#allocation3 + $0xe0] sm:$0xff] %vm1068, %v5056
      %5124 = vst.msk [vmem:[#allocation3 + $0xe8] sm:$0xff] %vm1068, %v5058
      %5125 = vst.msk [vmem:[#allocation3 + $0xf0] sm:$0xff] %vm1068, %v5060
      %5126 = vst.msk [vmem:[#allocation3 + $0xf8] sm:$0xff] %vm1068, %v5062
      %v5127 = vld [vmem:[%s232 + $0x2] sm:$0xff]
      %v5128 = vld [vmem:[%s232 + $0xa] sm:$0xff]
      %v5129 = vld [vmem:[%s232 + $0x1a] sm:$0xff]
      %v5130 = vld [vmem:[%s232 + $0x22] sm:$0xff]
      %v5131 = vld [vmem:[%s232 + $0x32] sm:$0xff]
      %v5132 = vld [vmem:[%s232 + $0x3a] sm:$0xff]
      %v5133 = vld [vmem:[%s232 + $0x4a] sm:$0xff]
      %v5134 = vld [vmem:[%s232 + $0x52] sm:$0xff]
      %v5135 = vld [vmem:[%s232 + $0x62] sm:$0xff]
      %v5136 = vld [vmem:[%s232 + $0x6a] sm:$0xff]
      %v5137 = vld [vmem:[%s232 + $0x7a] sm:$0xff]
      %v5138 = vld [vmem:[%s232 + $0x82] sm:$0xff]
      %v5139 = vld [vmem:[%s232 + $0x92] sm:$0xff]
      %v5140 = vld [vmem:[%s232 + $0x9a] sm:$0xff]
      %v5141 = vld [vmem:[%s232 + $0xaa] sm:$0xff]
      %v5142 = vld [vmem:[%s232 + $0xb2] sm:$0xff]
      %v5143 = vld [vmem:[%s232 + $0xc2] sm:$0xff]
      %v5144 = vld [vmem:[%s232 + $0xca] sm:$0xff]
      %v5145 = vld [vmem:[%s232 + $0xda] sm:$0xff]
      %v5146 = vld [vmem:[%s232 + $0xe2] sm:$0xff]
      %v5147 = vld [vmem:[%s232 + $0xf2] sm:$0xff]
      %v5148 = vld [vmem:[%s232 + $0xfa] sm:$0xff]
      %v5149 = vld [vmem:[%s232 + $0x10a] sm:$0xff]
      %v5150 = vld [vmem:[%s232 + $0x112] sm:$0xff]
      %v5151 = vld [vmem:[%s232 + $0x122] sm:$0xff]
      %v5152 = vld [vmem:[%s232 + $0x12a] sm:$0xff]
      %v5153 = vld [vmem:[%s232 + $0x13a] sm:$0xff]
      %v5154 = vld [vmem:[%s232 + $0x142] sm:$0xff]
      %v5155 = vld [vmem:[%s232 + $0x152] sm:$0xff]
      %v5156 = vld [vmem:[%s232 + $0x15a] sm:$0xff]
      %v5157 = vld [vmem:[%s232 + $0x16a] sm:$0xff]
      %v5158 = vld [vmem:[%s232 + $0x172] sm:$0xff]
      %5191 = vrot.lane.b32.xlu0 %v5127, 20
      %v5192 = vpop.permute.xlu0 %5191
      %5193 = vrot.lane.b32.xlu0 %v5128, 20
      %v5194 = vpop.permute.xlu0 %5193
      %5195 = vrot.lane.b32.xlu0 %v5129, 20
      %v5196 = vpop.permute.xlu0 %5195
      %5197 = vrot.lane.b32.xlu0 %v5130, 20
      %v5198 = vpop.permute.xlu0 %5197
      %5199 = vrot.lane.b32.xlu0 %v5131, 20
      %v5200 = vpop.permute.xlu0 %5199
      %5201 = vrot.lane.b32.xlu0 %v5132, 20
      %v5202 = vpop.permute.xlu0 %5201
      %5203 = vrot.lane.b32.xlu0 %v5133, 20
      %v5204 = vpop.permute.xlu0 %5203
      %5205 = vrot.lane.b32.xlu0 %v5134, 20
      %v5206 = vpop.permute.xlu0 %5205
      %5207 = vrot.lane.b32.xlu0 %v5135, 20
      %v5208 = vpop.permute.xlu0 %5207
      %5209 = vrot.lane.b32.xlu0 %v5136, 20
      %v5210 = vpop.permute.xlu0 %5209
      %5211 = vrot.lane.b32.xlu0 %v5137, 20
      %v5212 = vpop.permute.xlu0 %5211
      %5213 = vrot.lane.b32.xlu0 %v5138, 20
      %v5214 = vpop.permute.xlu0 %5213
      %5215 = vrot.lane.b32.xlu0 %v5139, 20
      %v5216 = vpop.permute.xlu0 %5215
      %5217 = vrot.lane.b32.xlu0 %v5140, 20
      %v5218 = vpop.permute.xlu0 %5217
      %5219 = vrot.lane.b32.xlu0 %v5141, 20
      %v5220 = vpop.permute.xlu0 %5219
      %5221 = vrot.lane.b32.xlu0 %v5142, 20
      %v5222 = vpop.permute.xlu0 %5221
      %5223 = vrot.lane.b32.xlu0 %v5143, 20
      %v5224 = vpop.permute.xlu0 %5223
      %5225 = vrot.lane.b32.xlu0 %v5144, 20
      %v5226 = vpop.permute.xlu0 %5225
      %5227 = vrot.lane.b32.xlu0 %v5145, 20
      %v5228 = vpop.permute.xlu0 %5227
      %5229 = vrot.lane.b32.xlu0 %v5146, 20
      %v5230 = vpop.permute.xlu0 %5229
      %5231 = vrot.lane.b32.xlu0 %v5147, 20
      %v5232 = vpop.permute.xlu0 %5231
      %5233 = vrot.lane.b32.xlu0 %v5148, 20
      %v5234 = vpop.permute.xlu0 %5233
      %5235 = vrot.lane.b32.xlu0 %v5149, 20
      %v5236 = vpop.permute.xlu0 %5235
      %5237 = vrot.lane.b32.xlu0 %v5150, 20
      %v5238 = vpop.permute.xlu0 %5237
      %5239 = vrot.lane.b32.xlu0 %v5151, 20
      %v5240 = vpop.permute.xlu0 %5239
      %5241 = vrot.lane.b32.xlu0 %v5152, 20
      %v5242 = vpop.permute.xlu0 %5241
      %5243 = vrot.lane.b32.xlu0 %v5153, 20
      %v5244 = vpop.permute.xlu0 %5243
      %5245 = vrot.lane.b32.xlu0 %v5154, 20
      %v5246 = vpop.permute.xlu0 %5245
      %5247 = vrot.lane.b32.xlu0 %v5155, 20
      %v5248 = vpop.permute.xlu0 %5247
      %5249 = vrot.lane.b32.xlu0 %v5156, 20
      %v5250 = vpop.permute.xlu0 %5249
      %5251 = vrot.lane.b32.xlu0 %v5157, 20
      %v5252 = vpop.permute.xlu0 %5251
      %5253 = vrot.lane.b32.xlu0 %v5158, 20
      %v5254 = vpop.permute.xlu0 %5253
      %5287 = vst.msk [vmem:[#allocation3] sm:$0xff] %vm1261, %v5192
      %5288 = vst.msk [vmem:[#allocation3 + $0x8] sm:$0xff] %vm1261, %v5194
      %5289 = vst.msk [vmem:[#allocation3 + $0x10] sm:$0xff] %vm1261, %v5196
      %5290 = vst.msk [vmem:[#allocation3 + $0x18] sm:$0xff] %vm1261, %v5198
      %5291 = vst.msk [vmem:[#allocation3 + $0x20] sm:$0xff] %vm1261, %v5200
      %5292 = vst.msk [vmem:[#allocation3 + $0x28] sm:$0xff] %vm1261, %v5202
      %5293 = vst.msk [vmem:[#allocation3 + $0x30] sm:$0xff] %vm1261, %v5204
      %5294 = vst.msk [vmem:[#allocation3 + $0x38] sm:$0xff] %vm1261, %v5206
      %5295 = vst.msk [vmem:[#allocation3 + $0x40] sm:$0xff] %vm1261, %v5208
      %5296 = vst.msk [vmem:[#allocation3 + $0x48] sm:$0xff] %vm1261, %v5210
      %5297 = vst.msk [vmem:[#allocation3 + $0x50] sm:$0xff] %vm1261, %v5212
      %5298 = vst.msk [vmem:[#allocation3 + $0x58] sm:$0xff] %vm1261, %v5214
      %5299 = vst.msk [vmem:[#allocation3 + $0x60] sm:$0xff] %vm1261, %v5216
      %5300 = vst.msk [vmem:[#allocation3 + $0x68] sm:$0xff] %vm1261, %v5218
      %5301 = vst.msk [vmem:[#allocation3 + $0x70] sm:$0xff] %vm1261, %v5220
      %5302 = vst.msk [vmem:[#allocation3 + $0x78] sm:$0xff] %vm1261, %v5222
      %5303 = vst.msk [vmem:[#allocation3 + $0x80] sm:$0xff] %vm1261, %v5224
      %5304 = vst.msk [vmem:[#allocation3 + $0x88] sm:$0xff] %vm1261, %v5226
      %5305 = vst.msk [vmem:[#allocation3 + $0x90] sm:$0xff] %vm1261, %v5228
      %5306 = vst.msk [vmem:[#allocation3 + $0x98] sm:$0xff] %vm1261, %v5230
      %5307 = vst.msk [vmem:[#allocation3 + $0xa0] sm:$0xff] %vm1261, %v5232
      %5308 = vst.msk [vmem:[#allocation3 + $0xa8] sm:$0xff] %vm1261, %v5234
      %5309 = vst.msk [vmem:[#allocation3 + $0xb0] sm:$0xff] %vm1261, %v5236
      %5310 = vst.msk [vmem:[#allocation3 + $0xb8] sm:$0xff] %vm1261, %v5238
      %5311 = vst.msk [vmem:[#allocation3 + $0xc0] sm:$0xff] %vm1261, %v5240
      %5312 = vst.msk [vmem:[#allocation3 + $0xc8] sm:$0xff] %vm1261, %v5242
      %5313 = vst.msk [vmem:[#allocation3 + $0xd0] sm:$0xff] %vm1261, %v5244
      %5314 = vst.msk [vmem:[#allocation3 + $0xd8] sm:$0xff] %vm1261, %v5246
      %5315 = vst.msk [vmem:[#allocation3 + $0xe0] sm:$0xff] %vm1261, %v5248
      %5316 = vst.msk [vmem:[#allocation3 + $0xe8] sm:$0xff] %vm1261, %v5250
      %5317 = vst.msk [vmem:[#allocation3 + $0xf0] sm:$0xff] %vm1261, %v5252
      %5318 = vst.msk [vmem:[#allocation3 + $0xf8] sm:$0xff] %vm1261, %v5254
      %v5319 = vld [vmem:[%s1294] sm:$0xff]
      %v5320 = vld [vmem:[%s1294 + $0x8] sm:$0xff]
      %v5321 = vld [vmem:[%s1294 + $0x18] sm:$0xff]
      %v5322 = vld [vmem:[%s1294 + $0x20] sm:$0xff]
      %v5323 = vld [vmem:[%s1294 + $0x30] sm:$0xff]
      %v5324 = vld [vmem:[%s1294 + $0x38] sm:$0xff]
      %v5325 = vld [vmem:[%s1294 + $0x48] sm:$0xff]
      %v5326 = vld [vmem:[%s1294 + $0x50] sm:$0xff]
      %v5327 = vld [vmem:[%s1294 + $0x60] sm:$0xff]
      %v5328 = vld [vmem:[%s1294 + $0x68] sm:$0xff]
      %v5329 = vld [vmem:[%s1294 + $0x78] sm:$0xff]
      %v5330 = vld [vmem:[%s1294 + $0x80] sm:$0xff]
      %v5331 = vld [vmem:[%s1294 + $0x90] sm:$0xff]
      %v5332 = vld [vmem:[%s1294 + $0x98] sm:$0xff]
      %v5333 = vld [vmem:[%s1294 + $0xa8] sm:$0xff]
      %v5334 = vld [vmem:[%s1294 + $0xb0] sm:$0xff]
      %v5335 = vld [vmem:[%s1294 + $0xc0] sm:$0xff]
      %v5336 = vld [vmem:[%s1294 + $0xc8] sm:$0xff]
      %v5337 = vld [vmem:[%s1294 + $0xd8] sm:$0xff]
      %v5338 = vld [vmem:[%s1294 + $0xe0] sm:$0xff]
      %v5339 = vld [vmem:[%s1294 + $0xf0] sm:$0xff]
      %v5340 = vld [vmem:[%s1294 + $0xf8] sm:$0xff]
      %v5341 = vld [vmem:[%s1294 + $0x108] sm:$0xff]
      %v5342 = vld [vmem:[%s1294 + $0x110] sm:$0xff]
      %v5343 = vld [vmem:[%s1294 + $0x120] sm:$0xff]
      %v5344 = vld [vmem:[%s1294 + $0x128] sm:$0xff]
      %v5345 = vld [vmem:[%s1294 + $0x138] sm:$0xff]
      %v5346 = vld [vmem:[%s1294 + $0x140] sm:$0xff]
      %v5347 = vld [vmem:[%s1294 + $0x150] sm:$0xff]
      %v5348 = vld [vmem:[%s1294 + $0x158] sm:$0xff]
      %v5349 = vld [vmem:[%s1294 + $0x168] sm:$0xff]
      %v5350 = vld [vmem:[%s1294 + $0x170] sm:$0xff]
      %5383 = vrot.lane.b32.xlu0 %v5319, 24
      %v5384 = vpop.permute.xlu0 %5383
      %5385 = vrot.lane.b32.xlu0 %v5320, 24
      %v5386 = vpop.permute.xlu0 %5385
      %5387 = vrot.lane.b32.xlu0 %v5321, 24
      %v5388 = vpop.permute.xlu0 %5387
      %5389 = vrot.lane.b32.xlu0 %v5322, 24
      %v5390 = vpop.permute.xlu0 %5389
      %5391 = vrot.lane.b32.xlu0 %v5323, 24
      %v5392 = vpop.permute.xlu0 %5391
      %5393 = vrot.lane.b32.xlu0 %v5324, 24
      %v5394 = vpop.permute.xlu0 %5393
      %5395 = vrot.lane.b32.xlu0 %v5325, 24
      %v5396 = vpop.permute.xlu0 %5395
      %5397 = vrot.lane.b32.xlu0 %v5326, 24
      %v5398 = vpop.permute.xlu0 %5397
      %5399 = vrot.lane.b32.xlu0 %v5327, 24
      %v5400 = vpop.permute.xlu0 %5399
      %5401 = vrot.lane.b32.xlu0 %v5328, 24
      %v5402 = vpop.permute.xlu0 %5401
      %5403 = vrot.lane.b32.xlu0 %v5329, 24
      %v5404 = vpop.permute.xlu0 %5403
      %5405 = vrot.lane.b32.xlu0 %v5330, 24
      %v5406 = vpop.permute.xlu0 %5405
      %5407 = vrot.lane.b32.xlu0 %v5331, 24
      %v5408 = vpop.permute.xlu0 %5407
      %5409 = vrot.lane.b32.xlu0 %v5332, 24
      %v5410 = vpop.permute.xlu0 %5409
      %5411 = vrot.lane.b32.xlu0 %v5333, 24
      %v5412 = vpop.permute.xlu0 %5411
      %5413 = vrot.lane.b32.xlu0 %v5334, 24
      %v5414 = vpop.permute.xlu0 %5413
      %5415 = vrot.lane.b32.xlu0 %v5335, 24
      %v5416 = vpop.permute.xlu0 %5415
      %5417 = vrot.lane.b32.xlu0 %v5336, 24
      %v5418 = vpop.permute.xlu0 %5417
      %5419 = vrot.lane.b32.xlu0 %v5337, 24
      %v5420 = vpop.permute.xlu0 %5419
      %5421 = vrot.lane.b32.xlu0 %v5338, 24
      %v5422 = vpop.permute.xlu0 %5421
      %5423 = vrot.lane.b32.xlu0 %v5339, 24
      %v5424 = vpop.permute.xlu0 %5423
      %5425 = vrot.lane.b32.xlu0 %v5340, 24
      %v5426 = vpop.permute.xlu0 %5425
      %5427 = vrot.lane.b32.xlu0 %v5341, 24
      %v5428 = vpop.permute.xlu0 %5427
      %5429 = vrot.lane.b32.xlu0 %v5342, 24
      %v5430 = vpop.permute.xlu0 %5429
      %5431 = vrot.lane.b32.xlu0 %v5343, 24
      %v5432 = vpop.permute.xlu0 %5431
      %5433 = vrot.lane.b32.xlu0 %v5344, 24
      %v5434 = vpop.permute.xlu0 %5433
      %5435 = vrot.lane.b32.xlu0 %v5345, 24
      %v5436 = vpop.permute.xlu0 %5435
      %5437 = vrot.lane.b32.xlu0 %v5346, 24
      %v5438 = vpop.permute.xlu0 %5437
      %5439 = vrot.lane.b32.xlu0 %v5347, 24
      %v5440 = vpop.permute.xlu0 %5439
      %5441 = vrot.lane.b32.xlu0 %v5348, 24
      %v5442 = vpop.permute.xlu0 %5441
      %5443 = vrot.lane.b32.xlu0 %v5349, 24
      %v5444 = vpop.permute.xlu0 %5443
      %5445 = vrot.lane.b32.xlu0 %v5350, 24
      %v5446 = vpop.permute.xlu0 %5445
      %5479 = vst.msk [vmem:[#allocation3] sm:$0xff] %vm1455, %v5384
      %5480 = vst.msk [vmem:[#allocation3 + $0x8] sm:$0xff] %vm1455, %v5386
      %5481 = vst.msk [vmem:[#allocation3 + $0x10] sm:$0xff] %vm1455, %v5388
      %5482 = vst.msk [vmem:[#allocation3 + $0x18] sm:$0xff] %vm1455, %v5390
      %5483 = vst.msk [vmem:[#allocation3 + $0x20] sm:$0xff] %vm1455, %v5392
      %5484 = vst.msk [vmem:[#allocation3 + $0x28] sm:$0xff] %vm1455, %v5394
      %5485 = vst.msk [vmem:[#allocation3 + $0x30] sm:$0xff] %vm1455, %v5396
      %5486 = vst.msk [vmem:[#allocation3 + $0x38] sm:$0xff] %vm1455, %v5398
      %5487 = vst.msk [vmem:[#allocation3 + $0x40] sm:$0xff] %vm1455, %v5400
      %5488 = vst.msk [vmem:[#allocation3 + $0x48] sm:$0xff] %vm1455, %v5402
      %5489 = vst.msk [vmem:[#allocation3 + $0x50] sm:$0xff] %vm1455, %v5404
      %5490 = vst.msk [vmem:[#allocation3 + $0x58] sm:$0xff] %vm1455, %v5406
      %5491 = vst.msk [vmem:[#allocation3 + $0x60] sm:$0xff] %vm1455, %v5408
      %5492 = vst.msk [vmem:[#allocation3 + $0x68] sm:$0xff] %vm1455, %v5410
      %5493 = vst.msk [vmem:[#allocation3 + $0x70] sm:$0xff] %vm1455, %v5412
      %5494 = vst.msk [vmem:[#allocation3 + $0x78] sm:$0xff] %vm1455, %v5414
      %5495 = vst.msk [vmem:[#allocation3 + $0x80] sm:$0xff] %vm1455, %v5416
      %5496 = vst.msk [vmem:[#allocation3 + $0x88] sm:$0xff] %vm1455, %v5418
      %5497 = vst.msk [vmem:[#allocation3 + $0x90] sm:$0xff] %vm1455, %v5420
      %5498 = vst.msk [vmem:[#allocation3 + $0x98] sm:$0xff] %vm1455, %v5422
      %5499 = vst.msk [vmem:[#allocation3 + $0xa0] sm:$0xff] %vm1455, %v5424
      %5500 = vst.msk [vmem:[#allocation3 + $0xa8] sm:$0xff] %vm1455, %v5426
      %5501 = vst.msk [vmem:[#allocation3 + $0xb0] sm:$0xff] %vm1455, %v5428
      %5502 = vst.msk [vmem:[#allocation3 + $0xb8] sm:$0xff] %vm1455, %v5430
      %5503 = vst.msk [vmem:[#allocation3 + $0xc0] sm:$0xff] %vm1455, %v5432
      %5504 = vst.msk [vmem:[#allocation3 + $0xc8] sm:$0xff] %vm1455, %v5434
      %5505 = vst.msk [vmem:[#allocation3 + $0xd0] sm:$0xff] %vm1455, %v5436
      %5506 = vst.msk [vmem:[#allocation3 + $0xd8] sm:$0xff] %vm1455, %v5438
      %5507 = vst.msk [vmem:[#allocation3 + $0xe0] sm:$0xff] %vm1455, %v5440
      %5508 = vst.msk [vmem:[#allocation3 + $0xe8] sm:$0xff] %vm1455, %v5442
      %5509 = vst.msk [vmem:[#allocation3 + $0xf0] sm:$0xff] %vm1455, %v5444
      %5510 = vst.msk [vmem:[#allocation3 + $0xf8] sm:$0xff] %vm1455, %v5446
      %v5511 = vld [vmem:[%s1294 + $0x1] sm:$0xff]
      %v5512 = vld [vmem:[%s1294 + $0x9] sm:$0xff]
      %v5513 = vld [vmem:[%s1294 + $0x19] sm:$0xff]
      %v5514 = vld [vmem:[%s1294 + $0x21] sm:$0xff]
      %v5515 = vld [vmem:[%s1294 + $0x31] sm:$0xff]
      %v5516 = vld [vmem:[%s1294 + $0x39] sm:$0xff]
      %v5517 = vld [vmem:[%s1294 + $0x49] sm:$0xff]
      %v5518 = vld [vmem:[%s1294 + $0x51] sm:$0xff]
      %v5519 = vld [vmem:[%s1294 + $0x61] sm:$0xff]
      %v5520 = vld [vmem:[%s1294 + $0x69] sm:$0xff]
      %v5521 = vld [vmem:[%s1294 + $0x79] sm:$0xff]
      %v5522 = vld [vmem:[%s1294 + $0x81] sm:$0xff]
      %v5523 = vld [vmem:[%s1294 + $0x91] sm:$0xff]
      %v5524 = vld [vmem:[%s1294 + $0x99] sm:$0xff]
      %v5525 = vld [vmem:[%s1294 + $0xa9] sm:$0xff]
      %v5526 = vld [vmem:[%s1294 + $0xb1] sm:$0xff]
      %v5527 = vld [vmem:[%s1294 + $0xc1] sm:$0xff]
      %v5528 = vld [vmem:[%s1294 + $0xc9] sm:$0xff]
      %v5529 = vld [vmem:[%s1294 + $0xd9] sm:$0xff]
      %v5530 = vld [vmem:[%s1294 + $0xe1] sm:$0xff]
      %v5531 = vld [vmem:[%s1294 + $0xf1] sm:$0xff]
      %v5532 = vld [vmem:[%s1294 + $0xf9] sm:$0xff]
      %v5533 = vld [vmem:[%s1294 + $0x109] sm:$0xff]
      %v5534 = vld [vmem:[%s1294 + $0x111] sm:$0xff]
      %v5535 = vld [vmem:[%s1294 + $0x121] sm:$0xff]
      %v5536 = vld [vmem:[%s1294 + $0x129] sm:$0xff]
      %v5537 = vld [vmem:[%s1294 + $0x139] sm:$0xff]
      %v5538 = vld [vmem:[%s1294 + $0x141] sm:$0xff]
      %v5539 = vld [vmem:[%s1294 + $0x151] sm:$0xff]
      %v5540 = vld [vmem:[%s1294 + $0x159] sm:$0xff]
      %v5541 = vld [vmem:[%s1294 + $0x169] sm:$0xff]
      %v5542 = vld [vmem:[%s1294 + $0x171] sm:$0xff]
      %5575 = vrot.lane.b32.xlu0 %v5511, 28
      %v5576 = vpop.permute.xlu0 %5575
      %5577 = vrot.lane.b32.xlu0 %v5512, 28
      %v5578 = vpop.permute.xlu0 %5577
      %5579 = vrot.lane.b32.xlu0 %v5513, 28
      %v5580 = vpop.permute.xlu0 %5579
      %5581 = vrot.lane.b32.xlu0 %v5514, 28
      %v5582 = vpop.permute.xlu0 %5581
      %5583 = vrot.lane.b32.xlu0 %v5515, 28
      %v5584 = vpop.permute.xlu0 %5583
      %5585 = vrot.lane.b32.xlu0 %v5516, 28
      %v5586 = vpop.permute.xlu0 %5585
      %5587 = vrot.lane.b32.xlu0 %v5517, 28
      %v5588 = vpop.permute.xlu0 %5587
      %5589 = vrot.lane.b32.xlu0 %v5518, 28
      %v5590 = vpop.permute.xlu0 %5589
      %5591 = vrot.lane.b32.xlu0 %v5519, 28
      %v5592 = vpop.permute.xlu0 %5591
      %5593 = vrot.lane.b32.xlu0 %v5520, 28
      %v5594 = vpop.permute.xlu0 %5593
      %5595 = vrot.lane.b32.xlu0 %v5521, 28
      %v5596 = vpop.permute.xlu0 %5595
      %5597 = vrot.lane.b32.xlu0 %v5522, 28
      %v5598 = vpop.permute.xlu0 %5597
      %5599 = vrot.lane.b32.xlu0 %v5523, 28
      %v5600 = vpop.permute.xlu0 %5599
      %5601 = vrot.lane.b32.xlu0 %v5524, 28
      %v5602 = vpop.permute.xlu0 %5601
      %5603 = vrot.lane.b32.xlu0 %v5525, 28
      %v5604 = vpop.permute.xlu0 %5603
      %5605 = vrot.lane.b32.xlu0 %v5526, 28
      %v5606 = vpop.permute.xlu0 %5605
      %5607 = vrot.lane.b32.xlu0 %v5527, 28
      %v5608 = vpop.permute.xlu0 %5607
      %5609 = vrot.lane.b32.xlu0 %v5528, 28
      %v5610 = vpop.permute.xlu0 %5609
      %5611 = vrot.lane.b32.xlu0 %v5529, 28
      %v5612 = vpop.permute.xlu0 %5611
      %5613 = vrot.lane.b32.xlu0 %v5530, 28
      %v5614 = vpop.permute.xlu0 %5613
      %5615 = vrot.lane.b32.xlu0 %v5531, 28
      %v5616 = vpop.permute.xlu0 %5615
      %5617 = vrot.lane.b32.xlu0 %v5532, 28
      %v5618 = vpop.permute.xlu0 %5617
      %5619 = vrot.lane.b32.xlu0 %v5533, 28
      %v5620 = vpop.permute.xlu0 %5619
      %5621 = vrot.lane.b32.xlu0 %v5534, 28
      %v5622 = vpop.permute.xlu0 %5621
      %5623 = vrot.lane.b32.xlu0 %v5535, 28
      %v5624 = vpop.permute.xlu0 %5623
      %5625 = vrot.lane.b32.xlu0 %v5536, 28
      %v5626 = vpop.permute.xlu0 %5625
      %5627 = vrot.lane.b32.xlu0 %v5537, 28
      %v5628 = vpop.permute.xlu0 %5627
      %5629 = vrot.lane.b32.xlu0 %v5538, 28
      %v5630 = vpop.permute.xlu0 %5629
      %5631 = vrot.lane.b32.xlu0 %v5539, 28
      %v5632 = vpop.permute.xlu0 %5631
      %5633 = vrot.lane.b32.xlu0 %v5540, 28
      %v5634 = vpop.permute.xlu0 %5633
      %5635 = vrot.lane.b32.xlu0 %v5541, 28
      %v5636 = vpop.permute.xlu0 %5635
      %5637 = vrot.lane.b32.xlu0 %v5542, 28
      %v5638 = vpop.permute.xlu0 %5637
      %5671 = vst.msk [vmem:[#allocation3] sm:$0xff] %vm1648, %v5576
      %5672 = vst.msk [vmem:[#allocation3 + $0x8] sm:$0xff] %vm1648, %v5578
      %5673 = vst.msk [vmem:[#allocation3 + $0x10] sm:$0xff] %vm1648, %v5580
      %5674 = vst.msk [vmem:[#allocation3 + $0x18] sm:$0xff] %vm1648, %v5582
      %5675 = vst.msk [vmem:[#allocation3 + $0x20] sm:$0xff] %vm1648, %v5584
      %5676 = vst.msk [vmem:[#allocation3 + $0x28] sm:$0xff] %vm1648, %v5586
      %5677 = vst.msk [vmem:[#allocation3 + $0x30] sm:$0xff] %vm1648, %v5588
      %5678 = vst.msk [vmem:[#allocation3 + $0x38] sm:$0xff] %vm1648, %v5590
      %5679 = vst.msk [vmem:[#allocation3 + $0x40] sm:$0xff] %vm1648, %v5592
      %5680 = vst.msk [vmem:[#allocation3 + $0x48] sm:$0xff] %vm1648, %v5594
      %5681 = vst.msk [vmem:[#allocation3 + $0x50] sm:$0xff] %vm1648, %v5596
      %5682 = vst.msk [vmem:[#allocation3 + $0x58] sm:$0xff] %vm1648, %v5598
      %5683 = vst.msk [vmem:[#allocation3 + $0x60] sm:$0xff] %vm1648, %v5600
      %5684 = vst.msk [vmem:[#allocation3 + $0x68] sm:$0xff] %vm1648, %v5602
      %5685 = vst.msk [vmem:[#allocation3 + $0x70] sm:$0xff] %vm1648, %v5604
      %5686 = vst.msk [vmem:[#allocation3 + $0x78] sm:$0xff] %vm1648, %v5606
      %5687 = vst.msk [vmem:[#allocation3 + $0x80] sm:$0xff] %vm1648, %v5608
      %5688 = vst.msk [vmem:[#allocation3 + $0x88] sm:$0xff] %vm1648, %v5610
      %5689 = vst.msk [vmem:[#allocation3 + $0x90] sm:$0xff] %vm1648, %v5612
      %5690 = vst.msk [vmem:[#allocation3 + $0x98] sm:$0xff] %vm1648, %v5614
      %5691 = vst.msk [vmem:[#allocation3 + $0xa0] sm:$0xff] %vm1648, %v5616
      %5692 = vst.msk [vmem:[#allocation3 + $0xa8] sm:$0xff] %vm1648, %v5618
      %5693 = vst.msk [vmem:[#allocation3 + $0xb0] sm:$0xff] %vm1648, %v5620
      %5694 = vst.msk [vmem:[#allocation3 + $0xb8] sm:$0xff] %vm1648, %v5622
      %5695 = vst.msk [vmem:[#allocation3 + $0xc0] sm:$0xff] %vm1648, %v5624
      %5696 = vst.msk [vmem:[#allocation3 + $0xc8] sm:$0xff] %vm1648, %v5626
      %5697 = vst.msk [vmem:[#allocation3 + $0xd0] sm:$0xff] %vm1648, %v5628
      %5698 = vst.msk [vmem:[#allocation3 + $0xd8] sm:$0xff] %vm1648, %v5630
      %5699 = vst.msk [vmem:[#allocation3 + $0xe0] sm:$0xff] %vm1648, %v5632
      %5700 = vst.msk [vmem:[#allocation3 + $0xe8] sm:$0xff] %vm1648, %v5634
      %5701 = vst.msk [vmem:[#allocation3 + $0xf0] sm:$0xff] %vm1648, %v5636
      %5702 = vst.msk [vmem:[#allocation3 + $0xf8] sm:$0xff] %vm1648, %v5638
      %v5703 = vld [vmem:[%s1294 + $0x2] sm:$0xff]
      %v5704 = vld [vmem:[%s1294 + $0xa] sm:$0xff]
      %v5705 = vld [vmem:[%s1294 + $0x1a] sm:$0xff]
      %v5706 = vld [vmem:[%s1294 + $0x22] sm:$0xff]
      %v5707 = vld [vmem:[%s1294 + $0x32] sm:$0xff]
      %v5708 = vld [vmem:[%s1294 + $0x3a] sm:$0xff]
      %v5709 = vld [vmem:[%s1294 + $0x4a] sm:$0xff]
      %v5710 = vld [vmem:[%s1294 + $0x52] sm:$0xff]
      %v5711 = vld [vmem:[%s1294 + $0x62] sm:$0xff]
      %v5712 = vld [vmem:[%s1294 + $0x6a] sm:$0xff]
      %v5713 = vld [vmem:[%s1294 + $0x7a] sm:$0xff]
      %v5714 = vld [vmem:[%s1294 + $0x82] sm:$0xff]
      %v5715 = vld [vmem:[%s1294 + $0x92] sm:$0xff]
      %v5716 = vld [vmem:[%s1294 + $0x9a] sm:$0xff]
      %v5717 = vld [vmem:[%s1294 + $0xaa] sm:$0xff]
      %v5718 = vld [vmem:[%s1294 + $0xb2] sm:$0xff]
      %v5719 = vld [vmem:[%s1294 + $0xc2] sm:$0xff]
      %v5720 = vld [vmem:[%s1294 + $0xca] sm:$0xff]
      %v5721 = vld [vmem:[%s1294 + $0xda] sm:$0xff]
      %v5722 = vld [vmem:[%s1294 + $0xe2] sm:$0xff]
      %v5723 = vld [vmem:[%s1294 + $0xf2] sm:$0xff]
      %v5724 = vld [vmem:[%s1294 + $0xfa] sm:$0xff]
      %v5725 = vld [vmem:[%s1294 + $0x10a] sm:$0xff]
      %v5726 = vld [vmem:[%s1294 + $0x112] sm:$0xff]
      %v5727 = vld [vmem:[%s1294 + $0x122] sm:$0xff]
      %v5728 = vld [vmem:[%s1294 + $0x12a] sm:$0xff]
      %v5729 = vld [vmem:[%s1294 + $0x13a] sm:$0xff]
      %v5730 = vld [vmem:[%s1294 + $0x142] sm:$0xff]
      %v5731 = vld [vmem:[%s1294 + $0x152] sm:$0xff]
      %v5732 = vld [vmem:[%s1294 + $0x15a] sm:$0xff]
      %v5733 = vld [vmem:[%s1294 + $0x16a] sm:$0xff]
      %v5734 = vld [vmem:[%s1294 + $0x172] sm:$0xff]
      %5767 = vrot.lane.b32.xlu0 %v5703, 32
      %v5768 = vpop.permute.xlu0 %5767
      %5769 = vrot.lane.b32.xlu0 %v5704, 32
      %v5770 = vpop.permute.xlu0 %5769
      %5771 = vrot.lane.b32.xlu0 %v5705, 32
      %v5772 = vpop.permute.xlu0 %5771
      %5773 = vrot.lane.b32.xlu0 %v5706, 32
      %v5774 = vpop.permute.xlu0 %5773
      %5775 = vrot.lane.b32.xlu0 %v5707, 32
      %v5776 = vpop.permute.xlu0 %5775
      %5777 = vrot.lane.b32.xlu0 %v5708, 32
      %v5778 = vpop.permute.xlu0 %5777
      %5779 = vrot.lane.b32.xlu0 %v5709, 32
      %v5780 = vpop.permute.xlu0 %5779
      %5781 = vrot.lane.b32.xlu0 %v5710, 32
      %v5782 = vpop.permute.xlu0 %5781
      %5783 = vrot.lane.b32.xlu0 %v5711, 32
      %v5784 = vpop.permute.xlu0 %5783
      %5785 = vrot.lane.b32.xlu0 %v5712, 32
      %v5786 = vpop.permute.xlu0 %5785
      %5787 = vrot.lane.b32.xlu0 %v5713, 32
      %v5788 = vpop.permute.xlu0 %5787
      %5789 = vrot.lane.b32.xlu0 %v5714, 32
      %v5790 = vpop.permute.xlu0 %5789
      %5791 = vrot.lane.b32.xlu0 %v5715, 32
      %v5792 = vpop.permute.xlu0 %5791
      %5793 = vrot.lane.b32.xlu0 %v5716, 32
      %v5794 = vpop.permute.xlu0 %5793
      %5795 = vrot.lane.b32.xlu0 %v5717, 32
      %v5796 = vpop.permute.xlu0 %5795
      %5797 = vrot.lane.b32.xlu0 %v5718, 32
      %v5798 = vpop.permute.xlu0 %5797
      %5799 = vrot.lane.b32.xlu0 %v5719, 32
      %v5800 = vpop.permute.xlu0 %5799
      %5801 = vrot.lane.b32.xlu0 %v5720, 32
      %v5802 = vpop.permute.xlu0 %5801
      %5803 = vrot.lane.b32.xlu0 %v5721, 32
      %v5804 = vpop.permute.xlu0 %5803
      %5805 = vrot.lane.b32.xlu0 %v5722, 32
      %v5806 = vpop.permute.xlu0 %5805
      %5807 = vrot.lane.b32.xlu0 %v5723, 32
      %v5808 = vpop.permute.xlu0 %5807
      %5809 = vrot.lane.b32.xlu0 %v5724, 32
      %v5810 = vpop.permute.xlu0 %5809
      %5811 = vrot.lane.b32.xlu0 %v5725, 32
      %v5812 = vpop.permute.xlu0 %5811
      %5813 = vrot.lane.b32.xlu0 %v5726, 32
      %v5814 = vpop.permute.xlu0 %5813
      %5815 = vrot.lane.b32.xlu0 %v5727, 32
      %v5816 = vpop.permute.xlu0 %5815
      %5817 = vrot.lane.b32.xlu0 %v5728, 32
      %v5818 = vpop.permute.xlu0 %5817
      %5819 = vrot.lane.b32.xlu0 %v5729, 32
      %v5820 = vpop.permute.xlu0 %5819
      %5821 = vrot.lane.b32.xlu0 %v5730, 32
      %v5822 = vpop.permute.xlu0 %5821
      %5823 = vrot.lane.b32.xlu0 %v5731, 32
      %v5824 = vpop.permute.xlu0 %5823
      %5825 = vrot.lane.b32.xlu0 %v5732, 32
      %v5826 = vpop.permute.xlu0 %5825
      %5827 = vrot.lane.b32.xlu0 %v5733, 32
      %v5828 = vpop.permute.xlu0 %5827
      %5829 = vrot.lane.b32.xlu0 %v5734, 32
      %v5830 = vpop.permute.xlu0 %5829
      %5863 = vst.msk [vmem:[#allocation3] sm:$0xff] %vm1841, %v5768
      %5864 = vst.msk [vmem:[#allocation3 + $0x8] sm:$0xff] %vm1841, %v5770
      %5865 = vst.msk [vmem:[#allocation3 + $0x10] sm:$0xff] %vm1841, %v5772
      %5866 = vst.msk [vmem:[#allocation3 + $0x18] sm:$0xff] %vm1841, %v5774
      %5867 = vst.msk [vmem:[#allocation3 + $0x20] sm:$0xff] %vm1841, %v5776
      %5868 = vst.msk [vmem:[#allocation3 + $0x28] sm:$0xff] %vm1841, %v5778
      %5869 = vst.msk [vmem:[#allocation3 + $0x30] sm:$0xff] %vm1841, %v5780
      %5870 = vst.msk [vmem:[#allocation3 + $0x38] sm:$0xff] %vm1841, %v5782
      %5871 = vst.msk [vmem:[#allocation3 + $0x40] sm:$0xff] %vm1841, %v5784
      %5872 = vst.msk [vmem:[#allocation3 + $0x48] sm:$0xff] %vm1841, %v5786
      %5873 = vst.msk [vmem:[#allocation3 + $0x50] sm:$0xff] %vm1841, %v5788
      %5874 = vst.msk [vmem:[#allocation3 + $0x58] sm:$0xff] %vm1841, %v5790
      %5875 = vst.msk [vmem:[#allocation3 + $0x60] sm:$0xff] %vm1841, %v5792
      %5876 = vst.msk [vmem:[#allocation3 + $0x68] sm:$0xff] %vm1841, %v5794
      %5877 = vst.msk [vmem:[#allocation3 + $0x70] sm:$0xff] %vm1841, %v5796
      %5878 = vst.msk [vmem:[#allocation3 + $0x78] sm:$0xff] %vm1841, %v5798
      %5879 = vst.msk [vmem:[#allocation3 + $0x80] sm:$0xff] %vm1841, %v5800
      %5880 = vst.msk [vmem:[#allocation3 + $0x88] sm:$0xff] %vm1841, %v5802
      %5881 = vst.msk [vmem:[#allocation3 + $0x90] sm:$0xff] %vm1841, %v5804
      %5882 = vst.msk [vmem:[#allocation3 + $0x98] sm:$0xff] %vm1841, %v5806
      %5883 = vst.msk [vmem:[#allocation3 + $0xa0] sm:$0xff] %vm1841, %v5808
      %5884 = vst.msk [vmem:[#allocation3 + $0xa8] sm:$0xff] %vm1841, %v5810
      %5885 = vst.msk [vmem:[#allocation3 + $0xb0] sm:$0xff] %vm1841, %v5812
      %5886 = vst.msk [vmem:[#allocation3 + $0xb8] sm:$0xff] %vm1841, %v5814
      %5887 = vst.msk [vmem:[#allocation3 + $0xc0] sm:$0xff] %vm1841, %v5816
      %5888 = vst.msk [vmem:[#allocation3 + $0xc8] sm:$0xff] %vm1841, %v5818
      %5889 = vst.msk [vmem:[#allocation3 + $0xd0] sm:$0xff] %vm1841, %v5820
      %5890 = vst.msk [vmem:[#allocation3 + $0xd8] sm:$0xff] %vm1841, %v5822
      %5891 = vst.msk [vmem:[#allocation3 + $0xe0] sm:$0xff] %vm1841, %v5824
      %5892 = vst.msk [vmem:[#allocation3 + $0xe8] sm:$0xff] %vm1841, %v5826
      %5893 = vst.msk [vmem:[#allocation3 + $0xf0] sm:$0xff] %vm1841, %v5828
      %5894 = vst.msk [vmem:[#allocation3 + $0xf8] sm:$0xff] %vm1841, %v5830
      %v5895 = vld [vmem:[#allocation3] sm:$0xff]
      %v5896 = vld [vmem:[#allocation3 + $0x8] sm:$0xff]
      %v5897 = vld [vmem:[#allocation3 + $0x10] sm:$0xff]
      %v5898 = vld [vmem:[#allocation3 + $0x18] sm:$0xff]
      %v5899 = vld [vmem:[#allocation3 + $0x20] sm:$0xff]
      %v5900 = vld [vmem:[#allocation3 + $0x28] sm:$0xff]
      %v5901 = vld [vmem:[#allocation3 + $0x30] sm:$0xff]
      %v5902 = vld [vmem:[#allocation3 + $0x38] sm:$0xff]
      %v5903 = vld [vmem:[#allocation3 + $0x40] sm:$0xff]
      %v5904 = vld [vmem:[#allocation3 + $0x48] sm:$0xff]
      %v5905 = vld [vmem:[#allocation3 + $0x50] sm:$0xff]
      %v5906 = vld [vmem:[#allocation3 + $0x58] sm:$0xff]
      %v5907 = vld [vmem:[#allocation3 + $0x60] sm:$0xff]
      %v5908 = vld [vmem:[#allocation3 + $0x68] sm:$0xff]
      %v5909 = vld [vmem:[#allocation3 + $0x70] sm:$0xff]
      %v5910 = vld [vmem:[#allocation3 + $0x78] sm:$0xff]
      %v5911 = vld [vmem:[#allocation3 + $0x80] sm:$0xff]
      %v5912 = vld [vmem:[#allocation3 + $0x88] sm:$0xff]
      %v5913 = vld [vmem:[#allocation3 + $0x90] sm:$0xff]
      %v5914 = vld [vmem:[#allocation3 + $0x98] sm:$0xff]
      %v5915 = vld [vmem:[#allocation3 + $0xa0] sm:$0xff]
      %v5916 = vld [vmem:[#allocation3 + $0xa8] sm:$0xff]
      %v5917 = vld [vmem:[#allocation3 + $0xb0] sm:$0xff]
      %v5918 = vld [vmem:[#allocation3 + $0xb8] sm:$0xff]
      %v5919 = vld [vmem:[#allocation3 + $0xc0] sm:$0xff]
      %v5920 = vld [vmem:[#allocation3 + $0xc8] sm:$0xff]
      %v5921 = vld [vmem:[#allocation3 + $0xd0] sm:$0xff]
      %v5922 = vld [vmem:[#allocation3 + $0xd8] sm:$0xff]
      %v5923 = vld [vmem:[#allocation3 + $0xe0] sm:$0xff]
      %v5924 = vld [vmem:[#allocation3 + $0xe8] sm:$0xff]
      %v5925 = vld [vmem:[#allocation3 + $0xf0] sm:$0xff]
      %v5926 = vld [vmem:[#allocation3 + $0xf8] sm:$0xff]
      %s5927 = scalar_lea.vmem %s1, 80
      %v5928 = vld [vmem:[%s5927] sm:$0xff]
      %v5929 = vld [vmem:[%s5927 + $0x8] sm:$0xff]
      %v5930 = vld [vmem:[%s5927 + $0x10] sm:$0xff]
      %v5931 = vld [vmem:[%s5927 + $0x18] sm:$0xff]
      %v5932 = vld [vmem:[%s5927 + $0x20] sm:$0xf]
      %v5934 = vsel %vm1911, %v5895, 0
      %v5937 = vsel %vm1911, %v5896, 0
      %v5940 = vsel %vm1911, %v5897, 0
      %v5943 = vsel %vm1911, %v5898, 0
      %v5946 = vsel %vm1911, %v5899, 0
      %v5949 = vsel %vm1911, %v5900, 0
      %v5952 = vsel %vm1911, %v5901, 0
      %v5955 = vsel %vm1911, %v5902, 0
      %v5958 = vsel %vm1911, %v5903, 0
      %v5961 = vsel %vm1911, %v5904, 0
      %v5964 = vsel %vm1911, %v5905, 0
      %v5967 = vsel %vm1911, %v5906, 0
      %v5970 = vsel %vm1911, %v5907, 0
      %v5973 = vsel %vm1911, %v5908, 0
      %v5976 = vsel %vm1911, %v5909, 0
      %v5979 = vsel %vm1911, %v5910, 0
      %v5982 = vsel %vm1911, %v5911, 0
      %v5985 = vsel %vm1911, %v5912, 0
      %v5988 = vsel %vm1911, %v5913, 0
      %v5991 = vsel %vm1911, %v5914, 0
      %v5994 = vsel %vm1911, %v5915, 0
      %v5997 = vsel %vm1911, %v5916, 0
      %v6000 = vsel %vm1911, %v5917, 0
      %v6003 = vsel %vm1911, %v5918, 0
      %v6006 = vsel %vm1911, %v5919, 0
      %v6009 = vsel %vm1911, %v5920, 0
      %v6012 = vsel %vm1911, %v5921, 0
      %v6015 = vsel %vm1911, %v5922, 0
      %v6018 = vsel %vm1911, %v5923, 0
      %v6021 = vsel %vm1911, %v5924, 0
      %v6024 = vsel %vm1911, %v5925, 0
      %v6027 = vsel %vm1911, %v5926, 0
      %v6030 = vsel %vm2008, %v5932, 0
      %6032 = vmatprep.subr.mxu0 0.0
      %6033 = vmatpush1.msra.mxu0 %v5928
      %6034 = vmatprep.subr.mxu0 0.0
      %6035 = vmatpush1.msra.mxu0 %v5929
      %6036 = vmatprep.subr.mxu0 0.0
      %6037 = vmatpush1.msra.mxu0 %v5930
      %6038 = vmatprep.subr.mxu0 0.0
      %6039 = vmatpush1.msra.mxu0 %v5931
      %6040 = vmatprep.subr.mxu0 0.0
      %6041 = vmatpush1.msra.mxu0 %v6030
      %6042 = vmatprep.subr.mxu0 0.0
      %6043 = vmatpush1.msra.mxu0 0.0
      %6044 = vmatprep.subr.mxu0 0.0
      %6045 = vmatpush1.msra.mxu0 0.0
      %6046 = vmatprep.subr.mxu0 0.0
      %6047 = vmatpush1.msra.mxu0 0.0
      %6048 = vmatprep.subr.mxu0 0.0
      %6049 = vmatpush1.msra.mxu0 0.0
      %6050 = vmatprep.subr.mxu0 0.0
      %6051 = vmatpush1.msra.mxu0 0.0
      %6052 = vmatprep.subr.mxu0 0.0
      %6053 = vmatpush1.msra.mxu0 0.0
      %6054 = vmatprep.subr.mxu0 0.0
      %6055 = vmatpush1.msra.mxu0 0.0
      %6056 = vmatprep.subr.mxu0 0.0
      %6057 = vmatpush1.msra.mxu0 0.0
      %6058 = vmatprep.subr.mxu0 0.0
      %6059 = vmatpush1.msra.mxu0 0.0
      %6060 = vmatprep.subr.mxu0 0.0
      %6061 = vmatpush1.msra.mxu0 0.0
      %6062 = vmatprep.subr.mxu0 0.0
      %6063 = vmatpush1.msra.mxu0 0.0
      %6064 = vmatprep.subr.mxu0 0.0
      %6065 = vmatpush1.msra.mxu0 0.0
      %6066 = vmatprep.subr.mxu0 0.0
      %6067 = vmatpush1.msra.mxu0 0.0
      %6068 = vmatprep.subr.mxu0 0.0
      %6069 = vmatpush1.msra.mxu0 0.0
      %6070 = vmatprep.subr.mxu0 0.0
      %6071 = vmatpush1.msra.mxu0 0.0
      %6072 = vmatprep.subr.mxu0 0.0
      %6073 = vmatpush1.msra.mxu0 0.0
      %6074 = vmatprep.subr.mxu0 0.0
      %6075 = vmatpush1.msra.mxu0 0.0
      %6076 = vmatprep.subr.mxu0 0.0
      %6077 = vmatpush1.msra.mxu0 0.0
      %6078 = vmatprep.subr.mxu0 0.0
      %6079 = vmatpush1.msra.mxu0 0.0
      %6080 = vmatprep.subr.mxu0 0.0
      %6081 = vmatpush1.msra.mxu0 0.0
      %6082 = vmatprep.subr.mxu0 0.0
      %6083 = vmatpush1.msra.mxu0 0.0
      %6084 = vmatprep.subr.mxu0 0.0
      %6085 = vmatpush1.msra.mxu0 0.0
      %6086 = vmatprep.subr.mxu0 0.0
      %6087 = vmatpush1.msra.mxu0 0.0
      %6088 = vmatprep.subr.mxu0 0.0
      %6089 = vmatpush1.msra.mxu0 0.0
      %6090 = vmatprep.subr.mxu0 0.0
      %6091 = vmatpush1.msra.mxu0 0.0
      %6092 = vmatprep.subr.mxu0 0.0
      %6093 = vmatpush1.msra.mxu0 0.0
      %6094 = vmatprep.subr.mxu0 0.0
      %6095 = vmatpush1.msra.mxu0 0.0
      %6096 = vmatprep.mubr.f32.mxu0 0.0
      %6097 = vmatmul.mubr.f32.gmra.mrb[0].mxu0 %v5934
      %v6098 = vpop.f32.mrb[0].mxu0
      %v6099 = vadd.f32 0.0, %v6098
      %v6100 = vpop.f32.mrb[0].mxu0
      %6101 = vmatprep.mubr.f32.mxu0 0.0
      %6102 = vmatmul.mubr.f32.gmra.mrb[0].mxu0 %v5937
      %v6103 = vpop.f32.mrb[0].mxu0
      %v6104 = vadd.f32 0.0, %v6103
      %v6105 = vpop.f32.mrb[0].mxu0
      %6106 = vmatprep.mubr.f32.mxu0 0.0
      %6107 = vmatmul.mubr.f32.gmra.mrb[0].mxu0 %v5940
      %v6108 = vpop.f32.mrb[0].mxu0
      %v6109 = vadd.f32 0.0, %v6108
      %v6110 = vpop.f32.mrb[0].mxu0
      %6111 = vmatprep.mubr.f32.mxu0 0.0
      %6112 = vmatmul.mubr.f32.gmra.mrb[0].mxu0 %v5943
      %v6113 = vpop.f32.mrb[0].mxu0
      %v6114 = vadd.f32 0.0, %v6113
      %v6115 = vpop.f32.mrb[0].mxu0
      %6116 = vmatprep.mubr.f32.mxu0 0.0
      %6117 = vmatmul.mubr.f32.gmra.mrb[0].mxu0 %v5946
      %v6118 = vpop.f32.mrb[0].mxu0
      %v6119 = vadd.f32 0.0, %v6118
      %v6120 = vpop.f32.mrb[0].mxu0
      %6121 = vmatprep.mubr.f32.mxu0 0.0
      %6122 = vmatmul.mubr.f32.gmra.mrb[0].mxu0 %v5949
      %v6123 = vpop.f32.mrb[0].mxu0
      %v6124 = vadd.f32 0.0, %v6123
      %v6125 = vpop.f32.mrb[0].mxu0
      %6126 = vmatprep.mubr.f32.mxu0 0.0
      %6127 = vmatmul.mubr.f32.gmra.mrb[0].mxu0 %v5952
      %v6128 = vpop.f32.mrb[0].mxu0
      %v6129 = vadd.f32 0.0, %v6128
      %v6130 = vpop.f32.mrb[0].mxu0
      %6131 = vmatprep.mubr.f32.mxu0 0.0
      %6132 = vmatmul.mubr.f32.gmra.mrb[0].mxu0 %v5955
      %v6133 = vpop.f32.mrb[0].mxu0
      %v6134 = vadd.f32 0.0, %v6133
      %v6135 = vpop.f32.mrb[0].mxu0
      %6136 = vmatprep.mubr.f32.mxu0 0.0
      %6137 = vmatmul.mubr.f32.gmra.mrb[0].mxu0 %v5958
      %v6138 = vpop.f32.mrb[0].mxu0
      %v6139 = vadd.f32 0.0, %v6138
      %v6140 = vpop.f32.mrb[0].mxu0
      %6141 = vmatprep.mubr.f32.mxu0 0.0
      %6142 = vmatmul.mubr.f32.gmra.mrb[0].mxu0 %v5961
      %v6143 = vpop.f32.mrb[0].mxu0
      %v6144 = vadd.f32 0.0, %v6143
      %v6145 = vpop.f32.mrb[0].mxu0
      %6146 = vmatprep.mubr.f32.mxu0 0.0
      %6147 = vmatmul.mubr.f32.gmra.mrb[0].mxu0 %v5964
      %v6148 = vpop.f32.mrb[0].mxu0
      %v6149 = vadd.f32 0.0, %v6148
      %v6150 = vpop.f32.mrb[0].mxu0
      %6151 = vmatprep.mubr.f32.mxu0 0.0
      %6152 = vmatmul.mubr.f32.gmra.mrb[0].mxu0 %v5967
      %v6153 = vpop.f32.mrb[0].mxu0
      %v6154 = vadd.f32 0.0, %v6153
      %v6155 = vpop.f32.mrb[0].mxu0
      %6156 = vmatprep.mubr.f32.mxu0 0.0
      %6157 = vmatmul.mubr.f32.gmra.mrb[0].mxu0 %v5970
      %v6158 = vpop.f32.mrb[0].mxu0
      %v6159 = vadd.f32 0.0, %v6158
      %v6160 = vpop.f32.mrb[0].mxu0
      %6161 = vmatprep.mubr.f32.mxu0 0.0
      %6162 = vmatmul.mubr.f32.gmra.mrb[0].mxu0 %v5973
      %v6163 = vpop.f32.mrb[0].mxu0
      %v6164 = vadd.f32 0.0, %v6163
      %v6165 = vpop.f32.mrb[0].mxu0
      %6166 = vmatprep.mubr.f32.mxu0 0.0
      %6167 = vmatmul.mubr.f32.gmra.mrb[0].mxu0 %v5976
      %v6168 = vpop.f32.mrb[0].mxu0
      %v6169 = vadd.f32 0.0, %v6168
      %v6170 = vpop.f32.mrb[0].mxu0
      %6171 = vmatprep.mubr.f32.mxu0 0.0
      %6172 = vmatmul.mubr.f32.gmra.mrb[0].mxu0 %v5979
      %v6173 = vpop.f32.mrb[0].mxu0
      %v6174 = vadd.f32 0.0, %v6173
      %v6175 = vpop.f32.mrb[0].mxu0
      %6176 = vmatprep.mubr.f32.mxu0 0.0
      %6177 = vmatmul.mubr.f32.gmra.mrb[0].mxu0 %v5982
      %v6178 = vpop.f32.mrb[0].mxu0
      %v6179 = vadd.f32 0.0, %v6178
      %v6180 = vpop.f32.mrb[0].mxu0
      %6181 = vmatprep.mubr.f32.mxu0 0.0
      %6182 = vmatmul.mubr.f32.gmra.mrb[0].mxu0 %v5985
      %v6183 = vpop.f32.mrb[0].mxu0
      %v6184 = vadd.f32 0.0, %v6183
      %v6185 = vpop.f32.mrb[0].mxu0
      %6186 = vmatprep.mubr.f32.mxu0 0.0
      %6187 = vmatmul.mubr.f32.gmra.mrb[0].mxu0 %v5988
      %v6188 = vpop.f32.mrb[0].mxu0
      %v6189 = vadd.f32 0.0, %v6188
      %v6190 = vpop.f32.mrb[0].mxu0
      %6191 = vmatprep.mubr.f32.mxu0 0.0
      %6192 = vmatmul.mubr.f32.gmra.mrb[0].mxu0 %v5991
      %v6193 = vpop.f32.mrb[0].mxu0
      %v6194 = vadd.f32 0.0, %v6193
      %v6195 = vpop.f32.mrb[0].mxu0
      %6196 = vmatprep.mubr.f32.mxu0 0.0
      %6197 = vmatmul.mubr.f32.gmra.mrb[0].mxu0 %v5994
      %v6198 = vpop.f32.mrb[0].mxu0
      %v6199 = vadd.f32 0.0, %v6198
      %v6200 = vpop.f32.mrb[0].mxu0
      %6201 = vmatprep.mubr.f32.mxu0 0.0
      %6202 = vmatmul.mubr.f32.gmra.mrb[0].mxu0 %v5997
      %v6203 = vpop.f32.mrb[0].mxu0
      %v6204 = vadd.f32 0.0, %v6203
      %v6205 = vpop.f32.mrb[0].mxu0
      %6206 = vmatprep.mubr.f32.mxu0 0.0
      %6207 = vmatmul.mubr.f32.gmra.mrb[0].mxu0 %v6000
      %v6208 = vpop.f32.mrb[0].mxu0
      %v6209 = vadd.f32 0.0, %v6208
      %v6210 = vpop.f32.mrb[0].mxu0
      %6211 = vmatprep.mubr.f32.mxu0 0.0
      %6212 = vmatmul.mubr.f32.gmra.mrb[0].mxu0 %v6003
      %v6213 = vpop.f32.mrb[0].mxu0
      %v6214 = vadd.f32 0.0, %v6213
      %v6215 = vpop.f32.mrb[0].mxu0
      %6216 = vmatprep.mubr.f32.mxu0 0.0
      %6217 = vmatmul.mubr.f32.gmra.mrb[0].mxu0 %v6006
      %v6218 = vpop.f32.mrb[0].mxu0
      %v6219 = vadd.f32 0.0, %v6218
      %v6220 = vpop.f32.mrb[0].mxu0
      %6221 = vmatprep.mubr.f32.mxu0 0.0
      %6222 = vmatmul.mubr.f32.gmra.mrb[0].mxu0 %v6009
      %v6223 = vpop.f32.mrb[0].mxu0
      %v6224 = vadd.f32 0.0, %v6223
      %v6225 = vpop.f32.mrb[0].mxu0
      %6226 = vmatprep.mubr.f32.mxu0 0.0
      %6227 = vmatmul.mubr.f32.gmra.mrb[0].mxu0 %v6012
      %v6228 = vpop.f32.mrb[0].mxu0
      %v6229 = vadd.f32 0.0, %v6228
      %v6230 = vpop.f32.mrb[0].mxu0
      %6231 = vmatprep.mubr.f32.mxu0 0.0
      %6232 = vmatmul.mubr.f32.gmra.mrb[0].mxu0 %v6015
      %v6233 = vpop.f32.mrb[0].mxu0
      %v6234 = vadd.f32 0.0, %v6233
      %v6235 = vpop.f32.mrb[0].mxu0
      %6236 = vmatprep.mubr.f32.mxu0 0.0
      %6237 = vmatmul.mubr.f32.gmra.mrb[0].mxu0 %v6018
      %v6238 = vpop.f32.mrb[0].mxu0
      %v6239 = vadd.f32 0.0, %v6238
      %v6240 = vpop.f32.mrb[0].mxu0
      %6241 = vmatprep.mubr.f32.mxu0 0.0
      %6242 = vmatmul.mubr.f32.gmra.mrb[0].mxu0 %v6021
      %v6243 = vpop.f32.mrb[0].mxu0
      %v6244 = vadd.f32 0.0, %v6243
      %v6245 = vpop.f32.mrb[0].mxu0
      %6246 = vmatprep.mubr.f32.mxu0 0.0
      %6247 = vmatmul.mubr.f32.gmra.mrb[0].mxu0 %v6024
      %v6248 = vpop.f32.mrb[0].mxu0
      %v6249 = vadd.f32 0.0, %v6248
      %v6250 = vpop.f32.mrb[0].mxu0
      %6251 = vmatprep.mubr.f32.mxu0 0.0
      %6252 = vmatmul.mubr.f32.gmra.mrb[0].mxu0 %v6027
      %v6253 = vpop.f32.mrb[0].mxu0
      %v6254 = vadd.f32 0.0, %v6253
      %v6255 = vpop.f32.mrb[0].mxu0
      %6256 = vdwg.mxu0
      %v6257 = vmax.f32 %v6099, 0.0
      %v6258 = vmax.f32 %v6104, 0.0
      %v6259 = vmax.f32 %v6109, 0.0
      %v6260 = vmax.f32 %v6114, 0.0
      %v6261 = vmax.f32 %v6119, 0.0
      %v6262 = vmax.f32 %v6124, 0.0
      %v6263 = vmax.f32 %v6129, 0.0
      %v6264 = vmax.f32 %v6134, 0.0
      %v6265 = vmax.f32 %v6139, 0.0
      %v6266 = vmax.f32 %v6144, 0.0
      %v6267 = vmax.f32 %v6149, 0.0
      %v6268 = vmax.f32 %v6154, 0.0
      %v6269 = vmax.f32 %v6159, 0.0
      %v6270 = vmax.f32 %v6164, 0.0
      %v6271 = vmax.f32 %v6169, 0.0
      %v6272 = vmax.f32 %v6174, 0.0
      %v6273 = vmax.f32 %v6179, 0.0
      %v6274 = vmax.f32 %v6184, 0.0
      %v6275 = vmax.f32 %v6189, 0.0
      %v6276 = vmax.f32 %v6194, 0.0
      %v6277 = vmax.f32 %v6199, 0.0
      %v6278 = vmax.f32 %v6204, 0.0
      %v6279 = vmax.f32 %v6209, 0.0
      %v6280 = vmax.f32 %v6214, 0.0
      %v6281 = vmax.f32 %v6219, 0.0
      %v6282 = vmax.f32 %v6224, 0.0
      %v6283 = vmax.f32 %v6229, 0.0
      %v6284 = vmax.f32 %v6234, 0.0
      %v6285 = vmax.f32 %v6239, 0.0
      %v6286 = vmax.f32 %v6244, 0.0
      %v6287 = vmax.f32 %v6249, 0.0
      %v6288 = vmax.f32 %v6254, 0.0
      %6289 = vst.msk [vmem:[%s232 + $0x1] sm:$0xff] %vm144, %v6257
      %6290 = vst.msk [vmem:[%s232 + $0x9] sm:$0xff] %vm144, %v6258
      %6291 = vst.msk [vmem:[%s232 + $0x19] sm:$0xff] %vm144, %v6259
      %6292 = vst.msk [vmem:[%s232 + $0x21] sm:$0xff] %vm144, %v6260
      %6293 = vst.msk [vmem:[%s232 + $0x31] sm:$0xff] %vm144, %v6261
      %6294 = vst.msk [vmem:[%s232 + $0x39] sm:$0xff] %vm144, %v6262
      %6295 = vst.msk [vmem:[%s232 + $0x49] sm:$0xff] %vm144, %v6263
      %6296 = vst.msk [vmem:[%s232 + $0x51] sm:$0xff] %vm144, %v6264
      %6297 = vst.msk [vmem:[%s232 + $0x61] sm:$0xff] %vm144, %v6265
      %6298 = vst.msk [vmem:[%s232 + $0x69] sm:$0xff] %vm144, %v6266
      %6299 = vst.msk [vmem:[%s232 + $0x79] sm:$0xff] %vm144, %v6267
      %6300 = vst.msk [vmem:[%s232 + $0x81] sm:$0xff] %vm144, %v6268
      %6301 = vst.msk [vmem:[%s232 + $0x91] sm:$0xff] %vm144, %v6269
      %6302 = vst.msk [vmem:[%s232 + $0x99] sm:$0xff] %vm144, %v6270
      %6303 = vst.msk [vmem:[%s232 + $0xa9] sm:$0xff] %vm144, %v6271
      %6304 = vst.msk [vmem:[%s232 + $0xb1] sm:$0xff] %vm144, %v6272
      %6305 = vst.msk [vmem:[%s232 + $0xc1] sm:$0xff] %vm144, %v6273
      %6306 = vst.msk [vmem:[%s232 + $0xc9] sm:$0xff] %vm144, %v6274
      %6307 = vst.msk [vmem:[%s232 + $0xd9] sm:$0xff] %vm144, %v6275
      %6308 = vst.msk [vmem:[%s232 + $0xe1] sm:$0xff] %vm144, %v6276
      %6309 = vst.msk [vmem:[%s232 + $0xf1] sm:$0xff] %vm144, %v6277
      %6310 = vst.msk [vmem:[%s232 + $0xf9] sm:$0xff] %vm144, %v6278
      %6311 = vst.msk [vmem:[%s232 + $0x109] sm:$0xff] %vm144, %v6279
      %6312 = vst.msk [vmem:[%s232 + $0x111] sm:$0xff] %vm144, %v6280
      %6313 = vst.msk [vmem:[%s232 + $0x121] sm:$0xff] %vm144, %v6281
      %6314 = vst.msk [vmem:[%s232 + $0x129] sm:$0xff] %vm144, %v6282
      %6315 = vst.msk [vmem:[%s232 + $0x139] sm:$0xff] %vm144, %v6283
      %6316 = vst.msk [vmem:[%s232 + $0x141] sm:$0xff] %vm144, %v6284
      %6317 = vst.msk [vmem:[%s232 + $0x151] sm:$0xff] %vm144, %v6285
      %6318 = vst.msk [vmem:[%s232 + $0x159] sm:$0xff] %vm144, %v6286
      %6319 = vst.msk [vmem:[%s232 + $0x169] sm:$0xff] %vm144, %v6287
      %6320 = vst.msk [vmem:[%s232 + $0x171] sm:$0xff] %vm144, %v6288
      %v6321 = vld [vmem:[#allocation2] sm:$0xff]
      %v6322 = vld [vmem:[#allocation2 + $0x8] sm:$0xff]
      %v6323 = vld [vmem:[#allocation2 + $0x18] sm:$0xff]
      %v6324 = vld [vmem:[#allocation2 + $0x20] sm:$0xff]
      %v6325 = vld [vmem:[#allocation2 + $0x30] sm:$0xff]
      %v6326 = vld [vmem:[#allocation2 + $0x38] sm:$0xff]
      %v6327 = vld [vmem:[#allocation2 + $0x48] sm:$0xff]
      %v6328 = vld [vmem:[#allocation2 + $0x50] sm:$0xff]
      %v6329 = vld [vmem:[#allocation2 + $0x60] sm:$0xff]
      %v6330 = vld [vmem:[#allocation2 + $0x68] sm:$0xff]
      %v6331 = vld [vmem:[#allocation2 + $0x78] sm:$0xff]
      %v6332 = vld [vmem:[#allocation2 + $0x80] sm:$0xff]
      %v6333 = vld [vmem:[#allocation2 + $0x90] sm:$0xff]
      %v6334 = vld [vmem:[#allocation2 + $0x98] sm:$0xff]
      %v6335 = vld [vmem:[#allocation2 + $0xa8] sm:$0xff]
      %v6336 = vld [vmem:[#allocation2 + $0xb0] sm:$0xff]
      %v6337 = vld [vmem:[#allocation2 + $0xc0] sm:$0xff]
      %v6338 = vld [vmem:[#allocation2 + $0xc8] sm:$0xff]
      %v6339 = vld [vmem:[#allocation2 + $0xd8] sm:$0xff]
      %v6340 = vld [vmem:[#allocation2 + $0xe0] sm:$0xff]
      %v6341 = vld [vmem:[#allocation2 + $0xf0] sm:$0xff]
      %v6342 = vld [vmem:[#allocation2 + $0xf8] sm:$0xff]
      %v6343 = vld [vmem:[#allocation2 + $0x108] sm:$0xff]
      %v6344 = vld [vmem:[#allocation2 + $0x110] sm:$0xff]
      %v6345 = vld [vmem:[#allocation2 + $0x120] sm:$0xff]
      %v6346 = vld [vmem:[#allocation2 + $0x128] sm:$0xff]
      %v6347 = vld [vmem:[#allocation2 + $0x138] sm:$0xff]
      %v6348 = vld [vmem:[#allocation2 + $0x140] sm:$0xff]
      %v6349 = vld [vmem:[#allocation2 + $0x150] sm:$0xff]
      %v6350 = vld [vmem:[#allocation2 + $0x158] sm:$0xff]
      %v6351 = vld [vmem:[#allocation2 + $0x168] sm:$0xff]
      %v6352 = vld [vmem:[#allocation2 + $0x170] sm:$0xff]
      %6353 = vst.msk [vmem:[#allocation3] sm:$0xff] %vm144, %v6321
      %6354 = vst.msk [vmem:[#allocation3 + $0x8] sm:$0xff] %vm144, %v6322
      %6355 = vst.msk [vmem:[#allocation3 + $0x10] sm:$0xff] %vm144, %v6323
      %6356 = vst.msk [vmem:[#allocation3 + $0x18] sm:$0xff] %vm144, %v6324
      %6357 = vst.msk [vmem:[#allocation3 + $0x20] sm:$0xff] %vm144, %v6325
      %6358 = vst.msk [vmem:[#allocation3 + $0x28] sm:$0xff] %vm144, %v6326
      %6359 = vst.msk [vmem:[#allocation3 + $0x30] sm:$0xff] %vm144, %v6327
      %6360 = vst.msk [vmem:[#allocation3 + $0x38] sm:$0xff] %vm144, %v6328
      %6361 = vst.msk [vmem:[#allocation3 + $0x40] sm:$0xff] %vm144, %v6329
      %6362 = vst.msk [vmem:[#allocation3 + $0x48] sm:$0xff] %vm144, %v6330
      %6363 = vst.msk [vmem:[#allocation3 + $0x50] sm:$0xff] %vm144, %v6331
      %6364 = vst.msk [vmem:[#allocation3 + $0x58] sm:$0xff] %vm144, %v6332
      %6365 = vst.msk [vmem:[#allocation3 + $0x60] sm:$0xff] %vm144, %v6333
      %6366 = vst.msk [vmem:[#allocation3 + $0x68] sm:$0xff] %vm144, %v6334
      %6367 = vst.msk [vmem:[#allocation3 + $0x70] sm:$0xff] %vm144, %v6335
      %6368 = vst.msk [vmem:[#allocation3 + $0x78] sm:$0xff] %vm144, %v6336
      %6369 = vst.msk [vmem:[#allocation3 + $0x80] sm:$0xff] %vm144, %v6337
      %6370 = vst.msk [vmem:[#allocation3 + $0x88] sm:$0xff] %vm144, %v6338
      %6371 = vst.msk [vmem:[#allocation3 + $0x90] sm:$0xff] %vm144, %v6339
      %6372 = vst.msk [vmem:[#allocation3 + $0x98] sm:$0xff] %vm144, %v6340
      %6373 = vst.msk [vmem:[#allocation3 + $0xa0] sm:$0xff] %vm144, %v6341
      %6374 = vst.msk [vmem:[#allocation3 + $0xa8] sm:$0xff] %vm144, %v6342
      %6375 = vst.msk [vmem:[#allocation3 + $0xb0] sm:$0xff] %vm144, %v6343
      %6376 = vst.msk [vmem:[#allocation3 + $0xb8] sm:$0xff] %vm144, %v6344
      %6377 = vst.msk [vmem:[#allocation3 + $0xc0] sm:$0xff] %vm144, %v6345
      %6378 = vst.msk [vmem:[#allocation3 + $0xc8] sm:$0xff] %vm144, %v6346
      %6379 = vst.msk [vmem:[#allocation3 + $0xd0] sm:$0xff] %vm144, %v6347
      %6380 = vst.msk [vmem:[#allocation3 + $0xd8] sm:$0xff] %vm144, %v6348
      %6381 = vst.msk [vmem:[#allocation3 + $0xe0] sm:$0xff] %vm144, %v6349
      %6382 = vst.msk [vmem:[#allocation3 + $0xe8] sm:$0xff] %vm144, %v6350
      %6383 = vst.msk [vmem:[#allocation3 + $0xf0] sm:$0xff] %vm144, %v6351
      %6384 = vst.msk [vmem:[#allocation3 + $0xf8] sm:$0xff] %vm144, %v6352
      %v6385 = vld [vmem:[#allocation2 + $0x1] sm:$0xff]
      %v6386 = vld [vmem:[#allocation2 + $0x9] sm:$0xff]
      %v6387 = vld [vmem:[#allocation2 + $0x19] sm:$0xff]
      %v6388 = vld [vmem:[#allocation2 + $0x21] sm:$0xff]
      %v6389 = vld [vmem:[#allocation2 + $0x31] sm:$0xff]
      %v6390 = vld [vmem:[#allocation2 + $0x39] sm:$0xff]
      %v6391 = vld [vmem:[#allocation2 + $0x49] sm:$0xff]
      %v6392 = vld [vmem:[#allocation2 + $0x51] sm:$0xff]
      %v6393 = vld [vmem:[#allocation2 + $0x61] sm:$0xff]
      %v6394 = vld [vmem:[#allocation2 + $0x69] sm:$0xff]
      %v6395 = vld [vmem:[#allocation2 + $0x79] sm:$0xff]
      %v6396 = vld [vmem:[#allocation2 + $0x81] sm:$0xff]
      %v6397 = vld [vmem:[#allocation2 + $0x91] sm:$0xff]
      %v6398 = vld [vmem:[#allocation2 + $0x99] sm:$0xff]
      %v6399 = vld [vmem:[#allocation2 + $0xa9] sm:$0xff]
      %v6400 = vld [vmem:[#allocation2 + $0xb1] sm:$0xff]
      %v6401 = vld [vmem:[#allocation2 + $0xc1] sm:$0xff]
      %v6402 = vld [vmem:[#allocation2 + $0xc9] sm:$0xff]
      %v6403 = vld [vmem:[#allocation2 + $0xd9] sm:$0xff]
      %v6404 = vld [vmem:[#allocation2 + $0xe1] sm:$0xff]
      %v6405 = vld [vmem:[#allocation2 + $0xf1] sm:$0xff]
      %v6406 = vld [vmem:[#allocation2 + $0xf9] sm:$0xff]
      %v6407 = vld [vmem:[#allocation2 + $0x109] sm:$0xff]
      %v6408 = vld [vmem:[#allocation2 + $0x111] sm:$0xff]
      %v6409 = vld [vmem:[#allocation2 + $0x121] sm:$0xff]
      %v6410 = vld [vmem:[#allocation2 + $0x129] sm:$0xff]
      %v6411 = vld [vmem:[#allocation2 + $0x139] sm:$0xff]
      %v6412 = vld [vmem:[#allocation2 + $0x141] sm:$0xff]
      %v6413 = vld [vmem:[#allocation2 + $0x151] sm:$0xff]
      %v6414 = vld [vmem:[#allocation2 + $0x159] sm:$0xff]
      %v6415 = vld [vmem:[#allocation2 + $0x169] sm:$0xff]
      %v6416 = vld [vmem:[#allocation2 + $0x171] sm:$0xff]
      %6449 = vrot.lane.b32.xlu0 %v6385, 4
      %v6450 = vpop.permute.xlu0 %6449
      %6451 = vrot.lane.b32.xlu0 %v6386, 4
      %v6452 = vpop.permute.xlu0 %6451
      %6453 = vrot.lane.b32.xlu0 %v6387, 4
      %v6454 = vpop.permute.xlu0 %6453
      %6455 = vrot.lane.b32.xlu0 %v6388, 4
      %v6456 = vpop.permute.xlu0 %6455
      %6457 = vrot.lane.b32.xlu0 %v6389, 4
      %v6458 = vpop.permute.xlu0 %6457
      %6459 = vrot.lane.b32.xlu0 %v6390, 4
      %v6460 = vpop.permute.xlu0 %6459
      %6461 = vrot.lane.b32.xlu0 %v6391, 4
      %v6462 = vpop.permute.xlu0 %6461
      %6463 = vrot.lane.b32.xlu0 %v6392, 4
      %v6464 = vpop.permute.xlu0 %6463
      %6465 = vrot.lane.b32.xlu0 %v6393, 4
      %v6466 = vpop.permute.xlu0 %6465
      %6467 = vrot.lane.b32.xlu0 %v6394, 4
      %v6468 = vpop.permute.xlu0 %6467
      %6469 = vrot.lane.b32.xlu0 %v6395, 4
      %v6470 = vpop.permute.xlu0 %6469
      %6471 = vrot.lane.b32.xlu0 %v6396, 4
      %v6472 = vpop.permute.xlu0 %6471
      %6473 = vrot.lane.b32.xlu0 %v6397, 4
      %v6474 = vpop.permute.xlu0 %6473
      %6475 = vrot.lane.b32.xlu0 %v6398, 4
      %v6476 = vpop.permute.xlu0 %6475
      %6477 = vrot.lane.b32.xlu0 %v6399, 4
      %v6478 = vpop.permute.xlu0 %6477
      %6479 = vrot.lane.b32.xlu0 %v6400, 4
      %v6480 = vpop.permute.xlu0 %6479
      %6481 = vrot.lane.b32.xlu0 %v6401, 4
      %v6482 = vpop.permute.xlu0 %6481
      %6483 = vrot.lane.b32.xlu0 %v6402, 4
      %v6484 = vpop.permute.xlu0 %6483
      %6485 = vrot.lane.b32.xlu0 %v6403, 4
      %v6486 = vpop.permute.xlu0 %6485
      %6487 = vrot.lane.b32.xlu0 %v6404, 4
      %v6488 = vpop.permute.xlu0 %6487
      %6489 = vrot.lane.b32.xlu0 %v6405, 4
      %v6490 = vpop.permute.xlu0 %6489
      %6491 = vrot.lane.b32.xlu0 %v6406, 4
      %v6492 = vpop.permute.xlu0 %6491
      %6493 = vrot.lane.b32.xlu0 %v6407, 4
      %v6494 = vpop.permute.xlu0 %6493
      %6495 = vrot.lane.b32.xlu0 %v6408, 4
      %v6496 = vpop.permute.xlu0 %6495
      %6497 = vrot.lane.b32.xlu0 %v6409, 4
      %v6498 = vpop.permute.xlu0 %6497
      %6499 = vrot.lane.b32.xlu0 %v6410, 4
      %v6500 = vpop.permute.xlu0 %6499
      %6501 = vrot.lane.b32.xlu0 %v6411, 4
      %v6502 = vpop.permute.xlu0 %6501
      %6503 = vrot.lane.b32.xlu0 %v6412, 4
      %v6504 = vpop.permute.xlu0 %6503
      %6505 = vrot.lane.b32.xlu0 %v6413, 4
      %v6506 = vpop.permute.xlu0 %6505
      %6507 = vrot.lane.b32.xlu0 %v6414, 4
      %v6508 = vpop.permute.xlu0 %6507
      %6509 = vrot.lane.b32.xlu0 %v6415, 4
      %v6510 = vpop.permute.xlu0 %6509
      %6511 = vrot.lane.b32.xlu0 %v6416, 4
      %v6512 = vpop.permute.xlu0 %6511
      %6545 = vst.msk [vmem:[#allocation3] sm:$0xff] %vm489, %v6450
      %6546 = vst.msk [vmem:[#allocation3 + $0x8] sm:$0xff] %vm489, %v6452
      %6547 = vst.msk [vmem:[#allocation3 + $0x10] sm:$0xff] %vm489, %v6454
      %6548 = vst.msk [vmem:[#allocation3 + $0x18] sm:$0xff] %vm489, %v6456
      %6549 = vst.msk [vmem:[#allocation3 + $0x20] sm:$0xff] %vm489, %v6458
      %6550 = vst.msk [vmem:[#allocation3 + $0x28] sm:$0xff] %vm489, %v6460
      %6551 = vst.msk [vmem:[#allocation3 + $0x30] sm:$0xff] %vm489, %v6462
      %6552 = vst.msk [vmem:[#allocation3 + $0x38] sm:$0xff] %vm489, %v6464
      %6553 = vst.msk [vmem:[#allocation3 + $0x40] sm:$0xff] %vm489, %v6466
      %6554 = vst.msk [vmem:[#allocation3 + $0x48] sm:$0xff] %vm489, %v6468
      %6555 = vst.msk [vmem:[#allocation3 + $0x50] sm:$0xff] %vm489, %v6470
      %6556 = vst.msk [vmem:[#allocation3 + $0x58] sm:$0xff] %vm489, %v6472
      %6557 = vst.msk [vmem:[#allocation3 + $0x60] sm:$0xff] %vm489, %v6474
      %6558 = vst.msk [vmem:[#allocation3 + $0x68] sm:$0xff] %vm489, %v6476
      %6559 = vst.msk [vmem:[#allocation3 + $0x70] sm:$0xff] %vm489, %v6478
      %6560 = vst.msk [vmem:[#allocation3 + $0x78] sm:$0xff] %vm489, %v6480
      %6561 = vst.msk [vmem:[#allocation3 + $0x80] sm:$0xff] %vm489, %v6482
      %6562 = vst.msk [vmem:[#allocation3 + $0x88] sm:$0xff] %vm489, %v6484
      %6563 = vst.msk [vmem:[#allocation3 + $0x90] sm:$0xff] %vm489, %v6486
      %6564 = vst.msk [vmem:[#allocation3 + $0x98] sm:$0xff] %vm489, %v6488
      %6565 = vst.msk [vmem:[#allocation3 + $0xa0] sm:$0xff] %vm489, %v6490
      %6566 = vst.msk [vmem:[#allocation3 + $0xa8] sm:$0xff] %vm489, %v6492
      %6567 = vst.msk [vmem:[#allocation3 + $0xb0] sm:$0xff] %vm489, %v6494
      %6568 = vst.msk [vmem:[#allocation3 + $0xb8] sm:$0xff] %vm489, %v6496
      %6569 = vst.msk [vmem:[#allocation3 + $0xc0] sm:$0xff] %vm489, %v6498
      %6570 = vst.msk [vmem:[#allocation3 + $0xc8] sm:$0xff] %vm489, %v6500
      %6571 = vst.msk [vmem:[#allocation3 + $0xd0] sm:$0xff] %vm489, %v6502
      %6572 = vst.msk [vmem:[#allocation3 + $0xd8] sm:$0xff] %vm489, %v6504
      %6573 = vst.msk [vmem:[#allocation3 + $0xe0] sm:$0xff] %vm489, %v6506
      %6574 = vst.msk [vmem:[#allocation3 + $0xe8] sm:$0xff] %vm489, %v6508
      %6575 = vst.msk [vmem:[#allocation3 + $0xf0] sm:$0xff] %vm489, %v6510
      %6576 = vst.msk [vmem:[#allocation3 + $0xf8] sm:$0xff] %vm489, %v6512
      %v6577 = vld [vmem:[#allocation2 + $0x2] sm:$0xff]
      %v6578 = vld [vmem:[#allocation2 + $0xa] sm:$0xff]
      %v6579 = vld [vmem:[#allocation2 + $0x1a] sm:$0xff]
      %v6580 = vld [vmem:[#allocation2 + $0x22] sm:$0xff]
      %v6581 = vld [vmem:[#allocation2 + $0x32] sm:$0xff]
      %v6582 = vld [vmem:[#allocation2 + $0x3a] sm:$0xff]
      %v6583 = vld [vmem:[#allocation2 + $0x4a] sm:$0xff]
      %v6584 = vld [vmem:[#allocation2 + $0x52] sm:$0xff]
      %v6585 = vld [vmem:[#allocation2 + $0x62] sm:$0xff]
      %v6586 = vld [vmem:[#allocation2 + $0x6a] sm:$0xff]
      %v6587 = vld [vmem:[#allocation2 + $0x7a] sm:$0xff]
      %v6588 = vld [vmem:[#allocation2 + $0x82] sm:$0xff]
      %v6589 = vld [vmem:[#allocation2 + $0x92] sm:$0xff]
      %v6590 = vld [vmem:[#allocation2 + $0x9a] sm:$0xff]
      %v6591 = vld [vmem:[#allocation2 + $0xaa] sm:$0xff]
      %v6592 = vld [vmem:[#allocation2 + $0xb2] sm:$0xff]
      %v6593 = vld [vmem:[#allocation2 + $0xc2] sm:$0xff]
      %v6594 = vld [vmem:[#allocation2 + $0xca] sm:$0xff]
      %v6595 = vld [vmem:[#allocation2 + $0xda] sm:$0xff]
      %v6596 = vld [vmem:[#allocation2 + $0xe2] sm:$0xff]
      %v6597 = vld [vmem:[#allocation2 + $0xf2] sm:$0xff]
      %v6598 = vld [vmem:[#allocation2 + $0xfa] sm:$0xff]
      %v6599 = vld [vmem:[#allocation2 + $0x10a] sm:$0xff]
      %v6600 = vld [vmem:[#allocation2 + $0x112] sm:$0xff]
      %v6601 = vld [vmem:[#allocation2 + $0x122] sm:$0xff]
      %v6602 = vld [vmem:[#allocation2 + $0x12a] sm:$0xff]
      %v6603 = vld [vmem:[#allocation2 + $0x13a] sm:$0xff]
      %v6604 = vld [vmem:[#allocation2 + $0x142] sm:$0xff]
      %v6605 = vld [vmem:[#allocation2 + $0x152] sm:$0xff]
      %v6606 = vld [vmem:[#allocation2 + $0x15a] sm:$0xff]
      %v6607 = vld [vmem:[#allocation2 + $0x16a] sm:$0xff]
      %v6608 = vld [vmem:[#allocation2 + $0x172] sm:$0xff]
      %6641 = vrot.lane.b32.xlu0 %v6577, 8
      %v6642 = vpop.permute.xlu0 %6641
      %6643 = vrot.lane.b32.xlu0 %v6578, 8
      %v6644 = vpop.permute.xlu0 %6643
      %6645 = vrot.lane.b32.xlu0 %v6579, 8
      %v6646 = vpop.permute.xlu0 %6645
      %6647 = vrot.lane.b32.xlu0 %v6580, 8
      %v6648 = vpop.permute.xlu0 %6647
      %6649 = vrot.lane.b32.xlu0 %v6581, 8
      %v6650 = vpop.permute.xlu0 %6649
      %6651 = vrot.lane.b32.xlu0 %v6582, 8
      %v6652 = vpop.permute.xlu0 %6651
      %6653 = vrot.lane.b32.xlu0 %v6583, 8
      %v6654 = vpop.permute.xlu0 %6653
      %6655 = vrot.lane.b32.xlu0 %v6584, 8
      %v6656 = vpop.permute.xlu0 %6655
      %6657 = vrot.lane.b32.xlu0 %v6585, 8
      %v6658 = vpop.permute.xlu0 %6657
      %6659 = vrot.lane.b32.xlu0 %v6586, 8
      %v6660 = vpop.permute.xlu0 %6659
      %6661 = vrot.lane.b32.xlu0 %v6587, 8
      %v6662 = vpop.permute.xlu0 %6661
      %6663 = vrot.lane.b32.xlu0 %v6588, 8
      %v6664 = vpop.permute.xlu0 %6663
      %6665 = vrot.lane.b32.xlu0 %v6589, 8
      %v6666 = vpop.permute.xlu0 %6665
      %6667 = vrot.lane.b32.xlu0 %v6590, 8
      %v6668 = vpop.permute.xlu0 %6667
      %6669 = vrot.lane.b32.xlu0 %v6591, 8
      %v6670 = vpop.permute.xlu0 %6669
      %6671 = vrot.lane.b32.xlu0 %v6592, 8
      %v6672 = vpop.permute.xlu0 %6671
      %6673 = vrot.lane.b32.xlu0 %v6593, 8
      %v6674 = vpop.permute.xlu0 %6673
      %6675 = vrot.lane.b32.xlu0 %v6594, 8
      %v6676 = vpop.permute.xlu0 %6675
      %6677 = vrot.lane.b32.xlu0 %v6595, 8
      %v6678 = vpop.permute.xlu0 %6677
      %6679 = vrot.lane.b32.xlu0 %v6596, 8
      %v6680 = vpop.permute.xlu0 %6679
      %6681 = vrot.lane.b32.xlu0 %v6597, 8
      %v6682 = vpop.permute.xlu0 %6681
      %6683 = vrot.lane.b32.xlu0 %v6598, 8
      %v6684 = vpop.permute.xlu0 %6683
      %6685 = vrot.lane.b32.xlu0 %v6599, 8
      %v6686 = vpop.permute.xlu0 %6685
      %6687 = vrot.lane.b32.xlu0 %v6600, 8
      %v6688 = vpop.permute.xlu0 %6687
      %6689 = vrot.lane.b32.xlu0 %v6601, 8
      %v6690 = vpop.permute.xlu0 %6689
      %6691 = vrot.lane.b32.xlu0 %v6602, 8
      %v6692 = vpop.permute.xlu0 %6691
      %6693 = vrot.lane.b32.xlu0 %v6603, 8
      %v6694 = vpop.permute.xlu0 %6693
      %6695 = vrot.lane.b32.xlu0 %v6604, 8
      %v6696 = vpop.permute.xlu0 %6695
      %6697 = vrot.lane.b32.xlu0 %v6605, 8
      %v6698 = vpop.permute.xlu0 %6697
      %6699 = vrot.lane.b32.xlu0 %v6606, 8
      %v6700 = vpop.permute.xlu0 %6699
      %6701 = vrot.lane.b32.xlu0 %v6607, 8
      %v6702 = vpop.permute.xlu0 %6701
      %6703 = vrot.lane.b32.xlu0 %v6608, 8
      %v6704 = vpop.permute.xlu0 %6703
      %6737 = vst.msk [vmem:[#allocation3] sm:$0xff] %vm682, %v6642
      %6738 = vst.msk [vmem:[#allocation3 + $0x8] sm:$0xff] %vm682, %v6644
      %6739 = vst.msk [vmem:[#allocation3 + $0x10] sm:$0xff] %vm682, %v6646
      %6740 = vst.msk [vmem:[#allocation3 + $0x18] sm:$0xff] %vm682, %v6648
      %6741 = vst.msk [vmem:[#allocation3 + $0x20] sm:$0xff] %vm682, %v6650
      %6742 = vst.msk [vmem:[#allocation3 + $0x28] sm:$0xff] %vm682, %v6652
      %6743 = vst.msk [vmem:[#allocation3 + $0x30] sm:$0xff] %vm682, %v6654
      %6744 = vst.msk [vmem:[#allocation3 + $0x38] sm:$0xff] %vm682, %v6656
      %6745 = vst.msk [vmem:[#allocation3 + $0x40] sm:$0xff] %vm682, %v6658
      %6746 = vst.msk [vmem:[#allocation3 + $0x48] sm:$0xff] %vm682, %v6660
      %6747 = vst.msk [vmem:[#allocation3 + $0x50] sm:$0xff] %vm682, %v6662
      %6748 = vst.msk [vmem:[#allocation3 + $0x58] sm:$0xff] %vm682, %v6664
      %6749 = vst.msk [vmem:[#allocation3 + $0x60] sm:$0xff] %vm682, %v6666
      %6750 = vst.msk [vmem:[#allocation3 + $0x68] sm:$0xff] %vm682, %v6668
      %6751 = vst.msk [vmem:[#allocation3 + $0x70] sm:$0xff] %vm682, %v6670
      %6752 = vst.msk [vmem:[#allocation3 + $0x78] sm:$0xff] %vm682, %v6672
      %6753 = vst.msk [vmem:[#allocation3 + $0x80] sm:$0xff] %vm682, %v6674
      %6754 = vst.msk [vmem:[#allocation3 + $0x88] sm:$0xff] %vm682, %v6676
      %6755 = vst.msk [vmem:[#allocation3 + $0x90] sm:$0xff] %vm682, %v6678
      %6756 = vst.msk [vmem:[#allocation3 + $0x98] sm:$0xff] %vm682, %v6680
      %6757 = vst.msk [vmem:[#allocation3 + $0xa0] sm:$0xff] %vm682, %v6682
      %6758 = vst.msk [vmem:[#allocation3 + $0xa8] sm:$0xff] %vm682, %v6684
      %6759 = vst.msk [vmem:[#allocation3 + $0xb0] sm:$0xff] %vm682, %v6686
      %6760 = vst.msk [vmem:[#allocation3 + $0xb8] sm:$0xff] %vm682, %v6688
      %6761 = vst.msk [vmem:[#allocation3 + $0xc0] sm:$0xff] %vm682, %v6690
      %6762 = vst.msk [vmem:[#allocation3 + $0xc8] sm:$0xff] %vm682, %v6692
      %6763 = vst.msk [vmem:[#allocation3 + $0xd0] sm:$0xff] %vm682, %v6694
      %6764 = vst.msk [vmem:[#allocation3 + $0xd8] sm:$0xff] %vm682, %v6696
      %6765 = vst.msk [vmem:[#allocation3 + $0xe0] sm:$0xff] %vm682, %v6698
      %6766 = vst.msk [vmem:[#allocation3 + $0xe8] sm:$0xff] %vm682, %v6700
      %6767 = vst.msk [vmem:[#allocation3 + $0xf0] sm:$0xff] %vm682, %v6702
      %6768 = vst.msk [vmem:[#allocation3 + $0xf8] sm:$0xff] %vm682, %v6704
      %v6769 = vld [vmem:[%s232] sm:$0xff]
      %v6770 = vld [vmem:[%s232 + $0x8] sm:$0xff]
      %v6771 = vld [vmem:[%s232 + $0x18] sm:$0xff]
      %v6772 = vld [vmem:[%s232 + $0x20] sm:$0xff]
      %v6773 = vld [vmem:[%s232 + $0x30] sm:$0xff]
      %v6774 = vld [vmem:[%s232 + $0x38] sm:$0xff]
      %v6775 = vld [vmem:[%s232 + $0x48] sm:$0xff]
      %v6776 = vld [vmem:[%s232 + $0x50] sm:$0xff]
      %v6777 = vld [vmem:[%s232 + $0x60] sm:$0xff]
      %v6778 = vld [vmem:[%s232 + $0x68] sm:$0xff]
      %v6779 = vld [vmem:[%s232 + $0x78] sm:$0xff]
      %v6780 = vld [vmem:[%s232 + $0x80] sm:$0xff]
      %v6781 = vld [vmem:[%s232 + $0x90] sm:$0xff]
      %v6782 = vld [vmem:[%s232 + $0x98] sm:$0xff]
      %v6783 = vld [vmem:[%s232 + $0xa8] sm:$0xff]
      %v6784 = vld [vmem:[%s232 + $0xb0] sm:$0xff]
      %v6785 = vld [vmem:[%s232 + $0xc0] sm:$0xff]
      %v6786 = vld [vmem:[%s232 + $0xc8] sm:$0xff]
      %v6787 = vld [vmem:[%s232 + $0xd8] sm:$0xff]
      %v6788 = vld [vmem:[%s232 + $0xe0] sm:$0xff]
      %v6789 = vld [vmem:[%s232 + $0xf0] sm:$0xff]
      %v6790 = vld [vmem:[%s232 + $0xf8] sm:$0xff]
      %v6791 = vld [vmem:[%s232 + $0x108] sm:$0xff]
      %v6792 = vld [vmem:[%s232 + $0x110] sm:$0xff]
      %v6793 = vld [vmem:[%s232 + $0x120] sm:$0xff]
      %v6794 = vld [vmem:[%s232 + $0x128] sm:$0xff]
      %v6795 = vld [vmem:[%s232 + $0x138] sm:$0xff]
      %v6796 = vld [vmem:[%s232 + $0x140] sm:$0xff]
      %v6797 = vld [vmem:[%s232 + $0x150] sm:$0xff]
      %v6798 = vld [vmem:[%s232 + $0x158] sm:$0xff]
      %v6799 = vld [vmem:[%s232 + $0x168] sm:$0xff]
      %v6800 = vld [vmem:[%s232 + $0x170] sm:$0xff]
      %6833 = vrot.lane.b32.xlu0 %v6769, 12
      %v6834 = vpop.permute.xlu0 %6833
      %6835 = vrot.lane.b32.xlu0 %v6770, 12
      %v6836 = vpop.permute.xlu0 %6835
      %6837 = vrot.lane.b32.xlu0 %v6771, 12
      %v6838 = vpop.permute.xlu0 %6837
      %6839 = vrot.lane.b32.xlu0 %v6772, 12
      %v6840 = vpop.permute.xlu0 %6839
      %6841 = vrot.lane.b32.xlu0 %v6773, 12
      %v6842 = vpop.permute.xlu0 %6841
      %6843 = vrot.lane.b32.xlu0 %v6774, 12
      %v6844 = vpop.permute.xlu0 %6843
      %6845 = vrot.lane.b32.xlu0 %v6775, 12
      %v6846 = vpop.permute.xlu0 %6845
      %6847 = vrot.lane.b32.xlu0 %v6776, 12
      %v6848 = vpop.permute.xlu0 %6847
      %6849 = vrot.lane.b32.xlu0 %v6777, 12
      %v6850 = vpop.permute.xlu0 %6849
      %6851 = vrot.lane.b32.xlu0 %v6778, 12
      %v6852 = vpop.permute.xlu0 %6851
      %6853 = vrot.lane.b32.xlu0 %v6779, 12
      %v6854 = vpop.permute.xlu0 %6853
      %6855 = vrot.lane.b32.xlu0 %v6780, 12
      %v6856 = vpop.permute.xlu0 %6855
      %6857 = vrot.lane.b32.xlu0 %v6781, 12
      %v6858 = vpop.permute.xlu0 %6857
      %6859 = vrot.lane.b32.xlu0 %v6782, 12
      %v6860 = vpop.permute.xlu0 %6859
      %6861 = vrot.lane.b32.xlu0 %v6783, 12
      %v6862 = vpop.permute.xlu0 %6861
      %6863 = vrot.lane.b32.xlu0 %v6784, 12
      %v6864 = vpop.permute.xlu0 %6863
      %6865 = vrot.lane.b32.xlu0 %v6785, 12
      %v6866 = vpop.permute.xlu0 %6865
      %6867 = vrot.lane.b32.xlu0 %v6786, 12
      %v6868 = vpop.permute.xlu0 %6867
      %6869 = vrot.lane.b32.xlu0 %v6787, 12
      %v6870 = vpop.permute.xlu0 %6869
      %6871 = vrot.lane.b32.xlu0 %v6788, 12
      %v6872 = vpop.permute.xlu0 %6871
      %6873 = vrot.lane.b32.xlu0 %v6789, 12
      %v6874 = vpop.permute.xlu0 %6873
      %6875 = vrot.lane.b32.xlu0 %v6790, 12
      %v6876 = vpop.permute.xlu0 %6875
      %6877 = vrot.lane.b32.xlu0 %v6791, 12
      %v6878 = vpop.permute.xlu0 %6877
      %6879 = vrot.lane.b32.xlu0 %v6792, 12
      %v6880 = vpop.permute.xlu0 %6879
      %6881 = vrot.lane.b32.xlu0 %v6793, 12
      %v6882 = vpop.permute.xlu0 %6881
      %6883 = vrot.lane.b32.xlu0 %v6794, 12
      %v6884 = vpop.permute.xlu0 %6883
      %6885 = vrot.lane.b32.xlu0 %v6795, 12
      %v6886 = vpop.permute.xlu0 %6885
      %6887 = vrot.lane.b32.xlu0 %v6796, 12
      %v6888 = vpop.permute.xlu0 %6887
      %6889 = vrot.lane.b32.xlu0 %v6797, 12
      %v6890 = vpop.permute.xlu0 %6889
      %6891 = vrot.lane.b32.xlu0 %v6798, 12
      %v6892 = vpop.permute.xlu0 %6891
      %6893 = vrot.lane.b32.xlu0 %v6799, 12
      %v6894 = vpop.permute.xlu0 %6893
      %6895 = vrot.lane.b32.xlu0 %v6800, 12
      %v6896 = vpop.permute.xlu0 %6895
      %6929 = vst.msk [vmem:[#allocation3] sm:$0xff] %vm875, %v6834
      %6930 = vst.msk [vmem:[#allocation3 + $0x8] sm:$0xff] %vm875, %v6836
      %6931 = vst.msk [vmem:[#allocation3 + $0x10] sm:$0xff] %vm875, %v6838
      %6932 = vst.msk [vmem:[#allocation3 + $0x18] sm:$0xff] %vm875, %v6840
      %6933 = vst.msk [vmem:[#allocation3 + $0x20] sm:$0xff] %vm875, %v6842
      %6934 = vst.msk [vmem:[#allocation3 + $0x28] sm:$0xff] %vm875, %v6844
      %6935 = vst.msk [vmem:[#allocation3 + $0x30] sm:$0xff] %vm875, %v6846
      %6936 = vst.msk [vmem:[#allocation3 + $0x38] sm:$0xff] %vm875, %v6848
      %6937 = vst.msk [vmem:[#allocation3 + $0x40] sm:$0xff] %vm875, %v6850
      %6938 = vst.msk [vmem:[#allocation3 + $0x48] sm:$0xff] %vm875, %v6852
      %6939 = vst.msk [vmem:[#allocation3 + $0x50] sm:$0xff] %vm875, %v6854
      %6940 = vst.msk [vmem:[#allocation3 + $0x58] sm:$0xff] %vm875, %v6856
      %6941 = vst.msk [vmem:[#allocation3 + $0x60] sm:$0xff] %vm875, %v6858
      %6942 = vst.msk [vmem:[#allocation3 + $0x68] sm:$0xff] %vm875, %v6860
      %6943 = vst.msk [vmem:[#allocation3 + $0x70] sm:$0xff] %vm875, %v6862
      %6944 = vst.msk [vmem:[#allocation3 + $0x78] sm:$0xff] %vm875, %v6864
      %6945 = vst.msk [vmem:[#allocation3 + $0x80] sm:$0xff] %vm875, %v6866
      %6946 = vst.msk [vmem:[#allocation3 + $0x88] sm:$0xff] %vm875, %v6868
      %6947 = vst.msk [vmem:[#allocation3 + $0x90] sm:$0xff] %vm875, %v6870
      %6948 = vst.msk [vmem:[#allocation3 + $0x98] sm:$0xff] %vm875, %v6872
      %6949 = vst.msk [vmem:[#allocation3 + $0xa0] sm:$0xff] %vm875, %v6874
      %6950 = vst.msk [vmem:[#allocation3 + $0xa8] sm:$0xff] %vm875, %v6876
      %6951 = vst.msk [vmem:[#allocation3 + $0xb0] sm:$0xff] %vm875, %v6878
      %6952 = vst.msk [vmem:[#allocation3 + $0xb8] sm:$0xff] %vm875, %v6880
      %6953 = vst.msk [vmem:[#allocation3 + $0xc0] sm:$0xff] %vm875, %v6882
      %6954 = vst.msk [vmem:[#allocation3 + $0xc8] sm:$0xff] %vm875, %v6884
      %6955 = vst.msk [vmem:[#allocation3 + $0xd0] sm:$0xff] %vm875, %v6886
      %6956 = vst.msk [vmem:[#allocation3 + $0xd8] sm:$0xff] %vm875, %v6888
      %6957 = vst.msk [vmem:[#allocation3 + $0xe0] sm:$0xff] %vm875, %v6890
      %6958 = vst.msk [vmem:[#allocation3 + $0xe8] sm:$0xff] %vm875, %v6892
      %6959 = vst.msk [vmem:[#allocation3 + $0xf0] sm:$0xff] %vm875, %v6894
      %6960 = vst.msk [vmem:[#allocation3 + $0xf8] sm:$0xff] %vm875, %v6896
      %v6961 = vld [vmem:[%s232 + $0x1] sm:$0xff]
      %v6962 = vld [vmem:[%s232 + $0x9] sm:$0xff]
      %v6963 = vld [vmem:[%s232 + $0x19] sm:$0xff]
      %v6964 = vld [vmem:[%s232 + $0x21] sm:$0xff]
      %v6965 = vld [vmem:[%s232 + $0x31] sm:$0xff]
      %v6966 = vld [vmem:[%s232 + $0x39] sm:$0xff]
      %v6967 = vld [vmem:[%s232 + $0x49] sm:$0xff]
      %v6968 = vld [vmem:[%s232 + $0x51] sm:$0xff]
      %v6969 = vld [vmem:[%s232 + $0x61] sm:$0xff]
      %v6970 = vld [vmem:[%s232 + $0x69] sm:$0xff]
      %v6971 = vld [vmem:[%s232 + $0x79] sm:$0xff]
      %v6972 = vld [vmem:[%s232 + $0x81] sm:$0xff]
      %v6973 = vld [vmem:[%s232 + $0x91] sm:$0xff]
      %v6974 = vld [vmem:[%s232 + $0x99] sm:$0xff]
      %v6975 = vld [vmem:[%s232 + $0xa9] sm:$0xff]
      %v6976 = vld [vmem:[%s232 + $0xb1] sm:$0xff]
      %v6977 = vld [vmem:[%s232 + $0xc1] sm:$0xff]
      %v6978 = vld [vmem:[%s232 + $0xc9] sm:$0xff]
      %v6979 = vld [vmem:[%s232 + $0xd9] sm:$0xff]
      %v6980 = vld [vmem:[%s232 + $0xe1] sm:$0xff]
      %v6981 = vld [vmem:[%s232 + $0xf1] sm:$0xff]
      %v6982 = vld [vmem:[%s232 + $0xf9] sm:$0xff]
      %v6983 = vld [vmem:[%s232 + $0x109] sm:$0xff]
      %v6984 = vld [vmem:[%s232 + $0x111] sm:$0xff]
      %v6985 = vld [vmem:[%s232 + $0x121] sm:$0xff]
      %v6986 = vld [vmem:[%s232 + $0x129] sm:$0xff]
      %v6987 = vld [vmem:[%s232 + $0x139] sm:$0xff]
      %v6988 = vld [vmem:[%s232 + $0x141] sm:$0xff]
      %v6989 = vld [vmem:[%s232 + $0x151] sm:$0xff]
      %v6990 = vld [vmem:[%s232 + $0x159] sm:$0xff]
      %v6991 = vld [vmem:[%s232 + $0x169] sm:$0xff]
      %v6992 = vld [vmem:[%s232 + $0x171] sm:$0xff]
      %7025 = vrot.lane.b32.xlu0 %v6961, 16
      %v7026 = vpop.permute.xlu0 %7025
      %7027 = vrot.lane.b32.xlu0 %v6962, 16
      %v7028 = vpop.permute.xlu0 %7027
      %7029 = vrot.lane.b32.xlu0 %v6963, 16
      %v7030 = vpop.permute.xlu0 %7029
      %7031 = vrot.lane.b32.xlu0 %v6964, 16
      %v7032 = vpop.permute.xlu0 %7031
      %7033 = vrot.lane.b32.xlu0 %v6965, 16
      %v7034 = vpop.permute.xlu0 %7033
      %7035 = vrot.lane.b32.xlu0 %v6966, 16
      %v7036 = vpop.permute.xlu0 %7035
      %7037 = vrot.lane.b32.xlu0 %v6967, 16
      %v7038 = vpop.permute.xlu0 %7037
      %7039 = vrot.lane.b32.xlu0 %v6968, 16
      %v7040 = vpop.permute.xlu0 %7039
      %7041 = vrot.lane.b32.xlu0 %v6969, 16
      %v7042 = vpop.permute.xlu0 %7041
      %7043 = vrot.lane.b32.xlu0 %v6970, 16
      %v7044 = vpop.permute.xlu0 %7043
      %7045 = vrot.lane.b32.xlu0 %v6971, 16
      %v7046 = vpop.permute.xlu0 %7045
      %7047 = vrot.lane.b32.xlu0 %v6972, 16
      %v7048 = vpop.permute.xlu0 %7047
      %7049 = vrot.lane.b32.xlu0 %v6973, 16
      %v7050 = vpop.permute.xlu0 %7049
      %7051 = vrot.lane.b32.xlu0 %v6974, 16
      %v7052 = vpop.permute.xlu0 %7051
      %7053 = vrot.lane.b32.xlu0 %v6975, 16
      %v7054 = vpop.permute.xlu0 %7053
      %7055 = vrot.lane.b32.xlu0 %v6976, 16
      %v7056 = vpop.permute.xlu0 %7055
      %7057 = vrot.lane.b32.xlu0 %v6977, 16
      %v7058 = vpop.permute.xlu0 %7057
      %7059 = vrot.lane.b32.xlu0 %v6978, 16
      %v7060 = vpop.permute.xlu0 %7059
      %7061 = vrot.lane.b32.xlu0 %v6979, 16
      %v7062 = vpop.permute.xlu0 %7061
      %7063 = vrot.lane.b32.xlu0 %v6980, 16
      %v7064 = vpop.permute.xlu0 %7063
      %7065 = vrot.lane.b32.xlu0 %v6981, 16
      %v7066 = vpop.permute.xlu0 %7065
      %7067 = vrot.lane.b32.xlu0 %v6982, 16
      %v7068 = vpop.permute.xlu0 %7067
      %7069 = vrot.lane.b32.xlu0 %v6983, 16
      %v7070 = vpop.permute.xlu0 %7069
      %7071 = vrot.lane.b32.xlu0 %v6984, 16
      %v7072 = vpop.permute.xlu0 %7071
      %7073 = vrot.lane.b32.xlu0 %v6985, 16
      %v7074 = vpop.permute.xlu0 %7073
      %7075 = vrot.lane.b32.xlu0 %v6986, 16
      %v7076 = vpop.permute.xlu0 %7075
      %7077 = vrot.lane.b32.xlu0 %v6987, 16
      %v7078 = vpop.permute.xlu0 %7077
      %7079 = vrot.lane.b32.xlu0 %v6988, 16
      %v7080 = vpop.permute.xlu0 %7079
      %7081 = vrot.lane.b32.xlu0 %v6989, 16
      %v7082 = vpop.permute.xlu0 %7081
      %7083 = vrot.lane.b32.xlu0 %v6990, 16
      %v7084 = vpop.permute.xlu0 %7083
      %7085 = vrot.lane.b32.xlu0 %v6991, 16
      %v7086 = vpop.permute.xlu0 %7085
      %7087 = vrot.lane.b32.xlu0 %v6992, 16
      %v7088 = vpop.permute.xlu0 %7087
      %7121 = vst.msk [vmem:[#allocation3] sm:$0xff] %vm1068, %v7026
      %7122 = vst.msk [vmem:[#allocation3 + $0x8] sm:$0xff] %vm1068, %v7028
      %7123 = vst.msk [vmem:[#allocation3 + $0x10] sm:$0xff] %vm1068, %v7030
      %7124 = vst.msk [vmem:[#allocation3 + $0x18] sm:$0xff] %vm1068, %v7032
      %7125 = vst.msk [vmem:[#allocation3 + $0x20] sm:$0xff] %vm1068, %v7034
      %7126 = vst.msk [vmem:[#allocation3 + $0x28] sm:$0xff] %vm1068, %v7036
      %7127 = vst.msk [vmem:[#allocation3 + $0x30] sm:$0xff] %vm1068, %v7038
      %7128 = vst.msk [vmem:[#allocation3 + $0x38] sm:$0xff] %vm1068, %v7040
      %7129 = vst.msk [vmem:[#allocation3 + $0x40] sm:$0xff] %vm1068, %v7042
      %7130 = vst.msk [vmem:[#allocation3 + $0x48] sm:$0xff] %vm1068, %v7044
      %7131 = vst.msk [vmem:[#allocation3 + $0x50] sm:$0xff] %vm1068, %v7046
      %7132 = vst.msk [vmem:[#allocation3 + $0x58] sm:$0xff] %vm1068, %v7048
      %7133 = vst.msk [vmem:[#allocation3 + $0x60] sm:$0xff] %vm1068, %v7050
      %7134 = vst.msk [vmem:[#allocation3 + $0x68] sm:$0xff] %vm1068, %v7052
      %7135 = vst.msk [vmem:[#allocation3 + $0x70] sm:$0xff] %vm1068, %v7054
      %7136 = vst.msk [vmem:[#allocation3 + $0x78] sm:$0xff] %vm1068, %v7056
      %7137 = vst.msk [vmem:[#allocation3 + $0x80] sm:$0xff] %vm1068, %v7058
      %7138 = vst.msk [vmem:[#allocation3 + $0x88] sm:$0xff] %vm1068, %v7060
      %7139 = vst.msk [vmem:[#allocation3 + $0x90] sm:$0xff] %vm1068, %v7062
      %7140 = vst.msk [vmem:[#allocation3 + $0x98] sm:$0xff] %vm1068, %v7064
      %7141 = vst.msk [vmem:[#allocation3 + $0xa0] sm:$0xff] %vm1068, %v7066
      %7142 = vst.msk [vmem:[#allocation3 + $0xa8] sm:$0xff] %vm1068, %v7068
      %7143 = vst.msk [vmem:[#allocation3 + $0xb0] sm:$0xff] %vm1068, %v7070
      %7144 = vst.msk [vmem:[#allocation3 + $0xb8] sm:$0xff] %vm1068, %v7072
      %7145 = vst.msk [vmem:[#allocation3 + $0xc0] sm:$0xff] %vm1068, %v7074
      %7146 = vst.msk [vmem:[#allocation3 + $0xc8] sm:$0xff] %vm1068, %v7076
      %7147 = vst.msk [vmem:[#allocation3 + $0xd0] sm:$0xff] %vm1068, %v7078
      %7148 = vst.msk [vmem:[#allocation3 + $0xd8] sm:$0xff] %vm1068, %v7080
      %7149 = vst.msk [vmem:[#allocation3 + $0xe0] sm:$0xff] %vm1068, %v7082
      %7150 = vst.msk [vmem:[#allocation3 + $0xe8] sm:$0xff] %vm1068, %v7084
      %7151 = vst.msk [vmem:[#allocation3 + $0xf0] sm:$0xff] %vm1068, %v7086
      %7152 = vst.msk [vmem:[#allocation3 + $0xf8] sm:$0xff] %vm1068, %v7088
      %v7153 = vld [vmem:[%s232 + $0x2] sm:$0xff]
      %v7154 = vld [vmem:[%s232 + $0xa] sm:$0xff]
      %v7155 = vld [vmem:[%s232 + $0x1a] sm:$0xff]
      %v7156 = vld [vmem:[%s232 + $0x22] sm:$0xff]
      %v7157 = vld [vmem:[%s232 + $0x32] sm:$0xff]
      %v7158 = vld [vmem:[%s232 + $0x3a] sm:$0xff]
      %v7159 = vld [vmem:[%s232 + $0x4a] sm:$0xff]
      %v7160 = vld [vmem:[%s232 + $0x52] sm:$0xff]
      %v7161 = vld [vmem:[%s232 + $0x62] sm:$0xff]
      %v7162 = vld [vmem:[%s232 + $0x6a] sm:$0xff]
      %v7163 = vld [vmem:[%s232 + $0x7a] sm:$0xff]
      %v7164 = vld [vmem:[%s232 + $0x82] sm:$0xff]
      %v7165 = vld [vmem:[%s232 + $0x92] sm:$0xff]
      %v7166 = vld [vmem:[%s232 + $0x9a] sm:$0xff]
      %v7167 = vld [vmem:[%s232 + $0xaa] sm:$0xff]
      %v7168 = vld [vmem:[%s232 + $0xb2] sm:$0xff]
      %v7169 = vld [vmem:[%s232 + $0xc2] sm:$0xff]
      %v7170 = vld [vmem:[%s232 + $0xca] sm:$0xff]
      %v7171 = vld [vmem:[%s232 + $0xda] sm:$0xff]
      %v7172 = vld [vmem:[%s232 + $0xe2] sm:$0xff]
      %v7173 = vld [vmem:[%s232 + $0xf2] sm:$0xff]
      %v7174 = vld [vmem:[%s232 + $0xfa] sm:$0xff]
      %v7175 = vld [vmem:[%s232 + $0x10a] sm:$0xff]
      %v7176 = vld [vmem:[%s232 + $0x112] sm:$0xff]
      %v7177 = vld [vmem:[%s232 + $0x122] sm:$0xff]
      %v7178 = vld [vmem:[%s232 + $0x12a] sm:$0xff]
      %v7179 = vld [vmem:[%s232 + $0x13a] sm:$0xff]
      %v7180 = vld [vmem:[%s232 + $0x142] sm:$0xff]
      %v7181 = vld [vmem:[%s232 + $0x152] sm:$0xff]
      %v7182 = vld [vmem:[%s232 + $0x15a] sm:$0xff]
      %v7183 = vld [vmem:[%s232 + $0x16a] sm:$0xff]
      %v7184 = vld [vmem:[%s232 + $0x172] sm:$0xff]
      %7217 = vrot.lane.b32.xlu0 %v7153, 20
      %v7218 = vpop.permute.xlu0 %7217
      %7219 = vrot.lane.b32.xlu0 %v7154, 20
      %v7220 = vpop.permute.xlu0 %7219
      %7221 = vrot.lane.b32.xlu0 %v7155, 20
      %v7222 = vpop.permute.xlu0 %7221
      %7223 = vrot.lane.b32.xlu0 %v7156, 20
      %v7224 = vpop.permute.xlu0 %7223
      %7225 = vrot.lane.b32.xlu0 %v7157, 20
      %v7226 = vpop.permute.xlu0 %7225
      %7227 = vrot.lane.b32.xlu0 %v7158, 20
      %v7228 = vpop.permute.xlu0 %7227
      %7229 = vrot.lane.b32.xlu0 %v7159, 20
      %v7230 = vpop.permute.xlu0 %7229
      %7231 = vrot.lane.b32.xlu0 %v7160, 20
      %v7232 = vpop.permute.xlu0 %7231
      %7233 = vrot.lane.b32.xlu0 %v7161, 20
      %v7234 = vpop.permute.xlu0 %7233
      %7235 = vrot.lane.b32.xlu0 %v7162, 20
      %v7236 = vpop.permute.xlu0 %7235
      %7237 = vrot.lane.b32.xlu0 %v7163, 20
      %v7238 = vpop.permute.xlu0 %7237
      %7239 = vrot.lane.b32.xlu0 %v7164, 20
      %v7240 = vpop.permute.xlu0 %7239
      %7241 = vrot.lane.b32.xlu0 %v7165, 20
      %v7242 = vpop.permute.xlu0 %7241
      %7243 = vrot.lane.b32.xlu0 %v7166, 20
      %v7244 = vpop.permute.xlu0 %7243
      %7245 = vrot.lane.b32.xlu0 %v7167, 20
      %v7246 = vpop.permute.xlu0 %7245
      %7247 = vrot.lane.b32.xlu0 %v7168, 20
      %v7248 = vpop.permute.xlu0 %7247
      %7249 = vrot.lane.b32.xlu0 %v7169, 20
      %v7250 = vpop.permute.xlu0 %7249
      %7251 = vrot.lane.b32.xlu0 %v7170, 20
      %v7252 = vpop.permute.xlu0 %7251
      %7253 = vrot.lane.b32.xlu0 %v7171, 20
      %v7254 = vpop.permute.xlu0 %7253
      %7255 = vrot.lane.b32.xlu0 %v7172, 20
      %v7256 = vpop.permute.xlu0 %7255
      %7257 = vrot.lane.b32.xlu0 %v7173, 20
      %v7258 = vpop.permute.xlu0 %7257
      %7259 = vrot.lane.b32.xlu0 %v7174, 20
      %v7260 = vpop.permute.xlu0 %7259
      %7261 = vrot.lane.b32.xlu0 %v7175, 20
      %v7262 = vpop.permute.xlu0 %7261
      %7263 = vrot.lane.b32.xlu0 %v7176, 20
      %v7264 = vpop.permute.xlu0 %7263
      %7265 = vrot.lane.b32.xlu0 %v7177, 20
      %v7266 = vpop.permute.xlu0 %7265
      %7267 = vrot.lane.b32.xlu0 %v7178, 20
      %v7268 = vpop.permute.xlu0 %7267
      %7269 = vrot.lane.b32.xlu0 %v7179, 20
      %v7270 = vpop.permute.xlu0 %7269
      %7271 = vrot.lane.b32.xlu0 %v7180, 20
      %v7272 = vpop.permute.xlu0 %7271
      %7273 = vrot.lane.b32.xlu0 %v7181, 20
      %v7274 = vpop.permute.xlu0 %7273
      %7275 = vrot.lane.b32.xlu0 %v7182, 20
      %v7276 = vpop.permute.xlu0 %7275
      %7277 = vrot.lane.b32.xlu0 %v7183, 20
      %v7278 = vpop.permute.xlu0 %7277
      %7279 = vrot.lane.b32.xlu0 %v7184, 20
      %v7280 = vpop.permute.xlu0 %7279
      %7313 = vst.msk [vmem:[#allocation3] sm:$0xff] %vm1261, %v7218
      %7314 = vst.msk [vmem:[#allocation3 + $0x8] sm:$0xff] %vm1261, %v7220
      %7315 = vst.msk [vmem:[#allocation3 + $0x10] sm:$0xff] %vm1261, %v7222
      %7316 = vst.msk [vmem:[#allocation3 + $0x18] sm:$0xff] %vm1261, %v7224
      %7317 = vst.msk [vmem:[#allocation3 + $0x20] sm:$0xff] %vm1261, %v7226
      %7318 = vst.msk [vmem:[#allocation3 + $0x28] sm:$0xff] %vm1261, %v7228
      %7319 = vst.msk [vmem:[#allocation3 + $0x30] sm:$0xff] %vm1261, %v7230
      %7320 = vst.msk [vmem:[#allocation3 + $0x38] sm:$0xff] %vm1261, %v7232
      %7321 = vst.msk [vmem:[#allocation3 + $0x40] sm:$0xff] %vm1261, %v7234
      %7322 = vst.msk [vmem:[#allocation3 + $0x48] sm:$0xff] %vm1261, %v7236
      %7323 = vst.msk [vmem:[#allocation3 + $0x50] sm:$0xff] %vm1261, %v7238
      %7324 = vst.msk [vmem:[#allocation3 + $0x58] sm:$0xff] %vm1261, %v7240
      %7325 = vst.msk [vmem:[#allocation3 + $0x60] sm:$0xff] %vm1261, %v7242
      %7326 = vst.msk [vmem:[#allocation3 + $0x68] sm:$0xff] %vm1261, %v7244
      %7327 = vst.msk [vmem:[#allocation3 + $0x70] sm:$0xff] %vm1261, %v7246
      %7328 = vst.msk [vmem:[#allocation3 + $0x78] sm:$0xff] %vm1261, %v7248
      %7329 = vst.msk [vmem:[#allocation3 + $0x80] sm:$0xff] %vm1261, %v7250
      %7330 = vst.msk [vmem:[#allocation3 + $0x88] sm:$0xff] %vm1261, %v7252
      %7331 = vst.msk [vmem:[#allocation3 + $0x90] sm:$0xff] %vm1261, %v7254
      %7332 = vst.msk [vmem:[#allocation3 + $0x98] sm:$0xff] %vm1261, %v7256
      %7333 = vst.msk [vmem:[#allocation3 + $0xa0] sm:$0xff] %vm1261, %v7258
      %7334 = vst.msk [vmem:[#allocation3 + $0xa8] sm:$0xff] %vm1261, %v7260
      %7335 = vst.msk [vmem:[#allocation3 + $0xb0] sm:$0xff] %vm1261, %v7262
      %7336 = vst.msk [vmem:[#allocation3 + $0xb8] sm:$0xff] %vm1261, %v7264
      %7337 = vst.msk [vmem:[#allocation3 + $0xc0] sm:$0xff] %vm1261, %v7266
      %7338 = vst.msk [vmem:[#allocation3 + $0xc8] sm:$0xff] %vm1261, %v7268
      %7339 = vst.msk [vmem:[#allocation3 + $0xd0] sm:$0xff] %vm1261, %v7270
      %7340 = vst.msk [vmem:[#allocation3 + $0xd8] sm:$0xff] %vm1261, %v7272
      %7341 = vst.msk [vmem:[#allocation3 + $0xe0] sm:$0xff] %vm1261, %v7274
      %7342 = vst.msk [vmem:[#allocation3 + $0xe8] sm:$0xff] %vm1261, %v7276
      %7343 = vst.msk [vmem:[#allocation3 + $0xf0] sm:$0xff] %vm1261, %v7278
      %7344 = vst.msk [vmem:[#allocation3 + $0xf8] sm:$0xff] %vm1261, %v7280
      %v7345 = vld [vmem:[%s1294] sm:$0xff]
      %v7346 = vld [vmem:[%s1294 + $0x8] sm:$0xff]
      %v7347 = vld [vmem:[%s1294 + $0x18] sm:$0xff]
      %v7348 = vld [vmem:[%s1294 + $0x20] sm:$0xff]
      %v7349 = vld [vmem:[%s1294 + $0x30] sm:$0xff]
      %v7350 = vld [vmem:[%s1294 + $0x38] sm:$0xff]
      %v7351 = vld [vmem:[%s1294 + $0x48] sm:$0xff]
      %v7352 = vld [vmem:[%s1294 + $0x50] sm:$0xff]
      %v7353 = vld [vmem:[%s1294 + $0x60] sm:$0xff]
      %v7354 = vld [vmem:[%s1294 + $0x68] sm:$0xff]
      %v7355 = vld [vmem:[%s1294 + $0x78] sm:$0xff]
      %v7356 = vld [vmem:[%s1294 + $0x80] sm:$0xff]
      %v7357 = vld [vmem:[%s1294 + $0x90] sm:$0xff]
      %v7358 = vld [vmem:[%s1294 + $0x98] sm:$0xff]
      %v7359 = vld [vmem:[%s1294 + $0xa8] sm:$0xff]
      %v7360 = vld [vmem:[%s1294 + $0xb0] sm:$0xff]
      %v7361 = vld [vmem:[%s1294 + $0xc0] sm:$0xff]
      %v7362 = vld [vmem:[%s1294 + $0xc8] sm:$0xff]
      %v7363 = vld [vmem:[%s1294 + $0xd8] sm:$0xff]
      %v7364 = vld [vmem:[%s1294 + $0xe0] sm:$0xff]
      %v7365 = vld [vmem:[%s1294 + $0xf0] sm:$0xff]
      %v7366 = vld [vmem:[%s1294 + $0xf8] sm:$0xff]
      %v7367 = vld [vmem:[%s1294 + $0x108] sm:$0xff]
      %v7368 = vld [vmem:[%s1294 + $0x110] sm:$0xff]
      %v7369 = vld [vmem:[%s1294 + $0x120] sm:$0xff]
      %v7370 = vld [vmem:[%s1294 + $0x128] sm:$0xff]
      %v7371 = vld [vmem:[%s1294 + $0x138] sm:$0xff]
      %v7372 = vld [vmem:[%s1294 + $0x140] sm:$0xff]
      %v7373 = vld [vmem:[%s1294 + $0x150] sm:$0xff]
      %v7374 = vld [vmem:[%s1294 + $0x158] sm:$0xff]
      %v7375 = vld [vmem:[%s1294 + $0x168] sm:$0xff]
      %v7376 = vld [vmem:[%s1294 + $0x170] sm:$0xff]
      %7409 = vrot.lane.b32.xlu0 %v7345, 24
      %v7410 = vpop.permute.xlu0 %7409
      %7411 = vrot.lane.b32.xlu0 %v7346, 24
      %v7412 = vpop.permute.xlu0 %7411
      %7413 = vrot.lane.b32.xlu0 %v7347, 24
      %v7414 = vpop.permute.xlu0 %7413
      %7415 = vrot.lane.b32.xlu0 %v7348, 24
      %v7416 = vpop.permute.xlu0 %7415
      %7417 = vrot.lane.b32.xlu0 %v7349, 24
      %v7418 = vpop.permute.xlu0 %7417
      %7419 = vrot.lane.b32.xlu0 %v7350, 24
      %v7420 = vpop.permute.xlu0 %7419
      %7421 = vrot.lane.b32.xlu0 %v7351, 24
      %v7422 = vpop.permute.xlu0 %7421
      %7423 = vrot.lane.b32.xlu0 %v7352, 24
      %v7424 = vpop.permute.xlu0 %7423
      %7425 = vrot.lane.b32.xlu0 %v7353, 24
      %v7426 = vpop.permute.xlu0 %7425
      %7427 = vrot.lane.b32.xlu0 %v7354, 24
      %v7428 = vpop.permute.xlu0 %7427
      %7429 = vrot.lane.b32.xlu0 %v7355, 24
      %v7430 = vpop.permute.xlu0 %7429
      %7431 = vrot.lane.b32.xlu0 %v7356, 24
      %v7432 = vpop.permute.xlu0 %7431
      %7433 = vrot.lane.b32.xlu0 %v7357, 24
      %v7434 = vpop.permute.xlu0 %7433
      %7435 = vrot.lane.b32.xlu0 %v7358, 24
      %v7436 = vpop.permute.xlu0 %7435
      %7437 = vrot.lane.b32.xlu0 %v7359, 24
      %v7438 = vpop.permute.xlu0 %7437
      %7439 = vrot.lane.b32.xlu0 %v7360, 24
      %v7440 = vpop.permute.xlu0 %7439
      %7441 = vrot.lane.b32.xlu0 %v7361, 24
      %v7442 = vpop.permute.xlu0 %7441
      %7443 = vrot.lane.b32.xlu0 %v7362, 24
      %v7444 = vpop.permute.xlu0 %7443
      %7445 = vrot.lane.b32.xlu0 %v7363, 24
      %v7446 = vpop.permute.xlu0 %7445
      %7447 = vrot.lane.b32.xlu0 %v7364, 24
      %v7448 = vpop.permute.xlu0 %7447
      %7449 = vrot.lane.b32.xlu0 %v7365, 24
      %v7450 = vpop.permute.xlu0 %7449
      %7451 = vrot.lane.b32.xlu0 %v7366, 24
      %v7452 = vpop.permute.xlu0 %7451
      %7453 = vrot.lane.b32.xlu0 %v7367, 24
      %v7454 = vpop.permute.xlu0 %7453
      %7455 = vrot.lane.b32.xlu0 %v7368, 24
      %v7456 = vpop.permute.xlu0 %7455
      %7457 = vrot.lane.b32.xlu0 %v7369, 24
      %v7458 = vpop.permute.xlu0 %7457
      %7459 = vrot.lane.b32.xlu0 %v7370, 24
      %v7460 = vpop.permute.xlu0 %7459
      %7461 = vrot.lane.b32.xlu0 %v7371, 24
      %v7462 = vpop.permute.xlu0 %7461
      %7463 = vrot.lane.b32.xlu0 %v7372, 24
      %v7464 = vpop.permute.xlu0 %7463
      %7465 = vrot.lane.b32.xlu0 %v7373, 24
      %v7466 = vpop.permute.xlu0 %7465
      %7467 = vrot.lane.b32.xlu0 %v7374, 24
      %v7468 = vpop.permute.xlu0 %7467
      %7469 = vrot.lane.b32.xlu0 %v7375, 24
      %v7470 = vpop.permute.xlu0 %7469
      %7471 = vrot.lane.b32.xlu0 %v7376, 24
      %v7472 = vpop.permute.xlu0 %7471
      %7505 = vst.msk [vmem:[#allocation3] sm:$0xff] %vm1455, %v7410
      %7506 = vst.msk [vmem:[#allocation3 + $0x8] sm:$0xff] %vm1455, %v7412
      %7507 = vst.msk [vmem:[#allocation3 + $0x10] sm:$0xff] %vm1455, %v7414
      %7508 = vst.msk [vmem:[#allocation3 + $0x18] sm:$0xff] %vm1455, %v7416
      %7509 = vst.msk [vmem:[#allocation3 + $0x20] sm:$0xff] %vm1455, %v7418
      %7510 = vst.msk [vmem:[#allocation3 + $0x28] sm:$0xff] %vm1455, %v7420
      %7511 = vst.msk [vmem:[#allocation3 + $0x30] sm:$0xff] %vm1455, %v7422
      %7512 = vst.msk [vmem:[#allocation3 + $0x38] sm:$0xff] %vm1455, %v7424
      %7513 = vst.msk [vmem:[#allocation3 + $0x40] sm:$0xff] %vm1455, %v7426
      %7514 = vst.msk [vmem:[#allocation3 + $0x48] sm:$0xff] %vm1455, %v7428
      %7515 = vst.msk [vmem:[#allocation3 + $0x50] sm:$0xff] %vm1455, %v7430
      %7516 = vst.msk [vmem:[#allocation3 + $0x58] sm:$0xff] %vm1455, %v7432
      %7517 = vst.msk [vmem:[#allocation3 + $0x60] sm:$0xff] %vm1455, %v7434
      %7518 = vst.msk [vmem:[#allocation3 + $0x68] sm:$0xff] %vm1455, %v7436
      %7519 = vst.msk [vmem:[#allocation3 + $0x70] sm:$0xff] %vm1455, %v7438
      %7520 = vst.msk [vmem:[#allocation3 + $0x78] sm:$0xff] %vm1455, %v7440
      %7521 = vst.msk [vmem:[#allocation3 + $0x80] sm:$0xff] %vm1455, %v7442
      %7522 = vst.msk [vmem:[#allocation3 + $0x88] sm:$0xff] %vm1455, %v7444
      %7523 = vst.msk [vmem:[#allocation3 + $0x90] sm:$0xff] %vm1455, %v7446
      %7524 = vst.msk [vmem:[#allocation3 + $0x98] sm:$0xff] %vm1455, %v7448
      %7525 = vst.msk [vmem:[#allocation3 + $0xa0] sm:$0xff] %vm1455, %v7450
      %7526 = vst.msk [vmem:[#allocation3 + $0xa8] sm:$0xff] %vm1455, %v7452
      %7527 = vst.msk [vmem:[#allocation3 + $0xb0] sm:$0xff] %vm1455, %v7454
      %7528 = vst.msk [vmem:[#allocation3 + $0xb8] sm:$0xff] %vm1455, %v7456
      %7529 = vst.msk [vmem:[#allocation3 + $0xc0] sm:$0xff] %vm1455, %v7458
      %7530 = vst.msk [vmem:[#allocation3 + $0xc8] sm:$0xff] %vm1455, %v7460
      %7531 = vst.msk [vmem:[#allocation3 + $0xd0] sm:$0xff] %vm1455, %v7462
      %7532 = vst.msk [vmem:[#allocation3 + $0xd8] sm:$0xff] %vm1455, %v7464
      %7533 = vst.msk [vmem:[#allocation3 + $0xe0] sm:$0xff] %vm1455, %v7466
      %7534 = vst.msk [vmem:[#allocation3 + $0xe8] sm:$0xff] %vm1455, %v7468
      %7535 = vst.msk [vmem:[#allocation3 + $0xf0] sm:$0xff] %vm1455, %v7470
      %7536 = vst.msk [vmem:[#allocation3 + $0xf8] sm:$0xff] %vm1455, %v7472
      %v7537 = vld [vmem:[%s1294 + $0x1] sm:$0xff]
      %v7538 = vld [vmem:[%s1294 + $0x9] sm:$0xff]
      %v7539 = vld [vmem:[%s1294 + $0x19] sm:$0xff]
      %v7540 = vld [vmem:[%s1294 + $0x21] sm:$0xff]
      %v7541 = vld [vmem:[%s1294 + $0x31] sm:$0xff]
      %v7542 = vld [vmem:[%s1294 + $0x39] sm:$0xff]
      %v7543 = vld [vmem:[%s1294 + $0x49] sm:$0xff]
      %v7544 = vld [vmem:[%s1294 + $0x51] sm:$0xff]
      %v7545 = vld [vmem:[%s1294 + $0x61] sm:$0xff]
      %v7546 = vld [vmem:[%s1294 + $0x69] sm:$0xff]
      %v7547 = vld [vmem:[%s1294 + $0x79] sm:$0xff]
      %v7548 = vld [vmem:[%s1294 + $0x81] sm:$0xff]
      %v7549 = vld [vmem:[%s1294 + $0x91] sm:$0xff]
      %v7550 = vld [vmem:[%s1294 + $0x99] sm:$0xff]
      %v7551 = vld [vmem:[%s1294 + $0xa9] sm:$0xff]
      %v7552 = vld [vmem:[%s1294 + $0xb1] sm:$0xff]
      %v7553 = vld [vmem:[%s1294 + $0xc1] sm:$0xff]
      %v7554 = vld [vmem:[%s1294 + $0xc9] sm:$0xff]
      %v7555 = vld [vmem:[%s1294 + $0xd9] sm:$0xff]
      %v7556 = vld [vmem:[%s1294 + $0xe1] sm:$0xff]
      %v7557 = vld [vmem:[%s1294 + $0xf1] sm:$0xff]
      %v7558 = vld [vmem:[%s1294 + $0xf9] sm:$0xff]
      %v7559 = vld [vmem:[%s1294 + $0x109] sm:$0xff]
      %v7560 = vld [vmem:[%s1294 + $0x111] sm:$0xff]
      %v7561 = vld [vmem:[%s1294 + $0x121] sm:$0xff]
      %v7562 = vld [vmem:[%s1294 + $0x129] sm:$0xff]
      %v7563 = vld [vmem:[%s1294 + $0x139] sm:$0xff]
      %v7564 = vld [vmem:[%s1294 + $0x141] sm:$0xff]
      %v7565 = vld [vmem:[%s1294 + $0x151] sm:$0xff]
      %v7566 = vld [vmem:[%s1294 + $0x159] sm:$0xff]
      %v7567 = vld [vmem:[%s1294 + $0x169] sm:$0xff]
      %v7568 = vld [vmem:[%s1294 + $0x171] sm:$0xff]
      %7601 = vrot.lane.b32.xlu0 %v7537, 28
      %v7602 = vpop.permute.xlu0 %7601
      %7603 = vrot.lane.b32.xlu0 %v7538, 28
      %v7604 = vpop.permute.xlu0 %7603
      %7605 = vrot.lane.b32.xlu0 %v7539, 28
      %v7606 = vpop.permute.xlu0 %7605
      %7607 = vrot.lane.b32.xlu0 %v7540, 28
      %v7608 = vpop.permute.xlu0 %7607
      %7609 = vrot.lane.b32.xlu0 %v7541, 28
      %v7610 = vpop.permute.xlu0 %7609
      %7611 = vrot.lane.b32.xlu0 %v7542, 28
      %v7612 = vpop.permute.xlu0 %7611
      %7613 = vrot.lane.b32.xlu0 %v7543, 28
      %v7614 = vpop.permute.xlu0 %7613
      %7615 = vrot.lane.b32.xlu0 %v7544, 28
      %v7616 = vpop.permute.xlu0 %7615
      %7617 = vrot.lane.b32.xlu0 %v7545, 28
      %v7618 = vpop.permute.xlu0 %7617
      %7619 = vrot.lane.b32.xlu0 %v7546, 28
      %v7620 = vpop.permute.xlu0 %7619
      %7621 = vrot.lane.b32.xlu0 %v7547, 28
      %v7622 = vpop.permute.xlu0 %7621
      %7623 = vrot.lane.b32.xlu0 %v7548, 28
      %v7624 = vpop.permute.xlu0 %7623
      %7625 = vrot.lane.b32.xlu0 %v7549, 28
      %v7626 = vpop.permute.xlu0 %7625
      %7627 = vrot.lane.b32.xlu0 %v7550, 28
      %v7628 = vpop.permute.xlu0 %7627
      %7629 = vrot.lane.b32.xlu0 %v7551, 28
      %v7630 = vpop.permute.xlu0 %7629
      %7631 = vrot.lane.b32.xlu0 %v7552, 28
      %v7632 = vpop.permute.xlu0 %7631
      %7633 = vrot.lane.b32.xlu0 %v7553, 28
      %v7634 = vpop.permute.xlu0 %7633
      %7635 = vrot.lane.b32.xlu0 %v7554, 28
      %v7636 = vpop.permute.xlu0 %7635
      %7637 = vrot.lane.b32.xlu0 %v7555, 28
      %v7638 = vpop.permute.xlu0 %7637
      %7639 = vrot.lane.b32.xlu0 %v7556, 28
      %v7640 = vpop.permute.xlu0 %7639
      %7641 = vrot.lane.b32.xlu0 %v7557, 28
      %v7642 = vpop.permute.xlu0 %7641
      %7643 = vrot.lane.b32.xlu0 %v7558, 28
      %v7644 = vpop.permute.xlu0 %7643
      %7645 = vrot.lane.b32.xlu0 %v7559, 28
      %v7646 = vpop.permute.xlu0 %7645
      %7647 = vrot.lane.b32.xlu0 %v7560, 28
      %v7648 = vpop.permute.xlu0 %7647
      %7649 = vrot.lane.b32.xlu0 %v7561, 28
      %v7650 = vpop.permute.xlu0 %7649
      %7651 = vrot.lane.b32.xlu0 %v7562, 28
      %v7652 = vpop.permute.xlu0 %7651
      %7653 = vrot.lane.b32.xlu0 %v7563, 28
      %v7654 = vpop.permute.xlu0 %7653
      %7655 = vrot.lane.b32.xlu0 %v7564, 28
      %v7656 = vpop.permute.xlu0 %7655
      %7657 = vrot.lane.b32.xlu0 %v7565, 28
      %v7658 = vpop.permute.xlu0 %7657
      %7659 = vrot.lane.b32.xlu0 %v7566, 28
      %v7660 = vpop.permute.xlu0 %7659
      %7661 = vrot.lane.b32.xlu0 %v7567, 28
      %v7662 = vpop.permute.xlu0 %7661
      %7663 = vrot.lane.b32.xlu0 %v7568, 28
      %v7664 = vpop.permute.xlu0 %7663
      %7697 = vst.msk [vmem:[#allocation3] sm:$0xff] %vm1648, %v7602
      %7698 = vst.msk [vmem:[#allocation3 + $0x8] sm:$0xff] %vm1648, %v7604
      %7699 = vst.msk [vmem:[#allocation3 + $0x10] sm:$0xff] %vm1648, %v7606
      %7700 = vst.msk [vmem:[#allocation3 + $0x18] sm:$0xff] %vm1648, %v7608
      %7701 = vst.msk [vmem:[#allocation3 + $0x20] sm:$0xff] %vm1648, %v7610
      %7702 = vst.msk [vmem:[#allocation3 + $0x28] sm:$0xff] %vm1648, %v7612
      %7703 = vst.msk [vmem:[#allocation3 + $0x30] sm:$0xff] %vm1648, %v7614
      %7704 = vst.msk [vmem:[#allocation3 + $0x38] sm:$0xff] %vm1648, %v7616
      %7705 = vst.msk [vmem:[#allocation3 + $0x40] sm:$0xff] %vm1648, %v7618
      %7706 = vst.msk [vmem:[#allocation3 + $0x48] sm:$0xff] %vm1648, %v7620
      %7707 = vst.msk [vmem:[#allocation3 + $0x50] sm:$0xff] %vm1648, %v7622
      %7708 = vst.msk [vmem:[#allocation3 + $0x58] sm:$0xff] %vm1648, %v7624
      %7709 = vst.msk [vmem:[#allocation3 + $0x60] sm:$0xff] %vm1648, %v7626
      %7710 = vst.msk [vmem:[#allocation3 + $0x68] sm:$0xff] %vm1648, %v7628
      %7711 = vst.msk [vmem:[#allocation3 + $0x70] sm:$0xff] %vm1648, %v7630
      %7712 = vst.msk [vmem:[#allocation3 + $0x78] sm:$0xff] %vm1648, %v7632
      %7713 = vst.msk [vmem:[#allocation3 + $0x80] sm:$0xff] %vm1648, %v7634
      %7714 = vst.msk [vmem:[#allocation3 + $0x88] sm:$0xff] %vm1648, %v7636
      %7715 = vst.msk [vmem:[#allocation3 + $0x90] sm:$0xff] %vm1648, %v7638
      %7716 = vst.msk [vmem:[#allocation3 + $0x98] sm:$0xff] %vm1648, %v7640
      %7717 = vst.msk [vmem:[#allocation3 + $0xa0] sm:$0xff] %vm1648, %v7642
      %7718 = vst.msk [vmem:[#allocation3 + $0xa8] sm:$0xff] %vm1648, %v7644
      %7719 = vst.msk [vmem:[#allocation3 + $0xb0] sm:$0xff] %vm1648, %v7646
      %7720 = vst.msk [vmem:[#allocation3 + $0xb8] sm:$0xff] %vm1648, %v7648
      %7721 = vst.msk [vmem:[#allocation3 + $0xc0] sm:$0xff] %vm1648, %v7650
      %7722 = vst.msk [vmem:[#allocation3 + $0xc8] sm:$0xff] %vm1648, %v7652
      %7723 = vst.msk [vmem:[#allocation3 + $0xd0] sm:$0xff] %vm1648, %v7654
      %7724 = vst.msk [vmem:[#allocation3 + $0xd8] sm:$0xff] %vm1648, %v7656
      %7725 = vst.msk [vmem:[#allocation3 + $0xe0] sm:$0xff] %vm1648, %v7658
      %7726 = vst.msk [vmem:[#allocation3 + $0xe8] sm:$0xff] %vm1648, %v7660
      %7727 = vst.msk [vmem:[#allocation3 + $0xf0] sm:$0xff] %vm1648, %v7662
      %7728 = vst.msk [vmem:[#allocation3 + $0xf8] sm:$0xff] %vm1648, %v7664
      %v7729 = vld [vmem:[%s1294 + $0x2] sm:$0xff]
      %v7730 = vld [vmem:[%s1294 + $0xa] sm:$0xff]
      %v7731 = vld [vmem:[%s1294 + $0x1a] sm:$0xff]
      %v7732 = vld [vmem:[%s1294 + $0x22] sm:$0xff]
      %v7733 = vld [vmem:[%s1294 + $0x32] sm:$0xff]
      %v7734 = vld [vmem:[%s1294 + $0x3a] sm:$0xff]
      %v7735 = vld [vmem:[%s1294 + $0x4a] sm:$0xff]
      %v7736 = vld [vmem:[%s1294 + $0x52] sm:$0xff]
      %v7737 = vld [vmem:[%s1294 + $0x62] sm:$0xff]
      %v7738 = vld [vmem:[%s1294 + $0x6a] sm:$0xff]
      %v7739 = vld [vmem:[%s1294 + $0x7a] sm:$0xff]
      %v7740 = vld [vmem:[%s1294 + $0x82] sm:$0xff]
      %v7741 = vld [vmem:[%s1294 + $0x92] sm:$0xff]
      %v7742 = vld [vmem:[%s1294 + $0x9a] sm:$0xff]
      %v7743 = vld [vmem:[%s1294 + $0xaa] sm:$0xff]
      %v7744 = vld [vmem:[%s1294 + $0xb2] sm:$0xff]
      %v7745 = vld [vmem:[%s1294 + $0xc2] sm:$0xff]
      %v7746 = vld [vmem:[%s1294 + $0xca] sm:$0xff]
      %v7747 = vld [vmem:[%s1294 + $0xda] sm:$0xff]
      %v7748 = vld [vmem:[%s1294 + $0xe2] sm:$0xff]
      %v7749 = vld [vmem:[%s1294 + $0xf2] sm:$0xff]
      %v7750 = vld [vmem:[%s1294 + $0xfa] sm:$0xff]
      %v7751 = vld [vmem:[%s1294 + $0x10a] sm:$0xff]
      %v7752 = vld [vmem:[%s1294 + $0x112] sm:$0xff]
      %v7753 = vld [vmem:[%s1294 + $0x122] sm:$0xff]
      %v7754 = vld [vmem:[%s1294 + $0x12a] sm:$0xff]
      %v7755 = vld [vmem:[%s1294 + $0x13a] sm:$0xff]
      %v7756 = vld [vmem:[%s1294 + $0x142] sm:$0xff]
      %v7757 = vld [vmem:[%s1294 + $0x152] sm:$0xff]
      %v7758 = vld [vmem:[%s1294 + $0x15a] sm:$0xff]
      %v7759 = vld [vmem:[%s1294 + $0x16a] sm:$0xff]
      %v7760 = vld [vmem:[%s1294 + $0x172] sm:$0xff]
      %7793 = vrot.lane.b32.xlu0 %v7729, 32
      %v7794 = vpop.permute.xlu0 %7793
      %7795 = vrot.lane.b32.xlu0 %v7730, 32
      %v7796 = vpop.permute.xlu0 %7795
      %7797 = vrot.lane.b32.xlu0 %v7731, 32
      %v7798 = vpop.permute.xlu0 %7797
      %7799 = vrot.lane.b32.xlu0 %v7732, 32
      %v7800 = vpop.permute.xlu0 %7799
      %7801 = vrot.lane.b32.xlu0 %v7733, 32
      %v7802 = vpop.permute.xlu0 %7801
      %7803 = vrot.lane.b32.xlu0 %v7734, 32
      %v7804 = vpop.permute.xlu0 %7803
      %7805 = vrot.lane.b32.xlu0 %v7735, 32
      %v7806 = vpop.permute.xlu0 %7805
      %7807 = vrot.lane.b32.xlu0 %v7736, 32
      %v7808 = vpop.permute.xlu0 %7807
      %7809 = vrot.lane.b32.xlu0 %v7737, 32
      %v7810 = vpop.permute.xlu0 %7809
      %7811 = vrot.lane.b32.xlu0 %v7738, 32
      %v7812 = vpop.permute.xlu0 %7811
      %7813 = vrot.lane.b32.xlu0 %v7739, 32
      %v7814 = vpop.permute.xlu0 %7813
      %7815 = vrot.lane.b32.xlu0 %v7740, 32
      %v7816 = vpop.permute.xlu0 %7815
      %7817 = vrot.lane.b32.xlu0 %v7741, 32
      %v7818 = vpop.permute.xlu0 %7817
      %7819 = vrot.lane.b32.xlu0 %v7742, 32
      %v7820 = vpop.permute.xlu0 %7819
      %7821 = vrot.lane.b32.xlu0 %v7743, 32
      %v7822 = vpop.permute.xlu0 %7821
      %7823 = vrot.lane.b32.xlu0 %v7744, 32
      %v7824 = vpop.permute.xlu0 %7823
      %7825 = vrot.lane.b32.xlu0 %v7745, 32
      %v7826 = vpop.permute.xlu0 %7825
      %7827 = vrot.lane.b32.xlu0 %v7746, 32
      %v7828 = vpop.permute.xlu0 %7827
      %7829 = vrot.lane.b32.xlu0 %v7747, 32
      %v7830 = vpop.permute.xlu0 %7829
      %7831 = vrot.lane.b32.xlu0 %v7748, 32
      %v7832 = vpop.permute.xlu0 %7831
      %7833 = vrot.lane.b32.xlu0 %v7749, 32
      %v7834 = vpop.permute.xlu0 %7833
      %7835 = vrot.lane.b32.xlu0 %v7750, 32
      %v7836 = vpop.permute.xlu0 %7835
      %7837 = vrot.lane.b32.xlu0 %v7751, 32
      %v7838 = vpop.permute.xlu0 %7837
      %7839 = vrot.lane.b32.xlu0 %v7752, 32
      %v7840 = vpop.permute.xlu0 %7839
      %7841 = vrot.lane.b32.xlu0 %v7753, 32
      %v7842 = vpop.permute.xlu0 %7841
      %7843 = vrot.lane.b32.xlu0 %v7754, 32
      %v7844 = vpop.permute.xlu0 %7843
      %7845 = vrot.lane.b32.xlu0 %v7755, 32
      %v7846 = vpop.permute.xlu0 %7845
      %7847 = vrot.lane.b32.xlu0 %v7756, 32
      %v7848 = vpop.permute.xlu0 %7847
      %7849 = vrot.lane.b32.xlu0 %v7757, 32
      %v7850 = vpop.permute.xlu0 %7849
      %7851 = vrot.lane.b32.xlu0 %v7758, 32
      %v7852 = vpop.permute.xlu0 %7851
      %7853 = vrot.lane.b32.xlu0 %v7759, 32
      %v7854 = vpop.permute.xlu0 %7853
      %7855 = vrot.lane.b32.xlu0 %v7760, 32
      %v7856 = vpop.permute.xlu0 %7855
      %7889 = vst.msk [vmem:[#allocation3] sm:$0xff] %vm1841, %v7794
      %7890 = vst.msk [vmem:[#allocation3 + $0x8] sm:$0xff] %vm1841, %v7796
      %7891 = vst.msk [vmem:[#allocation3 + $0x10] sm:$0xff] %vm1841, %v7798
      %7892 = vst.msk [vmem:[#allocation3 + $0x18] sm:$0xff] %vm1841, %v7800
      %7893 = vst.msk [vmem:[#allocation3 + $0x20] sm:$0xff] %vm1841, %v7802
      %7894 = vst.msk [vmem:[#allocation3 + $0x28] sm:$0xff] %vm1841, %v7804
      %7895 = vst.msk [vmem:[#allocation3 + $0x30] sm:$0xff] %vm1841, %v7806
      %7896 = vst.msk [vmem:[#allocation3 + $0x38] sm:$0xff] %vm1841, %v7808
      %7897 = vst.msk [vmem:[#allocation3 + $0x40] sm:$0xff] %vm1841, %v7810
      %7898 = vst.msk [vmem:[#allocation3 + $0x48] sm:$0xff] %vm1841, %v7812
      %7899 = vst.msk [vmem:[#allocation3 + $0x50] sm:$0xff] %vm1841, %v7814
      %7900 = vst.msk [vmem:[#allocation3 + $0x58] sm:$0xff] %vm1841, %v7816
      %7901 = vst.msk [vmem:[#allocation3 + $0x60] sm:$0xff] %vm1841, %v7818
      %7902 = vst.msk [vmem:[#allocation3 + $0x68] sm:$0xff] %vm1841, %v7820
      %7903 = vst.msk [vmem:[#allocation3 + $0x70] sm:$0xff] %vm1841, %v7822
      %7904 = vst.msk [vmem:[#allocation3 + $0x78] sm:$0xff] %vm1841, %v7824
      %7905 = vst.msk [vmem:[#allocation3 + $0x80] sm:$0xff] %vm1841, %v7826
      %7906 = vst.msk [vmem:[#allocation3 + $0x88] sm:$0xff] %vm1841, %v7828
      %7907 = vst.msk [vmem:[#allocation3 + $0x90] sm:$0xff] %vm1841, %v7830
      %7908 = vst.msk [vmem:[#allocation3 + $0x98] sm:$0xff] %vm1841, %v7832
      %7909 = vst.msk [vmem:[#allocation3 + $0xa0] sm:$0xff] %vm1841, %v7834
      %7910 = vst.msk [vmem:[#allocation3 + $0xa8] sm:$0xff] %vm1841, %v7836
      %7911 = vst.msk [vmem:[#allocation3 + $0xb0] sm:$0xff] %vm1841, %v7838
      %7912 = vst.msk [vmem:[#allocation3 + $0xb8] sm:$0xff] %vm1841, %v7840
      %7913 = vst.msk [vmem:[#allocation3 + $0xc0] sm:$0xff] %vm1841, %v7842
      %7914 = vst.msk [vmem:[#allocation3 + $0xc8] sm:$0xff] %vm1841, %v7844
      %7915 = vst.msk [vmem:[#allocation3 + $0xd0] sm:$0xff] %vm1841, %v7846
      %7916 = vst.msk [vmem:[#allocation3 + $0xd8] sm:$0xff] %vm1841, %v7848
      %7917 = vst.msk [vmem:[#allocation3 + $0xe0] sm:$0xff] %vm1841, %v7850
      %7918 = vst.msk [vmem:[#allocation3 + $0xe8] sm:$0xff] %vm1841, %v7852
      %7919 = vst.msk [vmem:[#allocation3 + $0xf0] sm:$0xff] %vm1841, %v7854
      %7920 = vst.msk [vmem:[#allocation3 + $0xf8] sm:$0xff] %vm1841, %v7856
      %v7921 = vld [vmem:[#allocation3] sm:$0xff]
      %v7922 = vld [vmem:[#allocation3 + $0x8] sm:$0xff]
      %v7923 = vld [vmem:[#allocation3 + $0x10] sm:$0xff]
      %v7924 = vld [vmem:[#allocation3 + $0x18] sm:$0xff]
      %v7925 = vld [vmem:[#allocation3 + $0x20] sm:$0xff]
      %v7926 = vld [vmem:[#allocation3 + $0x28] sm:$0xff]
      %v7927 = vld [vmem:[#allocation3 + $0x30] sm:$0xff]
      %v7928 = vld [vmem:[#allocation3 + $0x38] sm:$0xff]
      %v7929 = vld [vmem:[#allocation3 + $0x40] sm:$0xff]
      %v7930 = vld [vmem:[#allocation3 + $0x48] sm:$0xff]
      %v7931 = vld [vmem:[#allocation3 + $0x50] sm:$0xff]
      %v7932 = vld [vmem:[#allocation3 + $0x58] sm:$0xff]
      %v7933 = vld [vmem:[#allocation3 + $0x60] sm:$0xff]
      %v7934 = vld [vmem:[#allocation3 + $0x68] sm:$0xff]
      %v7935 = vld [vmem:[#allocation3 + $0x70] sm:$0xff]
      %v7936 = vld [vmem:[#allocation3 + $0x78] sm:$0xff]
      %v7937 = vld [vmem:[#allocation3 + $0x80] sm:$0xff]
      %v7938 = vld [vmem:[#allocation3 + $0x88] sm:$0xff]
      %v7939 = vld [vmem:[#allocation3 + $0x90] sm:$0xff]
      %v7940 = vld [vmem:[#allocation3 + $0x98] sm:$0xff]
      %v7941 = vld [vmem:[#allocation3 + $0xa0] sm:$0xff]
      %v7942 = vld [vmem:[#allocation3 + $0xa8] sm:$0xff]
      %v7943 = vld [vmem:[#allocation3 + $0xb0] sm:$0xff]
      %v7944 = vld [vmem:[#allocation3 + $0xb8] sm:$0xff]
      %v7945 = vld [vmem:[#allocation3 + $0xc0] sm:$0xff]
      %v7946 = vld [vmem:[#allocation3 + $0xc8] sm:$0xff]
      %v7947 = vld [vmem:[#allocation3 + $0xd0] sm:$0xff]
      %v7948 = vld [vmem:[#allocation3 + $0xd8] sm:$0xff]
      %v7949 = vld [vmem:[#allocation3 + $0xe0] sm:$0xff]
      %v7950 = vld [vmem:[#allocation3 + $0xe8] sm:$0xff]
      %v7951 = vld [vmem:[#allocation3 + $0xf0] sm:$0xff]
      %v7952 = vld [vmem:[#allocation3 + $0xf8] sm:$0xff]
      %s7953 = scalar_lea.vmem %s1, 120
      %v7954 = vld [vmem:[%s7953] sm:$0xff]
      %v7955 = vld [vmem:[%s7953 + $0x8] sm:$0xff]
      %v7956 = vld [vmem:[%s7953 + $0x10] sm:$0xff]
      %v7957 = vld [vmem:[%s7953 + $0x18] sm:$0xff]
      %v7958 = vld [vmem:[%s7953 + $0x20] sm:$0xf]
      %v7960 = vsel %vm1911, %v7921, 0
      %v7963 = vsel %vm1911, %v7922, 0
      %v7966 = vsel %vm1911, %v7923, 0
      %v7969 = vsel %vm1911, %v7924, 0
      %v7972 = vsel %vm1911, %v7925, 0
      %v7975 = vsel %vm1911, %v7926, 0
      %v7978 = vsel %vm1911, %v7927, 0
      %v7981 = vsel %vm1911, %v7928, 0
      %v7984 = vsel %vm1911, %v7929, 0
      %v7987 = vsel %vm1911, %v7930, 0
      %v7990 = vsel %vm1911, %v7931, 0
      %v7993 = vsel %vm1911, %v7932, 0
      %v7996 = vsel %vm1911, %v7933, 0
      %v7999 = vsel %vm1911, %v7934, 0
      %v8002 = vsel %vm1911, %v7935, 0
      %v8005 = vsel %vm1911, %v7936, 0
      %v8008 = vsel %vm1911, %v7937, 0
      %v8011 = vsel %vm1911, %v7938, 0
      %v8014 = vsel %vm1911, %v7939, 0
      %v8017 = vsel %vm1911, %v7940, 0
      %v8020 = vsel %vm1911, %v7941, 0
      %v8023 = vsel %vm1911, %v7942, 0
      %v8026 = vsel %vm1911, %v7943, 0
      %v8029 = vsel %vm1911, %v7944, 0
      %v8032 = vsel %vm1911, %v7945, 0
      %v8035 = vsel %vm1911, %v7946, 0
      %v8038 = vsel %vm1911, %v7947, 0
      %v8041 = vsel %vm1911, %v7948, 0
      %v8044 = vsel %vm1911, %v7949, 0
      %v8047 = vsel %vm1911, %v7950, 0
      %v8050 = vsel %vm1911, %v7951, 0
      %v8053 = vsel %vm1911, %v7952, 0
      %v8056 = vsel %vm2008, %v7958, 0
      %8058 = vmatprep.subr.mxu0 0.0
      %8059 = vmatpush1.msra.mxu0 %v7954
      %8060 = vmatprep.subr.mxu0 0.0
      %8061 = vmatpush1.msra.mxu0 %v7955
      %8062 = vmatprep.subr.mxu0 0.0
      %8063 = vmatpush1.msra.mxu0 %v7956
      %8064 = vmatprep.subr.mxu0 0.0
      %8065 = vmatpush1.msra.mxu0 %v7957
      %8066 = vmatprep.subr.mxu0 0.0
      %8067 = vmatpush1.msra.mxu0 %v8056
      %8068 = vmatprep.subr.mxu0 0.0
      %8069 = vmatpush1.msra.mxu0 0.0
      %8070 = vmatprep.subr.mxu0 0.0
      %8071 = vmatpush1.msra.mxu0 0.0
      %8072 = vmatprep.subr.mxu0 0.0
      %8073 = vmatpush1.msra.mxu0 0.0
      %8074 = vmatprep.subr.mxu0 0.0
      %8075 = vmatpush1.msra.mxu0 0.0
      %8076 = vmatprep.subr.mxu0 0.0
      %8077 = vmatpush1.msra.mxu0 0.0
      %8078 = vmatprep.subr.mxu0 0.0
      %8079 = vmatpush1.msra.mxu0 0.0
      %8080 = vmatprep.subr.mxu0 0.0
      %8081 = vmatpush1.msra.mxu0 0.0
      %8082 = vmatprep.subr.mxu0 0.0
      %8083 = vmatpush1.msra.mxu0 0.0
      %8084 = vmatprep.subr.mxu0 0.0
      %8085 = vmatpush1.msra.mxu0 0.0
      %8086 = vmatprep.subr.mxu0 0.0
      %8087 = vmatpush1.msra.mxu0 0.0
      %8088 = vmatprep.subr.mxu0 0.0
      %8089 = vmatpush1.msra.mxu0 0.0
      %8090 = vmatprep.subr.mxu0 0.0
      %8091 = vmatpush1.msra.mxu0 0.0
      %8092 = vmatprep.subr.mxu0 0.0
      %8093 = vmatpush1.msra.mxu0 0.0
      %8094 = vmatprep.subr.mxu0 0.0
      %8095 = vmatpush1.msra.mxu0 0.0
      %8096 = vmatprep.subr.mxu0 0.0
      %8097 = vmatpush1.msra.mxu0 0.0
      %8098 = vmatprep.subr.mxu0 0.0
      %8099 = vmatpush1.msra.mxu0 0.0
      %8100 = vmatprep.subr.mxu0 0.0
      %8101 = vmatpush1.msra.mxu0 0.0
      %8102 = vmatprep.subr.mxu0 0.0
      %8103 = vmatpush1.msra.mxu0 0.0
      %8104 = vmatprep.subr.mxu0 0.0
      %8105 = vmatpush1.msra.mxu0 0.0
      %8106 = vmatprep.subr.mxu0 0.0
      %8107 = vmatpush1.msra.mxu0 0.0
      %8108 = vmatprep.subr.mxu0 0.0
      %8109 = vmatpush1.msra.mxu0 0.0
      %8110 = vmatprep.subr.mxu0 0.0
      %8111 = vmatpush1.msra.mxu0 0.0
      %8112 = vmatprep.subr.mxu0 0.0
      %8113 = vmatpush1.msra.mxu0 0.0
      %8114 = vmatprep.subr.mxu0 0.0
      %8115 = vmatpush1.msra.mxu0 0.0
      %8116 = vmatprep.subr.mxu0 0.0
      %8117 = vmatpush1.msra.mxu0 0.0
      %8118 = vmatprep.subr.mxu0 0.0
      %8119 = vmatpush1.msra.mxu0 0.0
      %8120 = vmatprep.subr.mxu0 0.0
      %8121 = vmatpush1.msra.mxu0 0.0
      %8122 = vmatprep.mubr.f32.mxu0 0.0
      %8123 = vmatmul.mubr.f32.gmra.mrb[0].mxu0 %v7960
      %v8124 = vpop.f32.mrb[0].mxu0
      %v8125 = vadd.f32 %v4105, %v8124
      %v8126 = vpop.f32.mrb[0].mxu0
      %8127 = vmatprep.mubr.f32.mxu0 0.0
      %8128 = vmatmul.mubr.f32.gmra.mrb[0].mxu0 %v7963
      %v8129 = vpop.f32.mrb[0].mxu0
      %v8130 = vadd.f32 %v4110, %v8129
      %v8131 = vpop.f32.mrb[0].mxu0
      %8132 = vmatprep.mubr.f32.mxu0 0.0
      %8133 = vmatmul.mubr.f32.gmra.mrb[0].mxu0 %v7966
      %v8134 = vpop.f32.mrb[0].mxu0
      %v8135 = vadd.f32 %v4115, %v8134
      %v8136 = vpop.f32.mrb[0].mxu0
      %8137 = vmatprep.mubr.f32.mxu0 0.0
      %8138 = vmatmul.mubr.f32.gmra.mrb[0].mxu0 %v7969
      %v8139 = vpop.f32.mrb[0].mxu0
      %v8140 = vadd.f32 %v4120, %v8139
      %v8141 = vpop.f32.mrb[0].mxu0
      %8142 = vmatprep.mubr.f32.mxu0 0.0
      %8143 = vmatmul.mubr.f32.gmra.mrb[0].mxu0 %v7972
      %v8144 = vpop.f32.mrb[0].mxu0
      %v8145 = vadd.f32 %v4125, %v8144
      %v8146 = vpop.f32.mrb[0].mxu0
      %8147 = vmatprep.mubr.f32.mxu0 0.0
      %8148 = vmatmul.mubr.f32.gmra.mrb[0].mxu0 %v7975
      %v8149 = vpop.f32.mrb[0].mxu0
      %v8150 = vadd.f32 %v4130, %v8149
      %v8151 = vpop.f32.mrb[0].mxu0
      %8152 = vmatprep.mubr.f32.mxu0 0.0
      %8153 = vmatmul.mubr.f32.gmra.mrb[0].mxu0 %v7978
      %v8154 = vpop.f32.mrb[0].mxu0
      %v8155 = vadd.f32 %v4135, %v8154
      %v8156 = vpop.f32.mrb[0].mxu0
      %8157 = vmatprep.mubr.f32.mxu0 0.0
      %8158 = vmatmul.mubr.f32.gmra.mrb[0].mxu0 %v7981
      %v8159 = vpop.f32.mrb[0].mxu0
      %v8160 = vadd.f32 %v4140, %v8159
      %v8161 = vpop.f32.mrb[0].mxu0
      %8162 = vmatprep.mubr.f32.mxu0 0.0
      %8163 = vmatmul.mubr.f32.gmra.mrb[0].mxu0 %v7984
      %v8164 = vpop.f32.mrb[0].mxu0
      %v8165 = vadd.f32 %v4145, %v8164
      %v8166 = vpop.f32.mrb[0].mxu0
      %8167 = vmatprep.mubr.f32.mxu0 0.0
      %8168 = vmatmul.mubr.f32.gmra.mrb[0].mxu0 %v7987
      %v8169 = vpop.f32.mrb[0].mxu0
      %v8170 = vadd.f32 %v4150, %v8169
      %v8171 = vpop.f32.mrb[0].mxu0
      %8172 = vmatprep.mubr.f32.mxu0 0.0
      %8173 = vmatmul.mubr.f32.gmra.mrb[0].mxu0 %v7990
      %v8174 = vpop.f32.mrb[0].mxu0
      %v8175 = vadd.f32 %v4155, %v8174
      %v8176 = vpop.f32.mrb[0].mxu0
      %8177 = vmatprep.mubr.f32.mxu0 0.0
      %8178 = vmatmul.mubr.f32.gmra.mrb[0].mxu0 %v7993
      %v8179 = vpop.f32.mrb[0].mxu0
      %v8180 = vadd.f32 %v4160, %v8179
      %v8181 = vpop.f32.mrb[0].mxu0
      %8182 = vmatprep.mubr.f32.mxu0 0.0
      %8183 = vmatmul.mubr.f32.gmra.mrb[0].mxu0 %v7996
      %v8184 = vpop.f32.mrb[0].mxu0
      %v8185 = vadd.f32 %v4165, %v8184
      %v8186 = vpop.f32.mrb[0].mxu0
      %8187 = vmatprep.mubr.f32.mxu0 0.0
      %8188 = vmatmul.mubr.f32.gmra.mrb[0].mxu0 %v7999
      %v8189 = vpop.f32.mrb[0].mxu0
      %v8190 = vadd.f32 %v4170, %v8189
      %v8191 = vpop.f32.mrb[0].mxu0
      %8192 = vmatprep.mubr.f32.mxu0 0.0
      %8193 = vmatmul.mubr.f32.gmra.mrb[0].mxu0 %v8002
      %v8194 = vpop.f32.mrb[0].mxu0
      %v8195 = vadd.f32 %v4175, %v8194
      %v8196 = vpop.f32.mrb[0].mxu0
      %8197 = vmatprep.mubr.f32.mxu0 0.0
      %8198 = vmatmul.mubr.f32.gmra.mrb[0].mxu0 %v8005
      %v8199 = vpop.f32.mrb[0].mxu0
      %v8200 = vadd.f32 %v4180, %v8199
      %v8201 = vpop.f32.mrb[0].mxu0
      %8202 = vmatprep.mubr.f32.mxu0 0.0
      %8203 = vmatmul.mubr.f32.gmra.mrb[0].mxu0 %v8008
      %v8204 = vpop.f32.mrb[0].mxu0
      %v8205 = vadd.f32 %v4185, %v8204
      %v8206 = vpop.f32.mrb[0].mxu0
      %8207 = vmatprep.mubr.f32.mxu0 0.0
      %8208 = vmatmul.mubr.f32.gmra.mrb[0].mxu0 %v8011
      %v8209 = vpop.f32.mrb[0].mxu0
      %v8210 = vadd.f32 %v4190, %v8209
      %v8211 = vpop.f32.mrb[0].mxu0
      %8212 = vmatprep.mubr.f32.mxu0 0.0
      %8213 = vmatmul.mubr.f32.gmra.mrb[0].mxu0 %v8014
      %v8214 = vpop.f32.mrb[0].mxu0
      %v8215 = vadd.f32 %v4195, %v8214
      %v8216 = vpop.f32.mrb[0].mxu0
      %8217 = vmatprep.mubr.f32.mxu0 0.0
      %8218 = vmatmul.mubr.f32.gmra.mrb[0].mxu0 %v8017
      %v8219 = vpop.f32.mrb[0].mxu0
      %v8220 = vadd.f32 %v4200, %v8219
      %v8221 = vpop.f32.mrb[0].mxu0
      %8222 = vmatprep.mubr.f32.mxu0 0.0
      %8223 = vmatmul.mubr.f32.gmra.mrb[0].mxu0 %v8020
      %v8224 = vpop.f32.mrb[0].mxu0
      %v8225 = vadd.f32 %v4205, %v8224
      %v8226 = vpop.f32.mrb[0].mxu0
      %8227 = vmatprep.mubr.f32.mxu0 0.0
      %8228 = vmatmul.mubr.f32.gmra.mrb[0].mxu0 %v8023
      %v8229 = vpop.f32.mrb[0].mxu0
      %v8230 = vadd.f32 %v4210, %v8229
      %v8231 = vpop.f32.mrb[0].mxu0
      %8232 = vmatprep.mubr.f32.mxu0 0.0
      %8233 = vmatmul.mubr.f32.gmra.mrb[0].mxu0 %v8026
      %v8234 = vpop.f32.mrb[0].mxu0
      %v8235 = vadd.f32 %v4215, %v8234
      %v8236 = vpop.f32.mrb[0].mxu0
      %8237 = vmatprep.mubr.f32.mxu0 0.0
      %8238 = vmatmul.mubr.f32.gmra.mrb[0].mxu0 %v8029
      %v8239 = vpop.f32.mrb[0].mxu0
      %v8240 = vadd.f32 %v4220, %v8239
      %v8241 = vpop.f32.mrb[0].mxu0
      %8242 = vmatprep.mubr.f32.mxu0 0.0
      %8243 = vmatmul.mubr.f32.gmra.mrb[0].mxu0 %v8032
      %v8244 = vpop.f32.mrb[0].mxu0
      %v8245 = vadd.f32 %v4225, %v8244
      %v8246 = vpop.f32.mrb[0].mxu0
      %8247 = vmatprep.mubr.f32.mxu0 0.0
      %8248 = vmatmul.mubr.f32.gmra.mrb[0].mxu0 %v8035
      %v8249 = vpop.f32.mrb[0].mxu0
      %v8250 = vadd.f32 %v4230, %v8249
      %v8251 = vpop.f32.mrb[0].mxu0
      %8252 = vmatprep.mubr.f32.mxu0 0.0
      %8253 = vmatmul.mubr.f32.gmra.mrb[0].mxu0 %v8038
      %v8254 = vpop.f32.mrb[0].mxu0
      %v8255 = vadd.f32 %v4235, %v8254
      %v8256 = vpop.f32.mrb[0].mxu0
      %8257 = vmatprep.mubr.f32.mxu0 0.0
      %8258 = vmatmul.mubr.f32.gmra.mrb[0].mxu0 %v8041
      %v8259 = vpop.f32.mrb[0].mxu0
      %v8260 = vadd.f32 %v4240, %v8259
      %v8261 = vpop.f32.mrb[0].mxu0
      %8262 = vmatprep.mubr.f32.mxu0 0.0
      %8263 = vmatmul.mubr.f32.gmra.mrb[0].mxu0 %v8044
      %v8264 = vpop.f32.mrb[0].mxu0
      %v8265 = vadd.f32 %v4245, %v8264
      %v8266 = vpop.f32.mrb[0].mxu0
      %8267 = vmatprep.mubr.f32.mxu0 0.0
      %8268 = vmatmul.mubr.f32.gmra.mrb[0].mxu0 %v8047
      %v8269 = vpop.f32.mrb[0].mxu0
      %v8270 = vadd.f32 %v4250, %v8269
      %v8271 = vpop.f32.mrb[0].mxu0
      %8272 = vmatprep.mubr.f32.mxu0 0.0
      %8273 = vmatmul.mubr.f32.gmra.mrb[0].mxu0 %v8050
      %v8274 = vpop.f32.mrb[0].mxu0
      %v8275 = vadd.f32 %v4255, %v8274
      %v8276 = vpop.f32.mrb[0].mxu0
      %8277 = vmatprep.mubr.f32.mxu0 0.0
      %8278 = vmatmul.mubr.f32.gmra.mrb[0].mxu0 %v8053
      %v8279 = vpop.f32.mrb[0].mxu0
      %v8280 = vadd.f32 %v4260, %v8279
      %v8281 = vpop.f32.mrb[0].mxu0
      %8282 = vdwg.mxu0
      %v8283 = vadd.f32 %v8125, %v200
      %v8284 = vadd.f32 %v8130, %v201
      %v8285 = vadd.f32 %v8135, %v202
      %v8286 = vadd.f32 %v8140, %v203
      %v8287 = vadd.f32 %v8145, %v204
      %v8288 = vadd.f32 %v8150, %v205
      %v8289 = vadd.f32 %v8155, %v206
      %v8290 = vadd.f32 %v8160, %v207
      %v8291 = vadd.f32 %v8165, %v208
      %v8292 = vadd.f32 %v8170, %v209
      %v8293 = vadd.f32 %v8175, %v210
      %v8294 = vadd.f32 %v8180, %v211
      %v8295 = vadd.f32 %v8185, %v212
      %v8296 = vadd.f32 %v8190, %v213
      %v8297 = vadd.f32 %v8195, %v214
      %v8298 = vadd.f32 %v8200, %v215
      %v8299 = vadd.f32 %v8205, %v216
      %v8300 = vadd.f32 %v8210, %v217
      %v8301 = vadd.f32 %v8215, %v218
      %v8302 = vadd.f32 %v8220, %v219
      %v8303 = vadd.f32 %v8225, %v220
      %v8304 = vadd.f32 %v8230, %v221
      %v8305 = vadd.f32 %v8235, %v222
      %v8306 = vadd.f32 %v8240, %v223
      %v8307 = vadd.f32 %v8245, %v224
      %v8308 = vadd.f32 %v8250, %v225
      %v8309 = vadd.f32 %v8255, %v226
      %v8310 = vadd.f32 %v8260, %v227
      %v8311 = vadd.f32 %v8265, %v228
      %v8312 = vadd.f32 %v8270, %v229
      %v8313 = vadd.f32 %v8275, %v230
      %v8314 = vadd.f32 %v8280, %v231
      %8315 = vst.msk [vmem:[%s143] sm:$0xff] %vm144, %v8283
      %8316 = vst.msk [vmem:[%s143 + $0x8] sm:$0xff] %vm144, %v8284
      %8317 = vst.msk [vmem:[%s143 + $0x10] sm:$0xff] %vm144, %v8285
      %8318 = vst.msk [vmem:[%s143 + $0x18] sm:$0xff] %vm144, %v8286
      %8319 = vst.msk [vmem:[%s143 + $0x20] sm:$0xff] %vm144, %v8287
      %8320 = vst.msk [vmem:[%s143 + $0x28] sm:$0xff] %vm144, %v8288
      %8321 = vst.msk [vmem:[%s143 + $0x30] sm:$0xff] %vm144, %v8289
      %8322 = vst.msk [vmem:[%s143 + $0x38] sm:$0xff] %vm144, %v8290
      %8323 = vst.msk [vmem:[%s143 + $0x40] sm:$0xff] %vm144, %v8291
      %8324 = vst.msk [vmem:[%s143 + $0x48] sm:$0xff] %vm144, %v8292
      %8325 = vst.msk [vmem:[%s143 + $0x50] sm:$0xff] %vm144, %v8293
      %8326 = vst.msk [vmem:[%s143 + $0x58] sm:$0xff] %vm144, %v8294
      %8327 = vst.msk [vmem:[%s143 + $0x60] sm:$0xff] %vm144, %v8295
      %8328 = vst.msk [vmem:[%s143 + $0x68] sm:$0xff] %vm144, %v8296
      %8329 = vst.msk [vmem:[%s143 + $0x70] sm:$0xff] %vm144, %v8297
      %8330 = vst.msk [vmem:[%s143 + $0x78] sm:$0xff] %vm144, %v8298
      %8331 = vst.msk [vmem:[%s143 + $0x80] sm:$0xff] %vm144, %v8299
      %8332 = vst.msk [vmem:[%s143 + $0x88] sm:$0xff] %vm144, %v8300
      %8333 = vst.msk [vmem:[%s143 + $0x90] sm:$0xff] %vm144, %v8301
      %8334 = vst.msk [vmem:[%s143 + $0x98] sm:$0xff] %vm144, %v8302
      %8335 = vst.msk [vmem:[%s143 + $0xa0] sm:$0xff] %vm144, %v8303
      %8336 = vst.msk [vmem:[%s143 + $0xa8] sm:$0xff] %vm144, %v8304
      %8337 = vst.msk [vmem:[%s143 + $0xb0] sm:$0xff] %vm144, %v8305
      %8338 = vst.msk [vmem:[%s143 + $0xb8] sm:$0xff] %vm144, %v8306
      %8339 = vst.msk [vmem:[%s143 + $0xc0] sm:$0xff] %vm144, %v8307
      %8340 = vst.msk [vmem:[%s143 + $0xc8] sm:$0xff] %vm144, %v8308
      %8341 = vst.msk [vmem:[%s143 + $0xd0] sm:$0xff] %vm144, %v8309
      %8342 = vst.msk [vmem:[%s143 + $0xd8] sm:$0xff] %vm144, %v8310
      %8343 = vst.msk [vmem:[%s143 + $0xe0] sm:$0xff] %vm144, %v8311
      %8344 = vst.msk [vmem:[%s143 + $0xe8] sm:$0xff] %vm144, %v8312
      %8345 = vst.msk [vmem:[%s143 + $0xf0] sm:$0xff] %vm144, %v8313
      %8346 = vst.msk [vmem:[%s143 + $0xf8] sm:$0xff] %vm144, %v8314
      %p8347 = scmp.lt.s32.totalorder %s13, 1
      %s8348 = scalar_select %p8347, %s13, 1
      %s8349 = smul.addr %s8348, 32
      %s8350 = smul.addr %s8349, 8
      %s8351 = scalar_lea.vmem %s2, %s8350
      // Predicated region
      $region29: #{resnet_pallas.1} parent=27 // pred_check
        %p8352 = pneg %p78
      $region30: #{resnet_pallas.1} parent=27 // pred_check_branch
        %8354 = sbr.rel (%p8352) target = $region32
      $region31: #{resnet_pallas.1} parent=27 // pred_region
        _
      $region32: #{resnet_pallas.1} parent=27 // pred_fallthru
        _
    $region28: #{resnet_pallas.1} parent=5 // pred_fallthru
      _
    %p8355 = scmp.le.s32.totalorder 2, %s8
    // Predicated region
    $region33: #{resnet_pallas.1} parent=5 // pred_check
      %p8356 = pneg %p8355
    $region34: #{resnet_pallas.1} parent=5 // pred_check_branch
      %8358 = sbr.rel (%p8356) target = $region36
    $region35: #{resnet_pallas.1} parent=5 // pred_region
      %s8359 = ssub.s32 %s8, 2
      // Predicated region
      $region37: #{resnet_pallas.1} parent=35 // pred_check
        %p8360 = pneg %p84
      $region38: #{resnet_pallas.1} parent=35 // pred_check_branch
        %8362 = sbr.rel (%p8360) target = $region40
      $region39: #{resnet_pallas.1} parent=35 // pred_region
        %p8363 = scmp.lt.s32.totalorder %s14, 1
        %s8364 = scalar_select %p8363, %s14, 1
        %s8365 = smul.addr %s8364, 32
        %s8366 = smul.addr %s8365, 8
        %s8367 = scalar_lea.vmem %s2, %s8366
      $region40: #{resnet_pallas.1} parent=35 // pred_fallthru
        _
    $region36: #{resnet_pallas.1} parent=5 // pred_fallthru
      _
  $region6: #{resnet_pallas.1} parent=0 // loop_footer
    %s12 = sadd.s32 1, %s8
  $region7: #{resnet_pallas.1} parent=0 // loop_footer_branch
    %7 = sbr.rel target = $region3
  $region8: #{resnet_pallas.1} parent=0 // loop_exit
    _

</llo_original>
